<compile_context>
chip_gen: v7x
topology: tpu7x:2x2x1
jax: 0.10.0
libtpu: 0.0.40
codegen_flags: <defaults>
</compile_context>

<pallas_src>
import numpy as np
import jax
import jax.numpy as jnp
from jax import lax
from jax.experimental import pallas as pl
from jax.experimental.pallas import tpu as pltpu

LN_EPS = 1e-5
INV_SQRT2 = float(1.0 / np.sqrt(2.0))
HIDDEN = 512


def _round_up(x, m):
    return ((x + m - 1) // m) * m


def _device_kind():
    try:
        return jax.devices()[0].device_kind.lower()
    except Exception:
        return ""


def _tile_defaults():
    """(max batch tile, min grid steps) per TPU generation."""
    kind = _device_kind()
    if "v5" in kind:      # v5e: 128-wide MXU, 16 MiB scoped-VMEM default, 1 TC
        return 128, 1
    if "v7" in kind:      # v7x: 256-wide MXU, 2 TCs/chip -> want >= 2 parallel steps
        return 256, 2
    return 256, 1         # v6e and unknown: 256-wide MXU, 1 TC


def _choose_tb(B, tb_max, min_steps):
    """Pick the batch tile: MXU-shaped when B is large, full-extent block when tiny."""
    if B <= 8:
        return B                                   # single full-extent block
    tb = tb_max if B >= 2 * tb_max else min(128, _round_up(B, 8))
    tb = min(tb, _round_up(B, 8))
    if min_steps > 1 and pl.cdiv(B, tb) < min_steps:
        # Shrink the tile so both v7x TensorCores get work on small batches.
        tb = max(8, _round_up(pl.cdiv(B, min_steps), 8))
    return tb


def _text2eeg_kernel(x_ref, w1_ref, c_ref, w2_ref, b2_ref, o_ref):
    # ---- Linear(in_dim -> 512): streamed x tile @ resident w1, f32 MXU accumulation ----
    h = jnp.dot(x_ref[...], w1_ref[...], preferred_element_type=jnp.float32)
    h = h + c_ref[0:1, :]                                  # + b1   (f32)

    # ---- GELU (exact erf form; PyTorch nn.GELU default) ----
    h = 0.5 * h * (1.0 + lax.erf(h * INV_SQRT2))

    # ---- LayerNorm(512) over the last axis (biased variance, as in PyTorch) ----
    mean = jnp.mean(h, axis=-1, keepdims=True)
    cent = h - mean
    var = jnp.mean(cent * cent, axis=-1, keepdims=True)
    hn = cent * lax.rsqrt(var + LN_EPS)
    hn = hn * c_ref[1:2, :] + c_ref[2:3, :]                # * gamma + beta

    # ---- Linear(512 -> out_p) ----
    # NOTE: on the bf16 path the second matmul's LHS is also bf16 -> small extra drift
    # (covered by the relaxed tolerance); keep use_bf16=False for strict f32 parity.
    out = jnp.dot(hn.astype(w2_ref.dtype), w2_ref[...], preferred_element_type=jnp.float32)
    o_ref[...] = (out + b2_ref[...]).astype(o_ref.dtype)


def text2eeg_forward(x, params, *, tb=None, use_bf16=True):
    """Fused Text2EEG forward.

    x: (B, in_dim) float32.
    params: w1 (in_dim,512), b1 (1,512), gamma (1,512), beta (1,512),
            w2 (512,out_dim), b2 (1,out_dim) -- float32.
    Returns (B, out_dim) float32.
    """
    B, in_dim = x.shape
    hidden = params["w1"].shape[1]
    out_dim = params["w2"].shape[1]

    tb_max, min_steps = _tile_defaults()
    tb_eff = _choose_tb(B, int(tb) if tb is not None else tb_max, min_steps)
    grid = (pl.cdiv(B, tb_eff),)

    out_p = _round_up(out_dim, 128)            # lane-dense output (avoid masked vst)

    w_dtype = jnp.bfloat16 if use_bf16 else jnp.float32
    w1 = params["w1"].astype(w_dtype)
    w2 = params["w2"].astype(w_dtype)
    b2 = params["b2"].astype(jnp.float32)
    # Pack b1 / gamma / beta into one resident (3, hidden) f32 operand.
    consts = jnp.concatenate(
        [params["b1"], params["gamma"], params["beta"]], axis=0).astype(jnp.float32)
    if out_p != out_dim:
        w2 = jnp.pad(w2, ((0, 0), (0, out_p - out_dim)))
        b2 = jnp.pad(b2, ((0, 0), (0, out_p - out_dim)))

    # Stream x in bf16 on the fast path (halves per-step x DMA); keep f32 otherwise.
    x_in = x.astype(jnp.bfloat16) if use_bf16 else x.astype(jnp.float32)

    w_item = np.dtype(w_dtype).itemsize
    x_item = np.dtype(x_in.dtype).itemsize
    resident_bytes = w_item * (in_dim * hidden + hidden * out_p) + 4 * (3 * hidden + out_p)
    stream_bytes = 2 * (x_item * tb_eff * in_dim + 4 * tb_eff * out_p)   # double-buffered tiles
    interm_bytes = 4 * tb_eff * hidden * 4                               # f32 temporaries
    vmem_limit = int(min(max(resident_bytes + stream_bytes + interm_bytes + (8 << 20),
                             32 << 20), 48 << 20))

    cost = pl.CostEstimate(
        flops=int(2 * B * (in_dim * hidden + hidden * out_p)),
        transcendentals=int(B * hidden),                   # erf in GELU
        bytes_accessed=int(x_item * B * in_dim + 4 * B * out_p + resident_bytes),
    )

    def run(residents_in_vmem):
        if residents_in_vmem:
            # Whole-array VMEM residents: copied in once, single-buffered.
            resident_spec = lambda shape: pl.BlockSpec(memory_space=pltpu.MemorySpace.VMEM)
        else:
            # Fallback: blocked residents with constant index_map (fetched once).
            resident_spec = lambda shape: pl.BlockSpec(shape, lambda i: (0, 0))
        call = pl.pallas_call(
            _text2eeg_kernel,
            out_shape=jax.ShapeDtypeStruct((B, out_p), jnp.float32),
            grid_spec=pltpu.PrefetchScalarGridSpec(
                num_scalar_prefetch=0,
                grid=grid,
                in_specs=[
                    pl.BlockSpec((tb_eff, in_dim), lambda i: (i, 0)),   # streamed x tile
                    resident_spec((in_dim, hidden)),                    # w1
                    resident_spec((3, hidden)),                         # b1 / gamma / beta
                    resident_spec((hidden, out_p)),                     # w2
                    resident_spec((1, out_p)),                          # b2
                ],
                out_specs=pl.BlockSpec((tb_eff, out_p), lambda i: (i, 0)),
            ),
            compiler_params=pltpu.CompilerParams(
                dimension_semantics=("parallel",),
                vmem_limit_bytes=vmem_limit,
            ),
            cost_estimate=cost,
        )
        return call(x_in, w1, consts, w2, b2)

    try:
        out_padded = jax.block_until_ready(run(True))
    except Exception:
        # Robustness fallback if whole-array VMEM residency is rejected by this build.
        out_padded = jax.block_until_ready(run(False))

    return out_padded[:, :out_dim]


def init_params(key, in_dim, hidden, out_dim):
    """Deterministic init mimicking nn.Linear's uniform(-1/sqrt(fan_in), +1/sqrt(fan_in))."""
    k1, k2, k3, k4 = jax.random.split(key, 4)
    lim1 = 1.0 / np.sqrt(in_dim)
    lim2 = 1.0 / np.sqrt(hidden)
    return {
        "w1": jax.random.uniform(k1, (in_dim, hidden), jnp.float32, -lim1, lim1),
        "b1": jax.random.uniform(k2, (1, hidden), jnp.float32, -lim1, lim1),
        "gamma": jnp.ones((1, hidden), jnp.float32),
        "beta": jnp.zeros((1, hidden), jnp.float32),
        "w2": jax.random.uniform(k3, (hidden, out_dim), jnp.float32, -lim2, lim2),
        "b2": jax.random.uniform(k4, (1, out_dim), jnp.float32, -lim2, lim2),
    }


def text2eeg_reference(x, p):
    hp = lax.Precision.HIGHEST
    h = jnp.dot(x, p["w1"], precision=hp) + p["b1"]
    h = 0.5 * h * (1.0 + lax.erf(h * INV_SQRT2))
    mean = jnp.mean(h, axis=-1, keepdims=True)
    var = jnp.mean((h - mean) ** 2, axis=-1, keepdims=True)
    hn = (h - mean) * lax.rsqrt(var + LN_EPS)
    hn = hn * p["gamma"] + p["beta"]
    return jnp.dot(hn, p["w2"], precision=hp) + p["b2"]


if __name__ == "__main__":
    key = jax.random.PRNGKey(0)
    k1, k2, k3, k4, k5, k6 = jax.random.split(key, 6)

    # --- Case 1: module's natural projector dims (in=2048, hidden=512, out=800), small batch ---
    B, IN_DIM, OUT_DIM = 16, 2048, 800
    x = jax.random.normal(k1, (B, IN_DIM), jnp.float32)
    params = init_params(k2, IN_DIM, HIDDEN, OUT_DIM)
    ref = jax.block_until_ready(text2eeg_reference(x, params))

    out_f32 = jax.block_until_ready(text2eeg_forward(x, params, use_bf16=False))
    np.testing.assert_allclose(np.asarray(out_f32), np.asarray(ref), rtol=1e-3, atol=1e-3)

    out_bf16 = jax.block_until_ready(text2eeg_forward(x, params, use_bf16=True))
    np.testing.assert_allclose(np.asarray(out_bf16), np.asarray(ref), rtol=5e-2, atol=5e-2)

    # --- Case 2: ragged batch, non-aligned dims, multi-step grid with a partial last block ---
    B2, IN2, OUT2 = 40, 300, 200
    x2 = jax.random.normal(k3, (B2, IN2), jnp.float32)
    params2 = init_params(k4, IN2, HIDDEN, OUT2)
    ref2 = jax.block_until_ready(text2eeg_reference(x2, params2))
    out2 = jax.block_until_ready(text2eeg_forward(x2, params2, tb=16, use_bf16=False))
    np.testing.assert_allclose(np.asarray(out2), np.asarray(ref2), rtol=1e-3, atol=1e-3)

    # --- Case 3: tiny batch (< 8) -> single full-extent block, bf16 streaming path ---
    B3, IN3, OUT3 = 5, 256, 128
    x3 = jax.random.normal(k5, (B3, IN3), jnp.float32)
    params3 = init_params(k6, IN3, HIDDEN, OUT3)
    ref3 = jax.block_until_ready(text2eeg_reference(x3, params3))
    out3 = jax.block_until_ready(text2eeg_forward(x3, params3, use_bf16=True))
    np.testing.assert_allclose(np.asarray(out3), np.asarray(ref3), rtol=5e-2, atol=5e-2)

    print("KERNEL_OK")
</pallas_src>

<mosaic_0001>
module attributes {stable_mosaic.version = 11 : i64} {
  func.func @_text2eeg_kernel(%arg0: i32, %arg1: memref<16x2048xf32, #tpu.memory_space<vmem>>, %arg2: memref<2048x512xf32, #tpu.memory_space<vmem>>, %arg3: memref<3x512xf32, #tpu.memory_space<vmem>>, %arg4: memref<512x896xf32, #tpu.memory_space<vmem>>, %arg5: memref<1x896xf32, #tpu.memory_space<vmem>>, %arg6: memref<16x896xf32, #tpu.memory_space<vmem>>) attributes {dimension_semantics = [#tpu.dimension_semantics<parallel>], iteration_bounds = array<i64: 1>, scalar_prefetch = 0 : i64, scratch_operands = 0 : i64, tpu.core_type = #tpu.core_type<tc>, window_params = [{transform_indices = @transform_0, window_bounds = array<i64: 16, 2048>}, {pipeline_mode = #tpu.pipeline_mode<synchronous>, transform_indices = @transform_1, window_bounds = array<i64: 2048, 512>}, {pipeline_mode = #tpu.pipeline_mode<synchronous>, transform_indices = @transform_2, window_bounds = array<i64: 3, 512>}, {pipeline_mode = #tpu.pipeline_mode<synchronous>, transform_indices = @transform_3, window_bounds = array<i64: 512, 896>}, {pipeline_mode = #tpu.pipeline_mode<synchronous>, transform_indices = @transform_4, window_bounds = array<i64: 1, 896>}, {transform_indices = @transform_5, window_bounds = array<i64: 16, 896>}]} {
    %c0 = arith.constant 0 : index
    %c0_0 = arith.constant 0 : index
    %0 = vector.load %arg1[%c0, %c0_0] : memref<16x2048xf32, #tpu.memory_space<vmem>>, vector<16x2048xf32>
    %c0_1 = arith.constant 0 : index
    %c0_2 = arith.constant 0 : index
    %1 = vector.load %arg2[%c0_1, %c0_2] : memref<2048x512xf32, #tpu.memory_space<vmem>>, vector<2048x512xf32>
    %cst = arith.constant dense<0.000000e+00> : vector<16x512xf32>
    %2 = tpu.matmul %0, %1, %cst {dimension_numbers = #tpu.dot_dimension_numbers<[1], [0], [0], [1], [0, 0, 1, 1], [], []>} : vector<16x2048xf32>, vector<2048x512xf32>, vector<16x512xf32> -> vector<16x512xf32>
    %c0_3 = arith.constant 0 : index
    %c0_4 = arith.constant 0 : index
    %3 = vector.load %arg3[%c0_3, %c0_4] : memref<3x512xf32, #tpu.memory_space<vmem>>, vector<1x512xf32>
    %4 = vector.broadcast %3 : vector<1x512xf32> to vector<16x512xf32>
    %5 = arith.addf %2, %4 : vector<16x512xf32>
    %cst_5 = arith.constant 5.000000e-01 : f32
    %6 = vector.broadcast %cst_5 : f32 to vector<16x512xf32>
    %7 = arith.mulf %6, %5 : vector<16x512xf32>
    %cst_6 = arith.constant 0.707106769 : f32
    %8 = vector.broadcast %cst_6 : f32 to vector<16x512xf32>
    %9 = arith.mulf %5, %8 : vector<16x512xf32>
    %10 = math.erf %9 : vector<16x512xf32>
    %cst_7 = arith.constant 1.000000e+00 : f32
    %11 = vector.broadcast %cst_7 : f32 to vector<16x512xf32>
    %12 = arith.addf %11, %10 : vector<16x512xf32>
    %13 = arith.mulf %7, %12 : vector<16x512xf32>
    %cst_8 = arith.constant dense<0.000000e+00> : vector<16xf32>
    %14 = vector.multi_reduction <add>, %13, %cst_8 [1] : vector<16x512xf32> to vector<16xf32>
    %15 = vector.shape_cast %14 : vector<16xf32> to vector<16x1xf32>
    %cst_9 = arith.constant 5.120000e+02 : f32
    %16 = vector.broadcast %cst_9 : f32 to vector<16x1xf32>
    %17 = arith.divf %15, %16 : vector<16x1xf32>
    %18 = vector.broadcast %17 : vector<16x1xf32> to vector<16x512xf32>
    %19 = arith.subf %13, %18 : vector<16x512xf32>
    %20 = arith.mulf %19, %19 : vector<16x512xf32>
    %cst_10 = arith.constant dense<0.000000e+00> : vector<16xf32>
    %21 = vector.multi_reduction <add>, %20, %cst_10 [1] : vector<16x512xf32> to vector<16xf32>
    %22 = vector.shape_cast %21 : vector<16xf32> to vector<16x1xf32>
    %cst_11 = arith.constant 5.120000e+02 : f32
    %23 = vector.broadcast %cst_11 : f32 to vector<16x1xf32>
    %24 = arith.divf %22, %23 : vector<16x1xf32>
    %cst_12 = arith.constant 9.99999974E-6 : f32
    %25 = vector.broadcast %cst_12 : f32 to vector<16x1xf32>
    %26 = arith.addf %24, %25 : vector<16x1xf32>
    %27 = math.rsqrt %26 : vector<16x1xf32>
    %28 = vector.broadcast %27 : vector<16x1xf32> to vector<16x512xf32>
    %29 = arith.mulf %19, %28 : vector<16x512xf32>
    %c1 = arith.constant 1 : index
    %c0_13 = arith.constant 0 : index
    %30 = vector.load %arg3[%c1, %c0_13] : memref<3x512xf32, #tpu.memory_space<vmem>>, vector<1x512xf32>
    %31 = vector.broadcast %30 : vector<1x512xf32> to vector<16x512xf32>
    %32 = arith.mulf %29, %31 : vector<16x512xf32>
    %c2 = arith.constant 2 : index
    %c0_14 = arith.constant 0 : index
    %33 = vector.load %arg3[%c2, %c0_14] : memref<3x512xf32, #tpu.memory_space<vmem>>, vector<1x512xf32>
    %34 = vector.broadcast %33 : vector<1x512xf32> to vector<16x512xf32>
    %35 = arith.addf %32, %34 : vector<16x512xf32>
    %c0_15 = arith.constant 0 : index
    %c0_16 = arith.constant 0 : index
    %36 = vector.load %arg4[%c0_15, %c0_16] : memref<512x896xf32, #tpu.memory_space<vmem>>, vector<512x896xf32>
    %cst_17 = arith.constant dense<0.000000e+00> : vector<16x896xf32>
    %37 = tpu.matmul %35, %36, %cst_17 {dimension_numbers = #tpu.dot_dimension_numbers<[1], [0], [0], [1], [0, 0, 1, 1], [], []>} : vector<16x512xf32>, vector<512x896xf32>, vector<16x896xf32> -> vector<16x896xf32>
    %c0_18 = arith.constant 0 : index
    %c0_19 = arith.constant 0 : index
    %38 = vector.load %arg5[%c0_18, %c0_19] : memref<1x896xf32, #tpu.memory_space<vmem>>, vector<1x896xf32>
    %39 = vector.broadcast %38 : vector<1x896xf32> to vector<16x896xf32>
    %40 = arith.addf %37, %39 : vector<16x896xf32>
    %c0_20 = arith.constant 0 : index
    %c0_21 = arith.constant 0 : index
    %41 = vector.load %arg6[%c0_20, %c0_21] : memref<16x896xf32, #tpu.memory_space<vmem>>, vector<16x896xf32>
    tpu.vector_store %arg6[%c0_20, %c0_21], %40 {strides = array<i32>} : memref<16x896xf32, #tpu.memory_space<vmem>>, vector<16x896xf32>,
    return
  }
  func.func @transform_0(%arg0: i32) -> (i32, i32) {
    %c0_i32 = arith.constant 0 : i32
    %c0_i32_0 = arith.constant 0 : i32
    return %arg0, %c0_i32 : i32, i32
  }
  func.func @transform_1(%arg0: i32) -> (i32, i32) {
    %c0_i32 = arith.constant 0 : i32
    %c0_i32_0 = arith.constant 0 : i32
    %c0_i32_1 = arith.constant 0 : i32
    return %c0_i32, %c0_i32_0 : i32, i32
  }
  func.func @transform_2(%arg0: i32) -> (i32, i32) {
    %c0_i32 = arith.constant 0 : i32
    %c0_i32_0 = arith.constant 0 : i32
    %c0_i32_1 = arith.constant 0 : i32
    return %c0_i32, %c0_i32_0 : i32, i32
  }
  func.func @transform_3(%arg0: i32) -> (i32, i32) {
    %c0_i32 = arith.constant 0 : i32
    %c0_i32_0 = arith.constant 0 : i32
    %c0_i32_1 = arith.constant 0 : i32
    return %c0_i32, %c0_i32_0 : i32, i32
  }
  func.func @transform_4(%arg0: i32) -> (i32, i32) {
    %c0_i32 = arith.constant 0 : i32
    %c0_i32_0 = arith.constant 0 : i32
    %c0_i32_1 = arith.constant 0 : i32
    return %c0_i32, %c0_i32_0 : i32, i32
  }
  func.func @transform_5(%arg0: i32) -> (i32, i32) {
    %c0_i32 = arith.constant 0 : i32
    %c0_i32_0 = arith.constant 0 : i32
    return %arg0, %c0_i32 : i32, i32
  }
}

module attributes {stable_mosaic.version = 11 : i64} {
  func.func @_text2eeg_kernel(%arg0: i32, %arg1: memref<16x2048xf32, #tpu.memory_space<vmem>>, %arg2: memref<2048x512xf32, #tpu.memory_space<vmem>>, %arg3: memref<3x512xf32, #tpu.memory_space<vmem>>, %arg4: memref<512x896xf32, #tpu.memory_space<vmem>>, %arg5: memref<1x896xf32, #tpu.memory_space<vmem>>, %arg6: memref<16x896xf32, #tpu.memory_space<vmem>>) attributes {dimension_semantics = [#tpu.dimension_semantics<parallel>], iteration_bounds = array<i64: 1>, scalar_prefetch = 0 : i64, scratch_operands = 0 : i64, tpu.core_type = #tpu.core_type<tc>, window_params = [{transform_indices = @transform_0, window_bounds = array<i64: 16, 2048>}, {pipeline_mode = #tpu.pipeline_mode<synchronous>, transform_indices = @transform_1, window_bounds = array<i64: 2048, 512>}, {pipeline_mode = #tpu.pipeline_mode<synchronous>, transform_indices = @transform_2, window_bounds = array<i64: 3, 512>}, {pipeline_mode = #tpu.pipeline_mode<synchronous>, transform_indices = @transform_3, window_bounds = array<i64: 512, 896>}, {pipeline_mode = #tpu.pipeline_mode<synchronous>, transform_indices = @transform_4, window_bounds = array<i64: 1, 896>}, {transform_indices = @transform_5, window_bounds = array<i64: 16, 896>}]} {
    %c0 = arith.constant 0 : index
    %c0_0 = arith.constant 0 : index
    %0 = vector.load %arg1[%c0, %c0_0] : memref<16x2048xf32, #tpu.memory_space<vmem>>, vector<16x2048xf32>
    %c0_1 = arith.constant 0 : index
    %c0_2 = arith.constant 0 : index
    %1 = vector.load %arg2[%c0_1, %c0_2] : memref<2048x512xf32, #tpu.memory_space<vmem>>, vector<2048x512xf32>
    %cst = arith.constant dense<0.000000e+00> : vector<16x512xf32>
    %2 = tpu.matmul %0, %1, %cst {dimension_numbers = #tpu.dot_dimension_numbers<[1], [0], [0], [1], [0, 0, 1, 1], [], []>} : vector<16x2048xf32>, vector<2048x512xf32>, vector<16x512xf32> -> vector<16x512xf32>
    %c0_3 = arith.constant 0 : index
    %c0_4 = arith.constant 0 : index
    %3 = vector.load %arg3[%c0_3, %c0_4] : memref<3x512xf32, #tpu.memory_space<vmem>>, vector<1x512xf32>
    %4 = vector.broadcast %3 : vector<1x512xf32> to vector<16x512xf32>
    %5 = arith.addf %2, %4 : vector<16x512xf32>
    %cst_5 = arith.constant 5.000000e-01 : f32
    %6 = vector.broadcast %cst_5 : f32 to vector<16x512xf32>
    %7 = arith.mulf %6, %5 : vector<16x512xf32>
    %cst_6 = arith.constant 0.707106769 : f32
    %8 = vector.broadcast %cst_6 : f32 to vector<16x512xf32>
    %9 = arith.mulf %5, %8 : vector<16x512xf32>
    %10 = math.erf %9 : vector<16x512xf32>
    %cst_7 = arith.constant 1.000000e+00 : f32
    %11 = vector.broadcast %cst_7 : f32 to vector<16x512xf32>
    %12 = arith.addf %11, %10 : vector<16x512xf32>
    %13 = arith.mulf %7, %12 : vector<16x512xf32>
    %cst_8 = arith.constant dense<0.000000e+00> : vector<16xf32>
    %14 = vector.multi_reduction <add>, %13, %cst_8 [1] : vector<16x512xf32> to vector<16xf32>
    %15 = vector.shape_cast %14 : vector<16xf32> to vector<16x1xf32>
    %cst_9 = arith.constant 5.120000e+02 : f32
    %16 = vector.broadcast %cst_9 : f32 to vector<16x1xf32>
    %17 = arith.divf %15, %16 : vector<16x1xf32>
    %18 = vector.broadcast %17 : vector<16x1xf32> to vector<16x512xf32>
    %19 = arith.subf %13, %18 : vector<16x512xf32>
    %20 = arith.mulf %19, %19 : vector<16x512xf32>
    %cst_10 = arith.constant dense<0.000000e+00> : vector<16xf32>
    %21 = vector.multi_reduction <add>, %20, %cst_10 [1] : vector<16x512xf32> to vector<16xf32>
    %22 = vector.shape_cast %21 : vector<16xf32> to vector<16x1xf32>
    %cst_11 = arith.constant 5.120000e+02 : f32
    %23 = vector.broadcast %cst_11 : f32 to vector<16x1xf32>
    %24 = arith.divf %22, %23 : vector<16x1xf32>
    %cst_12 = arith.constant 9.99999974E-6 : f32
    %25 = vector.broadcast %cst_12 : f32 to vector<16x1xf32>
    %26 = arith.addf %24, %25 : vector<16x1xf32>
    %27 = math.rsqrt %26 : vector<16x1xf32>
    %28 = vector.broadcast %27 : vector<16x1xf32> to vector<16x512xf32>
    %29 = arith.mulf %19, %28 : vector<16x512xf32>
    %c1 = arith.constant 1 : index
    %c0_13 = arith.constant 0 : index
    %30 = vector.load %arg3[%c1, %c0_13] : memref<3x512xf32, #tpu.memory_space<vmem>>, vector<1x512xf32>
    %31 = vector.broadcast %30 : vector<1x512xf32> to vector<16x512xf32>
    %32 = arith.mulf %29, %31 : vector<16x512xf32>
    %c2 = arith.constant 2 : index
    %c0_14 = arith.constant 0 : index
    %33 = vector.load %arg3[%c2, %c0_14] : memref<3x512xf32, #tpu.memory_space<vmem>>, vector<1x512xf32>
    %34 = vector.broadcast %33 : vector<1x512xf32> to vector<16x512xf32>
    %35 = arith.addf %32, %34 : vector<16x512xf32>
    %c0_15 = arith.constant 0 : index
    %c0_16 = arith.constant 0 : index
    %36 = vector.load %arg4[%c0_15, %c0_16] : memref<512x896xf32, #tpu.memory_space<vmem>>, vector<512x896xf32>
    %cst_17 = arith.constant dense<0.000000e+00> : vector<16x896xf32>
    %37 = tpu.matmul %35, %36, %cst_17 {dimension_numbers = #tpu.dot_dimension_numbers<[1], [0], [0], [1], [0, 0, 1, 1], [], []>} : vector<16x512xf32>, vector<512x896xf32>, vector<16x896xf32> -> vector<16x896xf32>
    %c0_18 = arith.constant 0 : index
    %c0_19 = arith.constant 0 : index
    %38 = vector.load %arg5[%c0_18, %c0_19] : memref<1x896xf32, #tpu.memory_space<vmem>>, vector<1x896xf32>
    %39 = vector.broadcast %38 : vector<1x896xf32> to vector<16x896xf32>
    %40 = arith.addf %37, %39 : vector<16x896xf32>
    %c0_20 = arith.constant 0 : index
    %c0_21 = arith.constant 0 : index
    %41 = vector.load %arg6[%c0_20, %c0_21] : memref<16x896xf32, #tpu.memory_space<vmem>>, vector<16x896xf32>
    tpu.vector_store %arg6[%c0_20, %c0_21], %40 {strides = array<i32>} : memref<16x896xf32, #tpu.memory_space<vmem>>, vector<16x896xf32>,
    return
  }
  func.func @transform_0(%arg0: i32) -> (i32, i32) {
    %c0_i32 = arith.constant 0 : i32
    %c0_i32_0 = arith.constant 0 : i32
    return %arg0, %c0_i32 : i32, i32
  }
  func.func @transform_1(%arg0: i32) -> (i32, i32) {
    %c0_i32 = arith.constant 0 : i32
    %c0_i32_0 = arith.constant 0 : i32
    %c0_i32_1 = arith.constant 0 : i32
    return %c0_i32, %c0_i32_0 : i32, i32
  }
  func.func @transform_2(%arg0: i32) -> (i32, i32) {
    %c0_i32 = arith.constant 0 : i32
    %c0_i32_0 = arith.constant 0 : i32
    %c0_i32_1 = arith.constant 0 : i32
    return %c0_i32, %c0_i32_0 : i32, i32
  }
  func.func @transform_3(%arg0: i32) -> (i32, i32) {
    %c0_i32 = arith.constant 0 : i32
    %c0_i32_0 = arith.constant 0 : i32
    %c0_i32_1 = arith.constant 0 : i32
    return %c0_i32, %c0_i32_0 : i32, i32
  }
  func.func @transform_4(%arg0: i32) -> (i32, i32) {
    %c0_i32 = arith.constant 0 : i32
    %c0_i32_0 = arith.constant 0 : i32
    %c0_i32_1 = arith.constant 0 : i32
    return %c0_i32, %c0_i32_0 : i32, i32
  }
  func.func @transform_5(%arg0: i32) -> (i32, i32) {
    %c0_i32 = arith.constant 0 : i32
    %c0_i32_0 = arith.constant 0 : i32
    return %arg0, %c0_i32 : i32, i32
  }
}

</mosaic_0001>

<llo_original>
// kernel: tpu_custom_call.1
$region0: #{tpu_custom_call.1}
  #allocation0 [shape = 'u32[]', space=smem, size = 0x4, offset = 0x4, fixed_abs, tag = 'smem constant byte address 0x4 - core index']
  #allocation1 [shape = 'u32[144,128]{1,0:T(1,128)}', space=vmem, size = 0x12000, scoped, tag = 'internal scratch']
  %s0 = inlined_call_operand.hbm [shape: f32[16,2048], index: 0, kind: input, shape index: {}]
  %s1 = inlined_call_operand.hbm [shape: f32[2048,512], index: 1, kind: input, shape index: {}]
  %s2 = inlined_call_operand.hbm [shape: f32[3,512], index: 2, kind: input, shape index: {}]
  %s3 = inlined_call_operand.hbm [shape: f32[512,896], index: 3, kind: input, shape index: {}]
  %s4 = inlined_call_operand.hbm [shape: f32[1,896], index: 4, kind: input, shape index: {}]
  %s5 = inlined_call_operand.hbm [shape: f32[16,896], index: 5, kind: output, shape index: {}]
  %s6 = sld [smem:[#allocation0]]
  $region50: #{tpu_custom_call.1} parent=0
    _
  %s8 = ssub.s32 1, %s6
  %s9 = scalar_select 0, %s8, %s6
  $region1: #{tpu_custom_call.1} parent=0
    #allocation2 [shape = 'u8[131072]{0}', space=vmem, size = 0x20000, scoped, tag = 'input window, operand 0, single buffered']
    #allocation3 [shape = 's32[1]{0}', space=sflag, size = 0x4, scoped, tag = 'scoped memory for tpu_custom_call.1']
    #allocation4 [shape = 's32[1]{0}', space=sflag, size = 0x4, scoped, tag = 'scoped memory for tpu_custom_call.1']
    #allocation5 [shape = 'u8[4194304]{0}', space=vmem, size = 0x400000, scoped, tag = 'input window, operand 1, single buffered']
    #allocation6 [shape = 's32[1]{0}', space=sflag, size = 0x4, scoped, tag = 'scoped memory for tpu_custom_call.1']
    #allocation7 [shape = 'u8[8192]{0}', space=vmem, size = 0x2000, scoped, tag = 'input window, operand 2, single buffered']
    #allocation8 [shape = 'u8[1835008]{0}', space=vmem, size = 0x1c0000, scoped, tag = 'input window, operand 3, single buffered']
    #allocation9 [shape = 's32[1]{0}', space=sflag, size = 0x4, scoped, tag = 'scoped memory for tpu_custom_call.1']
    #allocation10 [shape = 'u8[3584]{0}', space=vmem, size = 0x1000, scoped, tag = 'input window, operand 4, single buffered']
    #allocation11 [shape = 'u8[57344]{0}', space=vmem, size = 0xe000, scoped, tag = 'output window, operand 0, single buffered']
    %10 = vsyncpa [#allocation3], 0
    %11 = vsyncpa [#allocation6], 0
    %12 = vsyncpa [#allocation9], 0
    %13 = vsyncpa [#allocation4], 0
    // Predicated region
    $region2: #{tpu_custom_call.1} parent=1 // pred_check
      _
    $region3: #{tpu_custom_call.1} parent=1 // pred_check_branch
      %15 = sbr.rel (0) target = $region5
    $region4: #{tpu_custom_call.1} parent=1 // pred_region
      %s17 = ssub.s32 4096, 4096
      %18 = vsyncadd [#allocation3], %s17
      %s19 = sshll.u32 [#allocation2], 4
      %s20 = int_to_ptr.vmem [resolvable:$true] %s19
      %25 = dma.hbm_to_vmem [thread:$0]  %s0, 4096, %s20, [#allocation3], 2048, 2048, 128
    $region5: #{tpu_custom_call.1} parent=1 // pred_fallthru
      _
    // Predicated region
    $region6: #{tpu_custom_call.1} parent=1 // pred_check
      _
    $region7: #{tpu_custom_call.1} parent=1 // pred_check_branch
      %27 = sbr.rel (0) target = $region9
    $region8: #{tpu_custom_call.1} parent=1 // pred_region
      %s29 = ssub.s32 131072, 131072
      %30 = vsyncadd [#allocation6], %s29
      %s31 = sshll.u32 [#allocation5], 4
      %s32 = int_to_ptr.vmem [resolvable:$true] %s31
      %37 = dma.hbm_to_vmem [thread:$0]  %s1, 131072, %s32, [#allocation6], 512, 512, 32
    $region9: #{tpu_custom_call.1} parent=1 // pred_fallthru
      _
    // Predicated region
    $region10: #{tpu_custom_call.1} parent=1 // pred_check
      _
    $region11: #{tpu_custom_call.1} parent=1 // pred_check_branch
      %39 = sbr.rel (0) target = $region13
    $region12: #{tpu_custom_call.1} parent=1 // pred_region
      %s41 = ssub.s32 256, 256
      %42 = vsyncadd [#allocation6], %s41
      %s44 = sshll.u32 [#allocation7], 4
      %s45 = int_to_ptr.vmem [resolvable:$true] %s44
      %47 = dma.hbm_to_vmem [thread:$0]  %s2, 256, %s45, [#allocation6]
    $region13: #{tpu_custom_call.1} parent=1 // pred_fallthru
      _
    // Predicated region
    $region14: #{tpu_custom_call.1} parent=1 // pred_check
      _
    $region15: #{tpu_custom_call.1} parent=1 // pred_check_branch
      %49 = sbr.rel (0) target = $region17
    $region16: #{tpu_custom_call.1} parent=1 // pred_region
      %s51 = ssub.s32 57344, 57344
      %52 = vsyncadd [#allocation9], %s51
      %s53 = sshll.u32 [#allocation8], 4
      %s54 = int_to_ptr.vmem [resolvable:$true] %s53
      %59 = dma.hbm_to_vmem [thread:$0]  %s3, 57344, %s54, [#allocation9], 896, 896, 56
    $region17: #{tpu_custom_call.1} parent=1 // pred_fallthru
      _
    // Predicated region
    $region18: #{tpu_custom_call.1} parent=1 // pred_check
      _
    $region19: #{tpu_custom_call.1} parent=1 // pred_check_branch
      %61 = sbr.rel (0) target = $region21
    $region20: #{tpu_custom_call.1} parent=1 // pred_region
      %s63 = ssub.s32 112, 112
      %64 = vsyncadd [#allocation9], %s63
      %s66 = sshll.u32 [#allocation10], 4
      %s67 = int_to_ptr.vmem [resolvable:$true] %s66
      %69 = dma.hbm_to_vmem [thread:$0]  %s4, 112, %s67, [#allocation9]
    $region21: #{tpu_custom_call.1} parent=1 // pred_fallthru
      _
    // Predicated region
    $region22: #{tpu_custom_call.1} parent=1 // pred_check
      _
    $region23: #{tpu_custom_call.1} parent=1 // pred_check_branch
      %71 = sbr.rel (0) target = $region25
    $region24: #{tpu_custom_call.1} parent=1 // pred_region
      %72 = dma.done [#allocation3], 4096
    $region25: #{tpu_custom_call.1} parent=1 // pred_fallthru
      _
    // Predicated region
    $region26: #{tpu_custom_call.1} parent=1 // pred_check
      _
    $region27: #{tpu_custom_call.1} parent=1 // pred_check_branch
      %74 = sbr.rel (0) target = $region29
    $region28: #{tpu_custom_call.1} parent=1 // pred_region
      %75 = dma.done [#allocation6], 131072
    $region29: #{tpu_custom_call.1} parent=1 // pred_fallthru
      _
    // Predicated region
    $region30: #{tpu_custom_call.1} parent=1 // pred_check
      _
    $region31: #{tpu_custom_call.1} parent=1 // pred_check_branch
      %77 = sbr.rel (0) target = $region33
    $region32: #{tpu_custom_call.1} parent=1 // pred_region
      %78 = dma.done [#allocation6], 256
    $region33: #{tpu_custom_call.1} parent=1 // pred_fallthru
      _
    // Predicated region
    $region34: #{tpu_custom_call.1} parent=1 // pred_check
      _
    $region35: #{tpu_custom_call.1} parent=1 // pred_check_branch
      %80 = sbr.rel (0) target = $region37
    $region36: #{tpu_custom_call.1} parent=1 // pred_region
      %81 = dma.done [#allocation9], 57344
    $region37: #{tpu_custom_call.1} parent=1 // pred_fallthru
      _
    // Predicated region
    $region38: #{tpu_custom_call.1} parent=1 // pred_check
      _
    $region39: #{tpu_custom_call.1} parent=1 // pred_check_branch
      %83 = sbr.rel (0) target = $region41
    $region40: #{tpu_custom_call.1} parent=1 // pred_region
      %84 = dma.done [#allocation9], 112
    $region41: #{tpu_custom_call.1} parent=1 // pred_fallthru
      _
    %v85 = vld [vmem:[#allocation2] sm:$0xff]
    %v86 = vld [vmem:[#allocation2 + $0x8] sm:$0xff]
    %v87 = vld [vmem:[#allocation2 + $0x10] sm:$0xff]
    %v88 = vld [vmem:[#allocation2 + $0x18] sm:$0xff]
    %v89 = vld [vmem:[#allocation2 + $0x20] sm:$0xff]
    %v90 = vld [vmem:[#allocation2 + $0x28] sm:$0xff]
    %v91 = vld [vmem:[#allocation2 + $0x30] sm:$0xff]
    %v92 = vld [vmem:[#allocation2 + $0x38] sm:$0xff]
    %v93 = vld [vmem:[#allocation2 + $0x40] sm:$0xff]
    %v94 = vld [vmem:[#allocation2 + $0x48] sm:$0xff]
    %v95 = vld [vmem:[#allocation2 + $0x50] sm:$0xff]
    %v96 = vld [vmem:[#allocation2 + $0x58] sm:$0xff]
    %v97 = vld [vmem:[#allocation2 + $0x60] sm:$0xff]
    %v98 = vld [vmem:[#allocation2 + $0x68] sm:$0xff]
    %v99 = vld [vmem:[#allocation2 + $0x70] sm:$0xff]
    %v100 = vld [vmem:[#allocation2 + $0x78] sm:$0xff]
    %v101 = vld [vmem:[#allocation2 + $0x80] sm:$0xff]
    %v102 = vld [vmem:[#allocation2 + $0x88] sm:$0xff]
    %v103 = vld [vmem:[#allocation2 + $0x90] sm:$0xff]
    %v104 = vld [vmem:[#allocation2 + $0x98] sm:$0xff]
    %v105 = vld [vmem:[#allocation2 + $0xa0] sm:$0xff]
    %v106 = vld [vmem:[#allocation2 + $0xa8] sm:$0xff]
    %v107 = vld [vmem:[#allocation2 + $0xb0] sm:$0xff]
    %v108 = vld [vmem:[#allocation2 + $0xb8] sm:$0xff]
    %v109 = vld [vmem:[#allocation2 + $0xc0] sm:$0xff]
    %v110 = vld [vmem:[#allocation2 + $0xc8] sm:$0xff]
    %v111 = vld [vmem:[#allocation2 + $0xd0] sm:$0xff]
    %v112 = vld [vmem:[#allocation2 + $0xd8] sm:$0xff]
    %v113 = vld [vmem:[#allocation2 + $0xe0] sm:$0xff]
    %v114 = vld [vmem:[#allocation2 + $0xe8] sm:$0xff]
    %v115 = vld [vmem:[#allocation2 + $0xf0] sm:$0xff]
    %v116 = vld [vmem:[#allocation2 + $0xf8] sm:$0xff]
    %v117 = vld [vmem:[#allocation5] sm:$0xff]
    %v118 = vld [vmem:[#allocation5 + $0x8] sm:$0xff]
    %v119 = vld [vmem:[#allocation5 + $0x10] sm:$0xff]
    %v120 = vld [vmem:[#allocation5 + $0x18] sm:$0xff]
    %v121 = vld [vmem:[#allocation5 + $0x20] sm:$0xff]
    %v122 = vld [vmem:[#allocation5 + $0x28] sm:$0xff]
    %v123 = vld [vmem:[#allocation5 + $0x30] sm:$0xff]
    %v124 = vld [vmem:[#allocation5 + $0x38] sm:$0xff]
    %v125 = vld [vmem:[#allocation5 + $0x40] sm:$0xff]
    %v126 = vld [vmem:[#allocation5 + $0x48] sm:$0xff]
    %v127 = vld [vmem:[#allocation5 + $0x50] sm:$0xff]
    %v128 = vld [vmem:[#allocation5 + $0x58] sm:$0xff]
    %v129 = vld [vmem:[#allocation5 + $0x60] sm:$0xff]
    %v130 = vld [vmem:[#allocation5 + $0x68] sm:$0xff]
    %v131 = vld [vmem:[#allocation5 + $0x70] sm:$0xff]
    %v132 = vld [vmem:[#allocation5 + $0x78] sm:$0xff]
    %v133 = vld [vmem:[#allocation5 + $0x80] sm:$0xff]
    %v134 = vld [vmem:[#allocation5 + $0x88] sm:$0xff]
    %v135 = vld [vmem:[#allocation5 + $0x90] sm:$0xff]
    %v136 = vld [vmem:[#allocation5 + $0x98] sm:$0xff]
    %v137 = vld [vmem:[#allocation5 + $0xa0] sm:$0xff]
    %v138 = vld [vmem:[#allocation5 + $0xa8] sm:$0xff]
    %v139 = vld [vmem:[#allocation5 + $0xb0] sm:$0xff]
    %v140 = vld [vmem:[#allocation5 + $0xb8] sm:$0xff]
    %v141 = vld [vmem:[#allocation5 + $0xc0] sm:$0xff]
    %v142 = vld [vmem:[#allocation5 + $0xc8] sm:$0xff]
    %v143 = vld [vmem:[#allocation5 + $0xd0] sm:$0xff]
    %v144 = vld [vmem:[#allocation5 + $0xd8] sm:$0xff]
    %v145 = vld [vmem:[#allocation5 + $0xe0] sm:$0xff]
    %v146 = vld [vmem:[#allocation5 + $0xe8] sm:$0xff]
    %v147 = vld [vmem:[#allocation5 + $0xf0] sm:$0xff]
    %v148 = vld [vmem:[#allocation5 + $0xf8] sm:$0xff]
    %v149 = vld [vmem:[#allocation5 + $0x100] sm:$0xff]
    %v150 = vld [vmem:[#allocation5 + $0x108] sm:$0xff]
    %v151 = vld [vmem:[#allocation5 + $0x110] sm:$0xff]
    %v152 = vld [vmem:[#allocation5 + $0x118] sm:$0xff]
    %v153 = vld [vmem:[#allocation5 + $0x120] sm:$0xff]
    %v154 = vld [vmem:[#allocation5 + $0x128] sm:$0xff]
    %v155 = vld [vmem:[#allocation5 + $0x130] sm:$0xff]
    %v156 = vld [vmem:[#allocation5 + $0x138] sm:$0xff]
    %v157 = vld [vmem:[#allocation5 + $0x140] sm:$0xff]
    %v158 = vld [vmem:[#allocation5 + $0x148] sm:$0xff]
    %v159 = vld [vmem:[#allocation5 + $0x150] sm:$0xff]
    %v160 = vld [vmem:[#allocation5 + $0x158] sm:$0xff]
    %v161 = vld [vmem:[#allocation5 + $0x160] sm:$0xff]
    %v162 = vld [vmem:[#allocation5 + $0x168] sm:$0xff]
    %v163 = vld [vmem:[#allocation5 + $0x170] sm:$0xff]
    %v164 = vld [vmem:[#allocation5 + $0x178] sm:$0xff]
    %v165 = vld [vmem:[#allocation5 + $0x180] sm:$0xff]
    %v166 = vld [vmem:[#allocation5 + $0x188] sm:$0xff]
    %v167 = vld [vmem:[#allocation5 + $0x190] sm:$0xff]
    %v168 = vld [vmem:[#allocation5 + $0x198] sm:$0xff]
    %v169 = vld [vmem:[#allocation5 + $0x1a0] sm:$0xff]
    %v170 = vld [vmem:[#allocation5 + $0x1a8] sm:$0xff]
    %v171 = vld [vmem:[#allocation5 + $0x1b0] sm:$0xff]
    %v172 = vld [vmem:[#allocation5 + $0x1b8] sm:$0xff]
    %v173 = vld [vmem:[#allocation5 + $0x1c0] sm:$0xff]
    %v174 = vld [vmem:[#allocation5 + $0x1c8] sm:$0xff]
    %v175 = vld [vmem:[#allocation5 + $0x1d0] sm:$0xff]
    %v176 = vld [vmem:[#allocation5 + $0x1d8] sm:$0xff]
    %v177 = vld [vmem:[#allocation5 + $0x1e0] sm:$0xff]
    %v178 = vld [vmem:[#allocation5 + $0x1e8] sm:$0xff]
    %v179 = vld [vmem:[#allocation5 + $0x1f0] sm:$0xff]
    %v180 = vld [vmem:[#allocation5 + $0x1f8] sm:$0xff]
    %v181 = vld [vmem:[#allocation5 + $0x200] sm:$0xff]
    %v182 = vld [vmem:[#allocation5 + $0x208] sm:$0xff]
    %v183 = vld [vmem:[#allocation5 + $0x210] sm:$0xff]
    %v184 = vld [vmem:[#allocation5 + $0x218] sm:$0xff]
    %v185 = vld [vmem:[#allocation5 + $0x220] sm:$0xff]
    %v186 = vld [vmem:[#allocation5 + $0x228] sm:$0xff]
    %v187 = vld [vmem:[#allocation5 + $0x230] sm:$0xff]
    %v188 = vld [vmem:[#allocation5 + $0x238] sm:$0xff]
    %v189 = vld [vmem:[#allocation5 + $0x240] sm:$0xff]
    %v190 = vld [vmem:[#allocation5 + $0x248] sm:$0xff]
    %v191 = vld [vmem:[#allocation5 + $0x250] sm:$0xff]
    %v192 = vld [vmem:[#allocation5 + $0x258] sm:$0xff]
    %v193 = vld [vmem:[#allocation5 + $0x260] sm:$0xff]
    %v194 = vld [vmem:[#allocation5 + $0x268] sm:$0xff]
    %v195 = vld [vmem:[#allocation5 + $0x270] sm:$0xff]
    %v196 = vld [vmem:[#allocation5 + $0x278] sm:$0xff]
    %v197 = vld [vmem:[#allocation5 + $0x280] sm:$0xff]
    %v198 = vld [vmem:[#allocation5 + $0x288] sm:$0xff]
    %v199 = vld [vmem:[#allocation5 + $0x290] sm:$0xff]
    %v200 = vld [vmem:[#allocation5 + $0x298] sm:$0xff]
    %v201 = vld [vmem:[#allocation5 + $0x2a0] sm:$0xff]
    %v202 = vld [vmem:[#allocation5 + $0x2a8] sm:$0xff]
    %v203 = vld [vmem:[#allocation5 + $0x2b0] sm:$0xff]
    %v204 = vld [vmem:[#allocation5 + $0x2b8] sm:$0xff]
    %v205 = vld [vmem:[#allocation5 + $0x2c0] sm:$0xff]
    %v206 = vld [vmem:[#allocation5 + $0x2c8] sm:$0xff]
    %v207 = vld [vmem:[#allocation5 + $0x2d0] sm:$0xff]
    %v208 = vld [vmem:[#allocation5 + $0x2d8] sm:$0xff]
    %v209 = vld [vmem:[#allocation5 + $0x2e0] sm:$0xff]
    %v210 = vld [vmem:[#allocation5 + $0x2e8] sm:$0xff]
    %v211 = vld [vmem:[#allocation5 + $0x2f0] sm:$0xff]
    %v212 = vld [vmem:[#allocation5 + $0x2f8] sm:$0xff]
    %v213 = vld [vmem:[#allocation5 + $0x300] sm:$0xff]
    %v214 = vld [vmem:[#allocation5 + $0x308] sm:$0xff]
    %v215 = vld [vmem:[#allocation5 + $0x310] sm:$0xff]
    %v216 = vld [vmem:[#allocation5 + $0x318] sm:$0xff]
    %v217 = vld [vmem:[#allocation5 + $0x320] sm:$0xff]
    %v218 = vld [vmem:[#allocation5 + $0x328] sm:$0xff]
    %v219 = vld [vmem:[#allocation5 + $0x330] sm:$0xff]
    %v220 = vld [vmem:[#allocation5 + $0x338] sm:$0xff]
    %v221 = vld [vmem:[#allocation5 + $0x340] sm:$0xff]
    %v222 = vld [vmem:[#allocation5 + $0x348] sm:$0xff]
    %v223 = vld [vmem:[#allocation5 + $0x350] sm:$0xff]
    %v224 = vld [vmem:[#allocation5 + $0x358] sm:$0xff]
    %v225 = vld [vmem:[#allocation5 + $0x360] sm:$0xff]
    %v226 = vld [vmem:[#allocation5 + $0x368] sm:$0xff]
    %v227 = vld [vmem:[#allocation5 + $0x370] sm:$0xff]
    %v228 = vld [vmem:[#allocation5 + $0x378] sm:$0xff]
    %v229 = vld [vmem:[#allocation5 + $0x380] sm:$0xff]
    %v230 = vld [vmem:[#allocation5 + $0x388] sm:$0xff]
    %v231 = vld [vmem:[#allocation5 + $0x390] sm:$0xff]
    %v232 = vld [vmem:[#allocation5 + $0x398] sm:$0xff]
    %v233 = vld [vmem:[#allocation5 + $0x3a0] sm:$0xff]
    %v234 = vld [vmem:[#allocation5 + $0x3a8] sm:$0xff]
    %v235 = vld [vmem:[#allocation5 + $0x3b0] sm:$0xff]
    %v236 = vld [vmem:[#allocation5 + $0x3b8] sm:$0xff]
    %v237 = vld [vmem:[#allocation5 + $0x3c0] sm:$0xff]
    %v238 = vld [vmem:[#allocation5 + $0x3c8] sm:$0xff]
    %v239 = vld [vmem:[#allocation5 + $0x3d0] sm:$0xff]
    %v240 = vld [vmem:[#allocation5 + $0x3d8] sm:$0xff]
    %v241 = vld [vmem:[#allocation5 + $0x3e0] sm:$0xff]
    %v242 = vld [vmem:[#allocation5 + $0x3e8] sm:$0xff]
    %v243 = vld [vmem:[#allocation5 + $0x3f0] sm:$0xff]
    %v244 = vld [vmem:[#allocation5 + $0x3f8] sm:$0xff]
    %v245 = vld [vmem:[#allocation5 + $0x400] sm:$0xff]
    %v246 = vld [vmem:[#allocation5 + $0x408] sm:$0xff]
    %v247 = vld [vmem:[#allocation5 + $0x410] sm:$0xff]
    %v248 = vld [vmem:[#allocation5 + $0x418] sm:$0xff]
    %v249 = vld [vmem:[#allocation5 + $0x420] sm:$0xff]
    %v250 = vld [vmem:[#allocation5 + $0x428] sm:$0xff]
    %v251 = vld [vmem:[#allocation5 + $0x430] sm:$0xff]
    %v252 = vld [vmem:[#allocation5 + $0x438] sm:$0xff]
    %v253 = vld [vmem:[#allocation5 + $0x440] sm:$0xff]
    %v254 = vld [vmem:[#allocation5 + $0x448] sm:$0xff]
    %v255 = vld [vmem:[#allocation5 + $0x450] sm:$0xff]
    %v256 = vld [vmem:[#allocation5 + $0x458] sm:$0xff]
    %v257 = vld [vmem:[#allocation5 + $0x460] sm:$0xff]
    %v258 = vld [vmem:[#allocation5 + $0x468] sm:$0xff]
    %v259 = vld [vmem:[#allocation5 + $0x470] sm:$0xff]
    %v260 = vld [vmem:[#allocation5 + $0x478] sm:$0xff]
    %v261 = vld [vmem:[#allocation5 + $0x480] sm:$0xff]
    %v262 = vld [vmem:[#allocation5 + $0x488] sm:$0xff]
    %v263 = vld [vmem:[#allocation5 + $0x490] sm:$0xff]
    %v264 = vld [vmem:[#allocation5 + $0x498] sm:$0xff]
    %v265 = vld [vmem:[#allocation5 + $0x4a0] sm:$0xff]
    %v266 = vld [vmem:[#allocation5 + $0x4a8] sm:$0xff]
    %v267 = vld [vmem:[#allocation5 + $0x4b0] sm:$0xff]
    %v268 = vld [vmem:[#allocation5 + $0x4b8] sm:$0xff]
    %v269 = vld [vmem:[#allocation5 + $0x4c0] sm:$0xff]
    %v270 = vld [vmem:[#allocation5 + $0x4c8] sm:$0xff]
    %v271 = vld [vmem:[#allocation5 + $0x4d0] sm:$0xff]
    %v272 = vld [vmem:[#allocation5 + $0x4d8] sm:$0xff]
    %v273 = vld [vmem:[#allocation5 + $0x4e0] sm:$0xff]
    %v274 = vld [vmem:[#allocation5 + $0x4e8] sm:$0xff]
    %v275 = vld [vmem:[#allocation5 + $0x4f0] sm:$0xff]
    %v276 = vld [vmem:[#allocation5 + $0x4f8] sm:$0xff]
    %v277 = vld [vmem:[#allocation5 + $0x500] sm:$0xff]
    %v278 = vld [vmem:[#allocation5 + $0x508] sm:$0xff]
    %v279 = vld [vmem:[#allocation5 + $0x510] sm:$0xff]
    %v280 = vld [vmem:[#allocation5 + $0x518] sm:$0xff]
    %v281 = vld [vmem:[#allocation5 + $0x520] sm:$0xff]
    %v282 = vld [vmem:[#allocation5 + $0x528] sm:$0xff]
    %v283 = vld [vmem:[#allocation5 + $0x530] sm:$0xff]
    %v284 = vld [vmem:[#allocation5 + $0x538] sm:$0xff]
    %v285 = vld [vmem:[#allocation5 + $0x540] sm:$0xff]
    %v286 = vld [vmem:[#allocation5 + $0x548] sm:$0xff]
    %v287 = vld [vmem:[#allocation5 + $0x550] sm:$0xff]
    %v288 = vld [vmem:[#allocation5 + $0x558] sm:$0xff]
    %v289 = vld [vmem:[#allocation5 + $0x560] sm:$0xff]
    %v290 = vld [vmem:[#allocation5 + $0x568] sm:$0xff]
    %v291 = vld [vmem:[#allocation5 + $0x570] sm:$0xff]
    %v292 = vld [vmem:[#allocation5 + $0x578] sm:$0xff]
    %v293 = vld [vmem:[#allocation5 + $0x580] sm:$0xff]
    %v294 = vld [vmem:[#allocation5 + $0x588] sm:$0xff]
    %v295 = vld [vmem:[#allocation5 + $0x590] sm:$0xff]
    %v296 = vld [vmem:[#allocation5 + $0x598] sm:$0xff]
    %v297 = vld [vmem:[#allocation5 + $0x5a0] sm:$0xff]
    %v298 = vld [vmem:[#allocation5 + $0x5a8] sm:$0xff]
    %v299 = vld [vmem:[#allocation5 + $0x5b0] sm:$0xff]
    %v300 = vld [vmem:[#allocation5 + $0x5b8] sm:$0xff]
    %v301 = vld [vmem:[#allocation5 + $0x5c0] sm:$0xff]
    %v302 = vld [vmem:[#allocation5 + $0x5c8] sm:$0xff]
    %v303 = vld [vmem:[#allocation5 + $0x5d0] sm:$0xff]
    %v304 = vld [vmem:[#allocation5 + $0x5d8] sm:$0xff]
    %v305 = vld [vmem:[#allocation5 + $0x5e0] sm:$0xff]
    %v306 = vld [vmem:[#allocation5 + $0x5e8] sm:$0xff]
    %v307 = vld [vmem:[#allocation5 + $0x5f0] sm:$0xff]
    %v308 = vld [vmem:[#allocation5 + $0x5f8] sm:$0xff]
    %v309 = vld [vmem:[#allocation5 + $0x600] sm:$0xff]
    %v310 = vld [vmem:[#allocation5 + $0x608] sm:$0xff]
    %v311 = vld [vmem:[#allocation5 + $0x610] sm:$0xff]
    %v312 = vld [vmem:[#allocation5 + $0x618] sm:$0xff]
    %v313 = vld [vmem:[#allocation5 + $0x620] sm:$0xff]
    %v314 = vld [vmem:[#allocation5 + $0x628] sm:$0xff]
    %v315 = vld [vmem:[#allocation5 + $0x630] sm:$0xff]
    %v316 = vld [vmem:[#allocation5 + $0x638] sm:$0xff]
    %v317 = vld [vmem:[#allocation5 + $0x640] sm:$0xff]
    %v318 = vld [vmem:[#allocation5 + $0x648] sm:$0xff]
    %v319 = vld [vmem:[#allocation5 + $0x650] sm:$0xff]
    %v320 = vld [vmem:[#allocation5 + $0x658] sm:$0xff]
    %v321 = vld [vmem:[#allocation5 + $0x660] sm:$0xff]
    %v322 = vld [vmem:[#allocation5 + $0x668] sm:$0xff]
    %v323 = vld [vmem:[#allocation5 + $0x670] sm:$0xff]
    %v324 = vld [vmem:[#allocation5 + $0x678] sm:$0xff]
    %v325 = vld [vmem:[#allocation5 + $0x680] sm:$0xff]
    %v326 = vld [vmem:[#allocation5 + $0x688] sm:$0xff]
    %v327 = vld [vmem:[#allocation5 + $0x690] sm:$0xff]
    %v328 = vld [vmem:[#allocation5 + $0x698] sm:$0xff]
    %v329 = vld [vmem:[#allocation5 + $0x6a0] sm:$0xff]
    %v330 = vld [vmem:[#allocation5 + $0x6a8] sm:$0xff]
    %v331 = vld [vmem:[#allocation5 + $0x6b0] sm:$0xff]
    %v332 = vld [vmem:[#allocation5 + $0x6b8] sm:$0xff]
    %v333 = vld [vmem:[#allocation5 + $0x6c0] sm:$0xff]
    %v334 = vld [vmem:[#allocation5 + $0x6c8] sm:$0xff]
    %v335 = vld [vmem:[#allocation5 + $0x6d0] sm:$0xff]
    %v336 = vld [vmem:[#allocation5 + $0x6d8] sm:$0xff]
    %v337 = vld [vmem:[#allocation5 + $0x6e0] sm:$0xff]
    %v338 = vld [vmem:[#allocation5 + $0x6e8] sm:$0xff]
    %v339 = vld [vmem:[#allocation5 + $0x6f0] sm:$0xff]
    %v340 = vld [vmem:[#allocation5 + $0x6f8] sm:$0xff]
    %v341 = vld [vmem:[#allocation5 + $0x700] sm:$0xff]
    %v342 = vld [vmem:[#allocation5 + $0x708] sm:$0xff]
    %v343 = vld [vmem:[#allocation5 + $0x710] sm:$0xff]
    %v344 = vld [vmem:[#allocation5 + $0x718] sm:$0xff]
    %v345 = vld [vmem:[#allocation5 + $0x720] sm:$0xff]
    %v346 = vld [vmem:[#allocation5 + $0x728] sm:$0xff]
    %v347 = vld [vmem:[#allocation5 + $0x730] sm:$0xff]
    %v348 = vld [vmem:[#allocation5 + $0x738] sm:$0xff]
    %v349 = vld [vmem:[#allocation5 + $0x740] sm:$0xff]
    %v350 = vld [vmem:[#allocation5 + $0x748] sm:$0xff]
    %v351 = vld [vmem:[#allocation5 + $0x750] sm:$0xff]
    %v352 = vld [vmem:[#allocation5 + $0x758] sm:$0xff]
    %v353 = vld [vmem:[#allocation5 + $0x760] sm:$0xff]
    %v354 = vld [vmem:[#allocation5 + $0x768] sm:$0xff]
    %v355 = vld [vmem:[#allocation5 + $0x770] sm:$0xff]
    %v356 = vld [vmem:[#allocation5 + $0x778] sm:$0xff]
    %v357 = vld [vmem:[#allocation5 + $0x780] sm:$0xff]
    %v358 = vld [vmem:[#allocation5 + $0x788] sm:$0xff]
    %v359 = vld [vmem:[#allocation5 + $0x790] sm:$0xff]
    %v360 = vld [vmem:[#allocation5 + $0x798] sm:$0xff]
    %v361 = vld [vmem:[#allocation5 + $0x7a0] sm:$0xff]
    %v362 = vld [vmem:[#allocation5 + $0x7a8] sm:$0xff]
    %v363 = vld [vmem:[#allocation5 + $0x7b0] sm:$0xff]
    %v364 = vld [vmem:[#allocation5 + $0x7b8] sm:$0xff]
    %v365 = vld [vmem:[#allocation5 + $0x7c0] sm:$0xff]
    %v366 = vld [vmem:[#allocation5 + $0x7c8] sm:$0xff]
    %v367 = vld [vmem:[#allocation5 + $0x7d0] sm:$0xff]
    %v368 = vld [vmem:[#allocation5 + $0x7d8] sm:$0xff]
    %v369 = vld [vmem:[#allocation5 + $0x7e0] sm:$0xff]
    %v370 = vld [vmem:[#allocation5 + $0x7e8] sm:$0xff]
    %v371 = vld [vmem:[#allocation5 + $0x7f0] sm:$0xff]
    %v372 = vld [vmem:[#allocation5 + $0x7f8] sm:$0xff]
    %v373 = vld [vmem:[#allocation5 + $0x800] sm:$0xff]
    %v374 = vld [vmem:[#allocation5 + $0x808] sm:$0xff]
    %v375 = vld [vmem:[#allocation5 + $0x810] sm:$0xff]
    %v376 = vld [vmem:[#allocation5 + $0x818] sm:$0xff]
    %v377 = vld [vmem:[#allocation5 + $0x820] sm:$0xff]
    %v378 = vld [vmem:[#allocation5 + $0x828] sm:$0xff]
    %v379 = vld [vmem:[#allocation5 + $0x830] sm:$0xff]
    %v380 = vld [vmem:[#allocation5 + $0x838] sm:$0xff]
    %v381 = vld [vmem:[#allocation5 + $0x840] sm:$0xff]
    %v382 = vld [vmem:[#allocation5 + $0x848] sm:$0xff]
    %v383 = vld [vmem:[#allocation5 + $0x850] sm:$0xff]
    %v384 = vld [vmem:[#allocation5 + $0x858] sm:$0xff]
    %v385 = vld [vmem:[#allocation5 + $0x860] sm:$0xff]
    %v386 = vld [vmem:[#allocation5 + $0x868] sm:$0xff]
    %v387 = vld [vmem:[#allocation5 + $0x870] sm:$0xff]
    %v388 = vld [vmem:[#allocation5 + $0x878] sm:$0xff]
    %v389 = vld [vmem:[#allocation5 + $0x880] sm:$0xff]
    %v390 = vld [vmem:[#allocation5 + $0x888] sm:$0xff]
    %v391 = vld [vmem:[#allocation5 + $0x890] sm:$0xff]
    %v392 = vld [vmem:[#allocation5 + $0x898] sm:$0xff]
    %v393 = vld [vmem:[#allocation5 + $0x8a0] sm:$0xff]
    %v394 = vld [vmem:[#allocation5 + $0x8a8] sm:$0xff]
    %v395 = vld [vmem:[#allocation5 + $0x8b0] sm:$0xff]
    %v396 = vld [vmem:[#allocation5 + $0x8b8] sm:$0xff]
    %v397 = vld [vmem:[#allocation5 + $0x8c0] sm:$0xff]
    %v398 = vld [vmem:[#allocation5 + $0x8c8] sm:$0xff]
    %v399 = vld [vmem:[#allocation5 + $0x8d0] sm:$0xff]
    %v400 = vld [vmem:[#allocation5 + $0x8d8] sm:$0xff]
    %v401 = vld [vmem:[#allocation5 + $0x8e0] sm:$0xff]
    %v402 = vld [vmem:[#allocation5 + $0x8e8] sm:$0xff]
    %v403 = vld [vmem:[#allocation5 + $0x8f0] sm:$0xff]
    %v404 = vld [vmem:[#allocation5 + $0x8f8] sm:$0xff]
    %v405 = vld [vmem:[#allocation5 + $0x900] sm:$0xff]
    %v406 = vld [vmem:[#allocation5 + $0x908] sm:$0xff]
    %v407 = vld [vmem:[#allocation5 + $0x910] sm:$0xff]
    %v408 = vld [vmem:[#allocation5 + $0x918] sm:$0xff]
    %v409 = vld [vmem:[#allocation5 + $0x920] sm:$0xff]
    %v410 = vld [vmem:[#allocation5 + $0x928] sm:$0xff]
    %v411 = vld [vmem:[#allocation5 + $0x930] sm:$0xff]
    %v412 = vld [vmem:[#allocation5 + $0x938] sm:$0xff]
    %v413 = vld [vmem:[#allocation5 + $0x940] sm:$0xff]
    %v414 = vld [vmem:[#allocation5 + $0x948] sm:$0xff]
    %v415 = vld [vmem:[#allocation5 + $0x950] sm:$0xff]
    %v416 = vld [vmem:[#allocation5 + $0x958] sm:$0xff]
    %v417 = vld [vmem:[#allocation5 + $0x960] sm:$0xff]
    %v418 = vld [vmem:[#allocation5 + $0x968] sm:$0xff]
    %v419 = vld [vmem:[#allocation5 + $0x970] sm:$0xff]
    %v420 = vld [vmem:[#allocation5 + $0x978] sm:$0xff]
    %v421 = vld [vmem:[#allocation5 + $0x980] sm:$0xff]
    %v422 = vld [vmem:[#allocation5 + $0x988] sm:$0xff]
    %v423 = vld [vmem:[#allocation5 + $0x990] sm:$0xff]
    %v424 = vld [vmem:[#allocation5 + $0x998] sm:$0xff]
    %v425 = vld [vmem:[#allocation5 + $0x9a0] sm:$0xff]
    %v426 = vld [vmem:[#allocation5 + $0x9a8] sm:$0xff]
    %v427 = vld [vmem:[#allocation5 + $0x9b0] sm:$0xff]
    %v428 = vld [vmem:[#allocation5 + $0x9b8] sm:$0xff]
    %v429 = vld [vmem:[#allocation5 + $0x9c0] sm:$0xff]
    %v430 = vld [vmem:[#allocation5 + $0x9c8] sm:$0xff]
    %v431 = vld [vmem:[#allocation5 + $0x9d0] sm:$0xff]
    %v432 = vld [vmem:[#allocation5 + $0x9d8] sm:$0xff]
    %v433 = vld [vmem:[#allocation5 + $0x9e0] sm:$0xff]
    %v434 = vld [vmem:[#allocation5 + $0x9e8] sm:$0xff]
    %v435 = vld [vmem:[#allocation5 + $0x9f0] sm:$0xff]
    %v436 = vld [vmem:[#allocation5 + $0x9f8] sm:$0xff]
    %v437 = vld [vmem:[#allocation5 + $0xa00] sm:$0xff]
    %v438 = vld [vmem:[#allocation5 + $0xa08] sm:$0xff]
    %v439 = vld [vmem:[#allocation5 + $0xa10] sm:$0xff]
    %v440 = vld [vmem:[#allocation5 + $0xa18] sm:$0xff]
    %v441 = vld [vmem:[#allocation5 + $0xa20] sm:$0xff]
    %v442 = vld [vmem:[#allocation5 + $0xa28] sm:$0xff]
    %v443 = vld [vmem:[#allocation5 + $0xa30] sm:$0xff]
    %v444 = vld [vmem:[#allocation5 + $0xa38] sm:$0xff]
    %v445 = vld [vmem:[#allocation5 + $0xa40] sm:$0xff]
    %v446 = vld [vmem:[#allocation5 + $0xa48] sm:$0xff]
    %v447 = vld [vmem:[#allocation5 + $0xa50] sm:$0xff]
    %v448 = vld [vmem:[#allocation5 + $0xa58] sm:$0xff]
    %v449 = vld [vmem:[#allocation5 + $0xa60] sm:$0xff]
    %v450 = vld [vmem:[#allocation5 + $0xa68] sm:$0xff]
    %v451 = vld [vmem:[#allocation5 + $0xa70] sm:$0xff]
    %v452 = vld [vmem:[#allocation5 + $0xa78] sm:$0xff]
    %v453 = vld [vmem:[#allocation5 + $0xa80] sm:$0xff]
    %v454 = vld [vmem:[#allocation5 + $0xa88] sm:$0xff]
    %v455 = vld [vmem:[#allocation5 + $0xa90] sm:$0xff]
    %v456 = vld [vmem:[#allocation5 + $0xa98] sm:$0xff]
    %v457 = vld [vmem:[#allocation5 + $0xaa0] sm:$0xff]
    %v458 = vld [vmem:[#allocation5 + $0xaa8] sm:$0xff]
    %v459 = vld [vmem:[#allocation5 + $0xab0] sm:$0xff]
    %v460 = vld [vmem:[#allocation5 + $0xab8] sm:$0xff]
    %v461 = vld [vmem:[#allocation5 + $0xac0] sm:$0xff]
    %v462 = vld [vmem:[#allocation5 + $0xac8] sm:$0xff]
    %v463 = vld [vmem:[#allocation5 + $0xad0] sm:$0xff]
    %v464 = vld [vmem:[#allocation5 + $0xad8] sm:$0xff]
    %v465 = vld [vmem:[#allocation5 + $0xae0] sm:$0xff]
    %v466 = vld [vmem:[#allocation5 + $0xae8] sm:$0xff]
    %v467 = vld [vmem:[#allocation5 + $0xaf0] sm:$0xff]
    %v468 = vld [vmem:[#allocation5 + $0xaf8] sm:$0xff]
    %v469 = vld [vmem:[#allocation5 + $0xb00] sm:$0xff]
    %v470 = vld [vmem:[#allocation5 + $0xb08] sm:$0xff]
    %v471 = vld [vmem:[#allocation5 + $0xb10] sm:$0xff]
    %v472 = vld [vmem:[#allocation5 + $0xb18] sm:$0xff]
    %v473 = vld [vmem:[#allocation5 + $0xb20] sm:$0xff]
    %v474 = vld [vmem:[#allocation5 + $0xb28] sm:$0xff]
    %v475 = vld [vmem:[#allocation5 + $0xb30] sm:$0xff]
    %v476 = vld [vmem:[#allocation5 + $0xb38] sm:$0xff]
    %v477 = vld [vmem:[#allocation5 + $0xb40] sm:$0xff]
    %v478 = vld [vmem:[#allocation5 + $0xb48] sm:$0xff]
    %v479 = vld [vmem:[#allocation5 + $0xb50] sm:$0xff]
    %v480 = vld [vmem:[#allocation5 + $0xb58] sm:$0xff]
    %v481 = vld [vmem:[#allocation5 + $0xb60] sm:$0xff]
    %v482 = vld [vmem:[#allocation5 + $0xb68] sm:$0xff]
    %v483 = vld [vmem:[#allocation5 + $0xb70] sm:$0xff]
    %v484 = vld [vmem:[#allocation5 + $0xb78] sm:$0xff]
    %v485 = vld [vmem:[#allocation5 + $0xb80] sm:$0xff]
    %v486 = vld [vmem:[#allocation5 + $0xb88] sm:$0xff]
    %v487 = vld [vmem:[#allocation5 + $0xb90] sm:$0xff]
    %v488 = vld [vmem:[#allocation5 + $0xb98] sm:$0xff]
    %v489 = vld [vmem:[#allocation5 + $0xba0] sm:$0xff]
    %v490 = vld [vmem:[#allocation5 + $0xba8] sm:$0xff]
    %v491 = vld [vmem:[#allocation5 + $0xbb0] sm:$0xff]
    %v492 = vld [vmem:[#allocation5 + $0xbb8] sm:$0xff]
    %v493 = vld [vmem:[#allocation5 + $0xbc0] sm:$0xff]
    %v494 = vld [vmem:[#allocation5 + $0xbc8] sm:$0xff]
    %v495 = vld [vmem:[#allocation5 + $0xbd0] sm:$0xff]
    %v496 = vld [vmem:[#allocation5 + $0xbd8] sm:$0xff]
    %v497 = vld [vmem:[#allocation5 + $0xbe0] sm:$0xff]
    %v498 = vld [vmem:[#allocation5 + $0xbe8] sm:$0xff]
    %v499 = vld [vmem:[#allocation5 + $0xbf0] sm:$0xff]
    %v500 = vld [vmem:[#allocation5 + $0xbf8] sm:$0xff]
    %v501 = vld [vmem:[#allocation5 + $0xc00] sm:$0xff]
    %v502 = vld [vmem:[#allocation5 + $0xc08] sm:$0xff]
    %v503 = vld [vmem:[#allocation5 + $0xc10] sm:$0xff]
    %v504 = vld [vmem:[#allocation5 + $0xc18] sm:$0xff]
    %v505 = vld [vmem:[#allocation5 + $0xc20] sm:$0xff]
    %v506 = vld [vmem:[#allocation5 + $0xc28] sm:$0xff]
    %v507 = vld [vmem:[#allocation5 + $0xc30] sm:$0xff]
    %v508 = vld [vmem:[#allocation5 + $0xc38] sm:$0xff]
    %v509 = vld [vmem:[#allocation5 + $0xc40] sm:$0xff]
    %v510 = vld [vmem:[#allocation5 + $0xc48] sm:$0xff]
    %v511 = vld [vmem:[#allocation5 + $0xc50] sm:$0xff]
    %v512 = vld [vmem:[#allocation5 + $0xc58] sm:$0xff]
    %v513 = vld [vmem:[#allocation5 + $0xc60] sm:$0xff]
    %v514 = vld [vmem:[#allocation5 + $0xc68] sm:$0xff]
    %v515 = vld [vmem:[#allocation5 + $0xc70] sm:$0xff]
    %v516 = vld [vmem:[#allocation5 + $0xc78] sm:$0xff]
    %v517 = vld [vmem:[#allocation5 + $0xc80] sm:$0xff]
    %v518 = vld [vmem:[#allocation5 + $0xc88] sm:$0xff]
    %v519 = vld [vmem:[#allocation5 + $0xc90] sm:$0xff]
    %v520 = vld [vmem:[#allocation5 + $0xc98] sm:$0xff]
    %v521 = vld [vmem:[#allocation5 + $0xca0] sm:$0xff]
    %v522 = vld [vmem:[#allocation5 + $0xca8] sm:$0xff]
    %v523 = vld [vmem:[#allocation5 + $0xcb0] sm:$0xff]
    %v524 = vld [vmem:[#allocation5 + $0xcb8] sm:$0xff]
    %v525 = vld [vmem:[#allocation5 + $0xcc0] sm:$0xff]
    %v526 = vld [vmem:[#allocation5 + $0xcc8] sm:$0xff]
    %v527 = vld [vmem:[#allocation5 + $0xcd0] sm:$0xff]
    %v528 = vld [vmem:[#allocation5 + $0xcd8] sm:$0xff]
    %v529 = vld [vmem:[#allocation5 + $0xce0] sm:$0xff]
    %v530 = vld [vmem:[#allocation5 + $0xce8] sm:$0xff]
    %v531 = vld [vmem:[#allocation5 + $0xcf0] sm:$0xff]
    %v532 = vld [vmem:[#allocation5 + $0xcf8] sm:$0xff]
    %v533 = vld [vmem:[#allocation5 + $0xd00] sm:$0xff]
    %v534 = vld [vmem:[#allocation5 + $0xd08] sm:$0xff]
    %v535 = vld [vmem:[#allocation5 + $0xd10] sm:$0xff]
    %v536 = vld [vmem:[#allocation5 + $0xd18] sm:$0xff]
    %v537 = vld [vmem:[#allocation5 + $0xd20] sm:$0xff]
    %v538 = vld [vmem:[#allocation5 + $0xd28] sm:$0xff]
    %v539 = vld [vmem:[#allocation5 + $0xd30] sm:$0xff]
    %v540 = vld [vmem:[#allocation5 + $0xd38] sm:$0xff]
    %v541 = vld [vmem:[#allocation5 + $0xd40] sm:$0xff]
    %v542 = vld [vmem:[#allocation5 + $0xd48] sm:$0xff]
    %v543 = vld [vmem:[#allocation5 + $0xd50] sm:$0xff]
    %v544 = vld [vmem:[#allocation5 + $0xd58] sm:$0xff]
    %v545 = vld [vmem:[#allocation5 + $0xd60] sm:$0xff]
    %v546 = vld [vmem:[#allocation5 + $0xd68] sm:$0xff]
    %v547 = vld [vmem:[#allocation5 + $0xd70] sm:$0xff]
    %v548 = vld [vmem:[#allocation5 + $0xd78] sm:$0xff]
    %v549 = vld [vmem:[#allocation5 + $0xd80] sm:$0xff]
    %v550 = vld [vmem:[#allocation5 + $0xd88] sm:$0xff]
    %v551 = vld [vmem:[#allocation5 + $0xd90] sm:$0xff]
    %v552 = vld [vmem:[#allocation5 + $0xd98] sm:$0xff]
    %v553 = vld [vmem:[#allocation5 + $0xda0] sm:$0xff]
    %v554 = vld [vmem:[#allocation5 + $0xda8] sm:$0xff]
    %v555 = vld [vmem:[#allocation5 + $0xdb0] sm:$0xff]
    %v556 = vld [vmem:[#allocation5 + $0xdb8] sm:$0xff]
    %v557 = vld [vmem:[#allocation5 + $0xdc0] sm:$0xff]
    %v558 = vld [vmem:[#allocation5 + $0xdc8] sm:$0xff]
    %v559 = vld [vmem:[#allocation5 + $0xdd0] sm:$0xff]
    %v560 = vld [vmem:[#allocation5 + $0xdd8] sm:$0xff]
    %v561 = vld [vmem:[#allocation5 + $0xde0] sm:$0xff]
    %v562 = vld [vmem:[#allocation5 + $0xde8] sm:$0xff]
    %v563 = vld [vmem:[#allocation5 + $0xdf0] sm:$0xff]
    %v564 = vld [vmem:[#allocation5 + $0xdf8] sm:$0xff]
    %v565 = vld [vmem:[#allocation5 + $0xe00] sm:$0xff]
    %v566 = vld [vmem:[#allocation5 + $0xe08] sm:$0xff]
    %v567 = vld [vmem:[#allocation5 + $0xe10] sm:$0xff]
    %v568 = vld [vmem:[#allocation5 + $0xe18] sm:$0xff]
    %v569 = vld [vmem:[#allocation5 + $0xe20] sm:$0xff]
    %v570 = vld [vmem:[#allocation5 + $0xe28] sm:$0xff]
    %v571 = vld [vmem:[#allocation5 + $0xe30] sm:$0xff]
    %v572 = vld [vmem:[#allocation5 + $0xe38] sm:$0xff]
    %v573 = vld [vmem:[#allocation5 + $0xe40] sm:$0xff]
    %v574 = vld [vmem:[#allocation5 + $0xe48] sm:$0xff]
    %v575 = vld [vmem:[#allocation5 + $0xe50] sm:$0xff]
    %v576 = vld [vmem:[#allocation5 + $0xe58] sm:$0xff]
    %v577 = vld [vmem:[#allocation5 + $0xe60] sm:$0xff]
    %v578 = vld [vmem:[#allocation5 + $0xe68] sm:$0xff]
    %v579 = vld [vmem:[#allocation5 + $0xe70] sm:$0xff]
    %v580 = vld [vmem:[#allocation5 + $0xe78] sm:$0xff]
    %v581 = vld [vmem:[#allocation5 + $0xe80] sm:$0xff]
    %v582 = vld [vmem:[#allocation5 + $0xe88] sm:$0xff]
    %v583 = vld [vmem:[#allocation5 + $0xe90] sm:$0xff]
    %v584 = vld [vmem:[#allocation5 + $0xe98] sm:$0xff]
    %v585 = vld [vmem:[#allocation5 + $0xea0] sm:$0xff]
    %v586 = vld [vmem:[#allocation5 + $0xea8] sm:$0xff]
    %v587 = vld [vmem:[#allocation5 + $0xeb0] sm:$0xff]
    %v588 = vld [vmem:[#allocation5 + $0xeb8] sm:$0xff]
    %v589 = vld [vmem:[#allocation5 + $0xec0] sm:$0xff]
    %v590 = vld [vmem:[#allocation5 + $0xec8] sm:$0xff]
    %v591 = vld [vmem:[#allocation5 + $0xed0] sm:$0xff]
    %v592 = vld [vmem:[#allocation5 + $0xed8] sm:$0xff]
    %v593 = vld [vmem:[#allocation5 + $0xee0] sm:$0xff]
    %v594 = vld [vmem:[#allocation5 + $0xee8] sm:$0xff]
    %v595 = vld [vmem:[#allocation5 + $0xef0] sm:$0xff]
    %v596 = vld [vmem:[#allocation5 + $0xef8] sm:$0xff]
    %v597 = vld [vmem:[#allocation5 + $0xf00] sm:$0xff]
    %v598 = vld [vmem:[#allocation5 + $0xf08] sm:$0xff]
    %v599 = vld [vmem:[#allocation5 + $0xf10] sm:$0xff]
    %v600 = vld [vmem:[#allocation5 + $0xf18] sm:$0xff]
    %v601 = vld [vmem:[#allocation5 + $0xf20] sm:$0xff]
    %v602 = vld [vmem:[#allocation5 + $0xf28] sm:$0xff]
    %v603 = vld [vmem:[#allocation5 + $0xf30] sm:$0xff]
    %v604 = vld [vmem:[#allocation5 + $0xf38] sm:$0xff]
    %v605 = vld [vmem:[#allocation5 + $0xf40] sm:$0xff]
    %v606 = vld [vmem:[#allocation5 + $0xf48] sm:$0xff]
    %v607 = vld [vmem:[#allocation5 + $0xf50] sm:$0xff]
    %v608 = vld [vmem:[#allocation5 + $0xf58] sm:$0xff]
    %v609 = vld [vmem:[#allocation5 + $0xf60] sm:$0xff]
    %v610 = vld [vmem:[#allocation5 + $0xf68] sm:$0xff]
    %v611 = vld [vmem:[#allocation5 + $0xf70] sm:$0xff]
    %v612 = vld [vmem:[#allocation5 + $0xf78] sm:$0xff]
    %v613 = vld [vmem:[#allocation5 + $0xf80] sm:$0xff]
    %v614 = vld [vmem:[#allocation5 + $0xf88] sm:$0xff]
    %v615 = vld [vmem:[#allocation5 + $0xf90] sm:$0xff]
    %v616 = vld [vmem:[#allocation5 + $0xf98] sm:$0xff]
    %v617 = vld [vmem:[#allocation5 + $0xfa0] sm:$0xff]
    %v618 = vld [vmem:[#allocation5 + $0xfa8] sm:$0xff]
    %v619 = vld [vmem:[#allocation5 + $0xfb0] sm:$0xff]
    %v620 = vld [vmem:[#allocation5 + $0xfb8] sm:$0xff]
    %v621 = vld [vmem:[#allocation5 + $0xfc0] sm:$0xff]
    %v622 = vld [vmem:[#allocation5 + $0xfc8] sm:$0xff]
    %v623 = vld [vmem:[#allocation5 + $0xfd0] sm:$0xff]
    %v624 = vld [vmem:[#allocation5 + $0xfd8] sm:$0xff]
    %v625 = vld [vmem:[#allocation5 + $0xfe0] sm:$0xff]
    %v626 = vld [vmem:[#allocation5 + $0xfe8] sm:$0xff]
    %v627 = vld [vmem:[#allocation5 + $0xff0] sm:$0xff]
    %v628 = vld [vmem:[#allocation5 + $0xff8] sm:$0xff]
    %v629 = vld [vmem:[#allocation5 + $0x1000] sm:$0xff]
    %v630 = vld [vmem:[#allocation5 + $0x1008] sm:$0xff]
    %v631 = vld [vmem:[#allocation5 + $0x1010] sm:$0xff]
    %v632 = vld [vmem:[#allocation5 + $0x1018] sm:$0xff]
    %v633 = vld [vmem:[#allocation5 + $0x1020] sm:$0xff]
    %v634 = vld [vmem:[#allocation5 + $0x1028] sm:$0xff]
    %v635 = vld [vmem:[#allocation5 + $0x1030] sm:$0xff]
    %v636 = vld [vmem:[#allocation5 + $0x1038] sm:$0xff]
    %v637 = vld [vmem:[#allocation5 + $0x1040] sm:$0xff]
    %v638 = vld [vmem:[#allocation5 + $0x1048] sm:$0xff]
    %v639 = vld [vmem:[#allocation5 + $0x1050] sm:$0xff]
    %v640 = vld [vmem:[#allocation5 + $0x1058] sm:$0xff]
    %v641 = vld [vmem:[#allocation5 + $0x1060] sm:$0xff]
    %v642 = vld [vmem:[#allocation5 + $0x1068] sm:$0xff]
    %v643 = vld [vmem:[#allocation5 + $0x1070] sm:$0xff]
    %v644 = vld [vmem:[#allocation5 + $0x1078] sm:$0xff]
    %v645 = vld [vmem:[#allocation5 + $0x1080] sm:$0xff]
    %v646 = vld [vmem:[#allocation5 + $0x1088] sm:$0xff]
    %v647 = vld [vmem:[#allocation5 + $0x1090] sm:$0xff]
    %v648 = vld [vmem:[#allocation5 + $0x1098] sm:$0xff]
    %v649 = vld [vmem:[#allocation5 + $0x10a0] sm:$0xff]
    %v650 = vld [vmem:[#allocation5 + $0x10a8] sm:$0xff]
    %v651 = vld [vmem:[#allocation5 + $0x10b0] sm:$0xff]
    %v652 = vld [vmem:[#allocation5 + $0x10b8] sm:$0xff]
    %v653 = vld [vmem:[#allocation5 + $0x10c0] sm:$0xff]
    %v654 = vld [vmem:[#allocation5 + $0x10c8] sm:$0xff]
    %v655 = vld [vmem:[#allocation5 + $0x10d0] sm:$0xff]
    %v656 = vld [vmem:[#allocation5 + $0x10d8] sm:$0xff]
    %v657 = vld [vmem:[#allocation5 + $0x10e0] sm:$0xff]
    %v658 = vld [vmem:[#allocation5 + $0x10e8] sm:$0xff]
    %v659 = vld [vmem:[#allocation5 + $0x10f0] sm:$0xff]
    %v660 = vld [vmem:[#allocation5 + $0x10f8] sm:$0xff]
    %v661 = vld [vmem:[#allocation5 + $0x1100] sm:$0xff]
    %v662 = vld [vmem:[#allocation5 + $0x1108] sm:$0xff]
    %v663 = vld [vmem:[#allocation5 + $0x1110] sm:$0xff]
    %v664 = vld [vmem:[#allocation5 + $0x1118] sm:$0xff]
    %v665 = vld [vmem:[#allocation5 + $0x1120] sm:$0xff]
    %v666 = vld [vmem:[#allocation5 + $0x1128] sm:$0xff]
    %v667 = vld [vmem:[#allocation5 + $0x1130] sm:$0xff]
    %v668 = vld [vmem:[#allocation5 + $0x1138] sm:$0xff]
    %v669 = vld [vmem:[#allocation5 + $0x1140] sm:$0xff]
    %v670 = vld [vmem:[#allocation5 + $0x1148] sm:$0xff]
    %v671 = vld [vmem:[#allocation5 + $0x1150] sm:$0xff]
    %v672 = vld [vmem:[#allocation5 + $0x1158] sm:$0xff]
    %v673 = vld [vmem:[#allocation5 + $0x1160] sm:$0xff]
    %v674 = vld [vmem:[#allocation5 + $0x1168] sm:$0xff]
    %v675 = vld [vmem:[#allocation5 + $0x1170] sm:$0xff]
    %v676 = vld [vmem:[#allocation5 + $0x1178] sm:$0xff]
    %v677 = vld [vmem:[#allocation5 + $0x1180] sm:$0xff]
    %v678 = vld [vmem:[#allocation5 + $0x1188] sm:$0xff]
    %v679 = vld [vmem:[#allocation5 + $0x1190] sm:$0xff]
    %v680 = vld [vmem:[#allocation5 + $0x1198] sm:$0xff]
    %v681 = vld [vmem:[#allocation5 + $0x11a0] sm:$0xff]
    %v682 = vld [vmem:[#allocation5 + $0x11a8] sm:$0xff]
    %v683 = vld [vmem:[#allocation5 + $0x11b0] sm:$0xff]
    %v684 = vld [vmem:[#allocation5 + $0x11b8] sm:$0xff]
    %v685 = vld [vmem:[#allocation5 + $0x11c0] sm:$0xff]
    %v686 = vld [vmem:[#allocation5 + $0x11c8] sm:$0xff]
    %v687 = vld [vmem:[#allocation5 + $0x11d0] sm:$0xff]
    %v688 = vld [vmem:[#allocation5 + $0x11d8] sm:$0xff]
    %v689 = vld [vmem:[#allocation5 + $0x11e0] sm:$0xff]
    %v690 = vld [vmem:[#allocation5 + $0x11e8] sm:$0xff]
    %v691 = vld [vmem:[#allocation5 + $0x11f0] sm:$0xff]
    %v692 = vld [vmem:[#allocation5 + $0x11f8] sm:$0xff]
    %v693 = vld [vmem:[#allocation5 + $0x1200] sm:$0xff]
    %v694 = vld [vmem:[#allocation5 + $0x1208] sm:$0xff]
    %v695 = vld [vmem:[#allocation5 + $0x1210] sm:$0xff]
    %v696 = vld [vmem:[#allocation5 + $0x1218] sm:$0xff]
    %v697 = vld [vmem:[#allocation5 + $0x1220] sm:$0xff]
    %v698 = vld [vmem:[#allocation5 + $0x1228] sm:$0xff]
    %v699 = vld [vmem:[#allocation5 + $0x1230] sm:$0xff]
    %v700 = vld [vmem:[#allocation5 + $0x1238] sm:$0xff]
    %v701 = vld [vmem:[#allocation5 + $0x1240] sm:$0xff]
    %v702 = vld [vmem:[#allocation5 + $0x1248] sm:$0xff]
    %v703 = vld [vmem:[#allocation5 + $0x1250] sm:$0xff]
    %v704 = vld [vmem:[#allocation5 + $0x1258] sm:$0xff]
    %v705 = vld [vmem:[#allocation5 + $0x1260] sm:$0xff]
    %v706 = vld [vmem:[#allocation5 + $0x1268] sm:$0xff]
    %v707 = vld [vmem:[#allocation5 + $0x1270] sm:$0xff]
    %v708 = vld [vmem:[#allocation5 + $0x1278] sm:$0xff]
    %v709 = vld [vmem:[#allocation5 + $0x1280] sm:$0xff]
    %v710 = vld [vmem:[#allocation5 + $0x1288] sm:$0xff]
    %v711 = vld [vmem:[#allocation5 + $0x1290] sm:$0xff]
    %v712 = vld [vmem:[#allocation5 + $0x1298] sm:$0xff]
    %v713 = vld [vmem:[#allocation5 + $0x12a0] sm:$0xff]
    %v714 = vld [vmem:[#allocation5 + $0x12a8] sm:$0xff]
    %v715 = vld [vmem:[#allocation5 + $0x12b0] sm:$0xff]
    %v716 = vld [vmem:[#allocation5 + $0x12b8] sm:$0xff]
    %v717 = vld [vmem:[#allocation5 + $0x12c0] sm:$0xff]
    %v718 = vld [vmem:[#allocation5 + $0x12c8] sm:$0xff]
    %v719 = vld [vmem:[#allocation5 + $0x12d0] sm:$0xff]
    %v720 = vld [vmem:[#allocation5 + $0x12d8] sm:$0xff]
    %v721 = vld [vmem:[#allocation5 + $0x12e0] sm:$0xff]
    %v722 = vld [vmem:[#allocation5 + $0x12e8] sm:$0xff]
    %v723 = vld [vmem:[#allocation5 + $0x12f0] sm:$0xff]
    %v724 = vld [vmem:[#allocation5 + $0x12f8] sm:$0xff]
    %v725 = vld [vmem:[#allocation5 + $0x1300] sm:$0xff]
    %v726 = vld [vmem:[#allocation5 + $0x1308] sm:$0xff]
    %v727 = vld [vmem:[#allocation5 + $0x1310] sm:$0xff]
    %v728 = vld [vmem:[#allocation5 + $0x1318] sm:$0xff]
    %v729 = vld [vmem:[#allocation5 + $0x1320] sm:$0xff]
    %v730 = vld [vmem:[#allocation5 + $0x1328] sm:$0xff]
    %v731 = vld [vmem:[#allocation5 + $0x1330] sm:$0xff]
    %v732 = vld [vmem:[#allocation5 + $0x1338] sm:$0xff]
    %v733 = vld [vmem:[#allocation5 + $0x1340] sm:$0xff]
    %v734 = vld [vmem:[#allocation5 + $0x1348] sm:$0xff]
    %v735 = vld [vmem:[#allocation5 + $0x1350] sm:$0xff]
    %v736 = vld [vmem:[#allocation5 + $0x1358] sm:$0xff]
    %v737 = vld [vmem:[#allocation5 + $0x1360] sm:$0xff]
    %v738 = vld [vmem:[#allocation5 + $0x1368] sm:$0xff]
    %v739 = vld [vmem:[#allocation5 + $0x1370] sm:$0xff]
    %v740 = vld [vmem:[#allocation5 + $0x1378] sm:$0xff]
    %v741 = vld [vmem:[#allocation5 + $0x1380] sm:$0xff]
    %v742 = vld [vmem:[#allocation5 + $0x1388] sm:$0xff]
    %v743 = vld [vmem:[#allocation5 + $0x1390] sm:$0xff]
    %v744 = vld [vmem:[#allocation5 + $0x1398] sm:$0xff]
    %v745 = vld [vmem:[#allocation5 + $0x13a0] sm:$0xff]
    %v746 = vld [vmem:[#allocation5 + $0x13a8] sm:$0xff]
    %v747 = vld [vmem:[#allocation5 + $0x13b0] sm:$0xff]
    %v748 = vld [vmem:[#allocation5 + $0x13b8] sm:$0xff]
    %v749 = vld [vmem:[#allocation5 + $0x13c0] sm:$0xff]
    %v750 = vld [vmem:[#allocation5 + $0x13c8] sm:$0xff]
    %v751 = vld [vmem:[#allocation5 + $0x13d0] sm:$0xff]
    %v752 = vld [vmem:[#allocation5 + $0x13d8] sm:$0xff]
    %v753 = vld [vmem:[#allocation5 + $0x13e0] sm:$0xff]
    %v754 = vld [vmem:[#allocation5 + $0x13e8] sm:$0xff]
    %v755 = vld [vmem:[#allocation5 + $0x13f0] sm:$0xff]
    %v756 = vld [vmem:[#allocation5 + $0x13f8] sm:$0xff]
    %v757 = vld [vmem:[#allocation5 + $0x1400] sm:$0xff]
    %v758 = vld [vmem:[#allocation5 + $0x1408] sm:$0xff]
    %v759 = vld [vmem:[#allocation5 + $0x1410] sm:$0xff]
    %v760 = vld [vmem:[#allocation5 + $0x1418] sm:$0xff]
    %v761 = vld [vmem:[#allocation5 + $0x1420] sm:$0xff]
    %v762 = vld [vmem:[#allocation5 + $0x1428] sm:$0xff]
    %v763 = vld [vmem:[#allocation5 + $0x1430] sm:$0xff]
    %v764 = vld [vmem:[#allocation5 + $0x1438] sm:$0xff]
    %v765 = vld [vmem:[#allocation5 + $0x1440] sm:$0xff]
    %v766 = vld [vmem:[#allocation5 + $0x1448] sm:$0xff]
    %v767 = vld [vmem:[#allocation5 + $0x1450] sm:$0xff]
    %v768 = vld [vmem:[#allocation5 + $0x1458] sm:$0xff]
    %v769 = vld [vmem:[#allocation5 + $0x1460] sm:$0xff]
    %v770 = vld [vmem:[#allocation5 + $0x1468] sm:$0xff]
    %v771 = vld [vmem:[#allocation5 + $0x1470] sm:$0xff]
    %v772 = vld [vmem:[#allocation5 + $0x1478] sm:$0xff]
    %v773 = vld [vmem:[#allocation5 + $0x1480] sm:$0xff]
    %v774 = vld [vmem:[#allocation5 + $0x1488] sm:$0xff]
    %v775 = vld [vmem:[#allocation5 + $0x1490] sm:$0xff]
    %v776 = vld [vmem:[#allocation5 + $0x1498] sm:$0xff]
    %v777 = vld [vmem:[#allocation5 + $0x14a0] sm:$0xff]
    %v778 = vld [vmem:[#allocation5 + $0x14a8] sm:$0xff]
    %v779 = vld [vmem:[#allocation5 + $0x14b0] sm:$0xff]
    %v780 = vld [vmem:[#allocation5 + $0x14b8] sm:$0xff]
    %v781 = vld [vmem:[#allocation5 + $0x14c0] sm:$0xff]
    %v782 = vld [vmem:[#allocation5 + $0x14c8] sm:$0xff]
    %v783 = vld [vmem:[#allocation5 + $0x14d0] sm:$0xff]
    %v784 = vld [vmem:[#allocation5 + $0x14d8] sm:$0xff]
    %v785 = vld [vmem:[#allocation5 + $0x14e0] sm:$0xff]
    %v786 = vld [vmem:[#allocation5 + $0x14e8] sm:$0xff]
    %v787 = vld [vmem:[#allocation5 + $0x14f0] sm:$0xff]
    %v788 = vld [vmem:[#allocation5 + $0x14f8] sm:$0xff]
    %v789 = vld [vmem:[#allocation5 + $0x1500] sm:$0xff]
    %v790 = vld [vmem:[#allocation5 + $0x1508] sm:$0xff]
    %v791 = vld [vmem:[#allocation5 + $0x1510] sm:$0xff]
    %v792 = vld [vmem:[#allocation5 + $0x1518] sm:$0xff]
    %v793 = vld [vmem:[#allocation5 + $0x1520] sm:$0xff]
    %v794 = vld [vmem:[#allocation5 + $0x1528] sm:$0xff]
    %v795 = vld [vmem:[#allocation5 + $0x1530] sm:$0xff]
    %v796 = vld [vmem:[#allocation5 + $0x1538] sm:$0xff]
    %v797 = vld [vmem:[#allocation5 + $0x1540] sm:$0xff]
    %v798 = vld [vmem:[#allocation5 + $0x1548] sm:$0xff]
    %v799 = vld [vmem:[#allocation5 + $0x1550] sm:$0xff]
    %v800 = vld [vmem:[#allocation5 + $0x1558] sm:$0xff]
    %v801 = vld [vmem:[#allocation5 + $0x1560] sm:$0xff]
    %v802 = vld [vmem:[#allocation5 + $0x1568] sm:$0xff]
    %v803 = vld [vmem:[#allocation5 + $0x1570] sm:$0xff]
    %v804 = vld [vmem:[#allocation5 + $0x1578] sm:$0xff]
    %v805 = vld [vmem:[#allocation5 + $0x1580] sm:$0xff]
    %v806 = vld [vmem:[#allocation5 + $0x1588] sm:$0xff]
    %v807 = vld [vmem:[#allocation5 + $0x1590] sm:$0xff]
    %v808 = vld [vmem:[#allocation5 + $0x1598] sm:$0xff]
    %v809 = vld [vmem:[#allocation5 + $0x15a0] sm:$0xff]
    %v810 = vld [vmem:[#allocation5 + $0x15a8] sm:$0xff]
    %v811 = vld [vmem:[#allocation5 + $0x15b0] sm:$0xff]
    %v812 = vld [vmem:[#allocation5 + $0x15b8] sm:$0xff]
    %v813 = vld [vmem:[#allocation5 + $0x15c0] sm:$0xff]
    %v814 = vld [vmem:[#allocation5 + $0x15c8] sm:$0xff]
    %v815 = vld [vmem:[#allocation5 + $0x15d0] sm:$0xff]
    %v816 = vld [vmem:[#allocation5 + $0x15d8] sm:$0xff]
    %v817 = vld [vmem:[#allocation5 + $0x15e0] sm:$0xff]
    %v818 = vld [vmem:[#allocation5 + $0x15e8] sm:$0xff]
    %v819 = vld [vmem:[#allocation5 + $0x15f0] sm:$0xff]
    %v820 = vld [vmem:[#allocation5 + $0x15f8] sm:$0xff]
    %v821 = vld [vmem:[#allocation5 + $0x1600] sm:$0xff]
    %v822 = vld [vmem:[#allocation5 + $0x1608] sm:$0xff]
    %v823 = vld [vmem:[#allocation5 + $0x1610] sm:$0xff]
    %v824 = vld [vmem:[#allocation5 + $0x1618] sm:$0xff]
    %v825 = vld [vmem:[#allocation5 + $0x1620] sm:$0xff]
    %v826 = vld [vmem:[#allocation5 + $0x1628] sm:$0xff]
    %v827 = vld [vmem:[#allocation5 + $0x1630] sm:$0xff]
    %v828 = vld [vmem:[#allocation5 + $0x1638] sm:$0xff]
    %v829 = vld [vmem:[#allocation5 + $0x1640] sm:$0xff]
    %v830 = vld [vmem:[#allocation5 + $0x1648] sm:$0xff]
    %v831 = vld [vmem:[#allocation5 + $0x1650] sm:$0xff]
    %v832 = vld [vmem:[#allocation5 + $0x1658] sm:$0xff]
    %v833 = vld [vmem:[#allocation5 + $0x1660] sm:$0xff]
    %v834 = vld [vmem:[#allocation5 + $0x1668] sm:$0xff]
    %v835 = vld [vmem:[#allocation5 + $0x1670] sm:$0xff]
    %v836 = vld [vmem:[#allocation5 + $0x1678] sm:$0xff]
    %v837 = vld [vmem:[#allocation5 + $0x1680] sm:$0xff]
    %v838 = vld [vmem:[#allocation5 + $0x1688] sm:$0xff]
    %v839 = vld [vmem:[#allocation5 + $0x1690] sm:$0xff]
    %v840 = vld [vmem:[#allocation5 + $0x1698] sm:$0xff]
    %v841 = vld [vmem:[#allocation5 + $0x16a0] sm:$0xff]
    %v842 = vld [vmem:[#allocation5 + $0x16a8] sm:$0xff]
    %v843 = vld [vmem:[#allocation5 + $0x16b0] sm:$0xff]
    %v844 = vld [vmem:[#allocation5 + $0x16b8] sm:$0xff]
    %v845 = vld [vmem:[#allocation5 + $0x16c0] sm:$0xff]
    %v846 = vld [vmem:[#allocation5 + $0x16c8] sm:$0xff]
    %v847 = vld [vmem:[#allocation5 + $0x16d0] sm:$0xff]
    %v848 = vld [vmem:[#allocation5 + $0x16d8] sm:$0xff]
    %v849 = vld [vmem:[#allocation5 + $0x16e0] sm:$0xff]
    %v850 = vld [vmem:[#allocation5 + $0x16e8] sm:$0xff]
    %v851 = vld [vmem:[#allocation5 + $0x16f0] sm:$0xff]
    %v852 = vld [vmem:[#allocation5 + $0x16f8] sm:$0xff]
    %v853 = vld [vmem:[#allocation5 + $0x1700] sm:$0xff]
    %v854 = vld [vmem:[#allocation5 + $0x1708] sm:$0xff]
    %v855 = vld [vmem:[#allocation5 + $0x1710] sm:$0xff]
    %v856 = vld [vmem:[#allocation5 + $0x1718] sm:$0xff]
    %v857 = vld [vmem:[#allocation5 + $0x1720] sm:$0xff]
    %v858 = vld [vmem:[#allocation5 + $0x1728] sm:$0xff]
    %v859 = vld [vmem:[#allocation5 + $0x1730] sm:$0xff]
    %v860 = vld [vmem:[#allocation5 + $0x1738] sm:$0xff]
    %v861 = vld [vmem:[#allocation5 + $0x1740] sm:$0xff]
    %v862 = vld [vmem:[#allocation5 + $0x1748] sm:$0xff]
    %v863 = vld [vmem:[#allocation5 + $0x1750] sm:$0xff]
    %v864 = vld [vmem:[#allocation5 + $0x1758] sm:$0xff]
    %v865 = vld [vmem:[#allocation5 + $0x1760] sm:$0xff]
    %v866 = vld [vmem:[#allocation5 + $0x1768] sm:$0xff]
    %v867 = vld [vmem:[#allocation5 + $0x1770] sm:$0xff]
    %v868 = vld [vmem:[#allocation5 + $0x1778] sm:$0xff]
    %v869 = vld [vmem:[#allocation5 + $0x1780] sm:$0xff]
    %v870 = vld [vmem:[#allocation5 + $0x1788] sm:$0xff]
    %v871 = vld [vmem:[#allocation5 + $0x1790] sm:$0xff]
    %v872 = vld [vmem:[#allocation5 + $0x1798] sm:$0xff]
    %v873 = vld [vmem:[#allocation5 + $0x17a0] sm:$0xff]
    %v874 = vld [vmem:[#allocation5 + $0x17a8] sm:$0xff]
    %v875 = vld [vmem:[#allocation5 + $0x17b0] sm:$0xff]
    %v876 = vld [vmem:[#allocation5 + $0x17b8] sm:$0xff]
    %v877 = vld [vmem:[#allocation5 + $0x17c0] sm:$0xff]
    %v878 = vld [vmem:[#allocation5 + $0x17c8] sm:$0xff]
    %v879 = vld [vmem:[#allocation5 + $0x17d0] sm:$0xff]
    %v880 = vld [vmem:[#allocation5 + $0x17d8] sm:$0xff]
    %v881 = vld [vmem:[#allocation5 + $0x17e0] sm:$0xff]
    %v882 = vld [vmem:[#allocation5 + $0x17e8] sm:$0xff]
    %v883 = vld [vmem:[#allocation5 + $0x17f0] sm:$0xff]
    %v884 = vld [vmem:[#allocation5 + $0x17f8] sm:$0xff]
    %v885 = vld [vmem:[#allocation5 + $0x1800] sm:$0xff]
    %v886 = vld [vmem:[#allocation5 + $0x1808] sm:$0xff]
    %v887 = vld [vmem:[#allocation5 + $0x1810] sm:$0xff]
    %v888 = vld [vmem:[#allocation5 + $0x1818] sm:$0xff]
    %v889 = vld [vmem:[#allocation5 + $0x1820] sm:$0xff]
    %v890 = vld [vmem:[#allocation5 + $0x1828] sm:$0xff]
    %v891 = vld [vmem:[#allocation5 + $0x1830] sm:$0xff]
    %v892 = vld [vmem:[#allocation5 + $0x1838] sm:$0xff]
    %v893 = vld [vmem:[#allocation5 + $0x1840] sm:$0xff]
    %v894 = vld [vmem:[#allocation5 + $0x1848] sm:$0xff]
    %v895 = vld [vmem:[#allocation5 + $0x1850] sm:$0xff]
    %v896 = vld [vmem:[#allocation5 + $0x1858] sm:$0xff]
    %v897 = vld [vmem:[#allocation5 + $0x1860] sm:$0xff]
    %v898 = vld [vmem:[#allocation5 + $0x1868] sm:$0xff]
    %v899 = vld [vmem:[#allocation5 + $0x1870] sm:$0xff]
    %v900 = vld [vmem:[#allocation5 + $0x1878] sm:$0xff]
    %v901 = vld [vmem:[#allocation5 + $0x1880] sm:$0xff]
    %v902 = vld [vmem:[#allocation5 + $0x1888] sm:$0xff]
    %v903 = vld [vmem:[#allocation5 + $0x1890] sm:$0xff]
    %v904 = vld [vmem:[#allocation5 + $0x1898] sm:$0xff]
    %v905 = vld [vmem:[#allocation5 + $0x18a0] sm:$0xff]
    %v906 = vld [vmem:[#allocation5 + $0x18a8] sm:$0xff]
    %v907 = vld [vmem:[#allocation5 + $0x18b0] sm:$0xff]
    %v908 = vld [vmem:[#allocation5 + $0x18b8] sm:$0xff]
    %v909 = vld [vmem:[#allocation5 + $0x18c0] sm:$0xff]
    %v910 = vld [vmem:[#allocation5 + $0x18c8] sm:$0xff]
    %v911 = vld [vmem:[#allocation5 + $0x18d0] sm:$0xff]
    %v912 = vld [vmem:[#allocation5 + $0x18d8] sm:$0xff]
    %v913 = vld [vmem:[#allocation5 + $0x18e0] sm:$0xff]
    %v914 = vld [vmem:[#allocation5 + $0x18e8] sm:$0xff]
    %v915 = vld [vmem:[#allocation5 + $0x18f0] sm:$0xff]
    %v916 = vld [vmem:[#allocation5 + $0x18f8] sm:$0xff]
    %v917 = vld [vmem:[#allocation5 + $0x1900] sm:$0xff]
    %v918 = vld [vmem:[#allocation5 + $0x1908] sm:$0xff]
    %v919 = vld [vmem:[#allocation5 + $0x1910] sm:$0xff]
    %v920 = vld [vmem:[#allocation5 + $0x1918] sm:$0xff]
    %v921 = vld [vmem:[#allocation5 + $0x1920] sm:$0xff]
    %v922 = vld [vmem:[#allocation5 + $0x1928] sm:$0xff]
    %v923 = vld [vmem:[#allocation5 + $0x1930] sm:$0xff]
    %v924 = vld [vmem:[#allocation5 + $0x1938] sm:$0xff]
    %v925 = vld [vmem:[#allocation5 + $0x1940] sm:$0xff]
    %v926 = vld [vmem:[#allocation5 + $0x1948] sm:$0xff]
    %v927 = vld [vmem:[#allocation5 + $0x1950] sm:$0xff]
    %v928 = vld [vmem:[#allocation5 + $0x1958] sm:$0xff]
    %v929 = vld [vmem:[#allocation5 + $0x1960] sm:$0xff]
    %v930 = vld [vmem:[#allocation5 + $0x1968] sm:$0xff]
    %v931 = vld [vmem:[#allocation5 + $0x1970] sm:$0xff]
    %v932 = vld [vmem:[#allocation5 + $0x1978] sm:$0xff]
    %v933 = vld [vmem:[#allocation5 + $0x1980] sm:$0xff]
    %v934 = vld [vmem:[#allocation5 + $0x1988] sm:$0xff]
    %v935 = vld [vmem:[#allocation5 + $0x1990] sm:$0xff]
    %v936 = vld [vmem:[#allocation5 + $0x1998] sm:$0xff]
    %v937 = vld [vmem:[#allocation5 + $0x19a0] sm:$0xff]
    %v938 = vld [vmem:[#allocation5 + $0x19a8] sm:$0xff]
    %v939 = vld [vmem:[#allocation5 + $0x19b0] sm:$0xff]
    %v940 = vld [vmem:[#allocation5 + $0x19b8] sm:$0xff]
    %v941 = vld [vmem:[#allocation5 + $0x19c0] sm:$0xff]
    %v942 = vld [vmem:[#allocation5 + $0x19c8] sm:$0xff]
    %v943 = vld [vmem:[#allocation5 + $0x19d0] sm:$0xff]
    %v944 = vld [vmem:[#allocation5 + $0x19d8] sm:$0xff]
    %v945 = vld [vmem:[#allocation5 + $0x19e0] sm:$0xff]
    %v946 = vld [vmem:[#allocation5 + $0x19e8] sm:$0xff]
    %v947 = vld [vmem:[#allocation5 + $0x19f0] sm:$0xff]
    %v948 = vld [vmem:[#allocation5 + $0x19f8] sm:$0xff]
    %v949 = vld [vmem:[#allocation5 + $0x1a00] sm:$0xff]
    %v950 = vld [vmem:[#allocation5 + $0x1a08] sm:$0xff]
    %v951 = vld [vmem:[#allocation5 + $0x1a10] sm:$0xff]
    %v952 = vld [vmem:[#allocation5 + $0x1a18] sm:$0xff]
    %v953 = vld [vmem:[#allocation5 + $0x1a20] sm:$0xff]
    %v954 = vld [vmem:[#allocation5 + $0x1a28] sm:$0xff]
    %v955 = vld [vmem:[#allocation5 + $0x1a30] sm:$0xff]
    %v956 = vld [vmem:[#allocation5 + $0x1a38] sm:$0xff]
    %v957 = vld [vmem:[#allocation5 + $0x1a40] sm:$0xff]
    %v958 = vld [vmem:[#allocation5 + $0x1a48] sm:$0xff]
    %v959 = vld [vmem:[#allocation5 + $0x1a50] sm:$0xff]
    %v960 = vld [vmem:[#allocation5 + $0x1a58] sm:$0xff]
    %v961 = vld [vmem:[#allocation5 + $0x1a60] sm:$0xff]
    %v962 = vld [vmem:[#allocation5 + $0x1a68] sm:$0xff]
    %v963 = vld [vmem:[#allocation5 + $0x1a70] sm:$0xff]
    %v964 = vld [vmem:[#allocation5 + $0x1a78] sm:$0xff]
    %v965 = vld [vmem:[#allocation5 + $0x1a80] sm:$0xff]
    %v966 = vld [vmem:[#allocation5 + $0x1a88] sm:$0xff]
    %v967 = vld [vmem:[#allocation5 + $0x1a90] sm:$0xff]
    %v968 = vld [vmem:[#allocation5 + $0x1a98] sm:$0xff]
    %v969 = vld [vmem:[#allocation5 + $0x1aa0] sm:$0xff]
    %v970 = vld [vmem:[#allocation5 + $0x1aa8] sm:$0xff]
    %v971 = vld [vmem:[#allocation5 + $0x1ab0] sm:$0xff]
    %v972 = vld [vmem:[#allocation5 + $0x1ab8] sm:$0xff]
    %v973 = vld [vmem:[#allocation5 + $0x1ac0] sm:$0xff]
    %v974 = vld [vmem:[#allocation5 + $0x1ac8] sm:$0xff]
    %v975 = vld [vmem:[#allocation5 + $0x1ad0] sm:$0xff]
    %v976 = vld [vmem:[#allocation5 + $0x1ad8] sm:$0xff]
    %v977 = vld [vmem:[#allocation5 + $0x1ae0] sm:$0xff]
    %v978 = vld [vmem:[#allocation5 + $0x1ae8] sm:$0xff]
    %v979 = vld [vmem:[#allocation5 + $0x1af0] sm:$0xff]
    %v980 = vld [vmem:[#allocation5 + $0x1af8] sm:$0xff]
    %v981 = vld [vmem:[#allocation5 + $0x1b00] sm:$0xff]
    %v982 = vld [vmem:[#allocation5 + $0x1b08] sm:$0xff]
    %v983 = vld [vmem:[#allocation5 + $0x1b10] sm:$0xff]
    %v984 = vld [vmem:[#allocation5 + $0x1b18] sm:$0xff]
    %v985 = vld [vmem:[#allocation5 + $0x1b20] sm:$0xff]
    %v986 = vld [vmem:[#allocation5 + $0x1b28] sm:$0xff]
    %v987 = vld [vmem:[#allocation5 + $0x1b30] sm:$0xff]
    %v988 = vld [vmem:[#allocation5 + $0x1b38] sm:$0xff]
    %v989 = vld [vmem:[#allocation5 + $0x1b40] sm:$0xff]
    %v990 = vld [vmem:[#allocation5 + $0x1b48] sm:$0xff]
    %v991 = vld [vmem:[#allocation5 + $0x1b50] sm:$0xff]
    %v992 = vld [vmem:[#allocation5 + $0x1b58] sm:$0xff]
    %v993 = vld [vmem:[#allocation5 + $0x1b60] sm:$0xff]
    %v994 = vld [vmem:[#allocation5 + $0x1b68] sm:$0xff]
    %v995 = vld [vmem:[#allocation5 + $0x1b70] sm:$0xff]
    %v996 = vld [vmem:[#allocation5 + $0x1b78] sm:$0xff]
    %v997 = vld [vmem:[#allocation5 + $0x1b80] sm:$0xff]
    %v998 = vld [vmem:[#allocation5 + $0x1b88] sm:$0xff]
    %v999 = vld [vmem:[#allocation5 + $0x1b90] sm:$0xff]
    %v1000 = vld [vmem:[#allocation5 + $0x1b98] sm:$0xff]
    %v1001 = vld [vmem:[#allocation5 + $0x1ba0] sm:$0xff]
    %v1002 = vld [vmem:[#allocation5 + $0x1ba8] sm:$0xff]
    %v1003 = vld [vmem:[#allocation5 + $0x1bb0] sm:$0xff]
    %v1004 = vld [vmem:[#allocation5 + $0x1bb8] sm:$0xff]
    %v1005 = vld [vmem:[#allocation5 + $0x1bc0] sm:$0xff]
    %v1006 = vld [vmem:[#allocation5 + $0x1bc8] sm:$0xff]
    %v1007 = vld [vmem:[#allocation5 + $0x1bd0] sm:$0xff]
    %v1008 = vld [vmem:[#allocation5 + $0x1bd8] sm:$0xff]
    %v1009 = vld [vmem:[#allocation5 + $0x1be0] sm:$0xff]
    %v1010 = vld [vmem:[#allocation5 + $0x1be8] sm:$0xff]
    %v1011 = vld [vmem:[#allocation5 + $0x1bf0] sm:$0xff]
    %v1012 = vld [vmem:[#allocation5 + $0x1bf8] sm:$0xff]
    %v1013 = vld [vmem:[#allocation5 + $0x1c00] sm:$0xff]
    %v1014 = vld [vmem:[#allocation5 + $0x1c08] sm:$0xff]
    %v1015 = vld [vmem:[#allocation5 + $0x1c10] sm:$0xff]
    %v1016 = vld [vmem:[#allocation5 + $0x1c18] sm:$0xff]
    %v1017 = vld [vmem:[#allocation5 + $0x1c20] sm:$0xff]
    %v1018 = vld [vmem:[#allocation5 + $0x1c28] sm:$0xff]
    %v1019 = vld [vmem:[#allocation5 + $0x1c30] sm:$0xff]
    %v1020 = vld [vmem:[#allocation5 + $0x1c38] sm:$0xff]
    %v1021 = vld [vmem:[#allocation5 + $0x1c40] sm:$0xff]
    %v1022 = vld [vmem:[#allocation5 + $0x1c48] sm:$0xff]
    %v1023 = vld [vmem:[#allocation5 + $0x1c50] sm:$0xff]
    %v1024 = vld [vmem:[#allocation5 + $0x1c58] sm:$0xff]
    %v1025 = vld [vmem:[#allocation5 + $0x1c60] sm:$0xff]
    %v1026 = vld [vmem:[#allocation5 + $0x1c68] sm:$0xff]
    %v1027 = vld [vmem:[#allocation5 + $0x1c70] sm:$0xff]
    %v1028 = vld [vmem:[#allocation5 + $0x1c78] sm:$0xff]
    %v1029 = vld [vmem:[#allocation5 + $0x1c80] sm:$0xff]
    %v1030 = vld [vmem:[#allocation5 + $0x1c88] sm:$0xff]
    %v1031 = vld [vmem:[#allocation5 + $0x1c90] sm:$0xff]
    %v1032 = vld [vmem:[#allocation5 + $0x1c98] sm:$0xff]
    %v1033 = vld [vmem:[#allocation5 + $0x1ca0] sm:$0xff]
    %v1034 = vld [vmem:[#allocation5 + $0x1ca8] sm:$0xff]
    %v1035 = vld [vmem:[#allocation5 + $0x1cb0] sm:$0xff]
    %v1036 = vld [vmem:[#allocation5 + $0x1cb8] sm:$0xff]
    %v1037 = vld [vmem:[#allocation5 + $0x1cc0] sm:$0xff]
    %v1038 = vld [vmem:[#allocation5 + $0x1cc8] sm:$0xff]
    %v1039 = vld [vmem:[#allocation5 + $0x1cd0] sm:$0xff]
    %v1040 = vld [vmem:[#allocation5 + $0x1cd8] sm:$0xff]
    %v1041 = vld [vmem:[#allocation5 + $0x1ce0] sm:$0xff]
    %v1042 = vld [vmem:[#allocation5 + $0x1ce8] sm:$0xff]
    %v1043 = vld [vmem:[#allocation5 + $0x1cf0] sm:$0xff]
    %v1044 = vld [vmem:[#allocation5 + $0x1cf8] sm:$0xff]
    %v1045 = vld [vmem:[#allocation5 + $0x1d00] sm:$0xff]
    %v1046 = vld [vmem:[#allocation5 + $0x1d08] sm:$0xff]
    %v1047 = vld [vmem:[#allocation5 + $0x1d10] sm:$0xff]
    %v1048 = vld [vmem:[#allocation5 + $0x1d18] sm:$0xff]
    %v1049 = vld [vmem:[#allocation5 + $0x1d20] sm:$0xff]
    %v1050 = vld [vmem:[#allocation5 + $0x1d28] sm:$0xff]
    %v1051 = vld [vmem:[#allocation5 + $0x1d30] sm:$0xff]
    %v1052 = vld [vmem:[#allocation5 + $0x1d38] sm:$0xff]
    %v1053 = vld [vmem:[#allocation5 + $0x1d40] sm:$0xff]
    %v1054 = vld [vmem:[#allocation5 + $0x1d48] sm:$0xff]
    %v1055 = vld [vmem:[#allocation5 + $0x1d50] sm:$0xff]
    %v1056 = vld [vmem:[#allocation5 + $0x1d58] sm:$0xff]
    %v1057 = vld [vmem:[#allocation5 + $0x1d60] sm:$0xff]
    %v1058 = vld [vmem:[#allocation5 + $0x1d68] sm:$0xff]
    %v1059 = vld [vmem:[#allocation5 + $0x1d70] sm:$0xff]
    %v1060 = vld [vmem:[#allocation5 + $0x1d78] sm:$0xff]
    %v1061 = vld [vmem:[#allocation5 + $0x1d80] sm:$0xff]
    %v1062 = vld [vmem:[#allocation5 + $0x1d88] sm:$0xff]
    %v1063 = vld [vmem:[#allocation5 + $0x1d90] sm:$0xff]
    %v1064 = vld [vmem:[#allocation5 + $0x1d98] sm:$0xff]
    %v1065 = vld [vmem:[#allocation5 + $0x1da0] sm:$0xff]
    %v1066 = vld [vmem:[#allocation5 + $0x1da8] sm:$0xff]
    %v1067 = vld [vmem:[#allocation5 + $0x1db0] sm:$0xff]
    %v1068 = vld [vmem:[#allocation5 + $0x1db8] sm:$0xff]
    %v1069 = vld [vmem:[#allocation5 + $0x1dc0] sm:$0xff]
    %v1070 = vld [vmem:[#allocation5 + $0x1dc8] sm:$0xff]
    %v1071 = vld [vmem:[#allocation5 + $0x1dd0] sm:$0xff]
    %v1072 = vld [vmem:[#allocation5 + $0x1dd8] sm:$0xff]
    %v1073 = vld [vmem:[#allocation5 + $0x1de0] sm:$0xff]
    %v1074 = vld [vmem:[#allocation5 + $0x1de8] sm:$0xff]
    %v1075 = vld [vmem:[#allocation5 + $0x1df0] sm:$0xff]
    %v1076 = vld [vmem:[#allocation5 + $0x1df8] sm:$0xff]
    %v1077 = vld [vmem:[#allocation5 + $0x1e00] sm:$0xff]
    %v1078 = vld [vmem:[#allocation5 + $0x1e08] sm:$0xff]
    %v1079 = vld [vmem:[#allocation5 + $0x1e10] sm:$0xff]
    %v1080 = vld [vmem:[#allocation5 + $0x1e18] sm:$0xff]
    %v1081 = vld [vmem:[#allocation5 + $0x1e20] sm:$0xff]
    %v1082 = vld [vmem:[#allocation5 + $0x1e28] sm:$0xff]
    %v1083 = vld [vmem:[#allocation5 + $0x1e30] sm:$0xff]
    %v1084 = vld [vmem:[#allocation5 + $0x1e38] sm:$0xff]
    %v1085 = vld [vmem:[#allocation5 + $0x1e40] sm:$0xff]
    %v1086 = vld [vmem:[#allocation5 + $0x1e48] sm:$0xff]
    %v1087 = vld [vmem:[#allocation5 + $0x1e50] sm:$0xff]
    %v1088 = vld [vmem:[#allocation5 + $0x1e58] sm:$0xff]
    %v1089 = vld [vmem:[#allocation5 + $0x1e60] sm:$0xff]
    %v1090 = vld [vmem:[#allocation5 + $0x1e68] sm:$0xff]
    %v1091 = vld [vmem:[#allocation5 + $0x1e70] sm:$0xff]
    %v1092 = vld [vmem:[#allocation5 + $0x1e78] sm:$0xff]
    %v1093 = vld [vmem:[#allocation5 + $0x1e80] sm:$0xff]
    %v1094 = vld [vmem:[#allocation5 + $0x1e88] sm:$0xff]
    %v1095 = vld [vmem:[#allocation5 + $0x1e90] sm:$0xff]
    %v1096 = vld [vmem:[#allocation5 + $0x1e98] sm:$0xff]
    %v1097 = vld [vmem:[#allocation5 + $0x1ea0] sm:$0xff]
    %v1098 = vld [vmem:[#allocation5 + $0x1ea8] sm:$0xff]
    %v1099 = vld [vmem:[#allocation5 + $0x1eb0] sm:$0xff]
    %v1100 = vld [vmem:[#allocation5 + $0x1eb8] sm:$0xff]
    %v1101 = vld [vmem:[#allocation5 + $0x1ec0] sm:$0xff]
    %v1102 = vld [vmem:[#allocation5 + $0x1ec8] sm:$0xff]
    %v1103 = vld [vmem:[#allocation5 + $0x1ed0] sm:$0xff]
    %v1104 = vld [vmem:[#allocation5 + $0x1ed8] sm:$0xff]
    %v1105 = vld [vmem:[#allocation5 + $0x1ee0] sm:$0xff]
    %v1106 = vld [vmem:[#allocation5 + $0x1ee8] sm:$0xff]
    %v1107 = vld [vmem:[#allocation5 + $0x1ef0] sm:$0xff]
    %v1108 = vld [vmem:[#allocation5 + $0x1ef8] sm:$0xff]
    %v1109 = vld [vmem:[#allocation5 + $0x1f00] sm:$0xff]
    %v1110 = vld [vmem:[#allocation5 + $0x1f08] sm:$0xff]
    %v1111 = vld [vmem:[#allocation5 + $0x1f10] sm:$0xff]
    %v1112 = vld [vmem:[#allocation5 + $0x1f18] sm:$0xff]
    %v1113 = vld [vmem:[#allocation5 + $0x1f20] sm:$0xff]
    %v1114 = vld [vmem:[#allocation5 + $0x1f28] sm:$0xff]
    %v1115 = vld [vmem:[#allocation5 + $0x1f30] sm:$0xff]
    %v1116 = vld [vmem:[#allocation5 + $0x1f38] sm:$0xff]
    %v1117 = vld [vmem:[#allocation5 + $0x1f40] sm:$0xff]
    %v1118 = vld [vmem:[#allocation5 + $0x1f48] sm:$0xff]
    %v1119 = vld [vmem:[#allocation5 + $0x1f50] sm:$0xff]
    %v1120 = vld [vmem:[#allocation5 + $0x1f58] sm:$0xff]
    %v1121 = vld [vmem:[#allocation5 + $0x1f60] sm:$0xff]
    %v1122 = vld [vmem:[#allocation5 + $0x1f68] sm:$0xff]
    %v1123 = vld [vmem:[#allocation5 + $0x1f70] sm:$0xff]
    %v1124 = vld [vmem:[#allocation5 + $0x1f78] sm:$0xff]
    %v1125 = vld [vmem:[#allocation5 + $0x1f80] sm:$0xff]
    %v1126 = vld [vmem:[#allocation5 + $0x1f88] sm:$0xff]
    %v1127 = vld [vmem:[#allocation5 + $0x1f90] sm:$0xff]
    %v1128 = vld [vmem:[#allocation5 + $0x1f98] sm:$0xff]
    %v1129 = vld [vmem:[#allocation5 + $0x1fa0] sm:$0xff]
    %v1130 = vld [vmem:[#allocation5 + $0x1fa8] sm:$0xff]
    %v1131 = vld [vmem:[#allocation5 + $0x1fb0] sm:$0xff]
    %v1132 = vld [vmem:[#allocation5 + $0x1fb8] sm:$0xff]
    %v1133 = vld [vmem:[#allocation5 + $0x1fc0] sm:$0xff]
    %v1134 = vld [vmem:[#allocation5 + $0x1fc8] sm:$0xff]
    %v1135 = vld [vmem:[#allocation5 + $0x1fd0] sm:$0xff]
    %v1136 = vld [vmem:[#allocation5 + $0x1fd8] sm:$0xff]
    %v1137 = vld [vmem:[#allocation5 + $0x1fe0] sm:$0xff]
    %v1138 = vld [vmem:[#allocation5 + $0x1fe8] sm:$0xff]
    %v1139 = vld [vmem:[#allocation5 + $0x1ff0] sm:$0xff]
    %v1140 = vld [vmem:[#allocation5 + $0x1ff8] sm:$0xff]
    %v1141 = vld [vmem:[#allocation7] ss:$4 sm:$0xf]
    %v1143 = vlaneseq
    %v1144 = vshrl.u32 %v1143, 7
    %v1145 = vsub.s32 0, %v1144
    %v1146 = vrot.slane %v1141, %v1145
    %v1147 = vlaneseq
    %v1148 = vshrl.u32 %v1147, 7
    %v1149 = vsub.s32 1, %v1148
    %v1150 = vrot.slane %v1141, %v1149
    %v1151 = vlaneseq
    %v1152 = vshrl.u32 %v1151, 7
    %v1153 = vsub.s32 2, %v1152
    %v1154 = vrot.slane %v1141, %v1153
    %v1155 = vlaneseq
    %v1156 = vshrl.u32 %v1155, 7
    %v1157 = vsub.s32 3, %v1156
    %v1158 = vrot.slane %v1141, %v1157
    %1163 = vmatprep.subr.mxu0 %v118
    %1164 = vmatpush1.msra.mxu0 %v117
    %1165 = vmatprep.subr.mxu0 %v122
    %1166 = vmatpush1.msra.mxu0 %v121
    %1167 = vmatprep.subr.mxu0 %v126
    %1168 = vmatpush1.msra.mxu0 %v125
    %1169 = vmatprep.subr.mxu0 %v130
    %1170 = vmatpush1.msra.mxu0 %v129
    %1171 = vmatprep.subr.mxu0 %v134
    %1172 = vmatpush1.msra.mxu0 %v133
    %1173 = vmatprep.subr.mxu0 %v138
    %1174 = vmatpush1.msra.mxu0 %v137
    %1175 = vmatprep.subr.mxu0 %v142
    %1176 = vmatpush1.msra.mxu0 %v141
    %1177 = vmatprep.subr.mxu0 %v146
    %1178 = vmatpush1.msra.mxu0 %v145
    %1179 = vmatprep.subr.mxu0 %v150
    %1180 = vmatpush1.msra.mxu0 %v149
    %1181 = vmatprep.subr.mxu0 %v154
    %1182 = vmatpush1.msra.mxu0 %v153
    %1183 = vmatprep.subr.mxu0 %v158
    %1184 = vmatpush1.msra.mxu0 %v157
    %1185 = vmatprep.subr.mxu0 %v162
    %1186 = vmatpush1.msra.mxu0 %v161
    %1187 = vmatprep.subr.mxu0 %v166
    %1188 = vmatpush1.msra.mxu0 %v165
    %1189 = vmatprep.subr.mxu0 %v170
    %1190 = vmatpush1.msra.mxu0 %v169
    %1191 = vmatprep.subr.mxu0 %v174
    %1192 = vmatpush1.msra.mxu0 %v173
    %1193 = vmatprep.subr.mxu0 %v178
    %1194 = vmatpush1.msra.mxu0 %v177
    %1195 = vmatprep.subr.mxu0 %v182
    %1196 = vmatpush1.msra.mxu0 %v181
    %1197 = vmatprep.subr.mxu0 %v186
    %1198 = vmatpush1.msra.mxu0 %v185
    %1199 = vmatprep.subr.mxu0 %v190
    %1200 = vmatpush1.msra.mxu0 %v189
    %1201 = vmatprep.subr.mxu0 %v194
    %1202 = vmatpush1.msra.mxu0 %v193
    %1203 = vmatprep.subr.mxu0 %v198
    %1204 = vmatpush1.msra.mxu0 %v197
    %1205 = vmatprep.subr.mxu0 %v202
    %1206 = vmatpush1.msra.mxu0 %v201
    %1207 = vmatprep.subr.mxu0 %v206
    %1208 = vmatpush1.msra.mxu0 %v205
    %1209 = vmatprep.subr.mxu0 %v210
    %1210 = vmatpush1.msra.mxu0 %v209
    %1211 = vmatprep.subr.mxu0 %v214
    %1212 = vmatpush1.msra.mxu0 %v213
    %1213 = vmatprep.subr.mxu0 %v218
    %1214 = vmatpush1.msra.mxu0 %v217
    %1215 = vmatprep.subr.mxu0 %v222
    %1216 = vmatpush1.msra.mxu0 %v221
    %1217 = vmatprep.subr.mxu0 %v226
    %1218 = vmatpush1.msra.mxu0 %v225
    %1219 = vmatprep.subr.mxu0 %v230
    %1220 = vmatpush1.msra.mxu0 %v229
    %1221 = vmatprep.subr.mxu0 %v234
    %1222 = vmatpush1.msra.mxu0 %v233
    %1223 = vmatprep.subr.mxu0 %v238
    %1224 = vmatpush1.msra.mxu0 %v237
    %1225 = vmatprep.subr.mxu0 %v242
    %1226 = vmatpush1.msra.mxu0 %v241
    %1227 = vmatprep.mubr.f32.mxu0 %v86
    %1228 = vmatmul.mubr.f32.gmra.mrb[0].mxu0 %v85
    %v1229 = vpop.f32.mrb[0].mxu0
    %v1230 = vadd.f32 %v1146, %v1229
    %v1231 = vpop.f32.mrb[0].mxu0
    %v1232 = vadd.f32 %v1150, %v1231
    %1233 = vmatprep.mubr.f32.mxu0 %v102
    %1234 = vmatmul.mubr.f32.gmra.mrb[0].mxu0 %v101
    %v1235 = vpop.f32.mrb[0].mxu0
    %v1236 = vadd.f32 %v1146, %v1235
    %v1237 = vpop.f32.mrb[0].mxu0
    %v1238 = vadd.f32 %v1150, %v1237
    %1239 = vdwg.mxu0
    %1240 = vmatprep.subr.mxu0 %v246
    %1241 = vmatpush1.msra.mxu0 %v245
    %1242 = vmatprep.subr.mxu0 %v250
    %1243 = vmatpush1.msra.mxu0 %v249
    %1244 = vmatprep.subr.mxu0 %v254
    %1245 = vmatpush1.msra.mxu0 %v253
    %1246 = vmatprep.subr.mxu0 %v258
    %1247 = vmatpush1.msra.mxu0 %v257
    %1248 = vmatprep.subr.mxu0 %v262
    %1249 = vmatpush1.msra.mxu0 %v261
    %1250 = vmatprep.subr.mxu0 %v266
    %1251 = vmatpush1.msra.mxu0 %v265
    %1252 = vmatprep.subr.mxu0 %v270
    %1253 = vmatpush1.msra.mxu0 %v269
    %1254 = vmatprep.subr.mxu0 %v274
    %1255 = vmatpush1.msra.mxu0 %v273
    %1256 = vmatprep.subr.mxu0 %v278
    %1257 = vmatpush1.msra.mxu0 %v277
    %1258 = vmatprep.subr.mxu0 %v282
    %1259 = vmatpush1.msra.mxu0 %v281
    %1260 = vmatprep.subr.mxu0 %v286
    %1261 = vmatpush1.msra.mxu0 %v285
    %1262 = vmatprep.subr.mxu0 %v290
    %1263 = vmatpush1.msra.mxu0 %v289
    %1264 = vmatprep.subr.mxu0 %v294
    %1265 = vmatpush1.msra.mxu0 %v293
    %1266 = vmatprep.subr.mxu0 %v298
    %1267 = vmatpush1.msra.mxu0 %v297
    %1268 = vmatprep.subr.mxu0 %v302
    %1269 = vmatpush1.msra.mxu0 %v301
    %1270 = vmatprep.subr.mxu0 %v306
    %1271 = vmatpush1.msra.mxu0 %v305
    %1272 = vmatprep.subr.mxu0 %v310
    %1273 = vmatpush1.msra.mxu0 %v309
    %1274 = vmatprep.subr.mxu0 %v314
    %1275 = vmatpush1.msra.mxu0 %v313
    %1276 = vmatprep.subr.mxu0 %v318
    %1277 = vmatpush1.msra.mxu0 %v317
    %1278 = vmatprep.subr.mxu0 %v322
    %1279 = vmatpush1.msra.mxu0 %v321
    %1280 = vmatprep.subr.mxu0 %v326
    %1281 = vmatpush1.msra.mxu0 %v325
    %1282 = vmatprep.subr.mxu0 %v330
    %1283 = vmatpush1.msra.mxu0 %v329
    %1284 = vmatprep.subr.mxu0 %v334
    %1285 = vmatpush1.msra.mxu0 %v333
    %1286 = vmatprep.subr.mxu0 %v338
    %1287 = vmatpush1.msra.mxu0 %v337
    %1288 = vmatprep.subr.mxu0 %v342
    %1289 = vmatpush1.msra.mxu0 %v341
    %1290 = vmatprep.subr.mxu0 %v346
    %1291 = vmatpush1.msra.mxu0 %v345
    %1292 = vmatprep.subr.mxu0 %v350
    %1293 = vmatpush1.msra.mxu0 %v349
    %1294 = vmatprep.subr.mxu0 %v354
    %1295 = vmatpush1.msra.mxu0 %v353
    %1296 = vmatprep.subr.mxu0 %v358
    %1297 = vmatpush1.msra.mxu0 %v357
    %1298 = vmatprep.subr.mxu0 %v362
    %1299 = vmatpush1.msra.mxu0 %v361
    %1300 = vmatprep.subr.mxu0 %v366
    %1301 = vmatpush1.msra.mxu0 %v365
    %1302 = vmatprep.subr.mxu0 %v370
    %1303 = vmatpush1.msra.mxu0 %v369
    %1304 = vmatprep.mubr.f32.mxu0 %v88
    %1305 = vmatmul.mubr.f32.gmra.mrb[0].mxu0 %v87
    %v1306 = vpop.f32.mrb[0].mxu0
    %v1307 = vadd.f32 %v1230, %v1306
    %v1308 = vpop.f32.mrb[0].mxu0
    %v1309 = vadd.f32 %v1232, %v1308
    %1310 = vmatprep.mubr.f32.mxu0 %v104
    %1311 = vmatmul.mubr.f32.gmra.mrb[0].mxu0 %v103
    %v1312 = vpop.f32.mrb[0].mxu0
    %v1313 = vadd.f32 %v1236, %v1312
    %v1314 = vpop.f32.mrb[0].mxu0
    %v1315 = vadd.f32 %v1238, %v1314
    %1316 = vdwg.mxu0
    %1317 = vmatprep.subr.mxu0 %v374
    %1318 = vmatpush1.msra.mxu0 %v373
    %1319 = vmatprep.subr.mxu0 %v378
    %1320 = vmatpush1.msra.mxu0 %v377
    %1321 = vmatprep.subr.mxu0 %v382
    %1322 = vmatpush1.msra.mxu0 %v381
    %1323 = vmatprep.subr.mxu0 %v386
    %1324 = vmatpush1.msra.mxu0 %v385
    %1325 = vmatprep.subr.mxu0 %v390
    %1326 = vmatpush1.msra.mxu0 %v389
    %1327 = vmatprep.subr.mxu0 %v394
    %1328 = vmatpush1.msra.mxu0 %v393
    %1329 = vmatprep.subr.mxu0 %v398
    %1330 = vmatpush1.msra.mxu0 %v397
    %1331 = vmatprep.subr.mxu0 %v402
    %1332 = vmatpush1.msra.mxu0 %v401
    %1333 = vmatprep.subr.mxu0 %v406
    %1334 = vmatpush1.msra.mxu0 %v405
    %1335 = vmatprep.subr.mxu0 %v410
    %1336 = vmatpush1.msra.mxu0 %v409
    %1337 = vmatprep.subr.mxu0 %v414
    %1338 = vmatpush1.msra.mxu0 %v413
    %1339 = vmatprep.subr.mxu0 %v418
    %1340 = vmatpush1.msra.mxu0 %v417
    %1341 = vmatprep.subr.mxu0 %v422
    %1342 = vmatpush1.msra.mxu0 %v421
    %1343 = vmatprep.subr.mxu0 %v426
    %1344 = vmatpush1.msra.mxu0 %v425
    %1345 = vmatprep.subr.mxu0 %v430
    %1346 = vmatpush1.msra.mxu0 %v429
    %1347 = vmatprep.subr.mxu0 %v434
    %1348 = vmatpush1.msra.mxu0 %v433
    %1349 = vmatprep.subr.mxu0 %v438
    %1350 = vmatpush1.msra.mxu0 %v437
    %1351 = vmatprep.subr.mxu0 %v442
    %1352 = vmatpush1.msra.mxu0 %v441
    %1353 = vmatprep.subr.mxu0 %v446
    %1354 = vmatpush1.msra.mxu0 %v445
    %1355 = vmatprep.subr.mxu0 %v450
    %1356 = vmatpush1.msra.mxu0 %v449
    %1357 = vmatprep.subr.mxu0 %v454
    %1358 = vmatpush1.msra.mxu0 %v453
    %1359 = vmatprep.subr.mxu0 %v458
    %1360 = vmatpush1.msra.mxu0 %v457
    %1361 = vmatprep.subr.mxu0 %v462
    %1362 = vmatpush1.msra.mxu0 %v461
    %1363 = vmatprep.subr.mxu0 %v466
    %1364 = vmatpush1.msra.mxu0 %v465
    %1365 = vmatprep.subr.mxu0 %v470
    %1366 = vmatpush1.msra.mxu0 %v469
    %1367 = vmatprep.subr.mxu0 %v474
    %1368 = vmatpush1.msra.mxu0 %v473
    %1369 = vmatprep.subr.mxu0 %v478
    %1370 = vmatpush1.msra.mxu0 %v477
    %1371 = vmatprep.subr.mxu0 %v482
    %1372 = vmatpush1.msra.mxu0 %v481
    %1373 = vmatprep.subr.mxu0 %v486
    %1374 = vmatpush1.msra.mxu0 %v485
    %1375 = vmatprep.subr.mxu0 %v490
    %1376 = vmatpush1.msra.mxu0 %v489
    %1377 = vmatprep.subr.mxu0 %v494
    %1378 = vmatpush1.msra.mxu0 %v493
    %1379 = vmatprep.subr.mxu0 %v498
    %1380 = vmatpush1.msra.mxu0 %v497
    %1381 = vmatprep.mubr.f32.mxu0 %v90
    %1382 = vmatmul.mubr.f32.gmra.mrb[0].mxu0 %v89
    %v1383 = vpop.f32.mrb[0].mxu0
    %v1384 = vadd.f32 %v1307, %v1383
    %v1385 = vpop.f32.mrb[0].mxu0
    %v1386 = vadd.f32 %v1309, %v1385
    %1387 = vmatprep.mubr.f32.mxu0 %v106
    %1388 = vmatmul.mubr.f32.gmra.mrb[0].mxu0 %v105
    %v1389 = vpop.f32.mrb[0].mxu0
    %v1390 = vadd.f32 %v1313, %v1389
    %v1391 = vpop.f32.mrb[0].mxu0
    %v1392 = vadd.f32 %v1315, %v1391
    %1393 = vdwg.mxu0
    %1394 = vmatprep.subr.mxu0 %v502
    %1395 = vmatpush1.msra.mxu0 %v501
    %1396 = vmatprep.subr.mxu0 %v506
    %1397 = vmatpush1.msra.mxu0 %v505
    %1398 = vmatprep.subr.mxu0 %v510
    %1399 = vmatpush1.msra.mxu0 %v509
    %1400 = vmatprep.subr.mxu0 %v514
    %1401 = vmatpush1.msra.mxu0 %v513
    %1402 = vmatprep.subr.mxu0 %v518
    %1403 = vmatpush1.msra.mxu0 %v517
    %1404 = vmatprep.subr.mxu0 %v522
    %1405 = vmatpush1.msra.mxu0 %v521
    %1406 = vmatprep.subr.mxu0 %v526
    %1407 = vmatpush1.msra.mxu0 %v525
    %1408 = vmatprep.subr.mxu0 %v530
    %1409 = vmatpush1.msra.mxu0 %v529
    %1410 = vmatprep.subr.mxu0 %v534
    %1411 = vmatpush1.msra.mxu0 %v533
    %1412 = vmatprep.subr.mxu0 %v538
    %1413 = vmatpush1.msra.mxu0 %v537
    %1414 = vmatprep.subr.mxu0 %v542
    %1415 = vmatpush1.msra.mxu0 %v541
    %1416 = vmatprep.subr.mxu0 %v546
    %1417 = vmatpush1.msra.mxu0 %v545
    %1418 = vmatprep.subr.mxu0 %v550
    %1419 = vmatpush1.msra.mxu0 %v549
    %1420 = vmatprep.subr.mxu0 %v554
    %1421 = vmatpush1.msra.mxu0 %v553
    %1422 = vmatprep.subr.mxu0 %v558
    %1423 = vmatpush1.msra.mxu0 %v557
    %1424 = vmatprep.subr.mxu0 %v562
    %1425 = vmatpush1.msra.mxu0 %v561
    %1426 = vmatprep.subr.mxu0 %v566
    %1427 = vmatpush1.msra.mxu0 %v565
    %1428 = vmatprep.subr.mxu0 %v570
    %1429 = vmatpush1.msra.mxu0 %v569
    %1430 = vmatprep.subr.mxu0 %v574
    %1431 = vmatpush1.msra.mxu0 %v573
    %1432 = vmatprep.subr.mxu0 %v578
    %1433 = vmatpush1.msra.mxu0 %v577
    %1434 = vmatprep.subr.mxu0 %v582
    %1435 = vmatpush1.msra.mxu0 %v581
    %1436 = vmatprep.subr.mxu0 %v586
    %1437 = vmatpush1.msra.mxu0 %v585
    %1438 = vmatprep.subr.mxu0 %v590
    %1439 = vmatpush1.msra.mxu0 %v589
    %1440 = vmatprep.subr.mxu0 %v594
    %1441 = vmatpush1.msra.mxu0 %v593
    %1442 = vmatprep.subr.mxu0 %v598
    %1443 = vmatpush1.msra.mxu0 %v597
    %1444 = vmatprep.subr.mxu0 %v602
    %1445 = vmatpush1.msra.mxu0 %v601
    %1446 = vmatprep.subr.mxu0 %v606
    %1447 = vmatpush1.msra.mxu0 %v605
    %1448 = vmatprep.subr.mxu0 %v610
    %1449 = vmatpush1.msra.mxu0 %v609
    %1450 = vmatprep.subr.mxu0 %v614
    %1451 = vmatpush1.msra.mxu0 %v613
    %1452 = vmatprep.subr.mxu0 %v618
    %1453 = vmatpush1.msra.mxu0 %v617
    %1454 = vmatprep.subr.mxu0 %v622
    %1455 = vmatpush1.msra.mxu0 %v621
    %1456 = vmatprep.subr.mxu0 %v626
    %1457 = vmatpush1.msra.mxu0 %v625
    %1458 = vmatprep.mubr.f32.mxu0 %v92
    %1459 = vmatmul.mubr.f32.gmra.mrb[0].mxu0 %v91
    %v1460 = vpop.f32.mrb[0].mxu0
    %v1461 = vadd.f32 %v1384, %v1460
    %v1462 = vpop.f32.mrb[0].mxu0
    %v1463 = vadd.f32 %v1386, %v1462
    %1464 = vmatprep.mubr.f32.mxu0 %v108
    %1465 = vmatmul.mubr.f32.gmra.mrb[0].mxu0 %v107
    %v1466 = vpop.f32.mrb[0].mxu0
    %v1467 = vadd.f32 %v1390, %v1466
    %v1468 = vpop.f32.mrb[0].mxu0
    %v1469 = vadd.f32 %v1392, %v1468
    %1470 = vdwg.mxu0
    %1471 = vmatprep.subr.mxu0 %v630
    %1472 = vmatpush1.msra.mxu0 %v629
    %1473 = vmatprep.subr.mxu0 %v634
    %1474 = vmatpush1.msra.mxu0 %v633
    %1475 = vmatprep.subr.mxu0 %v638
    %1476 = vmatpush1.msra.mxu0 %v637
    %1477 = vmatprep.subr.mxu0 %v642
    %1478 = vmatpush1.msra.mxu0 %v641
    %1479 = vmatprep.subr.mxu0 %v646
    %1480 = vmatpush1.msra.mxu0 %v645
    %1481 = vmatprep.subr.mxu0 %v650
    %1482 = vmatpush1.msra.mxu0 %v649
    %1483 = vmatprep.subr.mxu0 %v654
    %1484 = vmatpush1.msra.mxu0 %v653
    %1485 = vmatprep.subr.mxu0 %v658
    %1486 = vmatpush1.msra.mxu0 %v657
    %1487 = vmatprep.subr.mxu0 %v662
    %1488 = vmatpush1.msra.mxu0 %v661
    %1489 = vmatprep.subr.mxu0 %v666
    %1490 = vmatpush1.msra.mxu0 %v665
    %1491 = vmatprep.subr.mxu0 %v670
    %1492 = vmatpush1.msra.mxu0 %v669
    %1493 = vmatprep.subr.mxu0 %v674
    %1494 = vmatpush1.msra.mxu0 %v673
    %1495 = vmatprep.subr.mxu0 %v678
    %1496 = vmatpush1.msra.mxu0 %v677
    %1497 = vmatprep.subr.mxu0 %v682
    %1498 = vmatpush1.msra.mxu0 %v681
    %1499 = vmatprep.subr.mxu0 %v686
    %1500 = vmatpush1.msra.mxu0 %v685
    %1501 = vmatprep.subr.mxu0 %v690
    %1502 = vmatpush1.msra.mxu0 %v689
    %1503 = vmatprep.subr.mxu0 %v694
    %1504 = vmatpush1.msra.mxu0 %v693
    %1505 = vmatprep.subr.mxu0 %v698
    %1506 = vmatpush1.msra.mxu0 %v697
    %1507 = vmatprep.subr.mxu0 %v702
    %1508 = vmatpush1.msra.mxu0 %v701
    %1509 = vmatprep.subr.mxu0 %v706
    %1510 = vmatpush1.msra.mxu0 %v705
    %1511 = vmatprep.subr.mxu0 %v710
    %1512 = vmatpush1.msra.mxu0 %v709
    %1513 = vmatprep.subr.mxu0 %v714
    %1514 = vmatpush1.msra.mxu0 %v713
    %1515 = vmatprep.subr.mxu0 %v718
    %1516 = vmatpush1.msra.mxu0 %v717
    %1517 = vmatprep.subr.mxu0 %v722
    %1518 = vmatpush1.msra.mxu0 %v721
    %1519 = vmatprep.subr.mxu0 %v726
    %1520 = vmatpush1.msra.mxu0 %v725
    %1521 = vmatprep.subr.mxu0 %v730
    %1522 = vmatpush1.msra.mxu0 %v729
    %1523 = vmatprep.subr.mxu0 %v734
    %1524 = vmatpush1.msra.mxu0 %v733
    %1525 = vmatprep.subr.mxu0 %v738
    %1526 = vmatpush1.msra.mxu0 %v737
    %1527 = vmatprep.subr.mxu0 %v742
    %1528 = vmatpush1.msra.mxu0 %v741
    %1529 = vmatprep.subr.mxu0 %v746
    %1530 = vmatpush1.msra.mxu0 %v745
    %1531 = vmatprep.subr.mxu0 %v750
    %1532 = vmatpush1.msra.mxu0 %v749
    %1533 = vmatprep.subr.mxu0 %v754
    %1534 = vmatpush1.msra.mxu0 %v753
    %1535 = vmatprep.mubr.f32.mxu0 %v94
    %1536 = vmatmul.mubr.f32.gmra.mrb[0].mxu0 %v93
    %v1537 = vpop.f32.mrb[0].mxu0
    %v1538 = vadd.f32 %v1461, %v1537
    %v1539 = vpop.f32.mrb[0].mxu0
    %v1540 = vadd.f32 %v1463, %v1539
    %1541 = vmatprep.mubr.f32.mxu0 %v110
    %1542 = vmatmul.mubr.f32.gmra.mrb[0].mxu0 %v109
    %v1543 = vpop.f32.mrb[0].mxu0
    %v1544 = vadd.f32 %v1467, %v1543
    %v1545 = vpop.f32.mrb[0].mxu0
    %v1546 = vadd.f32 %v1469, %v1545
    %1547 = vdwg.mxu0
    %1548 = vmatprep.subr.mxu0 %v758
    %1549 = vmatpush1.msra.mxu0 %v757
    %1550 = vmatprep.subr.mxu0 %v762
    %1551 = vmatpush1.msra.mxu0 %v761
    %1552 = vmatprep.subr.mxu0 %v766
    %1553 = vmatpush1.msra.mxu0 %v765
    %1554 = vmatprep.subr.mxu0 %v770
    %1555 = vmatpush1.msra.mxu0 %v769
    %1556 = vmatprep.subr.mxu0 %v774
    %1557 = vmatpush1.msra.mxu0 %v773
    %1558 = vmatprep.subr.mxu0 %v778
    %1559 = vmatpush1.msra.mxu0 %v777
    %1560 = vmatprep.subr.mxu0 %v782
    %1561 = vmatpush1.msra.mxu0 %v781
    %1562 = vmatprep.subr.mxu0 %v786
    %1563 = vmatpush1.msra.mxu0 %v785
    %1564 = vmatprep.subr.mxu0 %v790
    %1565 = vmatpush1.msra.mxu0 %v789
    %1566 = vmatprep.subr.mxu0 %v794
    %1567 = vmatpush1.msra.mxu0 %v793
    %1568 = vmatprep.subr.mxu0 %v798
    %1569 = vmatpush1.msra.mxu0 %v797
    %1570 = vmatprep.subr.mxu0 %v802
    %1571 = vmatpush1.msra.mxu0 %v801
    %1572 = vmatprep.subr.mxu0 %v806
    %1573 = vmatpush1.msra.mxu0 %v805
    %1574 = vmatprep.subr.mxu0 %v810
    %1575 = vmatpush1.msra.mxu0 %v809
    %1576 = vmatprep.subr.mxu0 %v814
    %1577 = vmatpush1.msra.mxu0 %v813
    %1578 = vmatprep.subr.mxu0 %v818
    %1579 = vmatpush1.msra.mxu0 %v817
    %1580 = vmatprep.subr.mxu0 %v822
    %1581 = vmatpush1.msra.mxu0 %v821
    %1582 = vmatprep.subr.mxu0 %v826
    %1583 = vmatpush1.msra.mxu0 %v825
    %1584 = vmatprep.subr.mxu0 %v830
    %1585 = vmatpush1.msra.mxu0 %v829
    %1586 = vmatprep.subr.mxu0 %v834
    %1587 = vmatpush1.msra.mxu0 %v833
    %1588 = vmatprep.subr.mxu0 %v838
    %1589 = vmatpush1.msra.mxu0 %v837
    %1590 = vmatprep.subr.mxu0 %v842
    %1591 = vmatpush1.msra.mxu0 %v841
    %1592 = vmatprep.subr.mxu0 %v846
    %1593 = vmatpush1.msra.mxu0 %v845
    %1594 = vmatprep.subr.mxu0 %v850
    %1595 = vmatpush1.msra.mxu0 %v849
    %1596 = vmatprep.subr.mxu0 %v854
    %1597 = vmatpush1.msra.mxu0 %v853
    %1598 = vmatprep.subr.mxu0 %v858
    %1599 = vmatpush1.msra.mxu0 %v857
    %1600 = vmatprep.subr.mxu0 %v862
    %1601 = vmatpush1.msra.mxu0 %v861
    %1602 = vmatprep.subr.mxu0 %v866
    %1603 = vmatpush1.msra.mxu0 %v865
    %1604 = vmatprep.subr.mxu0 %v870
    %1605 = vmatpush1.msra.mxu0 %v869
    %1606 = vmatprep.subr.mxu0 %v874
    %1607 = vmatpush1.msra.mxu0 %v873
    %1608 = vmatprep.subr.mxu0 %v878
    %1609 = vmatpush1.msra.mxu0 %v877
    %1610 = vmatprep.subr.mxu0 %v882
    %1611 = vmatpush1.msra.mxu0 %v881
    %1612 = vmatprep.mubr.f32.mxu0 %v96
    %1613 = vmatmul.mubr.f32.gmra.mrb[0].mxu0 %v95
    %v1614 = vpop.f32.mrb[0].mxu0
    %v1615 = vadd.f32 %v1538, %v1614
    %v1616 = vpop.f32.mrb[0].mxu0
    %v1617 = vadd.f32 %v1540, %v1616
    %1618 = vmatprep.mubr.f32.mxu0 %v112
    %1619 = vmatmul.mubr.f32.gmra.mrb[0].mxu0 %v111
    %v1620 = vpop.f32.mrb[0].mxu0
    %v1621 = vadd.f32 %v1544, %v1620
    %v1622 = vpop.f32.mrb[0].mxu0
    %v1623 = vadd.f32 %v1546, %v1622
    %1624 = vdwg.mxu0
    %1625 = vmatprep.subr.mxu0 %v886
    %1626 = vmatpush1.msra.mxu0 %v885
    %1627 = vmatprep.subr.mxu0 %v890
    %1628 = vmatpush1.msra.mxu0 %v889
    %1629 = vmatprep.subr.mxu0 %v894
    %1630 = vmatpush1.msra.mxu0 %v893
    %1631 = vmatprep.subr.mxu0 %v898
    %1632 = vmatpush1.msra.mxu0 %v897
    %1633 = vmatprep.subr.mxu0 %v902
    %1634 = vmatpush1.msra.mxu0 %v901
    %1635 = vmatprep.subr.mxu0 %v906
    %1636 = vmatpush1.msra.mxu0 %v905
    %1637 = vmatprep.subr.mxu0 %v910
    %1638 = vmatpush1.msra.mxu0 %v909
    %1639 = vmatprep.subr.mxu0 %v914
    %1640 = vmatpush1.msra.mxu0 %v913
    %1641 = vmatprep.subr.mxu0 %v918
    %1642 = vmatpush1.msra.mxu0 %v917
    %1643 = vmatprep.subr.mxu0 %v922
    %1644 = vmatpush1.msra.mxu0 %v921
    %1645 = vmatprep.subr.mxu0 %v926
    %1646 = vmatpush1.msra.mxu0 %v925
    %1647 = vmatprep.subr.mxu0 %v930
    %1648 = vmatpush1.msra.mxu0 %v929
    %1649 = vmatprep.subr.mxu0 %v934
    %1650 = vmatpush1.msra.mxu0 %v933
    %1651 = vmatprep.subr.mxu0 %v938
    %1652 = vmatpush1.msra.mxu0 %v937
    %1653 = vmatprep.subr.mxu0 %v942
    %1654 = vmatpush1.msra.mxu0 %v941
    %1655 = vmatprep.subr.mxu0 %v946
    %1656 = vmatpush1.msra.mxu0 %v945
    %1657 = vmatprep.subr.mxu0 %v950
    %1658 = vmatpush1.msra.mxu0 %v949
    %1659 = vmatprep.subr.mxu0 %v954
    %1660 = vmatpush1.msra.mxu0 %v953
    %1661 = vmatprep.subr.mxu0 %v958
    %1662 = vmatpush1.msra.mxu0 %v957
    %1663 = vmatprep.subr.mxu0 %v962
    %1664 = vmatpush1.msra.mxu0 %v961
    %1665 = vmatprep.subr.mxu0 %v966
    %1666 = vmatpush1.msra.mxu0 %v965
    %1667 = vmatprep.subr.mxu0 %v970
    %1668 = vmatpush1.msra.mxu0 %v969
    %1669 = vmatprep.subr.mxu0 %v974
    %1670 = vmatpush1.msra.mxu0 %v973
    %1671 = vmatprep.subr.mxu0 %v978
    %1672 = vmatpush1.msra.mxu0 %v977
    %1673 = vmatprep.subr.mxu0 %v982
    %1674 = vmatpush1.msra.mxu0 %v981
    %1675 = vmatprep.subr.mxu0 %v986
    %1676 = vmatpush1.msra.mxu0 %v985
    %1677 = vmatprep.subr.mxu0 %v990
    %1678 = vmatpush1.msra.mxu0 %v989
    %1679 = vmatprep.subr.mxu0 %v994
    %1680 = vmatpush1.msra.mxu0 %v993
    %1681 = vmatprep.subr.mxu0 %v998
    %1682 = vmatpush1.msra.mxu0 %v997
    %1683 = vmatprep.subr.mxu0 %v1002
    %1684 = vmatpush1.msra.mxu0 %v1001
    %1685 = vmatprep.subr.mxu0 %v1006
    %1686 = vmatpush1.msra.mxu0 %v1005
    %1687 = vmatprep.subr.mxu0 %v1010
    %1688 = vmatpush1.msra.mxu0 %v1009
    %1689 = vmatprep.mubr.f32.mxu0 %v98
    %1690 = vmatmul.mubr.f32.gmra.mrb[0].mxu0 %v97
    %v1691 = vpop.f32.mrb[0].mxu0
    %v1692 = vadd.f32 %v1615, %v1691
    %v1693 = vpop.f32.mrb[0].mxu0
    %v1694 = vadd.f32 %v1617, %v1693
    %1695 = vmatprep.mubr.f32.mxu0 %v114
    %1696 = vmatmul.mubr.f32.gmra.mrb[0].mxu0 %v113
    %v1697 = vpop.f32.mrb[0].mxu0
    %v1698 = vadd.f32 %v1621, %v1697
    %v1699 = vpop.f32.mrb[0].mxu0
    %v1700 = vadd.f32 %v1623, %v1699
    %1701 = vdwg.mxu0
    %1702 = vmatprep.subr.mxu0 %v1014
    %1703 = vmatpush1.msra.mxu0 %v1013
    %1704 = vmatprep.subr.mxu0 %v1018
    %1705 = vmatpush1.msra.mxu0 %v1017
    %1706 = vmatprep.subr.mxu0 %v1022
    %1707 = vmatpush1.msra.mxu0 %v1021
    %1708 = vmatprep.subr.mxu0 %v1026
    %1709 = vmatpush1.msra.mxu0 %v1025
    %1710 = vmatprep.subr.mxu0 %v1030
    %1711 = vmatpush1.msra.mxu0 %v1029
    %1712 = vmatprep.subr.mxu0 %v1034
    %1713 = vmatpush1.msra.mxu0 %v1033
    %1714 = vmatprep.subr.mxu0 %v1038
    %1715 = vmatpush1.msra.mxu0 %v1037
    %1716 = vmatprep.subr.mxu0 %v1042
    %1717 = vmatpush1.msra.mxu0 %v1041
    %1718 = vmatprep.subr.mxu0 %v1046
    %1719 = vmatpush1.msra.mxu0 %v1045
    %1720 = vmatprep.subr.mxu0 %v1050
    %1721 = vmatpush1.msra.mxu0 %v1049
    %1722 = vmatprep.subr.mxu0 %v1054
    %1723 = vmatpush1.msra.mxu0 %v1053
    %1724 = vmatprep.subr.mxu0 %v1058
    %1725 = vmatpush1.msra.mxu0 %v1057
    %1726 = vmatprep.subr.mxu0 %v1062
    %1727 = vmatpush1.msra.mxu0 %v1061
    %1728 = vmatprep.subr.mxu0 %v1066
    %1729 = vmatpush1.msra.mxu0 %v1065
    %1730 = vmatprep.subr.mxu0 %v1070
    %1731 = vmatpush1.msra.mxu0 %v1069
    %1732 = vmatprep.subr.mxu0 %v1074
    %1733 = vmatpush1.msra.mxu0 %v1073
    %1734 = vmatprep.subr.mxu0 %v1078
    %1735 = vmatpush1.msra.mxu0 %v1077
    %1736 = vmatprep.subr.mxu0 %v1082
    %1737 = vmatpush1.msra.mxu0 %v1081
    %1738 = vmatprep.subr.mxu0 %v1086
    %1739 = vmatpush1.msra.mxu0 %v1085
    %1740 = vmatprep.subr.mxu0 %v1090
    %1741 = vmatpush1.msra.mxu0 %v1089
    %1742 = vmatprep.subr.mxu0 %v1094
    %1743 = vmatpush1.msra.mxu0 %v1093
    %1744 = vmatprep.subr.mxu0 %v1098
    %1745 = vmatpush1.msra.mxu0 %v1097
    %1746 = vmatprep.subr.mxu0 %v1102
    %1747 = vmatpush1.msra.mxu0 %v1101
    %1748 = vmatprep.subr.mxu0 %v1106
    %1749 = vmatpush1.msra.mxu0 %v1105
    %1750 = vmatprep.subr.mxu0 %v1110
    %1751 = vmatpush1.msra.mxu0 %v1109
    %1752 = vmatprep.subr.mxu0 %v1114
    %1753 = vmatpush1.msra.mxu0 %v1113
    %1754 = vmatprep.subr.mxu0 %v1118
    %1755 = vmatpush1.msra.mxu0 %v1117
    %1756 = vmatprep.subr.mxu0 %v1122
    %1757 = vmatpush1.msra.mxu0 %v1121
    %1758 = vmatprep.subr.mxu0 %v1126
    %1759 = vmatpush1.msra.mxu0 %v1125
    %1760 = vmatprep.subr.mxu0 %v1130
    %1761 = vmatpush1.msra.mxu0 %v1129
    %1762 = vmatprep.subr.mxu0 %v1134
    %1763 = vmatpush1.msra.mxu0 %v1133
    %1764 = vmatprep.subr.mxu0 %v1138
    %1765 = vmatpush1.msra.mxu0 %v1137
    %1766 = vmatprep.mubr.f32.mxu0 %v100
    %1767 = vmatmul.mubr.f32.gmra.mrb[0].mxu0 %v99
    %v1768 = vpop.f32.mrb[0].mxu0
    %v1769 = vadd.f32 %v1692, %v1768
    %v1770 = vpop.f32.mrb[0].mxu0
    %v1771 = vadd.f32 %v1694, %v1770
    %1772 = vmatprep.mubr.f32.mxu0 %v116
    %1773 = vmatmul.mubr.f32.gmra.mrb[0].mxu0 %v115
    %v1774 = vpop.f32.mrb[0].mxu0
    %v1775 = vadd.f32 %v1698, %v1774
    %v1776 = vpop.f32.mrb[0].mxu0
    %v1777 = vadd.f32 %v1700, %v1776
    %1778 = vdwg.mxu0
    %1779 = vmatprep.subr.mxu0 %v120
    %1780 = vmatpush1.msra.mxu0 %v119
    %1781 = vmatprep.subr.mxu0 %v124
    %1782 = vmatpush1.msra.mxu0 %v123
    %1783 = vmatprep.subr.mxu0 %v128
    %1784 = vmatpush1.msra.mxu0 %v127
    %1785 = vmatprep.subr.mxu0 %v132
    %1786 = vmatpush1.msra.mxu0 %v131
    %1787 = vmatprep.subr.mxu0 %v136
    %1788 = vmatpush1.msra.mxu0 %v135
    %1789 = vmatprep.subr.mxu0 %v140
    %1790 = vmatpush1.msra.mxu0 %v139
    %1791 = vmatprep.subr.mxu0 %v144
    %1792 = vmatpush1.msra.mxu0 %v143
    %1793 = vmatprep.subr.mxu0 %v148
    %1794 = vmatpush1.msra.mxu0 %v147
    %1795 = vmatprep.subr.mxu0 %v152
    %1796 = vmatpush1.msra.mxu0 %v151
    %1797 = vmatprep.subr.mxu0 %v156
    %1798 = vmatpush1.msra.mxu0 %v155
    %1799 = vmatprep.subr.mxu0 %v160
    %1800 = vmatpush1.msra.mxu0 %v159
    %1801 = vmatprep.subr.mxu0 %v164
    %1802 = vmatpush1.msra.mxu0 %v163
    %1803 = vmatprep.subr.mxu0 %v168
    %1804 = vmatpush1.msra.mxu0 %v167
    %1805 = vmatprep.subr.mxu0 %v172
    %1806 = vmatpush1.msra.mxu0 %v171
    %1807 = vmatprep.subr.mxu0 %v176
    %1808 = vmatpush1.msra.mxu0 %v175
    %1809 = vmatprep.subr.mxu0 %v180
    %1810 = vmatpush1.msra.mxu0 %v179
    %1811 = vmatprep.subr.mxu0 %v184
    %1812 = vmatpush1.msra.mxu0 %v183
    %1813 = vmatprep.subr.mxu0 %v188
    %1814 = vmatpush1.msra.mxu0 %v187
    %1815 = vmatprep.subr.mxu0 %v192
    %1816 = vmatpush1.msra.mxu0 %v191
    %1817 = vmatprep.subr.mxu0 %v196
    %1818 = vmatpush1.msra.mxu0 %v195
    %1819 = vmatprep.subr.mxu0 %v200
    %1820 = vmatpush1.msra.mxu0 %v199
    %1821 = vmatprep.subr.mxu0 %v204
    %1822 = vmatpush1.msra.mxu0 %v203
    %1823 = vmatprep.subr.mxu0 %v208
    %1824 = vmatpush1.msra.mxu0 %v207
    %1825 = vmatprep.subr.mxu0 %v212
    %1826 = vmatpush1.msra.mxu0 %v211
    %1827 = vmatprep.subr.mxu0 %v216
    %1828 = vmatpush1.msra.mxu0 %v215
    %1829 = vmatprep.subr.mxu0 %v220
    %1830 = vmatpush1.msra.mxu0 %v219
    %1831 = vmatprep.subr.mxu0 %v224
    %1832 = vmatpush1.msra.mxu0 %v223
    %1833 = vmatprep.subr.mxu0 %v228
    %1834 = vmatpush1.msra.mxu0 %v227
    %1835 = vmatprep.subr.mxu0 %v232
    %1836 = vmatpush1.msra.mxu0 %v231
    %1837 = vmatprep.subr.mxu0 %v236
    %1838 = vmatpush1.msra.mxu0 %v235
    %1839 = vmatprep.subr.mxu0 %v240
    %1840 = vmatpush1.msra.mxu0 %v239
    %1841 = vmatprep.subr.mxu0 %v244
    %1842 = vmatpush1.msra.mxu0 %v243
    %1843 = vmatprep.mubr.f32.mxu0 %v86
    %1844 = vmatmul.mubr.f32.gmra.mrb[0].mxu0 %v85
    %v1845 = vpop.f32.mrb[0].mxu0
    %v1846 = vadd.f32 %v1154, %v1845
    %v1847 = vpop.f32.mrb[0].mxu0
    %v1848 = vadd.f32 %v1158, %v1847
    %1849 = vmatprep.mubr.f32.mxu0 %v102
    %1850 = vmatmul.mubr.f32.gmra.mrb[0].mxu0 %v101
    %v1851 = vpop.f32.mrb[0].mxu0
    %v1852 = vadd.f32 %v1154, %v1851
    %v1853 = vpop.f32.mrb[0].mxu0
    %v1854 = vadd.f32 %v1158, %v1853
    %1855 = vdwg.mxu0
    %1856 = vmatprep.subr.mxu0 %v248
    %1857 = vmatpush1.msra.mxu0 %v247
    %1858 = vmatprep.subr.mxu0 %v252
    %1859 = vmatpush1.msra.mxu0 %v251
    %1860 = vmatprep.subr.mxu0 %v256
    %1861 = vmatpush1.msra.mxu0 %v255
    %1862 = vmatprep.subr.mxu0 %v260
    %1863 = vmatpush1.msra.mxu0 %v259
    %1864 = vmatprep.subr.mxu0 %v264
    %1865 = vmatpush1.msra.mxu0 %v263
    %1866 = vmatprep.subr.mxu0 %v268
    %1867 = vmatpush1.msra.mxu0 %v267
    %1868 = vmatprep.subr.mxu0 %v272
    %1869 = vmatpush1.msra.mxu0 %v271
    %1870 = vmatprep.subr.mxu0 %v276
    %1871 = vmatpush1.msra.mxu0 %v275
    %1872 = vmatprep.subr.mxu0 %v280
    %1873 = vmatpush1.msra.mxu0 %v279
    %1874 = vmatprep.subr.mxu0 %v284
    %1875 = vmatpush1.msra.mxu0 %v283
    %1876 = vmatprep.subr.mxu0 %v288
    %1877 = vmatpush1.msra.mxu0 %v287
    %1878 = vmatprep.subr.mxu0 %v292
    %1879 = vmatpush1.msra.mxu0 %v291
    %1880 = vmatprep.subr.mxu0 %v296
    %1881 = vmatpush1.msra.mxu0 %v295
    %1882 = vmatprep.subr.mxu0 %v300
    %1883 = vmatpush1.msra.mxu0 %v299
    %1884 = vmatprep.subr.mxu0 %v304
    %1885 = vmatpush1.msra.mxu0 %v303
    %1886 = vmatprep.subr.mxu0 %v308
    %1887 = vmatpush1.msra.mxu0 %v307
    %1888 = vmatprep.subr.mxu0 %v312
    %1889 = vmatpush1.msra.mxu0 %v311
    %1890 = vmatprep.subr.mxu0 %v316
    %1891 = vmatpush1.msra.mxu0 %v315
    %1892 = vmatprep.subr.mxu0 %v320
    %1893 = vmatpush1.msra.mxu0 %v319
    %1894 = vmatprep.subr.mxu0 %v324
    %1895 = vmatpush1.msra.mxu0 %v323
    %1896 = vmatprep.subr.mxu0 %v328
    %1897 = vmatpush1.msra.mxu0 %v327
    %1898 = vmatprep.subr.mxu0 %v332
    %1899 = vmatpush1.msra.mxu0 %v331
    %1900 = vmatprep.subr.mxu0 %v336
    %1901 = vmatpush1.msra.mxu0 %v335
    %1902 = vmatprep.subr.mxu0 %v340
    %1903 = vmatpush1.msra.mxu0 %v339
    %1904 = vmatprep.subr.mxu0 %v344
    %1905 = vmatpush1.msra.mxu0 %v343
    %1906 = vmatprep.subr.mxu0 %v348
    %1907 = vmatpush1.msra.mxu0 %v347
    %1908 = vmatprep.subr.mxu0 %v352
    %1909 = vmatpush1.msra.mxu0 %v351
    %1910 = vmatprep.subr.mxu0 %v356
    %1911 = vmatpush1.msra.mxu0 %v355
    %1912 = vmatprep.subr.mxu0 %v360
    %1913 = vmatpush1.msra.mxu0 %v359
    %1914 = vmatprep.subr.mxu0 %v364
    %1915 = vmatpush1.msra.mxu0 %v363
    %1916 = vmatprep.subr.mxu0 %v368
    %1917 = vmatpush1.msra.mxu0 %v367
    %1918 = vmatprep.subr.mxu0 %v372
    %1919 = vmatpush1.msra.mxu0 %v371
    %1920 = vmatprep.mubr.f32.mxu0 %v88
    %1921 = vmatmul.mubr.f32.gmra.mrb[0].mxu0 %v87
    %v1922 = vpop.f32.mrb[0].mxu0
    %v1923 = vadd.f32 %v1846, %v1922
    %v1924 = vpop.f32.mrb[0].mxu0
    %v1925 = vadd.f32 %v1848, %v1924
    %1926 = vmatprep.mubr.f32.mxu0 %v104
    %1927 = vmatmul.mubr.f32.gmra.mrb[0].mxu0 %v103
    %v1928 = vpop.f32.mrb[0].mxu0
    %v1929 = vadd.f32 %v1852, %v1928
    %v1930 = vpop.f32.mrb[0].mxu0
    %v1931 = vadd.f32 %v1854, %v1930
    %1932 = vdwg.mxu0
    %1933 = vmatprep.subr.mxu0 %v376
    %1934 = vmatpush1.msra.mxu0 %v375
    %1935 = vmatprep.subr.mxu0 %v380
    %1936 = vmatpush1.msra.mxu0 %v379
    %1937 = vmatprep.subr.mxu0 %v384
    %1938 = vmatpush1.msra.mxu0 %v383
    %1939 = vmatprep.subr.mxu0 %v388
    %1940 = vmatpush1.msra.mxu0 %v387
    %1941 = vmatprep.subr.mxu0 %v392
    %1942 = vmatpush1.msra.mxu0 %v391
    %1943 = vmatprep.subr.mxu0 %v396
    %1944 = vmatpush1.msra.mxu0 %v395
    %1945 = vmatprep.subr.mxu0 %v400
    %1946 = vmatpush1.msra.mxu0 %v399
    %1947 = vmatprep.subr.mxu0 %v404
    %1948 = vmatpush1.msra.mxu0 %v403
    %1949 = vmatprep.subr.mxu0 %v408
    %1950 = vmatpush1.msra.mxu0 %v407
    %1951 = vmatprep.subr.mxu0 %v412
    %1952 = vmatpush1.msra.mxu0 %v411
    %1953 = vmatprep.subr.mxu0 %v416
    %1954 = vmatpush1.msra.mxu0 %v415
    %1955 = vmatprep.subr.mxu0 %v420
    %1956 = vmatpush1.msra.mxu0 %v419
    %1957 = vmatprep.subr.mxu0 %v424
    %1958 = vmatpush1.msra.mxu0 %v423
    %1959 = vmatprep.subr.mxu0 %v428
    %1960 = vmatpush1.msra.mxu0 %v427
    %1961 = vmatprep.subr.mxu0 %v432
    %1962 = vmatpush1.msra.mxu0 %v431
    %1963 = vmatprep.subr.mxu0 %v436
    %1964 = vmatpush1.msra.mxu0 %v435
    %1965 = vmatprep.subr.mxu0 %v440
    %1966 = vmatpush1.msra.mxu0 %v439
    %1967 = vmatprep.subr.mxu0 %v444
    %1968 = vmatpush1.msra.mxu0 %v443
    %1969 = vmatprep.subr.mxu0 %v448
    %1970 = vmatpush1.msra.mxu0 %v447
    %1971 = vmatprep.subr.mxu0 %v452
    %1972 = vmatpush1.msra.mxu0 %v451
    %1973 = vmatprep.subr.mxu0 %v456
    %1974 = vmatpush1.msra.mxu0 %v455
    %1975 = vmatprep.subr.mxu0 %v460
    %1976 = vmatpush1.msra.mxu0 %v459
    %1977 = vmatprep.subr.mxu0 %v464
    %1978 = vmatpush1.msra.mxu0 %v463
    %1979 = vmatprep.subr.mxu0 %v468
    %1980 = vmatpush1.msra.mxu0 %v467
    %1981 = vmatprep.subr.mxu0 %v472
    %1982 = vmatpush1.msra.mxu0 %v471
    %1983 = vmatprep.subr.mxu0 %v476
    %1984 = vmatpush1.msra.mxu0 %v475
    %1985 = vmatprep.subr.mxu0 %v480
    %1986 = vmatpush1.msra.mxu0 %v479
    %1987 = vmatprep.subr.mxu0 %v484
    %1988 = vmatpush1.msra.mxu0 %v483
    %1989 = vmatprep.subr.mxu0 %v488
    %1990 = vmatpush1.msra.mxu0 %v487
    %1991 = vmatprep.subr.mxu0 %v492
    %1992 = vmatpush1.msra.mxu0 %v491
    %1993 = vmatprep.subr.mxu0 %v496
    %1994 = vmatpush1.msra.mxu0 %v495
    %1995 = vmatprep.subr.mxu0 %v500
    %1996 = vmatpush1.msra.mxu0 %v499
    %1997 = vmatprep.mubr.f32.mxu0 %v90
    %1998 = vmatmul.mubr.f32.gmra.mrb[0].mxu0 %v89
    %v1999 = vpop.f32.mrb[0].mxu0
    %v2000 = vadd.f32 %v1923, %v1999
    %v2001 = vpop.f32.mrb[0].mxu0
    %v2002 = vadd.f32 %v1925, %v2001
    %2003 = vmatprep.mubr.f32.mxu0 %v106
    %2004 = vmatmul.mubr.f32.gmra.mrb[0].mxu0 %v105
    %v2005 = vpop.f32.mrb[0].mxu0
    %v2006 = vadd.f32 %v1929, %v2005
    %v2007 = vpop.f32.mrb[0].mxu0
    %v2008 = vadd.f32 %v1931, %v2007
    %2009 = vdwg.mxu0
    %2010 = vmatprep.subr.mxu0 %v504
    %2011 = vmatpush1.msra.mxu0 %v503
    %2012 = vmatprep.subr.mxu0 %v508
    %2013 = vmatpush1.msra.mxu0 %v507
    %2014 = vmatprep.subr.mxu0 %v512
    %2015 = vmatpush1.msra.mxu0 %v511
    %2016 = vmatprep.subr.mxu0 %v516
    %2017 = vmatpush1.msra.mxu0 %v515
    %2018 = vmatprep.subr.mxu0 %v520
    %2019 = vmatpush1.msra.mxu0 %v519
    %2020 = vmatprep.subr.mxu0 %v524
    %2021 = vmatpush1.msra.mxu0 %v523
    %2022 = vmatprep.subr.mxu0 %v528
    %2023 = vmatpush1.msra.mxu0 %v527
    %2024 = vmatprep.subr.mxu0 %v532
    %2025 = vmatpush1.msra.mxu0 %v531
    %2026 = vmatprep.subr.mxu0 %v536
    %2027 = vmatpush1.msra.mxu0 %v535
    %2028 = vmatprep.subr.mxu0 %v540
    %2029 = vmatpush1.msra.mxu0 %v539
    %2030 = vmatprep.subr.mxu0 %v544
    %2031 = vmatpush1.msra.mxu0 %v543
    %2032 = vmatprep.subr.mxu0 %v548
    %2033 = vmatpush1.msra.mxu0 %v547
    %2034 = vmatprep.subr.mxu0 %v552
    %2035 = vmatpush1.msra.mxu0 %v551
    %2036 = vmatprep.subr.mxu0 %v556
    %2037 = vmatpush1.msra.mxu0 %v555
    %2038 = vmatprep.subr.mxu0 %v560
    %2039 = vmatpush1.msra.mxu0 %v559
    %2040 = vmatprep.subr.mxu0 %v564
    %2041 = vmatpush1.msra.mxu0 %v563
    %2042 = vmatprep.subr.mxu0 %v568
    %2043 = vmatpush1.msra.mxu0 %v567
    %2044 = vmatprep.subr.mxu0 %v572
    %2045 = vmatpush1.msra.mxu0 %v571
    %2046 = vmatprep.subr.mxu0 %v576
    %2047 = vmatpush1.msra.mxu0 %v575
    %2048 = vmatprep.subr.mxu0 %v580
    %2049 = vmatpush1.msra.mxu0 %v579
    %2050 = vmatprep.subr.mxu0 %v584
    %2051 = vmatpush1.msra.mxu0 %v583
    %2052 = vmatprep.subr.mxu0 %v588
    %2053 = vmatpush1.msra.mxu0 %v587
    %2054 = vmatprep.subr.mxu0 %v592
    %2055 = vmatpush1.msra.mxu0 %v591
    %2056 = vmatprep.subr.mxu0 %v596
    %2057 = vmatpush1.msra.mxu0 %v595
    %2058 = vmatprep.subr.mxu0 %v600
    %2059 = vmatpush1.msra.mxu0 %v599
    %2060 = vmatprep.subr.mxu0 %v604
    %2061 = vmatpush1.msra.mxu0 %v603
    %2062 = vmatprep.subr.mxu0 %v608
    %2063 = vmatpush1.msra.mxu0 %v607
    %2064 = vmatprep.subr.mxu0 %v612
    %2065 = vmatpush1.msra.mxu0 %v611
    %2066 = vmatprep.subr.mxu0 %v616
    %2067 = vmatpush1.msra.mxu0 %v615
    %2068 = vmatprep.subr.mxu0 %v620
    %2069 = vmatpush1.msra.mxu0 %v619
    %2070 = vmatprep.subr.mxu0 %v624
    %2071 = vmatpush1.msra.mxu0 %v623
    %2072 = vmatprep.subr.mxu0 %v628
    %2073 = vmatpush1.msra.mxu0 %v627
    %2074 = vmatprep.mubr.f32.mxu0 %v92
    %2075 = vmatmul.mubr.f32.gmra.mrb[0].mxu0 %v91
    %v2076 = vpop.f32.mrb[0].mxu0
    %v2077 = vadd.f32 %v2000, %v2076
    %v2078 = vpop.f32.mrb[0].mxu0
    %v2079 = vadd.f32 %v2002, %v2078
    %2080 = vmatprep.mubr.f32.mxu0 %v108
    %2081 = vmatmul.mubr.f32.gmra.mrb[0].mxu0 %v107
    %v2082 = vpop.f32.mrb[0].mxu0
    %v2083 = vadd.f32 %v2006, %v2082
    %v2084 = vpop.f32.mrb[0].mxu0
    %v2085 = vadd.f32 %v2008, %v2084
    %2086 = vdwg.mxu0
    %2087 = vmatprep.subr.mxu0 %v632
    %2088 = vmatpush1.msra.mxu0 %v631
    %2089 = vmatprep.subr.mxu0 %v636
    %2090 = vmatpush1.msra.mxu0 %v635
    %2091 = vmatprep.subr.mxu0 %v640
    %2092 = vmatpush1.msra.mxu0 %v639
    %2093 = vmatprep.subr.mxu0 %v644
    %2094 = vmatpush1.msra.mxu0 %v643
    %2095 = vmatprep.subr.mxu0 %v648
    %2096 = vmatpush1.msra.mxu0 %v647
    %2097 = vmatprep.subr.mxu0 %v652
    %2098 = vmatpush1.msra.mxu0 %v651
    %2099 = vmatprep.subr.mxu0 %v656
    %2100 = vmatpush1.msra.mxu0 %v655
    %2101 = vmatprep.subr.mxu0 %v660
    %2102 = vmatpush1.msra.mxu0 %v659
    %2103 = vmatprep.subr.mxu0 %v664
    %2104 = vmatpush1.msra.mxu0 %v663
    %2105 = vmatprep.subr.mxu0 %v668
    %2106 = vmatpush1.msra.mxu0 %v667
    %2107 = vmatprep.subr.mxu0 %v672
    %2108 = vmatpush1.msra.mxu0 %v671
    %2109 = vmatprep.subr.mxu0 %v676
    %2110 = vmatpush1.msra.mxu0 %v675
    %2111 = vmatprep.subr.mxu0 %v680
    %2112 = vmatpush1.msra.mxu0 %v679
    %2113 = vmatprep.subr.mxu0 %v684
    %2114 = vmatpush1.msra.mxu0 %v683
    %2115 = vmatprep.subr.mxu0 %v688
    %2116 = vmatpush1.msra.mxu0 %v687
    %2117 = vmatprep.subr.mxu0 %v692
    %2118 = vmatpush1.msra.mxu0 %v691
    %2119 = vmatprep.subr.mxu0 %v696
    %2120 = vmatpush1.msra.mxu0 %v695
    %2121 = vmatprep.subr.mxu0 %v700
    %2122 = vmatpush1.msra.mxu0 %v699
    %2123 = vmatprep.subr.mxu0 %v704
    %2124 = vmatpush1.msra.mxu0 %v703
    %2125 = vmatprep.subr.mxu0 %v708
    %2126 = vmatpush1.msra.mxu0 %v707
    %2127 = vmatprep.subr.mxu0 %v712
    %2128 = vmatpush1.msra.mxu0 %v711
    %2129 = vmatprep.subr.mxu0 %v716
    %2130 = vmatpush1.msra.mxu0 %v715
    %2131 = vmatprep.subr.mxu0 %v720
    %2132 = vmatpush1.msra.mxu0 %v719
    %2133 = vmatprep.subr.mxu0 %v724
    %2134 = vmatpush1.msra.mxu0 %v723
    %2135 = vmatprep.subr.mxu0 %v728
    %2136 = vmatpush1.msra.mxu0 %v727
    %2137 = vmatprep.subr.mxu0 %v732
    %2138 = vmatpush1.msra.mxu0 %v731
    %2139 = vmatprep.subr.mxu0 %v736
    %2140 = vmatpush1.msra.mxu0 %v735
    %2141 = vmatprep.subr.mxu0 %v740
    %2142 = vmatpush1.msra.mxu0 %v739
    %2143 = vmatprep.subr.mxu0 %v744
    %2144 = vmatpush1.msra.mxu0 %v743
    %2145 = vmatprep.subr.mxu0 %v748
    %2146 = vmatpush1.msra.mxu0 %v747
    %2147 = vmatprep.subr.mxu0 %v752
    %2148 = vmatpush1.msra.mxu0 %v751
    %2149 = vmatprep.subr.mxu0 %v756
    %2150 = vmatpush1.msra.mxu0 %v755
    %2151 = vmatprep.mubr.f32.mxu0 %v94
    %2152 = vmatmul.mubr.f32.gmra.mrb[0].mxu0 %v93
    %v2153 = vpop.f32.mrb[0].mxu0
    %v2154 = vadd.f32 %v2077, %v2153
    %v2155 = vpop.f32.mrb[0].mxu0
    %v2156 = vadd.f32 %v2079, %v2155
    %2157 = vmatprep.mubr.f32.mxu0 %v110
    %2158 = vmatmul.mubr.f32.gmra.mrb[0].mxu0 %v109
    %v2159 = vpop.f32.mrb[0].mxu0
    %v2160 = vadd.f32 %v2083, %v2159
    %v2161 = vpop.f32.mrb[0].mxu0
    %v2162 = vadd.f32 %v2085, %v2161
    %2163 = vdwg.mxu0
    %2164 = vmatprep.subr.mxu0 %v760
    %2165 = vmatpush1.msra.mxu0 %v759
    %2166 = vmatprep.subr.mxu0 %v764
    %2167 = vmatpush1.msra.mxu0 %v763
    %2168 = vmatprep.subr.mxu0 %v768
    %2169 = vmatpush1.msra.mxu0 %v767
    %2170 = vmatprep.subr.mxu0 %v772
    %2171 = vmatpush1.msra.mxu0 %v771
    %2172 = vmatprep.subr.mxu0 %v776
    %2173 = vmatpush1.msra.mxu0 %v775
    %2174 = vmatprep.subr.mxu0 %v780
    %2175 = vmatpush1.msra.mxu0 %v779
    %2176 = vmatprep.subr.mxu0 %v784
    %2177 = vmatpush1.msra.mxu0 %v783
    %2178 = vmatprep.subr.mxu0 %v788
    %2179 = vmatpush1.msra.mxu0 %v787
    %2180 = vmatprep.subr.mxu0 %v792
    %2181 = vmatpush1.msra.mxu0 %v791
    %2182 = vmatprep.subr.mxu0 %v796
    %2183 = vmatpush1.msra.mxu0 %v795
    %2184 = vmatprep.subr.mxu0 %v800
    %2185 = vmatpush1.msra.mxu0 %v799
    %2186 = vmatprep.subr.mxu0 %v804
    %2187 = vmatpush1.msra.mxu0 %v803
    %2188 = vmatprep.subr.mxu0 %v808
    %2189 = vmatpush1.msra.mxu0 %v807
    %2190 = vmatprep.subr.mxu0 %v812
    %2191 = vmatpush1.msra.mxu0 %v811
    %2192 = vmatprep.subr.mxu0 %v816
    %2193 = vmatpush1.msra.mxu0 %v815
    %2194 = vmatprep.subr.mxu0 %v820
    %2195 = vmatpush1.msra.mxu0 %v819
    %2196 = vmatprep.subr.mxu0 %v824
    %2197 = vmatpush1.msra.mxu0 %v823
    %2198 = vmatprep.subr.mxu0 %v828
    %2199 = vmatpush1.msra.mxu0 %v827
    %2200 = vmatprep.subr.mxu0 %v832
    %2201 = vmatpush1.msra.mxu0 %v831
    %2202 = vmatprep.subr.mxu0 %v836
    %2203 = vmatpush1.msra.mxu0 %v835
    %2204 = vmatprep.subr.mxu0 %v840
    %2205 = vmatpush1.msra.mxu0 %v839
    %2206 = vmatprep.subr.mxu0 %v844
    %2207 = vmatpush1.msra.mxu0 %v843
    %2208 = vmatprep.subr.mxu0 %v848
    %2209 = vmatpush1.msra.mxu0 %v847
    %2210 = vmatprep.subr.mxu0 %v852
    %2211 = vmatpush1.msra.mxu0 %v851
    %2212 = vmatprep.subr.mxu0 %v856
    %2213 = vmatpush1.msra.mxu0 %v855
    %2214 = vmatprep.subr.mxu0 %v860
    %2215 = vmatpush1.msra.mxu0 %v859
    %2216 = vmatprep.subr.mxu0 %v864
    %2217 = vmatpush1.msra.mxu0 %v863
    %2218 = vmatprep.subr.mxu0 %v868
    %2219 = vmatpush1.msra.mxu0 %v867
    %2220 = vmatprep.subr.mxu0 %v872
    %2221 = vmatpush1.msra.mxu0 %v871
    %2222 = vmatprep.subr.mxu0 %v876
    %2223 = vmatpush1.msra.mxu0 %v875
    %2224 = vmatprep.subr.mxu0 %v880
    %2225 = vmatpush1.msra.mxu0 %v879
    %2226 = vmatprep.subr.mxu0 %v884
    %2227 = vmatpush1.msra.mxu0 %v883
    %2228 = vmatprep.mubr.f32.mxu0 %v96
    %2229 = vmatmul.mubr.f32.gmra.mrb[0].mxu0 %v95
    %v2230 = vpop.f32.mrb[0].mxu0
    %v2231 = vadd.f32 %v2154, %v2230
    %v2232 = vpop.f32.mrb[0].mxu0
    %v2233 = vadd.f32 %v2156, %v2232
    %2234 = vmatprep.mubr.f32.mxu0 %v112
    %2235 = vmatmul.mubr.f32.gmra.mrb[0].mxu0 %v111
    %v2236 = vpop.f32.mrb[0].mxu0
    %v2237 = vadd.f32 %v2160, %v2236
    %v2238 = vpop.f32.mrb[0].mxu0
    %v2239 = vadd.f32 %v2162, %v2238
    %2240 = vdwg.mxu0
    %2241 = vmatprep.subr.mxu0 %v888
    %2242 = vmatpush1.msra.mxu0 %v887
    %2243 = vmatprep.subr.mxu0 %v892
    %2244 = vmatpush1.msra.mxu0 %v891
    %2245 = vmatprep.subr.mxu0 %v896
    %2246 = vmatpush1.msra.mxu0 %v895
    %2247 = vmatprep.subr.mxu0 %v900
    %2248 = vmatpush1.msra.mxu0 %v899
    %2249 = vmatprep.subr.mxu0 %v904
    %2250 = vmatpush1.msra.mxu0 %v903
    %2251 = vmatprep.subr.mxu0 %v908
    %2252 = vmatpush1.msra.mxu0 %v907
    %2253 = vmatprep.subr.mxu0 %v912
    %2254 = vmatpush1.msra.mxu0 %v911
    %2255 = vmatprep.subr.mxu0 %v916
    %2256 = vmatpush1.msra.mxu0 %v915
    %2257 = vmatprep.subr.mxu0 %v920
    %2258 = vmatpush1.msra.mxu0 %v919
    %2259 = vmatprep.subr.mxu0 %v924
    %2260 = vmatpush1.msra.mxu0 %v923
    %2261 = vmatprep.subr.mxu0 %v928
    %2262 = vmatpush1.msra.mxu0 %v927
    %2263 = vmatprep.subr.mxu0 %v932
    %2264 = vmatpush1.msra.mxu0 %v931
    %2265 = vmatprep.subr.mxu0 %v936
    %2266 = vmatpush1.msra.mxu0 %v935
    %2267 = vmatprep.subr.mxu0 %v940
    %2268 = vmatpush1.msra.mxu0 %v939
    %2269 = vmatprep.subr.mxu0 %v944
    %2270 = vmatpush1.msra.mxu0 %v943
    %2271 = vmatprep.subr.mxu0 %v948
    %2272 = vmatpush1.msra.mxu0 %v947
    %2273 = vmatprep.subr.mxu0 %v952
    %2274 = vmatpush1.msra.mxu0 %v951
    %2275 = vmatprep.subr.mxu0 %v956
    %2276 = vmatpush1.msra.mxu0 %v955
    %2277 = vmatprep.subr.mxu0 %v960
    %2278 = vmatpush1.msra.mxu0 %v959
    %2279 = vmatprep.subr.mxu0 %v964
    %2280 = vmatpush1.msra.mxu0 %v963
    %2281 = vmatprep.subr.mxu0 %v968
    %2282 = vmatpush1.msra.mxu0 %v967
    %2283 = vmatprep.subr.mxu0 %v972
    %2284 = vmatpush1.msra.mxu0 %v971
    %2285 = vmatprep.subr.mxu0 %v976
    %2286 = vmatpush1.msra.mxu0 %v975
    %2287 = vmatprep.subr.mxu0 %v980
    %2288 = vmatpush1.msra.mxu0 %v979
    %2289 = vmatprep.subr.mxu0 %v984
    %2290 = vmatpush1.msra.mxu0 %v983
    %2291 = vmatprep.subr.mxu0 %v988
    %2292 = vmatpush1.msra.mxu0 %v987
    %2293 = vmatprep.subr.mxu0 %v992
    %2294 = vmatpush1.msra.mxu0 %v991
    %2295 = vmatprep.subr.mxu0 %v996
    %2296 = vmatpush1.msra.mxu0 %v995
    %2297 = vmatprep.subr.mxu0 %v1000
    %2298 = vmatpush1.msra.mxu0 %v999
    %2299 = vmatprep.subr.mxu0 %v1004
    %2300 = vmatpush1.msra.mxu0 %v1003
    %2301 = vmatprep.subr.mxu0 %v1008
    %2302 = vmatpush1.msra.mxu0 %v1007
    %2303 = vmatprep.subr.mxu0 %v1012
    %2304 = vmatpush1.msra.mxu0 %v1011
    %2305 = vmatprep.mubr.f32.mxu0 %v98
    %2306 = vmatmul.mubr.f32.gmra.mrb[0].mxu0 %v97
    %v2307 = vpop.f32.mrb[0].mxu0
    %v2308 = vadd.f32 %v2231, %v2307
    %v2309 = vpop.f32.mrb[0].mxu0
    %v2310 = vadd.f32 %v2233, %v2309
    %2311 = vmatprep.mubr.f32.mxu0 %v114
    %2312 = vmatmul.mubr.f32.gmra.mrb[0].mxu0 %v113
    %v2313 = vpop.f32.mrb[0].mxu0
    %v2314 = vadd.f32 %v2237, %v2313
    %v2315 = vpop.f32.mrb[0].mxu0
    %v2316 = vadd.f32 %v2239, %v2315
    %2317 = vdwg.mxu0
    %2318 = vmatprep.subr.mxu0 %v1016
    %2319 = vmatpush1.msra.mxu0 %v1015
    %2320 = vmatprep.subr.mxu0 %v1020
    %2321 = vmatpush1.msra.mxu0 %v1019
    %2322 = vmatprep.subr.mxu0 %v1024
    %2323 = vmatpush1.msra.mxu0 %v1023
    %2324 = vmatprep.subr.mxu0 %v1028
    %2325 = vmatpush1.msra.mxu0 %v1027
    %2326 = vmatprep.subr.mxu0 %v1032
    %2327 = vmatpush1.msra.mxu0 %v1031
    %2328 = vmatprep.subr.mxu0 %v1036
    %2329 = vmatpush1.msra.mxu0 %v1035
    %2330 = vmatprep.subr.mxu0 %v1040
    %2331 = vmatpush1.msra.mxu0 %v1039
    %2332 = vmatprep.subr.mxu0 %v1044
    %2333 = vmatpush1.msra.mxu0 %v1043
    %2334 = vmatprep.subr.mxu0 %v1048
    %2335 = vmatpush1.msra.mxu0 %v1047
    %2336 = vmatprep.subr.mxu0 %v1052
    %2337 = vmatpush1.msra.mxu0 %v1051
    %2338 = vmatprep.subr.mxu0 %v1056
    %2339 = vmatpush1.msra.mxu0 %v1055
    %2340 = vmatprep.subr.mxu0 %v1060
    %2341 = vmatpush1.msra.mxu0 %v1059
    %2342 = vmatprep.subr.mxu0 %v1064
    %2343 = vmatpush1.msra.mxu0 %v1063
    %2344 = vmatprep.subr.mxu0 %v1068
    %2345 = vmatpush1.msra.mxu0 %v1067
    %2346 = vmatprep.subr.mxu0 %v1072
    %2347 = vmatpush1.msra.mxu0 %v1071
    %2348 = vmatprep.subr.mxu0 %v1076
    %2349 = vmatpush1.msra.mxu0 %v1075
    %2350 = vmatprep.subr.mxu0 %v1080
    %2351 = vmatpush1.msra.mxu0 %v1079
    %2352 = vmatprep.subr.mxu0 %v1084
    %2353 = vmatpush1.msra.mxu0 %v1083
    %2354 = vmatprep.subr.mxu0 %v1088
    %2355 = vmatpush1.msra.mxu0 %v1087
    %2356 = vmatprep.subr.mxu0 %v1092
    %2357 = vmatpush1.msra.mxu0 %v1091
    %2358 = vmatprep.subr.mxu0 %v1096
    %2359 = vmatpush1.msra.mxu0 %v1095
    %2360 = vmatprep.subr.mxu0 %v1100
    %2361 = vmatpush1.msra.mxu0 %v1099
    %2362 = vmatprep.subr.mxu0 %v1104
    %2363 = vmatpush1.msra.mxu0 %v1103
    %2364 = vmatprep.subr.mxu0 %v1108
    %2365 = vmatpush1.msra.mxu0 %v1107
    %2366 = vmatprep.subr.mxu0 %v1112
    %2367 = vmatpush1.msra.mxu0 %v1111
    %2368 = vmatprep.subr.mxu0 %v1116
    %2369 = vmatpush1.msra.mxu0 %v1115
    %2370 = vmatprep.subr.mxu0 %v1120
    %2371 = vmatpush1.msra.mxu0 %v1119
    %2372 = vmatprep.subr.mxu0 %v1124
    %2373 = vmatpush1.msra.mxu0 %v1123
    %2374 = vmatprep.subr.mxu0 %v1128
    %2375 = vmatpush1.msra.mxu0 %v1127
    %2376 = vmatprep.subr.mxu0 %v1132
    %2377 = vmatpush1.msra.mxu0 %v1131
    %2378 = vmatprep.subr.mxu0 %v1136
    %2379 = vmatpush1.msra.mxu0 %v1135
    %2380 = vmatprep.subr.mxu0 %v1140
    %2381 = vmatpush1.msra.mxu0 %v1139
    %2382 = vmatprep.mubr.f32.mxu0 %v100
    %2383 = vmatmul.mubr.f32.gmra.mrb[0].mxu0 %v99
    %v2384 = vpop.f32.mrb[0].mxu0
    %v2385 = vadd.f32 %v2308, %v2384
    %v2386 = vpop.f32.mrb[0].mxu0
    %v2387 = vadd.f32 %v2310, %v2386
    %2388 = vmatprep.mubr.f32.mxu0 %v116
    %2389 = vmatmul.mubr.f32.gmra.mrb[0].mxu0 %v115
    %v2390 = vpop.f32.mrb[0].mxu0
    %v2391 = vadd.f32 %v2314, %v2390
    %v2392 = vpop.f32.mrb[0].mxu0
    %v2393 = vadd.f32 %v2316, %v2392
    %2394 = vdwg.mxu0
    %v2395 = vmul.f32 %v1769, 0.5
    %v2396 = vmul.f32 %v1771, 0.5
    %v2397 = vmul.f32 %v2385, 0.5
    %v2398 = vmul.f32 %v2387, 0.5
    %v2399 = vmul.f32 %v1775, 0.5
    %v2400 = vmul.f32 %v1777, 0.5
    %v2401 = vmul.f32 %v2391, 0.5
    %v2402 = vmul.f32 %v2393, 0.5
    %v2403 = vmul.f32 %v1769, 0.70710677
    %v2404 = vmul.f32 %v1771, 0.70710677
    %v2405 = vmul.f32 %v2385, 0.70710677
    %v2406 = vmul.f32 %v2387, 0.70710677
    %v2407 = vmul.f32 %v1775, 0.70710677
    %v2408 = vmul.f32 %v1777, 0.70710677
    %v2409 = vmul.f32 %v2391, 0.70710677
    %v2410 = vmul.f32 %v2393, 0.70710677
    %v2411 = verf.f32.pop %v2403
    %v2412 = verf.f32.pop %v2404
    %v2413 = verf.f32.pop %v2405
    %v2414 = verf.f32.pop %v2406
    %v2415 = verf.f32.pop %v2407
    %v2416 = verf.f32.pop %v2408
    %v2417 = verf.f32.pop %v2409
    %v2418 = verf.f32.pop %v2410
    %v2419 = vadd.f32 %v2411, 1.0
    %v2420 = vadd.f32 %v2412, 1.0
    %v2421 = vadd.f32 %v2413, 1.0
    %v2422 = vadd.f32 %v2414, 1.0
    %v2423 = vadd.f32 %v2415, 1.0
    %v2424 = vadd.f32 %v2416, 1.0
    %v2425 = vadd.f32 %v2417, 1.0
    %v2426 = vadd.f32 %v2418, 1.0
    %v2427 = vmul.f32 %v2395, %v2419
    %v2428 = vmul.f32 %v2396, %v2420
    %v2429 = vmul.f32 %v2397, %v2421
    %v2430 = vmul.f32 %v2398, %v2422
    %v2431 = vmul.f32 %v2399, %v2423
    %v2432 = vmul.f32 %v2400, %v2424
    %v2433 = vmul.f32 %v2401, %v2425
    %v2434 = vmul.f32 %v2402, %v2426
    %v2435 = vadd.f32 %v2427, %v2428
    %v2436 = vadd.f32 %v2435, %v2429
    %v2437 = vadd.f32 %v2436, %v2430
    %2438 = vadd.xlane.f32.xlu0 %v2437
    %v2439 = vpop.xlane.xlu0 %2438
    %v2440 = vadd.f32 %v2431, %v2432
    %v2441 = vadd.f32 %v2440, %v2433
    %v2442 = vadd.f32 %v2441, %v2434
    %2443 = vadd.xlane.f32.xlu0 %v2442
    %v2444 = vpop.xlane.xlu0 %2443
    %v2445 = vrcp.pop 512.0
    %v2446 = vmul.f32 %v2439, %v2445
    %v2447 = vmul.f32 %v2444, %v2445
    %v2448 = vsub.f32 %v2427, %v2446
    %v2449 = vsub.f32 %v2428, %v2446
    %v2450 = vsub.f32 %v2429, %v2446
    %v2451 = vsub.f32 %v2430, %v2446
    %v2452 = vsub.f32 %v2431, %v2447
    %v2453 = vsub.f32 %v2432, %v2447
    %v2454 = vsub.f32 %v2433, %v2447
    %v2455 = vsub.f32 %v2434, %v2447
    %v2456 = vmul.f32 %v2448, %v2448
    %v2457 = vmul.f32 %v2449, %v2449
    %v2458 = vmul.f32 %v2450, %v2450
    %v2459 = vmul.f32 %v2451, %v2451
    %v2460 = vmul.f32 %v2452, %v2452
    %v2461 = vmul.f32 %v2453, %v2453
    %v2462 = vmul.f32 %v2454, %v2454
    %v2463 = vmul.f32 %v2455, %v2455
    %v2464 = vadd.f32 %v2456, %v2457
    %v2465 = vadd.f32 %v2464, %v2458
    %v2466 = vadd.f32 %v2465, %v2459
    %2467 = vadd.xlane.f32.xlu0 %v2466
    %v2468 = vpop.xlane.xlu0 %2467
    %v2469 = vadd.f32 %v2460, %v2461
    %v2470 = vadd.f32 %v2469, %v2462
    %v2471 = vadd.f32 %v2470, %v2463
    %2472 = vadd.xlane.f32.xlu0 %v2471
    %v2473 = vpop.xlane.xlu0 %2472
    %v2474 = vmul.f32 %v2468, %v2445
    %v2475 = vmul.f32 %v2473, %v2445
    %v2476 = vadd.f32 %v2474, 1e-05
    %v2477 = vadd.f32 %v2475, 1e-05
    %v2478 = vrsqrt.pop %v2476
    %v2479 = vrsqrt.pop %v2477
    %v2480 = vmul.f32 %v2448, %v2478
    %v2481 = vmul.f32 %v2449, %v2478
    %v2482 = vmul.f32 %v2450, %v2478
    %v2483 = vmul.f32 %v2451, %v2478
    %v2484 = vmul.f32 %v2452, %v2479
    %v2485 = vmul.f32 %v2453, %v2479
    %v2486 = vmul.f32 %v2454, %v2479
    %v2487 = vmul.f32 %v2455, %v2479
    %s2488 = scalar_lea.vmem [#allocation7], 1
    %v2489 = vld [vmem:[%s2488] ss:$4 sm:$0xf]
    %v2491 = vlaneseq
    %v2492 = vshrl.u32 %v2491, 7
    %v2493 = vsub.s32 0, %v2492
    %v2494 = vrot.slane %v2489, %v2493
    %v2495 = vlaneseq
    %v2496 = vshrl.u32 %v2495, 7
    %v2497 = vsub.s32 1, %v2496
    %v2498 = vrot.slane %v2489, %v2497
    %v2499 = vlaneseq
    %v2500 = vshrl.u32 %v2499, 7
    %v2501 = vsub.s32 2, %v2500
    %v2502 = vrot.slane %v2489, %v2501
    %v2503 = vlaneseq
    %v2504 = vshrl.u32 %v2503, 7
    %v2505 = vsub.s32 3, %v2504
    %v2506 = vrot.slane %v2489, %v2505
    %v2511 = vmul.f32 %v2480, %v2494
    %v2512 = vmul.f32 %v2481, %v2498
    %v2513 = vmul.f32 %v2482, %v2502
    %v2514 = vmul.f32 %v2483, %v2506
    %v2515 = vmul.f32 %v2484, %v2494
    %v2516 = vmul.f32 %v2485, %v2498
    %v2517 = vmul.f32 %v2486, %v2502
    %v2518 = vmul.f32 %v2487, %v2506
    %s2519 = scalar_lea.vmem [#allocation7], 2
    %v2520 = vld [vmem:[%s2519] ss:$4 sm:$0xf]
    %v2522 = vlaneseq
    %v2523 = vshrl.u32 %v2522, 7
    %v2524 = vsub.s32 0, %v2523
    %v2525 = vrot.slane %v2520, %v2524
    %v2526 = vlaneseq
    %v2527 = vshrl.u32 %v2526, 7
    %v2528 = vsub.s32 1, %v2527
    %v2529 = vrot.slane %v2520, %v2528
    %v2530 = vlaneseq
    %v2531 = vshrl.u32 %v2530, 7
    %v2532 = vsub.s32 2, %v2531
    %v2533 = vrot.slane %v2520, %v2532
    %v2534 = vlaneseq
    %v2535 = vshrl.u32 %v2534, 7
    %v2536 = vsub.s32 3, %v2535
    %v2537 = vrot.slane %v2520, %v2536
    %v2542 = vadd.f32 %v2511, %v2525
    %v2543 = vadd.f32 %v2512, %v2529
    %v2544 = vadd.f32 %v2513, %v2533
    %v2545 = vadd.f32 %v2514, %v2537
    %v2546 = vadd.f32 %v2515, %v2525
    %v2547 = vadd.f32 %v2516, %v2529
    %v2548 = vadd.f32 %v2517, %v2533
    %v2549 = vadd.f32 %v2518, %v2537
    %v2550 = vld [vmem:[#allocation8] sm:$0xff]
    %v2551 = vld [vmem:[#allocation8 + $0x8] sm:$0xff]
    %v2552 = vld [vmem:[#allocation8 + $0x10] sm:$0xff]
    %v2553 = vld [vmem:[#allocation8 + $0x18] sm:$0xff]
    %v2554 = vld [vmem:[#allocation8 + $0x20] sm:$0xff]
    %v2555 = vld [vmem:[#allocation8 + $0x28] sm:$0xff]
    %v2556 = vld [vmem:[#allocation8 + $0x30] sm:$0xff]
    %v2557 = vld [vmem:[#allocation8 + $0x38] sm:$0xff]
    %v2558 = vld [vmem:[#allocation8 + $0x40] sm:$0xff]
    %v2559 = vld [vmem:[#allocation8 + $0x48] sm:$0xff]
    %v2560 = vld [vmem:[#allocation8 + $0x50] sm:$0xff]
    %v2561 = vld [vmem:[#allocation8 + $0x58] sm:$0xff]
    %v2562 = vld [vmem:[#allocation8 + $0x60] sm:$0xff]
    %v2563 = vld [vmem:[#allocation8 + $0x68] sm:$0xff]
    %v2564 = vld [vmem:[#allocation8 + $0x70] sm:$0xff]
    %v2565 = vld [vmem:[#allocation8 + $0x78] sm:$0xff]
    %v2566 = vld [vmem:[#allocation8 + $0x80] sm:$0xff]
    %v2567 = vld [vmem:[#allocation8 + $0x88] sm:$0xff]
    %v2568 = vld [vmem:[#allocation8 + $0x90] sm:$0xff]
    %v2569 = vld [vmem:[#allocation8 + $0x98] sm:$0xff]
    %v2570 = vld [vmem:[#allocation8 + $0xa0] sm:$0xff]
    %v2571 = vld [vmem:[#allocation8 + $0xa8] sm:$0xff]
    %v2572 = vld [vmem:[#allocation8 + $0xb0] sm:$0xff]
    %v2573 = vld [vmem:[#allocation8 + $0xb8] sm:$0xff]
    %v2574 = vld [vmem:[#allocation8 + $0xc0] sm:$0xff]
    %v2575 = vld [vmem:[#allocation8 + $0xc8] sm:$0xff]
    %v2576 = vld [vmem:[#allocation8 + $0xd0] sm:$0xff]
    %v2577 = vld [vmem:[#allocation8 + $0xd8] sm:$0xff]
    %v2578 = vld [vmem:[#allocation8 + $0xe0] sm:$0xff]
    %v2579 = vld [vmem:[#allocation8 + $0xe8] sm:$0xff]
    %v2580 = vld [vmem:[#allocation8 + $0xf0] sm:$0xff]
    %v2581 = vld [vmem:[#allocation8 + $0xf8] sm:$0xff]
    %v2582 = vld [vmem:[#allocation8 + $0x100] sm:$0xff]
    %v2583 = vld [vmem:[#allocation8 + $0x108] sm:$0xff]
    %v2584 = vld [vmem:[#allocation8 + $0x110] sm:$0xff]
    %v2585 = vld [vmem:[#allocation8 + $0x118] sm:$0xff]
    %v2586 = vld [vmem:[#allocation8 + $0x120] sm:$0xff]
    %v2587 = vld [vmem:[#allocation8 + $0x128] sm:$0xff]
    %v2588 = vld [vmem:[#allocation8 + $0x130] sm:$0xff]
    %v2589 = vld [vmem:[#allocation8 + $0x138] sm:$0xff]
    %v2590 = vld [vmem:[#allocation8 + $0x140] sm:$0xff]
    %v2591 = vld [vmem:[#allocation8 + $0x148] sm:$0xff]
    %v2592 = vld [vmem:[#allocation8 + $0x150] sm:$0xff]
    %v2593 = vld [vmem:[#allocation8 + $0x158] sm:$0xff]
    %v2594 = vld [vmem:[#allocation8 + $0x160] sm:$0xff]
    %v2595 = vld [vmem:[#allocation8 + $0x168] sm:$0xff]
    %v2596 = vld [vmem:[#allocation8 + $0x170] sm:$0xff]
    %v2597 = vld [vmem:[#allocation8 + $0x178] sm:$0xff]
    %v2598 = vld [vmem:[#allocation8 + $0x180] sm:$0xff]
    %v2599 = vld [vmem:[#allocation8 + $0x188] sm:$0xff]
    %v2600 = vld [vmem:[#allocation8 + $0x190] sm:$0xff]
    %v2601 = vld [vmem:[#allocation8 + $0x198] sm:$0xff]
    %v2602 = vld [vmem:[#allocation8 + $0x1a0] sm:$0xff]
    %v2603 = vld [vmem:[#allocation8 + $0x1a8] sm:$0xff]
    %v2604 = vld [vmem:[#allocation8 + $0x1b0] sm:$0xff]
    %v2605 = vld [vmem:[#allocation8 + $0x1b8] sm:$0xff]
    %v2606 = vld [vmem:[#allocation8 + $0x1c0] sm:$0xff]
    %v2607 = vld [vmem:[#allocation8 + $0x1c8] sm:$0xff]
    %v2608 = vld [vmem:[#allocation8 + $0x1d0] sm:$0xff]
    %v2609 = vld [vmem:[#allocation8 + $0x1d8] sm:$0xff]
    %v2610 = vld [vmem:[#allocation8 + $0x1e0] sm:$0xff]
    %v2611 = vld [vmem:[#allocation8 + $0x1e8] sm:$0xff]
    %v2612 = vld [vmem:[#allocation8 + $0x1f0] sm:$0xff]
    %v2613 = vld [vmem:[#allocation8 + $0x1f8] sm:$0xff]
    %v2614 = vld [vmem:[#allocation8 + $0x200] sm:$0xff]
    %v2615 = vld [vmem:[#allocation8 + $0x208] sm:$0xff]
    %v2616 = vld [vmem:[#allocation8 + $0x210] sm:$0xff]
    %v2617 = vld [vmem:[#allocation8 + $0x218] sm:$0xff]
    %v2618 = vld [vmem:[#allocation8 + $0x220] sm:$0xff]
    %v2619 = vld [vmem:[#allocation8 + $0x228] sm:$0xff]
    %v2620 = vld [vmem:[#allocation8 + $0x230] sm:$0xff]
    %v2621 = vld [vmem:[#allocation8 + $0x238] sm:$0xff]
    %v2622 = vld [vmem:[#allocation8 + $0x240] sm:$0xff]
    %v2623 = vld [vmem:[#allocation8 + $0x248] sm:$0xff]
    %v2624 = vld [vmem:[#allocation8 + $0x250] sm:$0xff]
    %v2625 = vld [vmem:[#allocation8 + $0x258] sm:$0xff]
    %v2626 = vld [vmem:[#allocation8 + $0x260] sm:$0xff]
    %v2627 = vld [vmem:[#allocation8 + $0x268] sm:$0xff]
    %v2628 = vld [vmem:[#allocation8 + $0x270] sm:$0xff]
    %v2629 = vld [vmem:[#allocation8 + $0x278] sm:$0xff]
    %v2630 = vld [vmem:[#allocation8 + $0x280] sm:$0xff]
    %v2631 = vld [vmem:[#allocation8 + $0x288] sm:$0xff]
    %v2632 = vld [vmem:[#allocation8 + $0x290] sm:$0xff]
    %v2633 = vld [vmem:[#allocation8 + $0x298] sm:$0xff]
    %v2634 = vld [vmem:[#allocation8 + $0x2a0] sm:$0xff]
    %v2635 = vld [vmem:[#allocation8 + $0x2a8] sm:$0xff]
    %v2636 = vld [vmem:[#allocation8 + $0x2b0] sm:$0xff]
    %v2637 = vld [vmem:[#allocation8 + $0x2b8] sm:$0xff]
    %v2638 = vld [vmem:[#allocation8 + $0x2c0] sm:$0xff]
    %v2639 = vld [vmem:[#allocation8 + $0x2c8] sm:$0xff]
    %v2640 = vld [vmem:[#allocation8 + $0x2d0] sm:$0xff]
    %v2641 = vld [vmem:[#allocation8 + $0x2d8] sm:$0xff]
    %v2642 = vld [vmem:[#allocation8 + $0x2e0] sm:$0xff]
    %v2643 = vld [vmem:[#allocation8 + $0x2e8] sm:$0xff]
    %v2644 = vld [vmem:[#allocation8 + $0x2f0] sm:$0xff]
    %v2645 = vld [vmem:[#allocation8 + $0x2f8] sm:$0xff]
    %v2646 = vld [vmem:[#allocation8 + $0x300] sm:$0xff]
    %v2647 = vld [vmem:[#allocation8 + $0x308] sm:$0xff]
    %v2648 = vld [vmem:[#allocation8 + $0x310] sm:$0xff]
    %v2649 = vld [vmem:[#allocation8 + $0x318] sm:$0xff]
    %v2650 = vld [vmem:[#allocation8 + $0x320] sm:$0xff]
    %v2651 = vld [vmem:[#allocation8 + $0x328] sm:$0xff]
    %v2652 = vld [vmem:[#allocation8 + $0x330] sm:$0xff]
    %v2653 = vld [vmem:[#allocation8 + $0x338] sm:$0xff]
    %v2654 = vld [vmem:[#allocation8 + $0x340] sm:$0xff]
    %v2655 = vld [vmem:[#allocation8 + $0x348] sm:$0xff]
    %v2656 = vld [vmem:[#allocation8 + $0x350] sm:$0xff]
    %v2657 = vld [vmem:[#allocation8 + $0x358] sm:$0xff]
    %v2658 = vld [vmem:[#allocation8 + $0x360] sm:$0xff]
    %v2659 = vld [vmem:[#allocation8 + $0x368] sm:$0xff]
    %v2660 = vld [vmem:[#allocation8 + $0x370] sm:$0xff]
    %v2661 = vld [vmem:[#allocation8 + $0x378] sm:$0xff]
    %v2662 = vld [vmem:[#allocation8 + $0x380] sm:$0xff]
    %v2663 = vld [vmem:[#allocation8 + $0x388] sm:$0xff]
    %v2664 = vld [vmem:[#allocation8 + $0x390] sm:$0xff]
    %v2665 = vld [vmem:[#allocation8 + $0x398] sm:$0xff]
    %v2666 = vld [vmem:[#allocation8 + $0x3a0] sm:$0xff]
    %v2667 = vld [vmem:[#allocation8 + $0x3a8] sm:$0xff]
    %v2668 = vld [vmem:[#allocation8 + $0x3b0] sm:$0xff]
    %v2669 = vld [vmem:[#allocation8 + $0x3b8] sm:$0xff]
    %v2670 = vld [vmem:[#allocation8 + $0x3c0] sm:$0xff]
    %v2671 = vld [vmem:[#allocation8 + $0x3c8] sm:$0xff]
    %v2672 = vld [vmem:[#allocation8 + $0x3d0] sm:$0xff]
    %v2673 = vld [vmem:[#allocation8 + $0x3d8] sm:$0xff]
    %v2674 = vld [vmem:[#allocation8 + $0x3e0] sm:$0xff]
    %v2675 = vld [vmem:[#allocation8 + $0x3e8] sm:$0xff]
    %v2676 = vld [vmem:[#allocation8 + $0x3f0] sm:$0xff]
    %v2677 = vld [vmem:[#allocation8 + $0x3f8] sm:$0xff]
    %v2678 = vld [vmem:[#allocation8 + $0x400] sm:$0xff]
    %v2679 = vld [vmem:[#allocation8 + $0x408] sm:$0xff]
    %v2680 = vld [vmem:[#allocation8 + $0x410] sm:$0xff]
    %v2681 = vld [vmem:[#allocation8 + $0x418] sm:$0xff]
    %v2682 = vld [vmem:[#allocation8 + $0x420] sm:$0xff]
    %v2683 = vld [vmem:[#allocation8 + $0x428] sm:$0xff]
    %v2684 = vld [vmem:[#allocation8 + $0x430] sm:$0xff]
    %v2685 = vld [vmem:[#allocation8 + $0x438] sm:$0xff]
    %v2686 = vld [vmem:[#allocation8 + $0x440] sm:$0xff]
    %v2687 = vld [vmem:[#allocation8 + $0x448] sm:$0xff]
    %v2688 = vld [vmem:[#allocation8 + $0x450] sm:$0xff]
    %v2689 = vld [vmem:[#allocation8 + $0x458] sm:$0xff]
    %v2690 = vld [vmem:[#allocation8 + $0x460] sm:$0xff]
    %v2691 = vld [vmem:[#allocation8 + $0x468] sm:$0xff]
    %v2692 = vld [vmem:[#allocation8 + $0x470] sm:$0xff]
    %v2693 = vld [vmem:[#allocation8 + $0x478] sm:$0xff]
    %v2694 = vld [vmem:[#allocation8 + $0x480] sm:$0xff]
    %v2695 = vld [vmem:[#allocation8 + $0x488] sm:$0xff]
    %v2696 = vld [vmem:[#allocation8 + $0x490] sm:$0xff]
    %v2697 = vld [vmem:[#allocation8 + $0x498] sm:$0xff]
    %v2698 = vld [vmem:[#allocation8 + $0x4a0] sm:$0xff]
    %v2699 = vld [vmem:[#allocation8 + $0x4a8] sm:$0xff]
    %v2700 = vld [vmem:[#allocation8 + $0x4b0] sm:$0xff]
    %v2701 = vld [vmem:[#allocation8 + $0x4b8] sm:$0xff]
    %v2702 = vld [vmem:[#allocation8 + $0x4c0] sm:$0xff]
    %v2703 = vld [vmem:[#allocation8 + $0x4c8] sm:$0xff]
    %v2704 = vld [vmem:[#allocation8 + $0x4d0] sm:$0xff]
    %v2705 = vld [vmem:[#allocation8 + $0x4d8] sm:$0xff]
    %v2706 = vld [vmem:[#allocation8 + $0x4e0] sm:$0xff]
    %v2707 = vld [vmem:[#allocation8 + $0x4e8] sm:$0xff]
    %v2708 = vld [vmem:[#allocation8 + $0x4f0] sm:$0xff]
    %v2709 = vld [vmem:[#allocation8 + $0x4f8] sm:$0xff]
    %v2710 = vld [vmem:[#allocation8 + $0x500] sm:$0xff]
    %v2711 = vld [vmem:[#allocation8 + $0x508] sm:$0xff]
    %v2712 = vld [vmem:[#allocation8 + $0x510] sm:$0xff]
    %v2713 = vld [vmem:[#allocation8 + $0x518] sm:$0xff]
    %v2714 = vld [vmem:[#allocation8 + $0x520] sm:$0xff]
    %v2715 = vld [vmem:[#allocation8 + $0x528] sm:$0xff]
    %v2716 = vld [vmem:[#allocation8 + $0x530] sm:$0xff]
    %v2717 = vld [vmem:[#allocation8 + $0x538] sm:$0xff]
    %v2718 = vld [vmem:[#allocation8 + $0x540] sm:$0xff]
    %v2719 = vld [vmem:[#allocation8 + $0x548] sm:$0xff]
    %v2720 = vld [vmem:[#allocation8 + $0x550] sm:$0xff]
    %v2721 = vld [vmem:[#allocation8 + $0x558] sm:$0xff]
    %v2722 = vld [vmem:[#allocation8 + $0x560] sm:$0xff]
    %v2723 = vld [vmem:[#allocation8 + $0x568] sm:$0xff]
    %v2724 = vld [vmem:[#allocation8 + $0x570] sm:$0xff]
    %v2725 = vld [vmem:[#allocation8 + $0x578] sm:$0xff]
    %v2726 = vld [vmem:[#allocation8 + $0x580] sm:$0xff]
    %v2727 = vld [vmem:[#allocation8 + $0x588] sm:$0xff]
    %v2728 = vld [vmem:[#allocation8 + $0x590] sm:$0xff]
    %v2729 = vld [vmem:[#allocation8 + $0x598] sm:$0xff]
    %v2730 = vld [vmem:[#allocation8 + $0x5a0] sm:$0xff]
    %v2731 = vld [vmem:[#allocation8 + $0x5a8] sm:$0xff]
    %v2732 = vld [vmem:[#allocation8 + $0x5b0] sm:$0xff]
    %v2733 = vld [vmem:[#allocation8 + $0x5b8] sm:$0xff]
    %v2734 = vld [vmem:[#allocation8 + $0x5c0] sm:$0xff]
    %v2735 = vld [vmem:[#allocation8 + $0x5c8] sm:$0xff]
    %v2736 = vld [vmem:[#allocation8 + $0x5d0] sm:$0xff]
    %v2737 = vld [vmem:[#allocation8 + $0x5d8] sm:$0xff]
    %v2738 = vld [vmem:[#allocation8 + $0x5e0] sm:$0xff]
    %v2739 = vld [vmem:[#allocation8 + $0x5e8] sm:$0xff]
    %v2740 = vld [vmem:[#allocation8 + $0x5f0] sm:$0xff]
    %v2741 = vld [vmem:[#allocation8 + $0x5f8] sm:$0xff]
    %v2742 = vld [vmem:[#allocation8 + $0x600] sm:$0xff]
    %v2743 = vld [vmem:[#allocation8 + $0x608] sm:$0xff]
    %v2744 = vld [vmem:[#allocation8 + $0x610] sm:$0xff]
    %v2745 = vld [vmem:[#allocation8 + $0x618] sm:$0xff]
    %v2746 = vld [vmem:[#allocation8 + $0x620] sm:$0xff]
    %v2747 = vld [vmem:[#allocation8 + $0x628] sm:$0xff]
    %v2748 = vld [vmem:[#allocation8 + $0x630] sm:$0xff]
    %v2749 = vld [vmem:[#allocation8 + $0x638] sm:$0xff]
    %v2750 = vld [vmem:[#allocation8 + $0x640] sm:$0xff]
    %v2751 = vld [vmem:[#allocation8 + $0x648] sm:$0xff]
    %v2752 = vld [vmem:[#allocation8 + $0x650] sm:$0xff]
    %v2753 = vld [vmem:[#allocation8 + $0x658] sm:$0xff]
    %v2754 = vld [vmem:[#allocation8 + $0x660] sm:$0xff]
    %v2755 = vld [vmem:[#allocation8 + $0x668] sm:$0xff]
    %v2756 = vld [vmem:[#allocation8 + $0x670] sm:$0xff]
    %v2757 = vld [vmem:[#allocation8 + $0x678] sm:$0xff]
    %v2758 = vld [vmem:[#allocation8 + $0x680] sm:$0xff]
    %v2759 = vld [vmem:[#allocation8 + $0x688] sm:$0xff]
    %v2760 = vld [vmem:[#allocation8 + $0x690] sm:$0xff]
    %v2761 = vld [vmem:[#allocation8 + $0x698] sm:$0xff]
    %v2762 = vld [vmem:[#allocation8 + $0x6a0] sm:$0xff]
    %v2763 = vld [vmem:[#allocation8 + $0x6a8] sm:$0xff]
    %v2764 = vld [vmem:[#allocation8 + $0x6b0] sm:$0xff]
    %v2765 = vld [vmem:[#allocation8 + $0x6b8] sm:$0xff]
    %v2766 = vld [vmem:[#allocation8 + $0x6c0] sm:$0xff]
    %v2767 = vld [vmem:[#allocation8 + $0x6c8] sm:$0xff]
    %v2768 = vld [vmem:[#allocation8 + $0x6d0] sm:$0xff]
    %v2769 = vld [vmem:[#allocation8 + $0x6d8] sm:$0xff]
    %v2770 = vld [vmem:[#allocation8 + $0x6e0] sm:$0xff]
    %v2771 = vld [vmem:[#allocation8 + $0x6e8] sm:$0xff]
    %v2772 = vld [vmem:[#allocation8 + $0x6f0] sm:$0xff]
    %v2773 = vld [vmem:[#allocation8 + $0x6f8] sm:$0xff]
    %v2774 = vld [vmem:[#allocation8 + $0x700] sm:$0xff]
    %v2775 = vld [vmem:[#allocation8 + $0x708] sm:$0xff]
    %v2776 = vld [vmem:[#allocation8 + $0x710] sm:$0xff]
    %v2777 = vld [vmem:[#allocation8 + $0x718] sm:$0xff]
    %v2778 = vld [vmem:[#allocation8 + $0x720] sm:$0xff]
    %v2779 = vld [vmem:[#allocation8 + $0x728] sm:$0xff]
    %v2780 = vld [vmem:[#allocation8 + $0x730] sm:$0xff]
    %v2781 = vld [vmem:[#allocation8 + $0x738] sm:$0xff]
    %v2782 = vld [vmem:[#allocation8 + $0x740] sm:$0xff]
    %v2783 = vld [vmem:[#allocation8 + $0x748] sm:$0xff]
    %v2784 = vld [vmem:[#allocation8 + $0x750] sm:$0xff]
    %v2785 = vld [vmem:[#allocation8 + $0x758] sm:$0xff]
    %v2786 = vld [vmem:[#allocation8 + $0x760] sm:$0xff]
    %v2787 = vld [vmem:[#allocation8 + $0x768] sm:$0xff]
    %v2788 = vld [vmem:[#allocation8 + $0x770] sm:$0xff]
    %v2789 = vld [vmem:[#allocation8 + $0x778] sm:$0xff]
    %v2790 = vld [vmem:[#allocation8 + $0x780] sm:$0xff]
    %v2791 = vld [vmem:[#allocation8 + $0x788] sm:$0xff]
    %v2792 = vld [vmem:[#allocation8 + $0x790] sm:$0xff]
    %v2793 = vld [vmem:[#allocation8 + $0x798] sm:$0xff]
    %v2794 = vld [vmem:[#allocation8 + $0x7a0] sm:$0xff]
    %v2795 = vld [vmem:[#allocation8 + $0x7a8] sm:$0xff]
    %v2796 = vld [vmem:[#allocation8 + $0x7b0] sm:$0xff]
    %v2797 = vld [vmem:[#allocation8 + $0x7b8] sm:$0xff]
    %v2798 = vld [vmem:[#allocation8 + $0x7c0] sm:$0xff]
    %v2799 = vld [vmem:[#allocation8 + $0x7c8] sm:$0xff]
    %v2800 = vld [vmem:[#allocation8 + $0x7d0] sm:$0xff]
    %v2801 = vld [vmem:[#allocation8 + $0x7d8] sm:$0xff]
    %v2802 = vld [vmem:[#allocation8 + $0x7e0] sm:$0xff]
    %v2803 = vld [vmem:[#allocation8 + $0x7e8] sm:$0xff]
    %v2804 = vld [vmem:[#allocation8 + $0x7f0] sm:$0xff]
    %v2805 = vld [vmem:[#allocation8 + $0x7f8] sm:$0xff]
    %v2806 = vld [vmem:[#allocation8 + $0x800] sm:$0xff]
    %v2807 = vld [vmem:[#allocation8 + $0x808] sm:$0xff]
    %v2808 = vld [vmem:[#allocation8 + $0x810] sm:$0xff]
    %v2809 = vld [vmem:[#allocation8 + $0x818] sm:$0xff]
    %v2810 = vld [vmem:[#allocation8 + $0x820] sm:$0xff]
    %v2811 = vld [vmem:[#allocation8 + $0x828] sm:$0xff]
    %v2812 = vld [vmem:[#allocation8 + $0x830] sm:$0xff]
    %v2813 = vld [vmem:[#allocation8 + $0x838] sm:$0xff]
    %v2814 = vld [vmem:[#allocation8 + $0x840] sm:$0xff]
    %v2815 = vld [vmem:[#allocation8 + $0x848] sm:$0xff]
    %v2816 = vld [vmem:[#allocation8 + $0x850] sm:$0xff]
    %v2817 = vld [vmem:[#allocation8 + $0x858] sm:$0xff]
    %v2818 = vld [vmem:[#allocation8 + $0x860] sm:$0xff]
    %v2819 = vld [vmem:[#allocation8 + $0x868] sm:$0xff]
    %v2820 = vld [vmem:[#allocation8 + $0x870] sm:$0xff]
    %v2821 = vld [vmem:[#allocation8 + $0x878] sm:$0xff]
    %v2822 = vld [vmem:[#allocation8 + $0x880] sm:$0xff]
    %v2823 = vld [vmem:[#allocation8 + $0x888] sm:$0xff]
    %v2824 = vld [vmem:[#allocation8 + $0x890] sm:$0xff]
    %v2825 = vld [vmem:[#allocation8 + $0x898] sm:$0xff]
    %v2826 = vld [vmem:[#allocation8 + $0x8a0] sm:$0xff]
    %v2827 = vld [vmem:[#allocation8 + $0x8a8] sm:$0xff]
    %v2828 = vld [vmem:[#allocation8 + $0x8b0] sm:$0xff]
    %v2829 = vld [vmem:[#allocation8 + $0x8b8] sm:$0xff]
    %v2830 = vld [vmem:[#allocation8 + $0x8c0] sm:$0xff]
    %v2831 = vld [vmem:[#allocation8 + $0x8c8] sm:$0xff]
    %v2832 = vld [vmem:[#allocation8 + $0x8d0] sm:$0xff]
    %v2833 = vld [vmem:[#allocation8 + $0x8d8] sm:$0xff]
    %v2834 = vld [vmem:[#allocation8 + $0x8e0] sm:$0xff]
    %v2835 = vld [vmem:[#allocation8 + $0x8e8] sm:$0xff]
    %v2836 = vld [vmem:[#allocation8 + $0x8f0] sm:$0xff]
    %v2837 = vld [vmem:[#allocation8 + $0x8f8] sm:$0xff]
    %v2838 = vld [vmem:[#allocation8 + $0x900] sm:$0xff]
    %v2839 = vld [vmem:[#allocation8 + $0x908] sm:$0xff]
    %v2840 = vld [vmem:[#allocation8 + $0x910] sm:$0xff]
    %v2841 = vld [vmem:[#allocation8 + $0x918] sm:$0xff]
    %v2842 = vld [vmem:[#allocation8 + $0x920] sm:$0xff]
    %v2843 = vld [vmem:[#allocation8 + $0x928] sm:$0xff]
    %v2844 = vld [vmem:[#allocation8 + $0x930] sm:$0xff]
    %v2845 = vld [vmem:[#allocation8 + $0x938] sm:$0xff]
    %v2846 = vld [vmem:[#allocation8 + $0x940] sm:$0xff]
    %v2847 = vld [vmem:[#allocation8 + $0x948] sm:$0xff]
    %v2848 = vld [vmem:[#allocation8 + $0x950] sm:$0xff]
    %v2849 = vld [vmem:[#allocation8 + $0x958] sm:$0xff]
    %v2850 = vld [vmem:[#allocation8 + $0x960] sm:$0xff]
    %v2851 = vld [vmem:[#allocation8 + $0x968] sm:$0xff]
    %v2852 = vld [vmem:[#allocation8 + $0x970] sm:$0xff]
    %v2853 = vld [vmem:[#allocation8 + $0x978] sm:$0xff]
    %v2854 = vld [vmem:[#allocation8 + $0x980] sm:$0xff]
    %v2855 = vld [vmem:[#allocation8 + $0x988] sm:$0xff]
    %v2856 = vld [vmem:[#allocation8 + $0x990] sm:$0xff]
    %v2857 = vld [vmem:[#allocation8 + $0x998] sm:$0xff]
    %v2858 = vld [vmem:[#allocation8 + $0x9a0] sm:$0xff]
    %v2859 = vld [vmem:[#allocation8 + $0x9a8] sm:$0xff]
    %v2860 = vld [vmem:[#allocation8 + $0x9b0] sm:$0xff]
    %v2861 = vld [vmem:[#allocation8 + $0x9b8] sm:$0xff]
    %v2862 = vld [vmem:[#allocation8 + $0x9c0] sm:$0xff]
    %v2863 = vld [vmem:[#allocation8 + $0x9c8] sm:$0xff]
    %v2864 = vld [vmem:[#allocation8 + $0x9d0] sm:$0xff]
    %v2865 = vld [vmem:[#allocation8 + $0x9d8] sm:$0xff]
    %v2866 = vld [vmem:[#allocation8 + $0x9e0] sm:$0xff]
    %v2867 = vld [vmem:[#allocation8 + $0x9e8] sm:$0xff]
    %v2868 = vld [vmem:[#allocation8 + $0x9f0] sm:$0xff]
    %v2869 = vld [vmem:[#allocation8 + $0x9f8] sm:$0xff]
    %v2870 = vld [vmem:[#allocation8 + $0xa00] sm:$0xff]
    %v2871 = vld [vmem:[#allocation8 + $0xa08] sm:$0xff]
    %v2872 = vld [vmem:[#allocation8 + $0xa10] sm:$0xff]
    %v2873 = vld [vmem:[#allocation8 + $0xa18] sm:$0xff]
    %v2874 = vld [vmem:[#allocation8 + $0xa20] sm:$0xff]
    %v2875 = vld [vmem:[#allocation8 + $0xa28] sm:$0xff]
    %v2876 = vld [vmem:[#allocation8 + $0xa30] sm:$0xff]
    %v2877 = vld [vmem:[#allocation8 + $0xa38] sm:$0xff]
    %v2878 = vld [vmem:[#allocation8 + $0xa40] sm:$0xff]
    %v2879 = vld [vmem:[#allocation8 + $0xa48] sm:$0xff]
    %v2880 = vld [vmem:[#allocation8 + $0xa50] sm:$0xff]
    %v2881 = vld [vmem:[#allocation8 + $0xa58] sm:$0xff]
    %v2882 = vld [vmem:[#allocation8 + $0xa60] sm:$0xff]
    %v2883 = vld [vmem:[#allocation8 + $0xa68] sm:$0xff]
    %v2884 = vld [vmem:[#allocation8 + $0xa70] sm:$0xff]
    %v2885 = vld [vmem:[#allocation8 + $0xa78] sm:$0xff]
    %v2886 = vld [vmem:[#allocation8 + $0xa80] sm:$0xff]
    %v2887 = vld [vmem:[#allocation8 + $0xa88] sm:$0xff]
    %v2888 = vld [vmem:[#allocation8 + $0xa90] sm:$0xff]
    %v2889 = vld [vmem:[#allocation8 + $0xa98] sm:$0xff]
    %v2890 = vld [vmem:[#allocation8 + $0xaa0] sm:$0xff]
    %v2891 = vld [vmem:[#allocation8 + $0xaa8] sm:$0xff]
    %v2892 = vld [vmem:[#allocation8 + $0xab0] sm:$0xff]
    %v2893 = vld [vmem:[#allocation8 + $0xab8] sm:$0xff]
    %v2894 = vld [vmem:[#allocation8 + $0xac0] sm:$0xff]
    %v2895 = vld [vmem:[#allocation8 + $0xac8] sm:$0xff]
    %v2896 = vld [vmem:[#allocation8 + $0xad0] sm:$0xff]
    %v2897 = vld [vmem:[#allocation8 + $0xad8] sm:$0xff]
    %v2898 = vld [vmem:[#allocation8 + $0xae0] sm:$0xff]
    %v2899 = vld [vmem:[#allocation8 + $0xae8] sm:$0xff]
    %v2900 = vld [vmem:[#allocation8 + $0xaf0] sm:$0xff]
    %v2901 = vld [vmem:[#allocation8 + $0xaf8] sm:$0xff]
    %v2902 = vld [vmem:[#allocation8 + $0xb00] sm:$0xff]
    %v2903 = vld [vmem:[#allocation8 + $0xb08] sm:$0xff]
    %v2904 = vld [vmem:[#allocation8 + $0xb10] sm:$0xff]
    %v2905 = vld [vmem:[#allocation8 + $0xb18] sm:$0xff]
    %v2906 = vld [vmem:[#allocation8 + $0xb20] sm:$0xff]
    %v2907 = vld [vmem:[#allocation8 + $0xb28] sm:$0xff]
    %v2908 = vld [vmem:[#allocation8 + $0xb30] sm:$0xff]
    %v2909 = vld [vmem:[#allocation8 + $0xb38] sm:$0xff]
    %v2910 = vld [vmem:[#allocation8 + $0xb40] sm:$0xff]
    %v2911 = vld [vmem:[#allocation8 + $0xb48] sm:$0xff]
    %v2912 = vld [vmem:[#allocation8 + $0xb50] sm:$0xff]
    %v2913 = vld [vmem:[#allocation8 + $0xb58] sm:$0xff]
    %v2914 = vld [vmem:[#allocation8 + $0xb60] sm:$0xff]
    %v2915 = vld [vmem:[#allocation8 + $0xb68] sm:$0xff]
    %v2916 = vld [vmem:[#allocation8 + $0xb70] sm:$0xff]
    %v2917 = vld [vmem:[#allocation8 + $0xb78] sm:$0xff]
    %v2918 = vld [vmem:[#allocation8 + $0xb80] sm:$0xff]
    %v2919 = vld [vmem:[#allocation8 + $0xb88] sm:$0xff]
    %v2920 = vld [vmem:[#allocation8 + $0xb90] sm:$0xff]
    %v2921 = vld [vmem:[#allocation8 + $0xb98] sm:$0xff]
    %v2922 = vld [vmem:[#allocation8 + $0xba0] sm:$0xff]
    %v2923 = vld [vmem:[#allocation8 + $0xba8] sm:$0xff]
    %v2924 = vld [vmem:[#allocation8 + $0xbb0] sm:$0xff]
    %v2925 = vld [vmem:[#allocation8 + $0xbb8] sm:$0xff]
    %v2926 = vld [vmem:[#allocation8 + $0xbc0] sm:$0xff]
    %v2927 = vld [vmem:[#allocation8 + $0xbc8] sm:$0xff]
    %v2928 = vld [vmem:[#allocation8 + $0xbd0] sm:$0xff]
    %v2929 = vld [vmem:[#allocation8 + $0xbd8] sm:$0xff]
    %v2930 = vld [vmem:[#allocation8 + $0xbe0] sm:$0xff]
    %v2931 = vld [vmem:[#allocation8 + $0xbe8] sm:$0xff]
    %v2932 = vld [vmem:[#allocation8 + $0xbf0] sm:$0xff]
    %v2933 = vld [vmem:[#allocation8 + $0xbf8] sm:$0xff]
    %v2934 = vld [vmem:[#allocation8 + $0xc00] sm:$0xff]
    %v2935 = vld [vmem:[#allocation8 + $0xc08] sm:$0xff]
    %v2936 = vld [vmem:[#allocation8 + $0xc10] sm:$0xff]
    %v2937 = vld [vmem:[#allocation8 + $0xc18] sm:$0xff]
    %v2938 = vld [vmem:[#allocation8 + $0xc20] sm:$0xff]
    %v2939 = vld [vmem:[#allocation8 + $0xc28] sm:$0xff]
    %v2940 = vld [vmem:[#allocation8 + $0xc30] sm:$0xff]
    %v2941 = vld [vmem:[#allocation8 + $0xc38] sm:$0xff]
    %v2942 = vld [vmem:[#allocation8 + $0xc40] sm:$0xff]
    %v2943 = vld [vmem:[#allocation8 + $0xc48] sm:$0xff]
    %v2944 = vld [vmem:[#allocation8 + $0xc50] sm:$0xff]
    %v2945 = vld [vmem:[#allocation8 + $0xc58] sm:$0xff]
    %v2946 = vld [vmem:[#allocation8 + $0xc60] sm:$0xff]
    %v2947 = vld [vmem:[#allocation8 + $0xc68] sm:$0xff]
    %v2948 = vld [vmem:[#allocation8 + $0xc70] sm:$0xff]
    %v2949 = vld [vmem:[#allocation8 + $0xc78] sm:$0xff]
    %v2950 = vld [vmem:[#allocation8 + $0xc80] sm:$0xff]
    %v2951 = vld [vmem:[#allocation8 + $0xc88] sm:$0xff]
    %v2952 = vld [vmem:[#allocation8 + $0xc90] sm:$0xff]
    %v2953 = vld [vmem:[#allocation8 + $0xc98] sm:$0xff]
    %v2954 = vld [vmem:[#allocation8 + $0xca0] sm:$0xff]
    %v2955 = vld [vmem:[#allocation8 + $0xca8] sm:$0xff]
    %v2956 = vld [vmem:[#allocation8 + $0xcb0] sm:$0xff]
    %v2957 = vld [vmem:[#allocation8 + $0xcb8] sm:$0xff]
    %v2958 = vld [vmem:[#allocation8 + $0xcc0] sm:$0xff]
    %v2959 = vld [vmem:[#allocation8 + $0xcc8] sm:$0xff]
    %v2960 = vld [vmem:[#allocation8 + $0xcd0] sm:$0xff]
    %v2961 = vld [vmem:[#allocation8 + $0xcd8] sm:$0xff]
    %v2962 = vld [vmem:[#allocation8 + $0xce0] sm:$0xff]
    %v2963 = vld [vmem:[#allocation8 + $0xce8] sm:$0xff]
    %v2964 = vld [vmem:[#allocation8 + $0xcf0] sm:$0xff]
    %v2965 = vld [vmem:[#allocation8 + $0xcf8] sm:$0xff]
    %v2966 = vld [vmem:[#allocation8 + $0xd00] sm:$0xff]
    %v2967 = vld [vmem:[#allocation8 + $0xd08] sm:$0xff]
    %v2968 = vld [vmem:[#allocation8 + $0xd10] sm:$0xff]
    %v2969 = vld [vmem:[#allocation8 + $0xd18] sm:$0xff]
    %v2970 = vld [vmem:[#allocation8 + $0xd20] sm:$0xff]
    %v2971 = vld [vmem:[#allocation8 + $0xd28] sm:$0xff]
    %v2972 = vld [vmem:[#allocation8 + $0xd30] sm:$0xff]
    %v2973 = vld [vmem:[#allocation8 + $0xd38] sm:$0xff]
    %v2974 = vld [vmem:[#allocation8 + $0xd40] sm:$0xff]
    %v2975 = vld [vmem:[#allocation8 + $0xd48] sm:$0xff]
    %v2976 = vld [vmem:[#allocation8 + $0xd50] sm:$0xff]
    %v2977 = vld [vmem:[#allocation8 + $0xd58] sm:$0xff]
    %v2978 = vld [vmem:[#allocation8 + $0xd60] sm:$0xff]
    %v2979 = vld [vmem:[#allocation8 + $0xd68] sm:$0xff]
    %v2980 = vld [vmem:[#allocation8 + $0xd70] sm:$0xff]
    %v2981 = vld [vmem:[#allocation8 + $0xd78] sm:$0xff]
    %v2982 = vld [vmem:[#allocation8 + $0xd80] sm:$0xff]
    %v2983 = vld [vmem:[#allocation8 + $0xd88] sm:$0xff]
    %v2984 = vld [vmem:[#allocation8 + $0xd90] sm:$0xff]
    %v2985 = vld [vmem:[#allocation8 + $0xd98] sm:$0xff]
    %v2986 = vld [vmem:[#allocation8 + $0xda0] sm:$0xff]
    %v2987 = vld [vmem:[#allocation8 + $0xda8] sm:$0xff]
    %v2988 = vld [vmem:[#allocation8 + $0xdb0] sm:$0xff]
    %v2989 = vld [vmem:[#allocation8 + $0xdb8] sm:$0xff]
    %v2990 = vld [vmem:[#allocation8 + $0xdc0] sm:$0xff]
    %v2991 = vld [vmem:[#allocation8 + $0xdc8] sm:$0xff]
    %v2992 = vld [vmem:[#allocation8 + $0xdd0] sm:$0xff]
    %v2993 = vld [vmem:[#allocation8 + $0xdd8] sm:$0xff]
    %v2994 = vld [vmem:[#allocation8 + $0xde0] sm:$0xff]
    %v2995 = vld [vmem:[#allocation8 + $0xde8] sm:$0xff]
    %v2996 = vld [vmem:[#allocation8 + $0xdf0] sm:$0xff]
    %v2997 = vld [vmem:[#allocation8 + $0xdf8] sm:$0xff]
    %v2998 = vld [vmem:[#allocation10] sm:$0xff]
    %v3000 = vlaneseq
    %v3001 = vshrl.u32 %v3000, 7
    %v3002 = vsub.s32 0, %v3001
    %v3003 = vrot.slane %v2998, %v3002
    %v3004 = vlaneseq
    %v3005 = vshrl.u32 %v3004, 7
    %v3006 = vsub.s32 1, %v3005
    %v3007 = vrot.slane %v2998, %v3006
    %v3008 = vlaneseq
    %v3009 = vshrl.u32 %v3008, 7
    %v3010 = vsub.s32 2, %v3009
    %v3011 = vrot.slane %v2998, %v3010
    %v3012 = vlaneseq
    %v3013 = vshrl.u32 %v3012, 7
    %v3014 = vsub.s32 3, %v3013
    %v3015 = vrot.slane %v2998, %v3014
    %v3016 = vlaneseq
    %v3017 = vshrl.u32 %v3016, 7
    %v3018 = vsub.s32 4, %v3017
    %v3019 = vrot.slane %v2998, %v3018
    %v3020 = vlaneseq
    %v3021 = vshrl.u32 %v3020, 7
    %v3022 = vsub.s32 5, %v3021
    %v3023 = vrot.slane %v2998, %v3022
    %v3024 = vlaneseq
    %v3025 = vshrl.u32 %v3024, 7
    %v3026 = vsub.s32 6, %v3025
    %v3027 = vrot.slane %v2998, %v3026
    %3035 = vmatprep.subr.mxu0 %v2551
    %3036 = vmatpush1.msra.mxu0 %v2550
    %3037 = vmatprep.subr.mxu0 %v2558
    %3038 = vmatpush1.msra.mxu0 %v2557
    %3039 = vmatprep.subr.mxu0 %v2565
    %3040 = vmatpush1.msra.mxu0 %v2564
    %3041 = vmatprep.subr.mxu0 %v2572
    %3042 = vmatpush1.msra.mxu0 %v2571
    %3043 = vmatprep.subr.mxu0 %v2579
    %3044 = vmatpush1.msra.mxu0 %v2578
    %3045 = vmatprep.subr.mxu0 %v2586
    %3046 = vmatpush1.msra.mxu0 %v2585
    %3047 = vmatprep.subr.mxu0 %v2593
    %3048 = vmatpush1.msra.mxu0 %v2592
    %3049 = vmatprep.subr.mxu0 %v2600
    %3050 = vmatpush1.msra.mxu0 %v2599
    %3051 = vmatprep.subr.mxu0 %v2607
    %3052 = vmatpush1.msra.mxu0 %v2606
    %3053 = vmatprep.subr.mxu0 %v2614
    %3054 = vmatpush1.msra.mxu0 %v2613
    %3055 = vmatprep.subr.mxu0 %v2621
    %3056 = vmatpush1.msra.mxu0 %v2620
    %3057 = vmatprep.subr.mxu0 %v2628
    %3058 = vmatpush1.msra.mxu0 %v2627
    %3059 = vmatprep.subr.mxu0 %v2635
    %3060 = vmatpush1.msra.mxu0 %v2634
    %3061 = vmatprep.subr.mxu0 %v2642
    %3062 = vmatpush1.msra.mxu0 %v2641
    %3063 = vmatprep.subr.mxu0 %v2649
    %3064 = vmatpush1.msra.mxu0 %v2648
    %3065 = vmatprep.subr.mxu0 %v2656
    %3066 = vmatpush1.msra.mxu0 %v2655
    %3067 = vmatprep.subr.mxu0 %v2663
    %3068 = vmatpush1.msra.mxu0 %v2662
    %3069 = vmatprep.subr.mxu0 %v2670
    %3070 = vmatpush1.msra.mxu0 %v2669
    %3071 = vmatprep.subr.mxu0 %v2677
    %3072 = vmatpush1.msra.mxu0 %v2676
    %3073 = vmatprep.subr.mxu0 %v2684
    %3074 = vmatpush1.msra.mxu0 %v2683
    %3075 = vmatprep.subr.mxu0 %v2691
    %3076 = vmatpush1.msra.mxu0 %v2690
    %3077 = vmatprep.subr.mxu0 %v2698
    %3078 = vmatpush1.msra.mxu0 %v2697
    %3079 = vmatprep.subr.mxu0 %v2705
    %3080 = vmatpush1.msra.mxu0 %v2704
    %3081 = vmatprep.subr.mxu0 %v2712
    %3082 = vmatpush1.msra.mxu0 %v2711
    %3083 = vmatprep.subr.mxu0 %v2719
    %3084 = vmatpush1.msra.mxu0 %v2718
    %3085 = vmatprep.subr.mxu0 %v2726
    %3086 = vmatpush1.msra.mxu0 %v2725
    %3087 = vmatprep.subr.mxu0 %v2733
    %3088 = vmatpush1.msra.mxu0 %v2732
    %3089 = vmatprep.subr.mxu0 %v2740
    %3090 = vmatpush1.msra.mxu0 %v2739
    %3091 = vmatprep.subr.mxu0 %v2747
    %3092 = vmatpush1.msra.mxu0 %v2746
    %3093 = vmatprep.subr.mxu0 %v2754
    %3094 = vmatpush1.msra.mxu0 %v2753
    %3095 = vmatprep.subr.mxu0 %v2761
    %3096 = vmatpush1.msra.mxu0 %v2760
    %3097 = vmatprep.subr.mxu0 %v2768
    %3098 = vmatpush1.msra.mxu0 %v2767
    %3099 = vmatprep.mubr.f32.mxu0 %v2543
    %3100 = vmatmul.mubr.f32.gmra.mrb[0].mxu0 %v2542
    %v3101 = vpop.f32.mrb[0].mxu0
    %v3102 = vadd.f32 %v3003, %v3101
    %v3103 = vpop.f32.mrb[0].mxu0
    %v3104 = vadd.f32 %v3007, %v3103
    %3105 = vmatprep.mubr.f32.mxu0 %v2547
    %3106 = vmatmul.mubr.f32.gmra.mrb[0].mxu0 %v2546
    %v3107 = vpop.f32.mrb[0].mxu0
    %v3108 = vadd.f32 %v3003, %v3107
    %v3109 = vpop.f32.mrb[0].mxu0
    %v3110 = vadd.f32 %v3007, %v3109
    %3111 = vdwg.mxu0
    %3112 = vmatprep.subr.mxu0 %v2775
    %3113 = vmatpush1.msra.mxu0 %v2774
    %3114 = vmatprep.subr.mxu0 %v2782
    %3115 = vmatpush1.msra.mxu0 %v2781
    %3116 = vmatprep.subr.mxu0 %v2789
    %3117 = vmatpush1.msra.mxu0 %v2788
    %3118 = vmatprep.subr.mxu0 %v2796
    %3119 = vmatpush1.msra.mxu0 %v2795
    %3120 = vmatprep.subr.mxu0 %v2803
    %3121 = vmatpush1.msra.mxu0 %v2802
    %3122 = vmatprep.subr.mxu0 %v2810
    %3123 = vmatpush1.msra.mxu0 %v2809
    %3124 = vmatprep.subr.mxu0 %v2817
    %3125 = vmatpush1.msra.mxu0 %v2816
    %3126 = vmatprep.subr.mxu0 %v2824
    %3127 = vmatpush1.msra.mxu0 %v2823
    %3128 = vmatprep.subr.mxu0 %v2831
    %3129 = vmatpush1.msra.mxu0 %v2830
    %3130 = vmatprep.subr.mxu0 %v2838
    %3131 = vmatpush1.msra.mxu0 %v2837
    %3132 = vmatprep.subr.mxu0 %v2845
    %3133 = vmatpush1.msra.mxu0 %v2844
    %3134 = vmatprep.subr.mxu0 %v2852
    %3135 = vmatpush1.msra.mxu0 %v2851
    %3136 = vmatprep.subr.mxu0 %v2859
    %3137 = vmatpush1.msra.mxu0 %v2858
    %3138 = vmatprep.subr.mxu0 %v2866
    %3139 = vmatpush1.msra.mxu0 %v2865
    %3140 = vmatprep.subr.mxu0 %v2873
    %3141 = vmatpush1.msra.mxu0 %v2872
    %3142 = vmatprep.subr.mxu0 %v2880
    %3143 = vmatpush1.msra.mxu0 %v2879
    %3144 = vmatprep.subr.mxu0 %v2887
    %3145 = vmatpush1.msra.mxu0 %v2886
    %3146 = vmatprep.subr.mxu0 %v2894
    %3147 = vmatpush1.msra.mxu0 %v2893
    %3148 = vmatprep.subr.mxu0 %v2901
    %3149 = vmatpush1.msra.mxu0 %v2900
    %3150 = vmatprep.subr.mxu0 %v2908
    %3151 = vmatpush1.msra.mxu0 %v2907
    %3152 = vmatprep.subr.mxu0 %v2915
    %3153 = vmatpush1.msra.mxu0 %v2914
    %3154 = vmatprep.subr.mxu0 %v2922
    %3155 = vmatpush1.msra.mxu0 %v2921
    %3156 = vmatprep.subr.mxu0 %v2929
    %3157 = vmatpush1.msra.mxu0 %v2928
    %3158 = vmatprep.subr.mxu0 %v2936
    %3159 = vmatpush1.msra.mxu0 %v2935
    %3160 = vmatprep.subr.mxu0 %v2943
    %3161 = vmatpush1.msra.mxu0 %v2942
    %3162 = vmatprep.subr.mxu0 %v2950
    %3163 = vmatpush1.msra.mxu0 %v2949
    %3164 = vmatprep.subr.mxu0 %v2957
    %3165 = vmatpush1.msra.mxu0 %v2956
    %3166 = vmatprep.subr.mxu0 %v2964
    %3167 = vmatpush1.msra.mxu0 %v2963
    %3168 = vmatprep.subr.mxu0 %v2971
    %3169 = vmatpush1.msra.mxu0 %v2970
    %3170 = vmatprep.subr.mxu0 %v2978
    %3171 = vmatpush1.msra.mxu0 %v2977
    %3172 = vmatprep.subr.mxu0 %v2985
    %3173 = vmatpush1.msra.mxu0 %v2984
    %3174 = vmatprep.subr.mxu0 %v2992
    %3175 = vmatpush1.msra.mxu0 %v2991
    %3176 = vmatprep.mubr.f32.mxu0 %v2545
    %3177 = vmatmul.mubr.f32.gmra.mrb[0].mxu0 %v2544
    %v3178 = vpop.f32.mrb[0].mxu0
    %v3179 = vadd.f32 %v3102, %v3178
    %v3180 = vpop.f32.mrb[0].mxu0
    %v3181 = vadd.f32 %v3104, %v3180
    %3182 = vmatprep.mubr.f32.mxu0 %v2549
    %3183 = vmatmul.mubr.f32.gmra.mrb[0].mxu0 %v2548
    %v3184 = vpop.f32.mrb[0].mxu0
    %v3185 = vadd.f32 %v3108, %v3184
    %v3186 = vpop.f32.mrb[0].mxu0
    %v3187 = vadd.f32 %v3110, %v3186
    %3188 = vdwg.mxu0
    %3189 = vmatprep.subr.mxu0 %v2553
    %3190 = vmatpush1.msra.mxu0 %v2552
    %3191 = vmatprep.subr.mxu0 %v2560
    %3192 = vmatpush1.msra.mxu0 %v2559
    %3193 = vmatprep.subr.mxu0 %v2567
    %3194 = vmatpush1.msra.mxu0 %v2566
    %3195 = vmatprep.subr.mxu0 %v2574
    %3196 = vmatpush1.msra.mxu0 %v2573
    %3197 = vmatprep.subr.mxu0 %v2581
    %3198 = vmatpush1.msra.mxu0 %v2580
    %3199 = vmatprep.subr.mxu0 %v2588
    %3200 = vmatpush1.msra.mxu0 %v2587
    %3201 = vmatprep.subr.mxu0 %v2595
    %3202 = vmatpush1.msra.mxu0 %v2594
    %3203 = vmatprep.subr.mxu0 %v2602
    %3204 = vmatpush1.msra.mxu0 %v2601
    %3205 = vmatprep.subr.mxu0 %v2609
    %3206 = vmatpush1.msra.mxu0 %v2608
    %3207 = vmatprep.subr.mxu0 %v2616
    %3208 = vmatpush1.msra.mxu0 %v2615
    %3209 = vmatprep.subr.mxu0 %v2623
    %3210 = vmatpush1.msra.mxu0 %v2622
    %3211 = vmatprep.subr.mxu0 %v2630
    %3212 = vmatpush1.msra.mxu0 %v2629
    %3213 = vmatprep.subr.mxu0 %v2637
    %3214 = vmatpush1.msra.mxu0 %v2636
    %3215 = vmatprep.subr.mxu0 %v2644
    %3216 = vmatpush1.msra.mxu0 %v2643
    %3217 = vmatprep.subr.mxu0 %v2651
    %3218 = vmatpush1.msra.mxu0 %v2650
    %3219 = vmatprep.subr.mxu0 %v2658
    %3220 = vmatpush1.msra.mxu0 %v2657
    %3221 = vmatprep.subr.mxu0 %v2665
    %3222 = vmatpush1.msra.mxu0 %v2664
    %3223 = vmatprep.subr.mxu0 %v2672
    %3224 = vmatpush1.msra.mxu0 %v2671
    %3225 = vmatprep.subr.mxu0 %v2679
    %3226 = vmatpush1.msra.mxu0 %v2678
    %3227 = vmatprep.subr.mxu0 %v2686
    %3228 = vmatpush1.msra.mxu0 %v2685
    %3229 = vmatprep.subr.mxu0 %v2693
    %3230 = vmatpush1.msra.mxu0 %v2692
    %3231 = vmatprep.subr.mxu0 %v2700
    %3232 = vmatpush1.msra.mxu0 %v2699
    %3233 = vmatprep.subr.mxu0 %v2707
    %3234 = vmatpush1.msra.mxu0 %v2706
    %3235 = vmatprep.subr.mxu0 %v2714
    %3236 = vmatpush1.msra.mxu0 %v2713
    %3237 = vmatprep.subr.mxu0 %v2721
    %3238 = vmatpush1.msra.mxu0 %v2720
    %3239 = vmatprep.subr.mxu0 %v2728
    %3240 = vmatpush1.msra.mxu0 %v2727
    %3241 = vmatprep.subr.mxu0 %v2735
    %3242 = vmatpush1.msra.mxu0 %v2734
    %3243 = vmatprep.subr.mxu0 %v2742
    %3244 = vmatpush1.msra.mxu0 %v2741
    %3245 = vmatprep.subr.mxu0 %v2749
    %3246 = vmatpush1.msra.mxu0 %v2748
    %3247 = vmatprep.subr.mxu0 %v2756
    %3248 = vmatpush1.msra.mxu0 %v2755
    %3249 = vmatprep.subr.mxu0 %v2763
    %3250 = vmatpush1.msra.mxu0 %v2762
    %3251 = vmatprep.subr.mxu0 %v2770
    %3252 = vmatpush1.msra.mxu0 %v2769
    %3253 = vmatprep.mubr.f32.mxu0 %v2543
    %3254 = vmatmul.mubr.f32.gmra.mrb[0].mxu0 %v2542
    %v3255 = vpop.f32.mrb[0].mxu0
    %v3256 = vadd.f32 %v3011, %v3255
    %v3257 = vpop.f32.mrb[0].mxu0
    %v3258 = vadd.f32 %v3015, %v3257
    %3259 = vmatprep.mubr.f32.mxu0 %v2547
    %3260 = vmatmul.mubr.f32.gmra.mrb[0].mxu0 %v2546
    %v3261 = vpop.f32.mrb[0].mxu0
    %v3262 = vadd.f32 %v3011, %v3261
    %v3263 = vpop.f32.mrb[0].mxu0
    %v3264 = vadd.f32 %v3015, %v3263
    %3265 = vdwg.mxu0
    %3266 = vmatprep.subr.mxu0 %v2777
    %3267 = vmatpush1.msra.mxu0 %v2776
    %3268 = vmatprep.subr.mxu0 %v2784
    %3269 = vmatpush1.msra.mxu0 %v2783
    %3270 = vmatprep.subr.mxu0 %v2791
    %3271 = vmatpush1.msra.mxu0 %v2790
    %3272 = vmatprep.subr.mxu0 %v2798
    %3273 = vmatpush1.msra.mxu0 %v2797
    %3274 = vmatprep.subr.mxu0 %v2805
    %3275 = vmatpush1.msra.mxu0 %v2804
    %3276 = vmatprep.subr.mxu0 %v2812
    %3277 = vmatpush1.msra.mxu0 %v2811
    %3278 = vmatprep.subr.mxu0 %v2819
    %3279 = vmatpush1.msra.mxu0 %v2818
    %3280 = vmatprep.subr.mxu0 %v2826
    %3281 = vmatpush1.msra.mxu0 %v2825
    %3282 = vmatprep.subr.mxu0 %v2833
    %3283 = vmatpush1.msra.mxu0 %v2832
    %3284 = vmatprep.subr.mxu0 %v2840
    %3285 = vmatpush1.msra.mxu0 %v2839
    %3286 = vmatprep.subr.mxu0 %v2847
    %3287 = vmatpush1.msra.mxu0 %v2846
    %3288 = vmatprep.subr.mxu0 %v2854
    %3289 = vmatpush1.msra.mxu0 %v2853
    %3290 = vmatprep.subr.mxu0 %v2861
    %3291 = vmatpush1.msra.mxu0 %v2860
    %3292 = vmatprep.subr.mxu0 %v2868
    %3293 = vmatpush1.msra.mxu0 %v2867
    %3294 = vmatprep.subr.mxu0 %v2875
    %3295 = vmatpush1.msra.mxu0 %v2874
    %3296 = vmatprep.subr.mxu0 %v2882
    %3297 = vmatpush1.msra.mxu0 %v2881
    %3298 = vmatprep.subr.mxu0 %v2889
    %3299 = vmatpush1.msra.mxu0 %v2888
    %3300 = vmatprep.subr.mxu0 %v2896
    %3301 = vmatpush1.msra.mxu0 %v2895
    %3302 = vmatprep.subr.mxu0 %v2903
    %3303 = vmatpush1.msra.mxu0 %v2902
    %3304 = vmatprep.subr.mxu0 %v2910
    %3305 = vmatpush1.msra.mxu0 %v2909
    %3306 = vmatprep.subr.mxu0 %v2917
    %3307 = vmatpush1.msra.mxu0 %v2916
    %3308 = vmatprep.subr.mxu0 %v2924
    %3309 = vmatpush1.msra.mxu0 %v2923
    %3310 = vmatprep.subr.mxu0 %v2931
    %3311 = vmatpush1.msra.mxu0 %v2930
    %3312 = vmatprep.subr.mxu0 %v2938
    %3313 = vmatpush1.msra.mxu0 %v2937
    %3314 = vmatprep.subr.mxu0 %v2945
    %3315 = vmatpush1.msra.mxu0 %v2944
    %3316 = vmatprep.subr.mxu0 %v2952
    %3317 = vmatpush1.msra.mxu0 %v2951
    %3318 = vmatprep.subr.mxu0 %v2959
    %3319 = vmatpush1.msra.mxu0 %v2958
    %3320 = vmatprep.subr.mxu0 %v2966
    %3321 = vmatpush1.msra.mxu0 %v2965
    %3322 = vmatprep.subr.mxu0 %v2973
    %3323 = vmatpush1.msra.mxu0 %v2972
    %3324 = vmatprep.subr.mxu0 %v2980
    %3325 = vmatpush1.msra.mxu0 %v2979
    %3326 = vmatprep.subr.mxu0 %v2987
    %3327 = vmatpush1.msra.mxu0 %v2986
    %3328 = vmatprep.subr.mxu0 %v2994
    %3329 = vmatpush1.msra.mxu0 %v2993
    %3330 = vmatprep.mubr.f32.mxu0 %v2545
    %3331 = vmatmul.mubr.f32.gmra.mrb[0].mxu0 %v2544
    %v3332 = vpop.f32.mrb[0].mxu0
    %v3333 = vadd.f32 %v3256, %v3332
    %v3334 = vpop.f32.mrb[0].mxu0
    %v3335 = vadd.f32 %v3258, %v3334
    %3336 = vmatprep.mubr.f32.mxu0 %v2549
    %3337 = vmatmul.mubr.f32.gmra.mrb[0].mxu0 %v2548
    %v3338 = vpop.f32.mrb[0].mxu0
    %v3339 = vadd.f32 %v3262, %v3338
    %v3340 = vpop.f32.mrb[0].mxu0
    %v3341 = vadd.f32 %v3264, %v3340
    %3342 = vdwg.mxu0
    %3343 = vmatprep.subr.mxu0 %v2555
    %3344 = vmatpush1.msra.mxu0 %v2554
    %3345 = vmatprep.subr.mxu0 %v2562
    %3346 = vmatpush1.msra.mxu0 %v2561
    %3347 = vmatprep.subr.mxu0 %v2569
    %3348 = vmatpush1.msra.mxu0 %v2568
    %3349 = vmatprep.subr.mxu0 %v2576
    %3350 = vmatpush1.msra.mxu0 %v2575
    %3351 = vmatprep.subr.mxu0 %v2583
    %3352 = vmatpush1.msra.mxu0 %v2582
    %3353 = vmatprep.subr.mxu0 %v2590
    %3354 = vmatpush1.msra.mxu0 %v2589
    %3355 = vmatprep.subr.mxu0 %v2597
    %3356 = vmatpush1.msra.mxu0 %v2596
    %3357 = vmatprep.subr.mxu0 %v2604
    %3358 = vmatpush1.msra.mxu0 %v2603
    %3359 = vmatprep.subr.mxu0 %v2611
    %3360 = vmatpush1.msra.mxu0 %v2610
    %3361 = vmatprep.subr.mxu0 %v2618
    %3362 = vmatpush1.msra.mxu0 %v2617
    %3363 = vmatprep.subr.mxu0 %v2625
    %3364 = vmatpush1.msra.mxu0 %v2624
    %3365 = vmatprep.subr.mxu0 %v2632
    %3366 = vmatpush1.msra.mxu0 %v2631
    %3367 = vmatprep.subr.mxu0 %v2639
    %3368 = vmatpush1.msra.mxu0 %v2638
    %3369 = vmatprep.subr.mxu0 %v2646
    %3370 = vmatpush1.msra.mxu0 %v2645
    %3371 = vmatprep.subr.mxu0 %v2653
    %3372 = vmatpush1.msra.mxu0 %v2652
    %3373 = vmatprep.subr.mxu0 %v2660
    %3374 = vmatpush1.msra.mxu0 %v2659
    %3375 = vmatprep.subr.mxu0 %v2667
    %3376 = vmatpush1.msra.mxu0 %v2666
    %3377 = vmatprep.subr.mxu0 %v2674
    %3378 = vmatpush1.msra.mxu0 %v2673
    %3379 = vmatprep.subr.mxu0 %v2681
    %3380 = vmatpush1.msra.mxu0 %v2680
    %3381 = vmatprep.subr.mxu0 %v2688
    %3382 = vmatpush1.msra.mxu0 %v2687
    %3383 = vmatprep.subr.mxu0 %v2695
    %3384 = vmatpush1.msra.mxu0 %v2694
    %3385 = vmatprep.subr.mxu0 %v2702
    %3386 = vmatpush1.msra.mxu0 %v2701
    %3387 = vmatprep.subr.mxu0 %v2709
    %3388 = vmatpush1.msra.mxu0 %v2708
    %3389 = vmatprep.subr.mxu0 %v2716
    %3390 = vmatpush1.msra.mxu0 %v2715
    %3391 = vmatprep.subr.mxu0 %v2723
    %3392 = vmatpush1.msra.mxu0 %v2722
    %3393 = vmatprep.subr.mxu0 %v2730
    %3394 = vmatpush1.msra.mxu0 %v2729
    %3395 = vmatprep.subr.mxu0 %v2737
    %3396 = vmatpush1.msra.mxu0 %v2736
    %3397 = vmatprep.subr.mxu0 %v2744
    %3398 = vmatpush1.msra.mxu0 %v2743
    %3399 = vmatprep.subr.mxu0 %v2751
    %3400 = vmatpush1.msra.mxu0 %v2750
    %3401 = vmatprep.subr.mxu0 %v2758
    %3402 = vmatpush1.msra.mxu0 %v2757
    %3403 = vmatprep.subr.mxu0 %v2765
    %3404 = vmatpush1.msra.mxu0 %v2764
    %3405 = vmatprep.subr.mxu0 %v2772
    %3406 = vmatpush1.msra.mxu0 %v2771
    %3407 = vmatprep.mubr.f32.mxu0 %v2543
    %3408 = vmatmul.mubr.f32.gmra.mrb[0].mxu0 %v2542
    %v3409 = vpop.f32.mrb[0].mxu0
    %v3410 = vadd.f32 %v3019, %v3409
    %v3411 = vpop.f32.mrb[0].mxu0
    %v3412 = vadd.f32 %v3023, %v3411
    %3413 = vmatprep.mubr.f32.mxu0 %v2547
    %3414 = vmatmul.mubr.f32.gmra.mrb[0].mxu0 %v2546
    %v3415 = vpop.f32.mrb[0].mxu0
    %v3416 = vadd.f32 %v3019, %v3415
    %v3417 = vpop.f32.mrb[0].mxu0
    %v3418 = vadd.f32 %v3023, %v3417
    %3419 = vdwg.mxu0
    %3420 = vmatprep.subr.mxu0 %v2779
    %3421 = vmatpush1.msra.mxu0 %v2778
    %3422 = vmatprep.subr.mxu0 %v2786
    %3423 = vmatpush1.msra.mxu0 %v2785
    %3424 = vmatprep.subr.mxu0 %v2793
    %3425 = vmatpush1.msra.mxu0 %v2792
    %3426 = vmatprep.subr.mxu0 %v2800
    %3427 = vmatpush1.msra.mxu0 %v2799
    %3428 = vmatprep.subr.mxu0 %v2807
    %3429 = vmatpush1.msra.mxu0 %v2806
    %3430 = vmatprep.subr.mxu0 %v2814
    %3431 = vmatpush1.msra.mxu0 %v2813
    %3432 = vmatprep.subr.mxu0 %v2821
    %3433 = vmatpush1.msra.mxu0 %v2820
    %3434 = vmatprep.subr.mxu0 %v2828
    %3435 = vmatpush1.msra.mxu0 %v2827
    %3436 = vmatprep.subr.mxu0 %v2835
    %3437 = vmatpush1.msra.mxu0 %v2834
    %3438 = vmatprep.subr.mxu0 %v2842
    %3439 = vmatpush1.msra.mxu0 %v2841
    %3440 = vmatprep.subr.mxu0 %v2849
    %3441 = vmatpush1.msra.mxu0 %v2848
    %3442 = vmatprep.subr.mxu0 %v2856
    %3443 = vmatpush1.msra.mxu0 %v2855
    %3444 = vmatprep.subr.mxu0 %v2863
    %3445 = vmatpush1.msra.mxu0 %v2862
    %3446 = vmatprep.subr.mxu0 %v2870
    %3447 = vmatpush1.msra.mxu0 %v2869
    %3448 = vmatprep.subr.mxu0 %v2877
    %3449 = vmatpush1.msra.mxu0 %v2876
    %3450 = vmatprep.subr.mxu0 %v2884
    %3451 = vmatpush1.msra.mxu0 %v2883
    %3452 = vmatprep.subr.mxu0 %v2891
    %3453 = vmatpush1.msra.mxu0 %v2890
    %3454 = vmatprep.subr.mxu0 %v2898
    %3455 = vmatpush1.msra.mxu0 %v2897
    %3456 = vmatprep.subr.mxu0 %v2905
    %3457 = vmatpush1.msra.mxu0 %v2904
    %3458 = vmatprep.subr.mxu0 %v2912
    %3459 = vmatpush1.msra.mxu0 %v2911
    %3460 = vmatprep.subr.mxu0 %v2919
    %3461 = vmatpush1.msra.mxu0 %v2918
    %3462 = vmatprep.subr.mxu0 %v2926
    %3463 = vmatpush1.msra.mxu0 %v2925
    %3464 = vmatprep.subr.mxu0 %v2933
    %3465 = vmatpush1.msra.mxu0 %v2932
    %3466 = vmatprep.subr.mxu0 %v2940
    %3467 = vmatpush1.msra.mxu0 %v2939
    %3468 = vmatprep.subr.mxu0 %v2947
    %3469 = vmatpush1.msra.mxu0 %v2946
    %3470 = vmatprep.subr.mxu0 %v2954
    %3471 = vmatpush1.msra.mxu0 %v2953
    %3472 = vmatprep.subr.mxu0 %v2961
    %3473 = vmatpush1.msra.mxu0 %v2960
    %3474 = vmatprep.subr.mxu0 %v2968
    %3475 = vmatpush1.msra.mxu0 %v2967
    %3476 = vmatprep.subr.mxu0 %v2975
    %3477 = vmatpush1.msra.mxu0 %v2974
    %3478 = vmatprep.subr.mxu0 %v2982
    %3479 = vmatpush1.msra.mxu0 %v2981
    %3480 = vmatprep.subr.mxu0 %v2989
    %3481 = vmatpush1.msra.mxu0 %v2988
    %3482 = vmatprep.subr.mxu0 %v2996
    %3483 = vmatpush1.msra.mxu0 %v2995
    %3484 = vmatprep.mubr.f32.mxu0 %v2545
    %3485 = vmatmul.mubr.f32.gmra.mrb[0].mxu0 %v2544
    %v3486 = vpop.f32.mrb[0].mxu0
    %v3487 = vadd.f32 %v3410, %v3486
    %v3488 = vpop.f32.mrb[0].mxu0
    %v3489 = vadd.f32 %v3412, %v3488
    %3490 = vmatprep.mubr.f32.mxu0 %v2549
    %3491 = vmatmul.mubr.f32.gmra.mrb[0].mxu0 %v2548
    %v3492 = vpop.f32.mrb[0].mxu0
    %v3493 = vadd.f32 %v3416, %v3492
    %v3494 = vpop.f32.mrb[0].mxu0
    %v3495 = vadd.f32 %v3418, %v3494
    %3496 = vdwg.mxu0
    %3497 = vmatprep.subr.mxu0 0.0
    %3498 = vmatpush1.msra.mxu0 %v2556
    %3499 = vmatprep.subr.mxu0 0.0
    %3500 = vmatpush1.msra.mxu0 %v2563
    %3501 = vmatprep.subr.mxu0 0.0
    %3502 = vmatpush1.msra.mxu0 %v2570
    %3503 = vmatprep.subr.mxu0 0.0
    %3504 = vmatpush1.msra.mxu0 %v2577
    %3505 = vmatprep.subr.mxu0 0.0
    %3506 = vmatpush1.msra.mxu0 %v2584
    %3507 = vmatprep.subr.mxu0 0.0
    %3508 = vmatpush1.msra.mxu0 %v2591
    %3509 = vmatprep.subr.mxu0 0.0
    %3510 = vmatpush1.msra.mxu0 %v2598
    %3511 = vmatprep.subr.mxu0 0.0
    %3512 = vmatpush1.msra.mxu0 %v2605
    %3513 = vmatprep.subr.mxu0 0.0
    %3514 = vmatpush1.msra.mxu0 %v2612
    %3515 = vmatprep.subr.mxu0 0.0
    %3516 = vmatpush1.msra.mxu0 %v2619
    %3517 = vmatprep.subr.mxu0 0.0
    %3518 = vmatpush1.msra.mxu0 %v2626
    %3519 = vmatprep.subr.mxu0 0.0
    %3520 = vmatpush1.msra.mxu0 %v2633
    %3521 = vmatprep.subr.mxu0 0.0
    %3522 = vmatpush1.msra.mxu0 %v2640
    %3523 = vmatprep.subr.mxu0 0.0
    %3524 = vmatpush1.msra.mxu0 %v2647
    %3525 = vmatprep.subr.mxu0 0.0
    %3526 = vmatpush1.msra.mxu0 %v2654
    %3527 = vmatprep.subr.mxu0 0.0
    %3528 = vmatpush1.msra.mxu0 %v2661
    %3529 = vmatprep.subr.mxu0 0.0
    %3530 = vmatpush1.msra.mxu0 %v2668
    %3531 = vmatprep.subr.mxu0 0.0
    %3532 = vmatpush1.msra.mxu0 %v2675
    %3533 = vmatprep.subr.mxu0 0.0
    %3534 = vmatpush1.msra.mxu0 %v2682
    %3535 = vmatprep.subr.mxu0 0.0
    %3536 = vmatpush1.msra.mxu0 %v2689
    %3537 = vmatprep.subr.mxu0 0.0
    %3538 = vmatpush1.msra.mxu0 %v2696
    %3539 = vmatprep.subr.mxu0 0.0
    %3540 = vmatpush1.msra.mxu0 %v2703
    %3541 = vmatprep.subr.mxu0 0.0
    %3542 = vmatpush1.msra.mxu0 %v2710
    %3543 = vmatprep.subr.mxu0 0.0
    %3544 = vmatpush1.msra.mxu0 %v2717
    %3545 = vmatprep.subr.mxu0 0.0
    %3546 = vmatpush1.msra.mxu0 %v2724
    %3547 = vmatprep.subr.mxu0 0.0
    %3548 = vmatpush1.msra.mxu0 %v2731
    %3549 = vmatprep.subr.mxu0 0.0
    %3550 = vmatpush1.msra.mxu0 %v2738
    %3551 = vmatprep.subr.mxu0 0.0
    %3552 = vmatpush1.msra.mxu0 %v2745
    %3553 = vmatprep.subr.mxu0 0.0
    %3554 = vmatpush1.msra.mxu0 %v2752
    %3555 = vmatprep.subr.mxu0 0.0
    %3556 = vmatpush1.msra.mxu0 %v2759
    %3557 = vmatprep.subr.mxu0 0.0
    %3558 = vmatpush1.msra.mxu0 %v2766
    %3559 = vmatprep.subr.mxu0 0.0
    %3560 = vmatpush1.msra.mxu0 %v2773
    %3561 = vmatprep.mubr.f32.mxu0 %v2543
    %3562 = vmatmul.mubr.f32.gmra.mrb[0].mxu0 %v2542
    %v3563 = vpop.f32.mrb[0].mxu0
    %v3564 = vadd.f32 %v3027, %v3563
    %v3565 = vpop.f32.mrb[0].mxu0
    %3566 = vmatprep.mubr.f32.mxu0 %v2547
    %3567 = vmatmul.mubr.f32.gmra.mrb[0].mxu0 %v2546
    %v3568 = vpop.f32.mrb[0].mxu0
    %v3569 = vadd.f32 %v3027, %v3568
    %v3570 = vpop.f32.mrb[0].mxu0
    %3571 = vdwg.mxu0
    %3572 = vmatprep.subr.mxu0 0.0
    %3573 = vmatpush1.msra.mxu0 %v2780
    %3574 = vmatprep.subr.mxu0 0.0
    %3575 = vmatpush1.msra.mxu0 %v2787
    %3576 = vmatprep.subr.mxu0 0.0
    %3577 = vmatpush1.msra.mxu0 %v2794
    %3578 = vmatprep.subr.mxu0 0.0
    %3579 = vmatpush1.msra.mxu0 %v2801
    %3580 = vmatprep.subr.mxu0 0.0
    %3581 = vmatpush1.msra.mxu0 %v2808
    %3582 = vmatprep.subr.mxu0 0.0
    %3583 = vmatpush1.msra.mxu0 %v2815
    %3584 = vmatprep.subr.mxu0 0.0
    %3585 = vmatpush1.msra.mxu0 %v2822
    %3586 = vmatprep.subr.mxu0 0.0
    %3587 = vmatpush1.msra.mxu0 %v2829
    %3588 = vmatprep.subr.mxu0 0.0
    %3589 = vmatpush1.msra.mxu0 %v2836
    %3590 = vmatprep.subr.mxu0 0.0
    %3591 = vmatpush1.msra.mxu0 %v2843
    %3592 = vmatprep.subr.mxu0 0.0
    %3593 = vmatpush1.msra.mxu0 %v2850
    %3594 = vmatprep.subr.mxu0 0.0
    %3595 = vmatpush1.msra.mxu0 %v2857
    %3596 = vmatprep.subr.mxu0 0.0
    %3597 = vmatpush1.msra.mxu0 %v2864
    %3598 = vmatprep.subr.mxu0 0.0
    %3599 = vmatpush1.msra.mxu0 %v2871
    %3600 = vmatprep.subr.mxu0 0.0
    %3601 = vmatpush1.msra.mxu0 %v2878
    %3602 = vmatprep.subr.mxu0 0.0
    %3603 = vmatpush1.msra.mxu0 %v2885
    %3604 = vmatprep.subr.mxu0 0.0
    %3605 = vmatpush1.msra.mxu0 %v2892
    %3606 = vmatprep.subr.mxu0 0.0
    %3607 = vmatpush1.msra.mxu0 %v2899
    %3608 = vmatprep.subr.mxu0 0.0
    %3609 = vmatpush1.msra.mxu0 %v2906
    %3610 = vmatprep.subr.mxu0 0.0
    %3611 = vmatpush1.msra.mxu0 %v2913
    %3612 = vmatprep.subr.mxu0 0.0
    %3613 = vmatpush1.msra.mxu0 %v2920
    %3614 = vmatprep.subr.mxu0 0.0
    %3615 = vmatpush1.msra.mxu0 %v2927
    %3616 = vmatprep.subr.mxu0 0.0
    %3617 = vmatpush1.msra.mxu0 %v2934
    %3618 = vmatprep.subr.mxu0 0.0
    %3619 = vmatpush1.msra.mxu0 %v2941
    %3620 = vmatprep.subr.mxu0 0.0
    %3621 = vmatpush1.msra.mxu0 %v2948
    %3622 = vmatprep.subr.mxu0 0.0
    %3623 = vmatpush1.msra.mxu0 %v2955
    %3624 = vmatprep.subr.mxu0 0.0
    %3625 = vmatpush1.msra.mxu0 %v2962
    %3626 = vmatprep.subr.mxu0 0.0
    %3627 = vmatpush1.msra.mxu0 %v2969
    %3628 = vmatprep.subr.mxu0 0.0
    %3629 = vmatpush1.msra.mxu0 %v2976
    %3630 = vmatprep.subr.mxu0 0.0
    %3631 = vmatpush1.msra.mxu0 %v2983
    %3632 = vmatprep.subr.mxu0 0.0
    %3633 = vmatpush1.msra.mxu0 %v2990
    %3634 = vmatprep.subr.mxu0 0.0
    %3635 = vmatpush1.msra.mxu0 %v2997
    %3636 = vmatprep.mubr.f32.mxu0 %v2545
    %3637 = vmatmul.mubr.f32.gmra.mrb[0].mxu0 %v2544
    %v3638 = vpop.f32.mrb[0].mxu0
    %v3639 = vadd.f32 %v3564, %v3638
    %v3640 = vpop.f32.mrb[0].mxu0
    %3641 = vmatprep.mubr.f32.mxu0 %v2549
    %3642 = vmatmul.mubr.f32.gmra.mrb[0].mxu0 %v2548
    %v3643 = vpop.f32.mrb[0].mxu0
    %v3644 = vadd.f32 %v3569, %v3643
    %v3645 = vpop.f32.mrb[0].mxu0
    %3646 = vdwg.mxu0
    %3647 = vst [vmem:[#allocation11] sm:$0xff] %v3179
    %3648 = vst [vmem:[#allocation11 + $0x8] sm:$0xff] %v3181
    %3649 = vst [vmem:[#allocation11 + $0x10] sm:$0xff] %v3333
    %3650 = vst [vmem:[#allocation11 + $0x18] sm:$0xff] %v3335
    %3651 = vst [vmem:[#allocation11 + $0x20] sm:$0xff] %v3487
    %3652 = vst [vmem:[#allocation11 + $0x28] sm:$0xff] %v3489
    %3653 = vst [vmem:[#allocation11 + $0x30] sm:$0xff] %v3639
    %3654 = vst [vmem:[#allocation11 + $0x38] sm:$0xff] %v3185
    %3655 = vst [vmem:[#allocation11 + $0x40] sm:$0xff] %v3187
    %3656 = vst [vmem:[#allocation11 + $0x48] sm:$0xff] %v3339
    %3657 = vst [vmem:[#allocation11 + $0x50] sm:$0xff] %v3341
    %3658 = vst [vmem:[#allocation11 + $0x58] sm:$0xff] %v3493
    %3659 = vst [vmem:[#allocation11 + $0x60] sm:$0xff] %v3495
    %3660 = vst [vmem:[#allocation11 + $0x68] sm:$0xff] %v3644
    // Predicated region
    $region42: #{tpu_custom_call.1} parent=1 // pred_check
      _
    $region43: #{tpu_custom_call.1} parent=1 // pred_check_branch
      %3662 = sbr.rel (0) target = $region45
    $region44: #{tpu_custom_call.1} parent=1 // pred_region
      %s3664 = ssub.s32 1792, 1792
      %3665 = vsyncadd [#allocation4], %s3664
      %s3666 = sshll.u32 [#allocation11], 4
      %s3667 = int_to_ptr.vmem [resolvable:$true] %s3666
      %3672 = dma.vmem_to_hbm [thread:$0]  %s3667, 1792, %s5, [#allocation4], 896, 896, 56
    $region45: #{tpu_custom_call.1} parent=1 // pred_fallthru
      _
    // Predicated region
    $region46: #{tpu_custom_call.1} parent=1 // pred_check
      _
    $region47: #{tpu_custom_call.1} parent=1 // pred_check_branch
      %3674 = sbr.rel (0) target = $region49
    $region48: #{tpu_custom_call.1} parent=1 // pred_region
      %3675 = dma.done [#allocation4], 1792
    $region49: #{tpu_custom_call.1} parent=1 // pred_fallthru
      _
    %3676 = vsyncpa [#allocation3], 1
    %3677 = vsyncpa [#allocation6], 1
    %3678 = vsyncpa [#allocation9], 1
    %3679 = vsyncpa [#allocation4], 1

// kernel: tpu_custom_call.1
$region0: #{tpu_custom_call.1}
  #allocation0 [shape = 'u32[]', space=smem, size = 0x4, offset = 0x4, fixed_abs, tag = 'smem constant byte address 0x4 - core index']
  #allocation1 [shape = 'u32[144,128]{1,0:T(1,128)}', space=vmem, size = 0x12000, scoped, tag = 'internal scratch']
  %s0 = inlined_call_operand.hbm [shape: f32[16,2048], index: 0, kind: input, shape index: {}]
  %s1 = inlined_call_operand.hbm [shape: f32[2048,512], index: 1, kind: input, shape index: {}]
  %s2 = inlined_call_operand.hbm [shape: f32[3,512], index: 2, kind: input, shape index: {}]
  %s3 = inlined_call_operand.hbm [shape: f32[512,896], index: 3, kind: input, shape index: {}]
  %s4 = inlined_call_operand.hbm [shape: f32[1,896], index: 4, kind: input, shape index: {}]
  %s5 = inlined_call_operand.hbm [shape: f32[16,896], index: 5, kind: output, shape index: {}]
  %s6 = sld [smem:[#allocation0]]
  $region50: #{tpu_custom_call.1} parent=0
    _
  %s8 = ssub.s32 1, %s6
  %s9 = scalar_select 0, %s8, %s6
  $region1: #{tpu_custom_call.1} parent=0
    #allocation2 [shape = 'u8[131072]{0}', space=vmem, size = 0x20000, scoped, tag = 'input window, operand 0, single buffered']
    #allocation3 [shape = 's32[1]{0}', space=sflag, size = 0x4, scoped, tag = 'scoped memory for tpu_custom_call.1']
    #allocation4 [shape = 's32[1]{0}', space=sflag, size = 0x4, scoped, tag = 'scoped memory for tpu_custom_call.1']
    #allocation5 [shape = 'u8[4194304]{0}', space=vmem, size = 0x400000, scoped, tag = 'input window, operand 1, single buffered']
    #allocation6 [shape = 's32[1]{0}', space=sflag, size = 0x4, scoped, tag = 'scoped memory for tpu_custom_call.1']
    #allocation7 [shape = 'u8[8192]{0}', space=vmem, size = 0x2000, scoped, tag = 'input window, operand 2, single buffered']
    #allocation8 [shape = 'u8[1835008]{0}', space=vmem, size = 0x1c0000, scoped, tag = 'input window, operand 3, single buffered']
    #allocation9 [shape = 's32[1]{0}', space=sflag, size = 0x4, scoped, tag = 'scoped memory for tpu_custom_call.1']
    #allocation10 [shape = 'u8[3584]{0}', space=vmem, size = 0x1000, scoped, tag = 'input window, operand 4, single buffered']
    #allocation11 [shape = 'u8[57344]{0}', space=vmem, size = 0xe000, scoped, tag = 'output window, operand 0, single buffered']
    %10 = vsyncpa [#allocation3], 0
    %11 = vsyncpa [#allocation6], 0
    %12 = vsyncpa [#allocation9], 0
    %13 = vsyncpa [#allocation4], 0
    // Predicated region
    $region2: #{tpu_custom_call.1} parent=1 // pred_check
      _
    $region3: #{tpu_custom_call.1} parent=1 // pred_check_branch
      %15 = sbr.rel (0) target = $region5
    $region4: #{tpu_custom_call.1} parent=1 // pred_region
      %s17 = ssub.s32 4096, 4096
      %18 = vsyncadd [#allocation3], %s17
      %s19 = sshll.u32 [#allocation2], 4
      %s20 = int_to_ptr.vmem [resolvable:$true] %s19
      %25 = dma.hbm_to_vmem [thread:$0]  %s0, 4096, %s20, [#allocation3], 2048, 2048, 128
    $region5: #{tpu_custom_call.1} parent=1 // pred_fallthru
      _
    // Predicated region
    $region6: #{tpu_custom_call.1} parent=1 // pred_check
      _
    $region7: #{tpu_custom_call.1} parent=1 // pred_check_branch
      %27 = sbr.rel (0) target = $region9
    $region8: #{tpu_custom_call.1} parent=1 // pred_region
      %s29 = ssub.s32 131072, 131072
      %30 = vsyncadd [#allocation6], %s29
      %s31 = sshll.u32 [#allocation5], 4
      %s32 = int_to_ptr.vmem [resolvable:$true] %s31
      %37 = dma.hbm_to_vmem [thread:$0]  %s1, 131072, %s32, [#allocation6], 512, 512, 32
    $region9: #{tpu_custom_call.1} parent=1 // pred_fallthru
      _
    // Predicated region
    $region10: #{tpu_custom_call.1} parent=1 // pred_check
      _
    $region11: #{tpu_custom_call.1} parent=1 // pred_check_branch
      %39 = sbr.rel (0) target = $region13
    $region12: #{tpu_custom_call.1} parent=1 // pred_region
      %s41 = ssub.s32 256, 256
      %42 = vsyncadd [#allocation6], %s41
      %s44 = sshll.u32 [#allocation7], 4
      %s45 = int_to_ptr.vmem [resolvable:$true] %s44
      %47 = dma.hbm_to_vmem [thread:$0]  %s2, 256, %s45, [#allocation6]
    $region13: #{tpu_custom_call.1} parent=1 // pred_fallthru
      _
    // Predicated region
    $region14: #{tpu_custom_call.1} parent=1 // pred_check
      _
    $region15: #{tpu_custom_call.1} parent=1 // pred_check_branch
      %49 = sbr.rel (0) target = $region17
    $region16: #{tpu_custom_call.1} parent=1 // pred_region
      %s51 = ssub.s32 57344, 57344
      %52 = vsyncadd [#allocation9], %s51
      %s53 = sshll.u32 [#allocation8], 4
      %s54 = int_to_ptr.vmem [resolvable:$true] %s53
      %59 = dma.hbm_to_vmem [thread:$0]  %s3, 57344, %s54, [#allocation9], 896, 896, 56
    $region17: #{tpu_custom_call.1} parent=1 // pred_fallthru
      _
    // Predicated region
    $region18: #{tpu_custom_call.1} parent=1 // pred_check
      _
    $region19: #{tpu_custom_call.1} parent=1 // pred_check_branch
      %61 = sbr.rel (0) target = $region21
    $region20: #{tpu_custom_call.1} parent=1 // pred_region
      %s63 = ssub.s32 112, 112
      %64 = vsyncadd [#allocation9], %s63
      %s66 = sshll.u32 [#allocation10], 4
      %s67 = int_to_ptr.vmem [resolvable:$true] %s66
      %69 = dma.hbm_to_vmem [thread:$0]  %s4, 112, %s67, [#allocation9]
    $region21: #{tpu_custom_call.1} parent=1 // pred_fallthru
      _
    // Predicated region
    $region22: #{tpu_custom_call.1} parent=1 // pred_check
      _
    $region23: #{tpu_custom_call.1} parent=1 // pred_check_branch
      %71 = sbr.rel (0) target = $region25
    $region24: #{tpu_custom_call.1} parent=1 // pred_region
      %72 = dma.done [#allocation3], 4096
    $region25: #{tpu_custom_call.1} parent=1 // pred_fallthru
      _
    // Predicated region
    $region26: #{tpu_custom_call.1} parent=1 // pred_check
      _
    $region27: #{tpu_custom_call.1} parent=1 // pred_check_branch
      %74 = sbr.rel (0) target = $region29
    $region28: #{tpu_custom_call.1} parent=1 // pred_region
      %75 = dma.done [#allocation6], 131072
    $region29: #{tpu_custom_call.1} parent=1 // pred_fallthru
      _
    // Predicated region
    $region30: #{tpu_custom_call.1} parent=1 // pred_check
      _
    $region31: #{tpu_custom_call.1} parent=1 // pred_check_branch
      %77 = sbr.rel (0) target = $region33
    $region32: #{tpu_custom_call.1} parent=1 // pred_region
      %78 = dma.done [#allocation6], 256
    $region33: #{tpu_custom_call.1} parent=1 // pred_fallthru
      _
    // Predicated region
    $region34: #{tpu_custom_call.1} parent=1 // pred_check
      _
    $region35: #{tpu_custom_call.1} parent=1 // pred_check_branch
      %80 = sbr.rel (0) target = $region37
    $region36: #{tpu_custom_call.1} parent=1 // pred_region
      %81 = dma.done [#allocation9], 57344
    $region37: #{tpu_custom_call.1} parent=1 // pred_fallthru
      _
    // Predicated region
    $region38: #{tpu_custom_call.1} parent=1 // pred_check
      _
    $region39: #{tpu_custom_call.1} parent=1 // pred_check_branch
      %83 = sbr.rel (0) target = $region41
    $region40: #{tpu_custom_call.1} parent=1 // pred_region
      %84 = dma.done [#allocation9], 112
    $region41: #{tpu_custom_call.1} parent=1 // pred_fallthru
      _
    %v85 = vld [vmem:[#allocation2] sm:$0xff]
    %v86 = vld [vmem:[#allocation2 + $0x8] sm:$0xff]
    %v87 = vld [vmem:[#allocation2 + $0x10] sm:$0xff]
    %v88 = vld [vmem:[#allocation2 + $0x18] sm:$0xff]
    %v89 = vld [vmem:[#allocation2 + $0x20] sm:$0xff]
    %v90 = vld [vmem:[#allocation2 + $0x28] sm:$0xff]
    %v91 = vld [vmem:[#allocation2 + $0x30] sm:$0xff]
    %v92 = vld [vmem:[#allocation2 + $0x38] sm:$0xff]
    %v93 = vld [vmem:[#allocation2 + $0x40] sm:$0xff]
    %v94 = vld [vmem:[#allocation2 + $0x48] sm:$0xff]
    %v95 = vld [vmem:[#allocation2 + $0x50] sm:$0xff]
    %v96 = vld [vmem:[#allocation2 + $0x58] sm:$0xff]
    %v97 = vld [vmem:[#allocation2 + $0x60] sm:$0xff]
    %v98 = vld [vmem:[#allocation2 + $0x68] sm:$0xff]
    %v99 = vld [vmem:[#allocation2 + $0x70] sm:$0xff]
    %v100 = vld [vmem:[#allocation2 + $0x78] sm:$0xff]
    %v101 = vld [vmem:[#allocation2 + $0x80] sm:$0xff]
    %v102 = vld [vmem:[#allocation2 + $0x88] sm:$0xff]
    %v103 = vld [vmem:[#allocation2 + $0x90] sm:$0xff]
    %v104 = vld [vmem:[#allocation2 + $0x98] sm:$0xff]
    %v105 = vld [vmem:[#allocation2 + $0xa0] sm:$0xff]
    %v106 = vld [vmem:[#allocation2 + $0xa8] sm:$0xff]
    %v107 = vld [vmem:[#allocation2 + $0xb0] sm:$0xff]
    %v108 = vld [vmem:[#allocation2 + $0xb8] sm:$0xff]
    %v109 = vld [vmem:[#allocation2 + $0xc0] sm:$0xff]
    %v110 = vld [vmem:[#allocation2 + $0xc8] sm:$0xff]
    %v111 = vld [vmem:[#allocation2 + $0xd0] sm:$0xff]
    %v112 = vld [vmem:[#allocation2 + $0xd8] sm:$0xff]
    %v113 = vld [vmem:[#allocation2 + $0xe0] sm:$0xff]
    %v114 = vld [vmem:[#allocation2 + $0xe8] sm:$0xff]
    %v115 = vld [vmem:[#allocation2 + $0xf0] sm:$0xff]
    %v116 = vld [vmem:[#allocation2 + $0xf8] sm:$0xff]
    %v117 = vld [vmem:[#allocation5] sm:$0xff]
    %v118 = vld [vmem:[#allocation5 + $0x8] sm:$0xff]
    %v119 = vld [vmem:[#allocation5 + $0x10] sm:$0xff]
    %v120 = vld [vmem:[#allocation5 + $0x18] sm:$0xff]
    %v121 = vld [vmem:[#allocation5 + $0x20] sm:$0xff]
    %v122 = vld [vmem:[#allocation5 + $0x28] sm:$0xff]
    %v123 = vld [vmem:[#allocation5 + $0x30] sm:$0xff]
    %v124 = vld [vmem:[#allocation5 + $0x38] sm:$0xff]
    %v125 = vld [vmem:[#allocation5 + $0x40] sm:$0xff]
    %v126 = vld [vmem:[#allocation5 + $0x48] sm:$0xff]
    %v127 = vld [vmem:[#allocation5 + $0x50] sm:$0xff]
    %v128 = vld [vmem:[#allocation5 + $0x58] sm:$0xff]
    %v129 = vld [vmem:[#allocation5 + $0x60] sm:$0xff]
    %v130 = vld [vmem:[#allocation5 + $0x68] sm:$0xff]
    %v131 = vld [vmem:[#allocation5 + $0x70] sm:$0xff]
    %v132 = vld [vmem:[#allocation5 + $0x78] sm:$0xff]
    %v133 = vld [vmem:[#allocation5 + $0x80] sm:$0xff]
    %v134 = vld [vmem:[#allocation5 + $0x88] sm:$0xff]
    %v135 = vld [vmem:[#allocation5 + $0x90] sm:$0xff]
    %v136 = vld [vmem:[#allocation5 + $0x98] sm:$0xff]
    %v137 = vld [vmem:[#allocation5 + $0xa0] sm:$0xff]
    %v138 = vld [vmem:[#allocation5 + $0xa8] sm:$0xff]
    %v139 = vld [vmem:[#allocation5 + $0xb0] sm:$0xff]
    %v140 = vld [vmem:[#allocation5 + $0xb8] sm:$0xff]
    %v141 = vld [vmem:[#allocation5 + $0xc0] sm:$0xff]
    %v142 = vld [vmem:[#allocation5 + $0xc8] sm:$0xff]
    %v143 = vld [vmem:[#allocation5 + $0xd0] sm:$0xff]
    %v144 = vld [vmem:[#allocation5 + $0xd8] sm:$0xff]
    %v145 = vld [vmem:[#allocation5 + $0xe0] sm:$0xff]
    %v146 = vld [vmem:[#allocation5 + $0xe8] sm:$0xff]
    %v147 = vld [vmem:[#allocation5 + $0xf0] sm:$0xff]
    %v148 = vld [vmem:[#allocation5 + $0xf8] sm:$0xff]
    %v149 = vld [vmem:[#allocation5 + $0x100] sm:$0xff]
    %v150 = vld [vmem:[#allocation5 + $0x108] sm:$0xff]
    %v151 = vld [vmem:[#allocation5 + $0x110] sm:$0xff]
    %v152 = vld [vmem:[#allocation5 + $0x118] sm:$0xff]
    %v153 = vld [vmem:[#allocation5 + $0x120] sm:$0xff]
    %v154 = vld [vmem:[#allocation5 + $0x128] sm:$0xff]
    %v155 = vld [vmem:[#allocation5 + $0x130] sm:$0xff]
    %v156 = vld [vmem:[#allocation5 + $0x138] sm:$0xff]
    %v157 = vld [vmem:[#allocation5 + $0x140] sm:$0xff]
    %v158 = vld [vmem:[#allocation5 + $0x148] sm:$0xff]
    %v159 = vld [vmem:[#allocation5 + $0x150] sm:$0xff]
    %v160 = vld [vmem:[#allocation5 + $0x158] sm:$0xff]
    %v161 = vld [vmem:[#allocation5 + $0x160] sm:$0xff]
    %v162 = vld [vmem:[#allocation5 + $0x168] sm:$0xff]
    %v163 = vld [vmem:[#allocation5 + $0x170] sm:$0xff]
    %v164 = vld [vmem:[#allocation5 + $0x178] sm:$0xff]
    %v165 = vld [vmem:[#allocation5 + $0x180] sm:$0xff]
    %v166 = vld [vmem:[#allocation5 + $0x188] sm:$0xff]
    %v167 = vld [vmem:[#allocation5 + $0x190] sm:$0xff]
    %v168 = vld [vmem:[#allocation5 + $0x198] sm:$0xff]
    %v169 = vld [vmem:[#allocation5 + $0x1a0] sm:$0xff]
    %v170 = vld [vmem:[#allocation5 + $0x1a8] sm:$0xff]
    %v171 = vld [vmem:[#allocation5 + $0x1b0] sm:$0xff]
    %v172 = vld [vmem:[#allocation5 + $0x1b8] sm:$0xff]
    %v173 = vld [vmem:[#allocation5 + $0x1c0] sm:$0xff]
    %v174 = vld [vmem:[#allocation5 + $0x1c8] sm:$0xff]
    %v175 = vld [vmem:[#allocation5 + $0x1d0] sm:$0xff]
    %v176 = vld [vmem:[#allocation5 + $0x1d8] sm:$0xff]
    %v177 = vld [vmem:[#allocation5 + $0x1e0] sm:$0xff]
    %v178 = vld [vmem:[#allocation5 + $0x1e8] sm:$0xff]
    %v179 = vld [vmem:[#allocation5 + $0x1f0] sm:$0xff]
    %v180 = vld [vmem:[#allocation5 + $0x1f8] sm:$0xff]
    %v181 = vld [vmem:[#allocation5 + $0x200] sm:$0xff]
    %v182 = vld [vmem:[#allocation5 + $0x208] sm:$0xff]
    %v183 = vld [vmem:[#allocation5 + $0x210] sm:$0xff]
    %v184 = vld [vmem:[#allocation5 + $0x218] sm:$0xff]
    %v185 = vld [vmem:[#allocation5 + $0x220] sm:$0xff]
    %v186 = vld [vmem:[#allocation5 + $0x228] sm:$0xff]
    %v187 = vld [vmem:[#allocation5 + $0x230] sm:$0xff]
    %v188 = vld [vmem:[#allocation5 + $0x238] sm:$0xff]
    %v189 = vld [vmem:[#allocation5 + $0x240] sm:$0xff]
    %v190 = vld [vmem:[#allocation5 + $0x248] sm:$0xff]
    %v191 = vld [vmem:[#allocation5 + $0x250] sm:$0xff]
    %v192 = vld [vmem:[#allocation5 + $0x258] sm:$0xff]
    %v193 = vld [vmem:[#allocation5 + $0x260] sm:$0xff]
    %v194 = vld [vmem:[#allocation5 + $0x268] sm:$0xff]
    %v195 = vld [vmem:[#allocation5 + $0x270] sm:$0xff]
    %v196 = vld [vmem:[#allocation5 + $0x278] sm:$0xff]
    %v197 = vld [vmem:[#allocation5 + $0x280] sm:$0xff]
    %v198 = vld [vmem:[#allocation5 + $0x288] sm:$0xff]
    %v199 = vld [vmem:[#allocation5 + $0x290] sm:$0xff]
    %v200 = vld [vmem:[#allocation5 + $0x298] sm:$0xff]
    %v201 = vld [vmem:[#allocation5 + $0x2a0] sm:$0xff]
    %v202 = vld [vmem:[#allocation5 + $0x2a8] sm:$0xff]
    %v203 = vld [vmem:[#allocation5 + $0x2b0] sm:$0xff]
    %v204 = vld [vmem:[#allocation5 + $0x2b8] sm:$0xff]
    %v205 = vld [vmem:[#allocation5 + $0x2c0] sm:$0xff]
    %v206 = vld [vmem:[#allocation5 + $0x2c8] sm:$0xff]
    %v207 = vld [vmem:[#allocation5 + $0x2d0] sm:$0xff]
    %v208 = vld [vmem:[#allocation5 + $0x2d8] sm:$0xff]
    %v209 = vld [vmem:[#allocation5 + $0x2e0] sm:$0xff]
    %v210 = vld [vmem:[#allocation5 + $0x2e8] sm:$0xff]
    %v211 = vld [vmem:[#allocation5 + $0x2f0] sm:$0xff]
    %v212 = vld [vmem:[#allocation5 + $0x2f8] sm:$0xff]
    %v213 = vld [vmem:[#allocation5 + $0x300] sm:$0xff]
    %v214 = vld [vmem:[#allocation5 + $0x308] sm:$0xff]
    %v215 = vld [vmem:[#allocation5 + $0x310] sm:$0xff]
    %v216 = vld [vmem:[#allocation5 + $0x318] sm:$0xff]
    %v217 = vld [vmem:[#allocation5 + $0x320] sm:$0xff]
    %v218 = vld [vmem:[#allocation5 + $0x328] sm:$0xff]
    %v219 = vld [vmem:[#allocation5 + $0x330] sm:$0xff]
    %v220 = vld [vmem:[#allocation5 + $0x338] sm:$0xff]
    %v221 = vld [vmem:[#allocation5 + $0x340] sm:$0xff]
    %v222 = vld [vmem:[#allocation5 + $0x348] sm:$0xff]
    %v223 = vld [vmem:[#allocation5 + $0x350] sm:$0xff]
    %v224 = vld [vmem:[#allocation5 + $0x358] sm:$0xff]
    %v225 = vld [vmem:[#allocation5 + $0x360] sm:$0xff]
    %v226 = vld [vmem:[#allocation5 + $0x368] sm:$0xff]
    %v227 = vld [vmem:[#allocation5 + $0x370] sm:$0xff]
    %v228 = vld [vmem:[#allocation5 + $0x378] sm:$0xff]
    %v229 = vld [vmem:[#allocation5 + $0x380] sm:$0xff]
    %v230 = vld [vmem:[#allocation5 + $0x388] sm:$0xff]
    %v231 = vld [vmem:[#allocation5 + $0x390] sm:$0xff]
    %v232 = vld [vmem:[#allocation5 + $0x398] sm:$0xff]
    %v233 = vld [vmem:[#allocation5 + $0x3a0] sm:$0xff]
    %v234 = vld [vmem:[#allocation5 + $0x3a8] sm:$0xff]
    %v235 = vld [vmem:[#allocation5 + $0x3b0] sm:$0xff]
    %v236 = vld [vmem:[#allocation5 + $0x3b8] sm:$0xff]
    %v237 = vld [vmem:[#allocation5 + $0x3c0] sm:$0xff]
    %v238 = vld [vmem:[#allocation5 + $0x3c8] sm:$0xff]
    %v239 = vld [vmem:[#allocation5 + $0x3d0] sm:$0xff]
    %v240 = vld [vmem:[#allocation5 + $0x3d8] sm:$0xff]
    %v241 = vld [vmem:[#allocation5 + $0x3e0] sm:$0xff]
    %v242 = vld [vmem:[#allocation5 + $0x3e8] sm:$0xff]
    %v243 = vld [vmem:[#allocation5 + $0x3f0] sm:$0xff]
    %v244 = vld [vmem:[#allocation5 + $0x3f8] sm:$0xff]
    %v245 = vld [vmem:[#allocation5 + $0x400] sm:$0xff]
    %v246 = vld [vmem:[#allocation5 + $0x408] sm:$0xff]
    %v247 = vld [vmem:[#allocation5 + $0x410] sm:$0xff]
    %v248 = vld [vmem:[#allocation5 + $0x418] sm:$0xff]
    %v249 = vld [vmem:[#allocation5 + $0x420] sm:$0xff]
    %v250 = vld [vmem:[#allocation5 + $0x428] sm:$0xff]
    %v251 = vld [vmem:[#allocation5 + $0x430] sm:$0xff]
    %v252 = vld [vmem:[#allocation5 + $0x438] sm:$0xff]
    %v253 = vld [vmem:[#allocation5 + $0x440] sm:$0xff]
    %v254 = vld [vmem:[#allocation5 + $0x448] sm:$0xff]
    %v255 = vld [vmem:[#allocation5 + $0x450] sm:$0xff]
    %v256 = vld [vmem:[#allocation5 + $0x458] sm:$0xff]
    %v257 = vld [vmem:[#allocation5 + $0x460] sm:$0xff]
    %v258 = vld [vmem:[#allocation5 + $0x468] sm:$0xff]
    %v259 = vld [vmem:[#allocation5 + $0x470] sm:$0xff]
    %v260 = vld [vmem:[#allocation5 + $0x478] sm:$0xff]
    %v261 = vld [vmem:[#allocation5 + $0x480] sm:$0xff]
    %v262 = vld [vmem:[#allocation5 + $0x488] sm:$0xff]
    %v263 = vld [vmem:[#allocation5 + $0x490] sm:$0xff]
    %v264 = vld [vmem:[#allocation5 + $0x498] sm:$0xff]
    %v265 = vld [vmem:[#allocation5 + $0x4a0] sm:$0xff]
    %v266 = vld [vmem:[#allocation5 + $0x4a8] sm:$0xff]
    %v267 = vld [vmem:[#allocation5 + $0x4b0] sm:$0xff]
    %v268 = vld [vmem:[#allocation5 + $0x4b8] sm:$0xff]
    %v269 = vld [vmem:[#allocation5 + $0x4c0] sm:$0xff]
    %v270 = vld [vmem:[#allocation5 + $0x4c8] sm:$0xff]
    %v271 = vld [vmem:[#allocation5 + $0x4d0] sm:$0xff]
    %v272 = vld [vmem:[#allocation5 + $0x4d8] sm:$0xff]
    %v273 = vld [vmem:[#allocation5 + $0x4e0] sm:$0xff]
    %v274 = vld [vmem:[#allocation5 + $0x4e8] sm:$0xff]
    %v275 = vld [vmem:[#allocation5 + $0x4f0] sm:$0xff]
    %v276 = vld [vmem:[#allocation5 + $0x4f8] sm:$0xff]
    %v277 = vld [vmem:[#allocation5 + $0x500] sm:$0xff]
    %v278 = vld [vmem:[#allocation5 + $0x508] sm:$0xff]
    %v279 = vld [vmem:[#allocation5 + $0x510] sm:$0xff]
    %v280 = vld [vmem:[#allocation5 + $0x518] sm:$0xff]
    %v281 = vld [vmem:[#allocation5 + $0x520] sm:$0xff]
    %v282 = vld [vmem:[#allocation5 + $0x528] sm:$0xff]
    %v283 = vld [vmem:[#allocation5 + $0x530] sm:$0xff]
    %v284 = vld [vmem:[#allocation5 + $0x538] sm:$0xff]
    %v285 = vld [vmem:[#allocation5 + $0x540] sm:$0xff]
    %v286 = vld [vmem:[#allocation5 + $0x548] sm:$0xff]
    %v287 = vld [vmem:[#allocation5 + $0x550] sm:$0xff]
    %v288 = vld [vmem:[#allocation5 + $0x558] sm:$0xff]
    %v289 = vld [vmem:[#allocation5 + $0x560] sm:$0xff]
    %v290 = vld [vmem:[#allocation5 + $0x568] sm:$0xff]
    %v291 = vld [vmem:[#allocation5 + $0x570] sm:$0xff]
    %v292 = vld [vmem:[#allocation5 + $0x578] sm:$0xff]
    %v293 = vld [vmem:[#allocation5 + $0x580] sm:$0xff]
    %v294 = vld [vmem:[#allocation5 + $0x588] sm:$0xff]
    %v295 = vld [vmem:[#allocation5 + $0x590] sm:$0xff]
    %v296 = vld [vmem:[#allocation5 + $0x598] sm:$0xff]
    %v297 = vld [vmem:[#allocation5 + $0x5a0] sm:$0xff]
    %v298 = vld [vmem:[#allocation5 + $0x5a8] sm:$0xff]
    %v299 = vld [vmem:[#allocation5 + $0x5b0] sm:$0xff]
    %v300 = vld [vmem:[#allocation5 + $0x5b8] sm:$0xff]
    %v301 = vld [vmem:[#allocation5 + $0x5c0] sm:$0xff]
    %v302 = vld [vmem:[#allocation5 + $0x5c8] sm:$0xff]
    %v303 = vld [vmem:[#allocation5 + $0x5d0] sm:$0xff]
    %v304 = vld [vmem:[#allocation5 + $0x5d8] sm:$0xff]
    %v305 = vld [vmem:[#allocation5 + $0x5e0] sm:$0xff]
    %v306 = vld [vmem:[#allocation5 + $0x5e8] sm:$0xff]
    %v307 = vld [vmem:[#allocation5 + $0x5f0] sm:$0xff]
    %v308 = vld [vmem:[#allocation5 + $0x5f8] sm:$0xff]
    %v309 = vld [vmem:[#allocation5 + $0x600] sm:$0xff]
    %v310 = vld [vmem:[#allocation5 + $0x608] sm:$0xff]
    %v311 = vld [vmem:[#allocation5 + $0x610] sm:$0xff]
    %v312 = vld [vmem:[#allocation5 + $0x618] sm:$0xff]
    %v313 = vld [vmem:[#allocation5 + $0x620] sm:$0xff]
    %v314 = vld [vmem:[#allocation5 + $0x628] sm:$0xff]
    %v315 = vld [vmem:[#allocation5 + $0x630] sm:$0xff]
    %v316 = vld [vmem:[#allocation5 + $0x638] sm:$0xff]
    %v317 = vld [vmem:[#allocation5 + $0x640] sm:$0xff]
    %v318 = vld [vmem:[#allocation5 + $0x648] sm:$0xff]
    %v319 = vld [vmem:[#allocation5 + $0x650] sm:$0xff]
    %v320 = vld [vmem:[#allocation5 + $0x658] sm:$0xff]
    %v321 = vld [vmem:[#allocation5 + $0x660] sm:$0xff]
    %v322 = vld [vmem:[#allocation5 + $0x668] sm:$0xff]
    %v323 = vld [vmem:[#allocation5 + $0x670] sm:$0xff]
    %v324 = vld [vmem:[#allocation5 + $0x678] sm:$0xff]
    %v325 = vld [vmem:[#allocation5 + $0x680] sm:$0xff]
    %v326 = vld [vmem:[#allocation5 + $0x688] sm:$0xff]
    %v327 = vld [vmem:[#allocation5 + $0x690] sm:$0xff]
    %v328 = vld [vmem:[#allocation5 + $0x698] sm:$0xff]
    %v329 = vld [vmem:[#allocation5 + $0x6a0] sm:$0xff]
    %v330 = vld [vmem:[#allocation5 + $0x6a8] sm:$0xff]
    %v331 = vld [vmem:[#allocation5 + $0x6b0] sm:$0xff]
    %v332 = vld [vmem:[#allocation5 + $0x6b8] sm:$0xff]
    %v333 = vld [vmem:[#allocation5 + $0x6c0] sm:$0xff]
    %v334 = vld [vmem:[#allocation5 + $0x6c8] sm:$0xff]
    %v335 = vld [vmem:[#allocation5 + $0x6d0] sm:$0xff]
    %v336 = vld [vmem:[#allocation5 + $0x6d8] sm:$0xff]
    %v337 = vld [vmem:[#allocation5 + $0x6e0] sm:$0xff]
    %v338 = vld [vmem:[#allocation5 + $0x6e8] sm:$0xff]
    %v339 = vld [vmem:[#allocation5 + $0x6f0] sm:$0xff]
    %v340 = vld [vmem:[#allocation5 + $0x6f8] sm:$0xff]
    %v341 = vld [vmem:[#allocation5 + $0x700] sm:$0xff]
    %v342 = vld [vmem:[#allocation5 + $0x708] sm:$0xff]
    %v343 = vld [vmem:[#allocation5 + $0x710] sm:$0xff]
    %v344 = vld [vmem:[#allocation5 + $0x718] sm:$0xff]
    %v345 = vld [vmem:[#allocation5 + $0x720] sm:$0xff]
    %v346 = vld [vmem:[#allocation5 + $0x728] sm:$0xff]
    %v347 = vld [vmem:[#allocation5 + $0x730] sm:$0xff]
    %v348 = vld [vmem:[#allocation5 + $0x738] sm:$0xff]
    %v349 = vld [vmem:[#allocation5 + $0x740] sm:$0xff]
    %v350 = vld [vmem:[#allocation5 + $0x748] sm:$0xff]
    %v351 = vld [vmem:[#allocation5 + $0x750] sm:$0xff]
    %v352 = vld [vmem:[#allocation5 + $0x758] sm:$0xff]
    %v353 = vld [vmem:[#allocation5 + $0x760] sm:$0xff]
    %v354 = vld [vmem:[#allocation5 + $0x768] sm:$0xff]
    %v355 = vld [vmem:[#allocation5 + $0x770] sm:$0xff]
    %v356 = vld [vmem:[#allocation5 + $0x778] sm:$0xff]
    %v357 = vld [vmem:[#allocation5 + $0x780] sm:$0xff]
    %v358 = vld [vmem:[#allocation5 + $0x788] sm:$0xff]
    %v359 = vld [vmem:[#allocation5 + $0x790] sm:$0xff]
    %v360 = vld [vmem:[#allocation5 + $0x798] sm:$0xff]
    %v361 = vld [vmem:[#allocation5 + $0x7a0] sm:$0xff]
    %v362 = vld [vmem:[#allocation5 + $0x7a8] sm:$0xff]
    %v363 = vld [vmem:[#allocation5 + $0x7b0] sm:$0xff]
    %v364 = vld [vmem:[#allocation5 + $0x7b8] sm:$0xff]
    %v365 = vld [vmem:[#allocation5 + $0x7c0] sm:$0xff]
    %v366 = vld [vmem:[#allocation5 + $0x7c8] sm:$0xff]
    %v367 = vld [vmem:[#allocation5 + $0x7d0] sm:$0xff]
    %v368 = vld [vmem:[#allocation5 + $0x7d8] sm:$0xff]
    %v369 = vld [vmem:[#allocation5 + $0x7e0] sm:$0xff]
    %v370 = vld [vmem:[#allocation5 + $0x7e8] sm:$0xff]
    %v371 = vld [vmem:[#allocation5 + $0x7f0] sm:$0xff]
    %v372 = vld [vmem:[#allocation5 + $0x7f8] sm:$0xff]
    %v373 = vld [vmem:[#allocation5 + $0x800] sm:$0xff]
    %v374 = vld [vmem:[#allocation5 + $0x808] sm:$0xff]
    %v375 = vld [vmem:[#allocation5 + $0x810] sm:$0xff]
    %v376 = vld [vmem:[#allocation5 + $0x818] sm:$0xff]
    %v377 = vld [vmem:[#allocation5 + $0x820] sm:$0xff]
    %v378 = vld [vmem:[#allocation5 + $0x828] sm:$0xff]
    %v379 = vld [vmem:[#allocation5 + $0x830] sm:$0xff]
    %v380 = vld [vmem:[#allocation5 + $0x838] sm:$0xff]
    %v381 = vld [vmem:[#allocation5 + $0x840] sm:$0xff]
    %v382 = vld [vmem:[#allocation5 + $0x848] sm:$0xff]
    %v383 = vld [vmem:[#allocation5 + $0x850] sm:$0xff]
    %v384 = vld [vmem:[#allocation5 + $0x858] sm:$0xff]
    %v385 = vld [vmem:[#allocation5 + $0x860] sm:$0xff]
    %v386 = vld [vmem:[#allocation5 + $0x868] sm:$0xff]
    %v387 = vld [vmem:[#allocation5 + $0x870] sm:$0xff]
    %v388 = vld [vmem:[#allocation5 + $0x878] sm:$0xff]
    %v389 = vld [vmem:[#allocation5 + $0x880] sm:$0xff]
    %v390 = vld [vmem:[#allocation5 + $0x888] sm:$0xff]
    %v391 = vld [vmem:[#allocation5 + $0x890] sm:$0xff]
    %v392 = vld [vmem:[#allocation5 + $0x898] sm:$0xff]
    %v393 = vld [vmem:[#allocation5 + $0x8a0] sm:$0xff]
    %v394 = vld [vmem:[#allocation5 + $0x8a8] sm:$0xff]
    %v395 = vld [vmem:[#allocation5 + $0x8b0] sm:$0xff]
    %v396 = vld [vmem:[#allocation5 + $0x8b8] sm:$0xff]
    %v397 = vld [vmem:[#allocation5 + $0x8c0] sm:$0xff]
    %v398 = vld [vmem:[#allocation5 + $0x8c8] sm:$0xff]
    %v399 = vld [vmem:[#allocation5 + $0x8d0] sm:$0xff]
    %v400 = vld [vmem:[#allocation5 + $0x8d8] sm:$0xff]
    %v401 = vld [vmem:[#allocation5 + $0x8e0] sm:$0xff]
    %v402 = vld [vmem:[#allocation5 + $0x8e8] sm:$0xff]
    %v403 = vld [vmem:[#allocation5 + $0x8f0] sm:$0xff]
    %v404 = vld [vmem:[#allocation5 + $0x8f8] sm:$0xff]
    %v405 = vld [vmem:[#allocation5 + $0x900] sm:$0xff]
    %v406 = vld [vmem:[#allocation5 + $0x908] sm:$0xff]
    %v407 = vld [vmem:[#allocation5 + $0x910] sm:$0xff]
    %v408 = vld [vmem:[#allocation5 + $0x918] sm:$0xff]
    %v409 = vld [vmem:[#allocation5 + $0x920] sm:$0xff]
    %v410 = vld [vmem:[#allocation5 + $0x928] sm:$0xff]
    %v411 = vld [vmem:[#allocation5 + $0x930] sm:$0xff]
    %v412 = vld [vmem:[#allocation5 + $0x938] sm:$0xff]
    %v413 = vld [vmem:[#allocation5 + $0x940] sm:$0xff]
    %v414 = vld [vmem:[#allocation5 + $0x948] sm:$0xff]
    %v415 = vld [vmem:[#allocation5 + $0x950] sm:$0xff]
    %v416 = vld [vmem:[#allocation5 + $0x958] sm:$0xff]
    %v417 = vld [vmem:[#allocation5 + $0x960] sm:$0xff]
    %v418 = vld [vmem:[#allocation5 + $0x968] sm:$0xff]
    %v419 = vld [vmem:[#allocation5 + $0x970] sm:$0xff]
    %v420 = vld [vmem:[#allocation5 + $0x978] sm:$0xff]
    %v421 = vld [vmem:[#allocation5 + $0x980] sm:$0xff]
    %v422 = vld [vmem:[#allocation5 + $0x988] sm:$0xff]
    %v423 = vld [vmem:[#allocation5 + $0x990] sm:$0xff]
    %v424 = vld [vmem:[#allocation5 + $0x998] sm:$0xff]
    %v425 = vld [vmem:[#allocation5 + $0x9a0] sm:$0xff]
    %v426 = vld [vmem:[#allocation5 + $0x9a8] sm:$0xff]
    %v427 = vld [vmem:[#allocation5 + $0x9b0] sm:$0xff]
    %v428 = vld [vmem:[#allocation5 + $0x9b8] sm:$0xff]
    %v429 = vld [vmem:[#allocation5 + $0x9c0] sm:$0xff]
    %v430 = vld [vmem:[#allocation5 + $0x9c8] sm:$0xff]
    %v431 = vld [vmem:[#allocation5 + $0x9d0] sm:$0xff]
    %v432 = vld [vmem:[#allocation5 + $0x9d8] sm:$0xff]
    %v433 = vld [vmem:[#allocation5 + $0x9e0] sm:$0xff]
    %v434 = vld [vmem:[#allocation5 + $0x9e8] sm:$0xff]
    %v435 = vld [vmem:[#allocation5 + $0x9f0] sm:$0xff]
    %v436 = vld [vmem:[#allocation5 + $0x9f8] sm:$0xff]
    %v437 = vld [vmem:[#allocation5 + $0xa00] sm:$0xff]
    %v438 = vld [vmem:[#allocation5 + $0xa08] sm:$0xff]
    %v439 = vld [vmem:[#allocation5 + $0xa10] sm:$0xff]
    %v440 = vld [vmem:[#allocation5 + $0xa18] sm:$0xff]
    %v441 = vld [vmem:[#allocation5 + $0xa20] sm:$0xff]
    %v442 = vld [vmem:[#allocation5 + $0xa28] sm:$0xff]
    %v443 = vld [vmem:[#allocation5 + $0xa30] sm:$0xff]
    %v444 = vld [vmem:[#allocation5 + $0xa38] sm:$0xff]
    %v445 = vld [vmem:[#allocation5 + $0xa40] sm:$0xff]
    %v446 = vld [vmem:[#allocation5 + $0xa48] sm:$0xff]
    %v447 = vld [vmem:[#allocation5 + $0xa50] sm:$0xff]
    %v448 = vld [vmem:[#allocation5 + $0xa58] sm:$0xff]
    %v449 = vld [vmem:[#allocation5 + $0xa60] sm:$0xff]
    %v450 = vld [vmem:[#allocation5 + $0xa68] sm:$0xff]
    %v451 = vld [vmem:[#allocation5 + $0xa70] sm:$0xff]
    %v452 = vld [vmem:[#allocation5 + $0xa78] sm:$0xff]
    %v453 = vld [vmem:[#allocation5 + $0xa80] sm:$0xff]
    %v454 = vld [vmem:[#allocation5 + $0xa88] sm:$0xff]
    %v455 = vld [vmem:[#allocation5 + $0xa90] sm:$0xff]
    %v456 = vld [vmem:[#allocation5 + $0xa98] sm:$0xff]
    %v457 = vld [vmem:[#allocation5 + $0xaa0] sm:$0xff]
    %v458 = vld [vmem:[#allocation5 + $0xaa8] sm:$0xff]
    %v459 = vld [vmem:[#allocation5 + $0xab0] sm:$0xff]
    %v460 = vld [vmem:[#allocation5 + $0xab8] sm:$0xff]
    %v461 = vld [vmem:[#allocation5 + $0xac0] sm:$0xff]
    %v462 = vld [vmem:[#allocation5 + $0xac8] sm:$0xff]
    %v463 = vld [vmem:[#allocation5 + $0xad0] sm:$0xff]
    %v464 = vld [vmem:[#allocation5 + $0xad8] sm:$0xff]
    %v465 = vld [vmem:[#allocation5 + $0xae0] sm:$0xff]
    %v466 = vld [vmem:[#allocation5 + $0xae8] sm:$0xff]
    %v467 = vld [vmem:[#allocation5 + $0xaf0] sm:$0xff]
    %v468 = vld [vmem:[#allocation5 + $0xaf8] sm:$0xff]
    %v469 = vld [vmem:[#allocation5 + $0xb00] sm:$0xff]
    %v470 = vld [vmem:[#allocation5 + $0xb08] sm:$0xff]
    %v471 = vld [vmem:[#allocation5 + $0xb10] sm:$0xff]
    %v472 = vld [vmem:[#allocation5 + $0xb18] sm:$0xff]
    %v473 = vld [vmem:[#allocation5 + $0xb20] sm:$0xff]
    %v474 = vld [vmem:[#allocation5 + $0xb28] sm:$0xff]
    %v475 = vld [vmem:[#allocation5 + $0xb30] sm:$0xff]
    %v476 = vld [vmem:[#allocation5 + $0xb38] sm:$0xff]
    %v477 = vld [vmem:[#allocation5 + $0xb40] sm:$0xff]
    %v478 = vld [vmem:[#allocation5 + $0xb48] sm:$0xff]
    %v479 = vld [vmem:[#allocation5 + $0xb50] sm:$0xff]
    %v480 = vld [vmem:[#allocation5 + $0xb58] sm:$0xff]
    %v481 = vld [vmem:[#allocation5 + $0xb60] sm:$0xff]
    %v482 = vld [vmem:[#allocation5 + $0xb68] sm:$0xff]
    %v483 = vld [vmem:[#allocation5 + $0xb70] sm:$0xff]
    %v484 = vld [vmem:[#allocation5 + $0xb78] sm:$0xff]
    %v485 = vld [vmem:[#allocation5 + $0xb80] sm:$0xff]
    %v486 = vld [vmem:[#allocation5 + $0xb88] sm:$0xff]
    %v487 = vld [vmem:[#allocation5 + $0xb90] sm:$0xff]
    %v488 = vld [vmem:[#allocation5 + $0xb98] sm:$0xff]
    %v489 = vld [vmem:[#allocation5 + $0xba0] sm:$0xff]
    %v490 = vld [vmem:[#allocation5 + $0xba8] sm:$0xff]
    %v491 = vld [vmem:[#allocation5 + $0xbb0] sm:$0xff]
    %v492 = vld [vmem:[#allocation5 + $0xbb8] sm:$0xff]
    %v493 = vld [vmem:[#allocation5 + $0xbc0] sm:$0xff]
    %v494 = vld [vmem:[#allocation5 + $0xbc8] sm:$0xff]
    %v495 = vld [vmem:[#allocation5 + $0xbd0] sm:$0xff]
    %v496 = vld [vmem:[#allocation5 + $0xbd8] sm:$0xff]
    %v497 = vld [vmem:[#allocation5 + $0xbe0] sm:$0xff]
    %v498 = vld [vmem:[#allocation5 + $0xbe8] sm:$0xff]
    %v499 = vld [vmem:[#allocation5 + $0xbf0] sm:$0xff]
    %v500 = vld [vmem:[#allocation5 + $0xbf8] sm:$0xff]
    %v501 = vld [vmem:[#allocation5 + $0xc00] sm:$0xff]
    %v502 = vld [vmem:[#allocation5 + $0xc08] sm:$0xff]
    %v503 = vld [vmem:[#allocation5 + $0xc10] sm:$0xff]
    %v504 = vld [vmem:[#allocation5 + $0xc18] sm:$0xff]
    %v505 = vld [vmem:[#allocation5 + $0xc20] sm:$0xff]
    %v506 = vld [vmem:[#allocation5 + $0xc28] sm:$0xff]
    %v507 = vld [vmem:[#allocation5 + $0xc30] sm:$0xff]
    %v508 = vld [vmem:[#allocation5 + $0xc38] sm:$0xff]
    %v509 = vld [vmem:[#allocation5 + $0xc40] sm:$0xff]
    %v510 = vld [vmem:[#allocation5 + $0xc48] sm:$0xff]
    %v511 = vld [vmem:[#allocation5 + $0xc50] sm:$0xff]
    %v512 = vld [vmem:[#allocation5 + $0xc58] sm:$0xff]
    %v513 = vld [vmem:[#allocation5 + $0xc60] sm:$0xff]
    %v514 = vld [vmem:[#allocation5 + $0xc68] sm:$0xff]
    %v515 = vld [vmem:[#allocation5 + $0xc70] sm:$0xff]
    %v516 = vld [vmem:[#allocation5 + $0xc78] sm:$0xff]
    %v517 = vld [vmem:[#allocation5 + $0xc80] sm:$0xff]
    %v518 = vld [vmem:[#allocation5 + $0xc88] sm:$0xff]
    %v519 = vld [vmem:[#allocation5 + $0xc90] sm:$0xff]
    %v520 = vld [vmem:[#allocation5 + $0xc98] sm:$0xff]
    %v521 = vld [vmem:[#allocation5 + $0xca0] sm:$0xff]
    %v522 = vld [vmem:[#allocation5 + $0xca8] sm:$0xff]
    %v523 = vld [vmem:[#allocation5 + $0xcb0] sm:$0xff]
    %v524 = vld [vmem:[#allocation5 + $0xcb8] sm:$0xff]
    %v525 = vld [vmem:[#allocation5 + $0xcc0] sm:$0xff]
    %v526 = vld [vmem:[#allocation5 + $0xcc8] sm:$0xff]
    %v527 = vld [vmem:[#allocation5 + $0xcd0] sm:$0xff]
    %v528 = vld [vmem:[#allocation5 + $0xcd8] sm:$0xff]
    %v529 = vld [vmem:[#allocation5 + $0xce0] sm:$0xff]
    %v530 = vld [vmem:[#allocation5 + $0xce8] sm:$0xff]
    %v531 = vld [vmem:[#allocation5 + $0xcf0] sm:$0xff]
    %v532 = vld [vmem:[#allocation5 + $0xcf8] sm:$0xff]
    %v533 = vld [vmem:[#allocation5 + $0xd00] sm:$0xff]
    %v534 = vld [vmem:[#allocation5 + $0xd08] sm:$0xff]
    %v535 = vld [vmem:[#allocation5 + $0xd10] sm:$0xff]
    %v536 = vld [vmem:[#allocation5 + $0xd18] sm:$0xff]
    %v537 = vld [vmem:[#allocation5 + $0xd20] sm:$0xff]
    %v538 = vld [vmem:[#allocation5 + $0xd28] sm:$0xff]
    %v539 = vld [vmem:[#allocation5 + $0xd30] sm:$0xff]
    %v540 = vld [vmem:[#allocation5 + $0xd38] sm:$0xff]
    %v541 = vld [vmem:[#allocation5 + $0xd40] sm:$0xff]
    %v542 = vld [vmem:[#allocation5 + $0xd48] sm:$0xff]
    %v543 = vld [vmem:[#allocation5 + $0xd50] sm:$0xff]
    %v544 = vld [vmem:[#allocation5 + $0xd58] sm:$0xff]
    %v545 = vld [vmem:[#allocation5 + $0xd60] sm:$0xff]
    %v546 = vld [vmem:[#allocation5 + $0xd68] sm:$0xff]
    %v547 = vld [vmem:[#allocation5 + $0xd70] sm:$0xff]
    %v548 = vld [vmem:[#allocation5 + $0xd78] sm:$0xff]
    %v549 = vld [vmem:[#allocation5 + $0xd80] sm:$0xff]
    %v550 = vld [vmem:[#allocation5 + $0xd88] sm:$0xff]
    %v551 = vld [vmem:[#allocation5 + $0xd90] sm:$0xff]
    %v552 = vld [vmem:[#allocation5 + $0xd98] sm:$0xff]
    %v553 = vld [vmem:[#allocation5 + $0xda0] sm:$0xff]
    %v554 = vld [vmem:[#allocation5 + $0xda8] sm:$0xff]
    %v555 = vld [vmem:[#allocation5 + $0xdb0] sm:$0xff]
    %v556 = vld [vmem:[#allocation5 + $0xdb8] sm:$0xff]
    %v557 = vld [vmem:[#allocation5 + $0xdc0] sm:$0xff]
    %v558 = vld [vmem:[#allocation5 + $0xdc8] sm:$0xff]
    %v559 = vld [vmem:[#allocation5 + $0xdd0] sm:$0xff]
    %v560 = vld [vmem:[#allocation5 + $0xdd8] sm:$0xff]
    %v561 = vld [vmem:[#allocation5 + $0xde0] sm:$0xff]
    %v562 = vld [vmem:[#allocation5 + $0xde8] sm:$0xff]
    %v563 = vld [vmem:[#allocation5 + $0xdf0] sm:$0xff]
    %v564 = vld [vmem:[#allocation5 + $0xdf8] sm:$0xff]
    %v565 = vld [vmem:[#allocation5 + $0xe00] sm:$0xff]
    %v566 = vld [vmem:[#allocation5 + $0xe08] sm:$0xff]
    %v567 = vld [vmem:[#allocation5 + $0xe10] sm:$0xff]
    %v568 = vld [vmem:[#allocation5 + $0xe18] sm:$0xff]
    %v569 = vld [vmem:[#allocation5 + $0xe20] sm:$0xff]
    %v570 = vld [vmem:[#allocation5 + $0xe28] sm:$0xff]
    %v571 = vld [vmem:[#allocation5 + $0xe30] sm:$0xff]
    %v572 = vld [vmem:[#allocation5 + $0xe38] sm:$0xff]
    %v573 = vld [vmem:[#allocation5 + $0xe40] sm:$0xff]
    %v574 = vld [vmem:[#allocation5 + $0xe48] sm:$0xff]
    %v575 = vld [vmem:[#allocation5 + $0xe50] sm:$0xff]
    %v576 = vld [vmem:[#allocation5 + $0xe58] sm:$0xff]
    %v577 = vld [vmem:[#allocation5 + $0xe60] sm:$0xff]
    %v578 = vld [vmem:[#allocation5 + $0xe68] sm:$0xff]
    %v579 = vld [vmem:[#allocation5 + $0xe70] sm:$0xff]
    %v580 = vld [vmem:[#allocation5 + $0xe78] sm:$0xff]
    %v581 = vld [vmem:[#allocation5 + $0xe80] sm:$0xff]
    %v582 = vld [vmem:[#allocation5 + $0xe88] sm:$0xff]
    %v583 = vld [vmem:[#allocation5 + $0xe90] sm:$0xff]
    %v584 = vld [vmem:[#allocation5 + $0xe98] sm:$0xff]
    %v585 = vld [vmem:[#allocation5 + $0xea0] sm:$0xff]
    %v586 = vld [vmem:[#allocation5 + $0xea8] sm:$0xff]
    %v587 = vld [vmem:[#allocation5 + $0xeb0] sm:$0xff]
    %v588 = vld [vmem:[#allocation5 + $0xeb8] sm:$0xff]
    %v589 = vld [vmem:[#allocation5 + $0xec0] sm:$0xff]
    %v590 = vld [vmem:[#allocation5 + $0xec8] sm:$0xff]
    %v591 = vld [vmem:[#allocation5 + $0xed0] sm:$0xff]
    %v592 = vld [vmem:[#allocation5 + $0xed8] sm:$0xff]
    %v593 = vld [vmem:[#allocation5 + $0xee0] sm:$0xff]
    %v594 = vld [vmem:[#allocation5 + $0xee8] sm:$0xff]
    %v595 = vld [vmem:[#allocation5 + $0xef0] sm:$0xff]
    %v596 = vld [vmem:[#allocation5 + $0xef8] sm:$0xff]
    %v597 = vld [vmem:[#allocation5 + $0xf00] sm:$0xff]
    %v598 = vld [vmem:[#allocation5 + $0xf08] sm:$0xff]
    %v599 = vld [vmem:[#allocation5 + $0xf10] sm:$0xff]
    %v600 = vld [vmem:[#allocation5 + $0xf18] sm:$0xff]
    %v601 = vld [vmem:[#allocation5 + $0xf20] sm:$0xff]
    %v602 = vld [vmem:[#allocation5 + $0xf28] sm:$0xff]
    %v603 = vld [vmem:[#allocation5 + $0xf30] sm:$0xff]
    %v604 = vld [vmem:[#allocation5 + $0xf38] sm:$0xff]
    %v605 = vld [vmem:[#allocation5 + $0xf40] sm:$0xff]
    %v606 = vld [vmem:[#allocation5 + $0xf48] sm:$0xff]
    %v607 = vld [vmem:[#allocation5 + $0xf50] sm:$0xff]
    %v608 = vld [vmem:[#allocation5 + $0xf58] sm:$0xff]
    %v609 = vld [vmem:[#allocation5 + $0xf60] sm:$0xff]
    %v610 = vld [vmem:[#allocation5 + $0xf68] sm:$0xff]
    %v611 = vld [vmem:[#allocation5 + $0xf70] sm:$0xff]
    %v612 = vld [vmem:[#allocation5 + $0xf78] sm:$0xff]
    %v613 = vld [vmem:[#allocation5 + $0xf80] sm:$0xff]
    %v614 = vld [vmem:[#allocation5 + $0xf88] sm:$0xff]
    %v615 = vld [vmem:[#allocation5 + $0xf90] sm:$0xff]
    %v616 = vld [vmem:[#allocation5 + $0xf98] sm:$0xff]
    %v617 = vld [vmem:[#allocation5 + $0xfa0] sm:$0xff]
    %v618 = vld [vmem:[#allocation5 + $0xfa8] sm:$0xff]
    %v619 = vld [vmem:[#allocation5 + $0xfb0] sm:$0xff]
    %v620 = vld [vmem:[#allocation5 + $0xfb8] sm:$0xff]
    %v621 = vld [vmem:[#allocation5 + $0xfc0] sm:$0xff]
    %v622 = vld [vmem:[#allocation5 + $0xfc8] sm:$0xff]
    %v623 = vld [vmem:[#allocation5 + $0xfd0] sm:$0xff]
    %v624 = vld [vmem:[#allocation5 + $0xfd8] sm:$0xff]
    %v625 = vld [vmem:[#allocation5 + $0xfe0] sm:$0xff]
    %v626 = vld [vmem:[#allocation5 + $0xfe8] sm:$0xff]
    %v627 = vld [vmem:[#allocation5 + $0xff0] sm:$0xff]
    %v628 = vld [vmem:[#allocation5 + $0xff8] sm:$0xff]
    %v629 = vld [vmem:[#allocation5 + $0x1000] sm:$0xff]
    %v630 = vld [vmem:[#allocation5 + $0x1008] sm:$0xff]
    %v631 = vld [vmem:[#allocation5 + $0x1010] sm:$0xff]
    %v632 = vld [vmem:[#allocation5 + $0x1018] sm:$0xff]
    %v633 = vld [vmem:[#allocation5 + $0x1020] sm:$0xff]
    %v634 = vld [vmem:[#allocation5 + $0x1028] sm:$0xff]
    %v635 = vld [vmem:[#allocation5 + $0x1030] sm:$0xff]
    %v636 = vld [vmem:[#allocation5 + $0x1038] sm:$0xff]
    %v637 = vld [vmem:[#allocation5 + $0x1040] sm:$0xff]
    %v638 = vld [vmem:[#allocation5 + $0x1048] sm:$0xff]
    %v639 = vld [vmem:[#allocation5 + $0x1050] sm:$0xff]
    %v640 = vld [vmem:[#allocation5 + $0x1058] sm:$0xff]
    %v641 = vld [vmem:[#allocation5 + $0x1060] sm:$0xff]
    %v642 = vld [vmem:[#allocation5 + $0x1068] sm:$0xff]
    %v643 = vld [vmem:[#allocation5 + $0x1070] sm:$0xff]
    %v644 = vld [vmem:[#allocation5 + $0x1078] sm:$0xff]
    %v645 = vld [vmem:[#allocation5 + $0x1080] sm:$0xff]
    %v646 = vld [vmem:[#allocation5 + $0x1088] sm:$0xff]
    %v647 = vld [vmem:[#allocation5 + $0x1090] sm:$0xff]
    %v648 = vld [vmem:[#allocation5 + $0x1098] sm:$0xff]
    %v649 = vld [vmem:[#allocation5 + $0x10a0] sm:$0xff]
    %v650 = vld [vmem:[#allocation5 + $0x10a8] sm:$0xff]
    %v651 = vld [vmem:[#allocation5 + $0x10b0] sm:$0xff]
    %v652 = vld [vmem:[#allocation5 + $0x10b8] sm:$0xff]
    %v653 = vld [vmem:[#allocation5 + $0x10c0] sm:$0xff]
    %v654 = vld [vmem:[#allocation5 + $0x10c8] sm:$0xff]
    %v655 = vld [vmem:[#allocation5 + $0x10d0] sm:$0xff]
    %v656 = vld [vmem:[#allocation5 + $0x10d8] sm:$0xff]
    %v657 = vld [vmem:[#allocation5 + $0x10e0] sm:$0xff]
    %v658 = vld [vmem:[#allocation5 + $0x10e8] sm:$0xff]
    %v659 = vld [vmem:[#allocation5 + $0x10f0] sm:$0xff]
    %v660 = vld [vmem:[#allocation5 + $0x10f8] sm:$0xff]
    %v661 = vld [vmem:[#allocation5 + $0x1100] sm:$0xff]
    %v662 = vld [vmem:[#allocation5 + $0x1108] sm:$0xff]
    %v663 = vld [vmem:[#allocation5 + $0x1110] sm:$0xff]
    %v664 = vld [vmem:[#allocation5 + $0x1118] sm:$0xff]
    %v665 = vld [vmem:[#allocation5 + $0x1120] sm:$0xff]
    %v666 = vld [vmem:[#allocation5 + $0x1128] sm:$0xff]
    %v667 = vld [vmem:[#allocation5 + $0x1130] sm:$0xff]
    %v668 = vld [vmem:[#allocation5 + $0x1138] sm:$0xff]
    %v669 = vld [vmem:[#allocation5 + $0x1140] sm:$0xff]
    %v670 = vld [vmem:[#allocation5 + $0x1148] sm:$0xff]
    %v671 = vld [vmem:[#allocation5 + $0x1150] sm:$0xff]
    %v672 = vld [vmem:[#allocation5 + $0x1158] sm:$0xff]
    %v673 = vld [vmem:[#allocation5 + $0x1160] sm:$0xff]
    %v674 = vld [vmem:[#allocation5 + $0x1168] sm:$0xff]
    %v675 = vld [vmem:[#allocation5 + $0x1170] sm:$0xff]
    %v676 = vld [vmem:[#allocation5 + $0x1178] sm:$0xff]
    %v677 = vld [vmem:[#allocation5 + $0x1180] sm:$0xff]
    %v678 = vld [vmem:[#allocation5 + $0x1188] sm:$0xff]
    %v679 = vld [vmem:[#allocation5 + $0x1190] sm:$0xff]
    %v680 = vld [vmem:[#allocation5 + $0x1198] sm:$0xff]
    %v681 = vld [vmem:[#allocation5 + $0x11a0] sm:$0xff]
    %v682 = vld [vmem:[#allocation5 + $0x11a8] sm:$0xff]
    %v683 = vld [vmem:[#allocation5 + $0x11b0] sm:$0xff]
    %v684 = vld [vmem:[#allocation5 + $0x11b8] sm:$0xff]
    %v685 = vld [vmem:[#allocation5 + $0x11c0] sm:$0xff]
    %v686 = vld [vmem:[#allocation5 + $0x11c8] sm:$0xff]
    %v687 = vld [vmem:[#allocation5 + $0x11d0] sm:$0xff]
    %v688 = vld [vmem:[#allocation5 + $0x11d8] sm:$0xff]
    %v689 = vld [vmem:[#allocation5 + $0x11e0] sm:$0xff]
    %v690 = vld [vmem:[#allocation5 + $0x11e8] sm:$0xff]
    %v691 = vld [vmem:[#allocation5 + $0x11f0] sm:$0xff]
    %v692 = vld [vmem:[#allocation5 + $0x11f8] sm:$0xff]
    %v693 = vld [vmem:[#allocation5 + $0x1200] sm:$0xff]
    %v694 = vld [vmem:[#allocation5 + $0x1208] sm:$0xff]
    %v695 = vld [vmem:[#allocation5 + $0x1210] sm:$0xff]
    %v696 = vld [vmem:[#allocation5 + $0x1218] sm:$0xff]
    %v697 = vld [vmem:[#allocation5 + $0x1220] sm:$0xff]
    %v698 = vld [vmem:[#allocation5 + $0x1228] sm:$0xff]
    %v699 = vld [vmem:[#allocation5 + $0x1230] sm:$0xff]
    %v700 = vld [vmem:[#allocation5 + $0x1238] sm:$0xff]
    %v701 = vld [vmem:[#allocation5 + $0x1240] sm:$0xff]
    %v702 = vld [vmem:[#allocation5 + $0x1248] sm:$0xff]
    %v703 = vld [vmem:[#allocation5 + $0x1250] sm:$0xff]
    %v704 = vld [vmem:[#allocation5 + $0x1258] sm:$0xff]
    %v705 = vld [vmem:[#allocation5 + $0x1260] sm:$0xff]
    %v706 = vld [vmem:[#allocation5 + $0x1268] sm:$0xff]
    %v707 = vld [vmem:[#allocation5 + $0x1270] sm:$0xff]
    %v708 = vld [vmem:[#allocation5 + $0x1278] sm:$0xff]
    %v709 = vld [vmem:[#allocation5 + $0x1280] sm:$0xff]
    %v710 = vld [vmem:[#allocation5 + $0x1288] sm:$0xff]
    %v711 = vld [vmem:[#allocation5 + $0x1290] sm:$0xff]
    %v712 = vld [vmem:[#allocation5 + $0x1298] sm:$0xff]
    %v713 = vld [vmem:[#allocation5 + $0x12a0] sm:$0xff]
    %v714 = vld [vmem:[#allocation5 + $0x12a8] sm:$0xff]
    %v715 = vld [vmem:[#allocation5 + $0x12b0] sm:$0xff]
    %v716 = vld [vmem:[#allocation5 + $0x12b8] sm:$0xff]
    %v717 = vld [vmem:[#allocation5 + $0x12c0] sm:$0xff]
    %v718 = vld [vmem:[#allocation5 + $0x12c8] sm:$0xff]
    %v719 = vld [vmem:[#allocation5 + $0x12d0] sm:$0xff]
    %v720 = vld [vmem:[#allocation5 + $0x12d8] sm:$0xff]
    %v721 = vld [vmem:[#allocation5 + $0x12e0] sm:$0xff]
    %v722 = vld [vmem:[#allocation5 + $0x12e8] sm:$0xff]
    %v723 = vld [vmem:[#allocation5 + $0x12f0] sm:$0xff]
    %v724 = vld [vmem:[#allocation5 + $0x12f8] sm:$0xff]
    %v725 = vld [vmem:[#allocation5 + $0x1300] sm:$0xff]
    %v726 = vld [vmem:[#allocation5 + $0x1308] sm:$0xff]
    %v727 = vld [vmem:[#allocation5 + $0x1310] sm:$0xff]
    %v728 = vld [vmem:[#allocation5 + $0x1318] sm:$0xff]
    %v729 = vld [vmem:[#allocation5 + $0x1320] sm:$0xff]
    %v730 = vld [vmem:[#allocation5 + $0x1328] sm:$0xff]
    %v731 = vld [vmem:[#allocation5 + $0x1330] sm:$0xff]
    %v732 = vld [vmem:[#allocation5 + $0x1338] sm:$0xff]
    %v733 = vld [vmem:[#allocation5 + $0x1340] sm:$0xff]
    %v734 = vld [vmem:[#allocation5 + $0x1348] sm:$0xff]
    %v735 = vld [vmem:[#allocation5 + $0x1350] sm:$0xff]
    %v736 = vld [vmem:[#allocation5 + $0x1358] sm:$0xff]
    %v737 = vld [vmem:[#allocation5 + $0x1360] sm:$0xff]
    %v738 = vld [vmem:[#allocation5 + $0x1368] sm:$0xff]
    %v739 = vld [vmem:[#allocation5 + $0x1370] sm:$0xff]
    %v740 = vld [vmem:[#allocation5 + $0x1378] sm:$0xff]
    %v741 = vld [vmem:[#allocation5 + $0x1380] sm:$0xff]
    %v742 = vld [vmem:[#allocation5 + $0x1388] sm:$0xff]
    %v743 = vld [vmem:[#allocation5 + $0x1390] sm:$0xff]
    %v744 = vld [vmem:[#allocation5 + $0x1398] sm:$0xff]
    %v745 = vld [vmem:[#allocation5 + $0x13a0] sm:$0xff]
    %v746 = vld [vmem:[#allocation5 + $0x13a8] sm:$0xff]
    %v747 = vld [vmem:[#allocation5 + $0x13b0] sm:$0xff]
    %v748 = vld [vmem:[#allocation5 + $0x13b8] sm:$0xff]
    %v749 = vld [vmem:[#allocation5 + $0x13c0] sm:$0xff]
    %v750 = vld [vmem:[#allocation5 + $0x13c8] sm:$0xff]
    %v751 = vld [vmem:[#allocation5 + $0x13d0] sm:$0xff]
    %v752 = vld [vmem:[#allocation5 + $0x13d8] sm:$0xff]
    %v753 = vld [vmem:[#allocation5 + $0x13e0] sm:$0xff]
    %v754 = vld [vmem:[#allocation5 + $0x13e8] sm:$0xff]
    %v755 = vld [vmem:[#allocation5 + $0x13f0] sm:$0xff]
    %v756 = vld [vmem:[#allocation5 + $0x13f8] sm:$0xff]
    %v757 = vld [vmem:[#allocation5 + $0x1400] sm:$0xff]
    %v758 = vld [vmem:[#allocation5 + $0x1408] sm:$0xff]
    %v759 = vld [vmem:[#allocation5 + $0x1410] sm:$0xff]
    %v760 = vld [vmem:[#allocation5 + $0x1418] sm:$0xff]
    %v761 = vld [vmem:[#allocation5 + $0x1420] sm:$0xff]
    %v762 = vld [vmem:[#allocation5 + $0x1428] sm:$0xff]
    %v763 = vld [vmem:[#allocation5 + $0x1430] sm:$0xff]
    %v764 = vld [vmem:[#allocation5 + $0x1438] sm:$0xff]
    %v765 = vld [vmem:[#allocation5 + $0x1440] sm:$0xff]
    %v766 = vld [vmem:[#allocation5 + $0x1448] sm:$0xff]
    %v767 = vld [vmem:[#allocation5 + $0x1450] sm:$0xff]
    %v768 = vld [vmem:[#allocation5 + $0x1458] sm:$0xff]
    %v769 = vld [vmem:[#allocation5 + $0x1460] sm:$0xff]
    %v770 = vld [vmem:[#allocation5 + $0x1468] sm:$0xff]
    %v771 = vld [vmem:[#allocation5 + $0x1470] sm:$0xff]
    %v772 = vld [vmem:[#allocation5 + $0x1478] sm:$0xff]
    %v773 = vld [vmem:[#allocation5 + $0x1480] sm:$0xff]
    %v774 = vld [vmem:[#allocation5 + $0x1488] sm:$0xff]
    %v775 = vld [vmem:[#allocation5 + $0x1490] sm:$0xff]
    %v776 = vld [vmem:[#allocation5 + $0x1498] sm:$0xff]
    %v777 = vld [vmem:[#allocation5 + $0x14a0] sm:$0xff]
    %v778 = vld [vmem:[#allocation5 + $0x14a8] sm:$0xff]
    %v779 = vld [vmem:[#allocation5 + $0x14b0] sm:$0xff]
    %v780 = vld [vmem:[#allocation5 + $0x14b8] sm:$0xff]
    %v781 = vld [vmem:[#allocation5 + $0x14c0] sm:$0xff]
    %v782 = vld [vmem:[#allocation5 + $0x14c8] sm:$0xff]
    %v783 = vld [vmem:[#allocation5 + $0x14d0] sm:$0xff]
    %v784 = vld [vmem:[#allocation5 + $0x14d8] sm:$0xff]
    %v785 = vld [vmem:[#allocation5 + $0x14e0] sm:$0xff]
    %v786 = vld [vmem:[#allocation5 + $0x14e8] sm:$0xff]
    %v787 = vld [vmem:[#allocation5 + $0x14f0] sm:$0xff]
    %v788 = vld [vmem:[#allocation5 + $0x14f8] sm:$0xff]
    %v789 = vld [vmem:[#allocation5 + $0x1500] sm:$0xff]
    %v790 = vld [vmem:[#allocation5 + $0x1508] sm:$0xff]
    %v791 = vld [vmem:[#allocation5 + $0x1510] sm:$0xff]
    %v792 = vld [vmem:[#allocation5 + $0x1518] sm:$0xff]
    %v793 = vld [vmem:[#allocation5 + $0x1520] sm:$0xff]
    %v794 = vld [vmem:[#allocation5 + $0x1528] sm:$0xff]
    %v795 = vld [vmem:[#allocation5 + $0x1530] sm:$0xff]
    %v796 = vld [vmem:[#allocation5 + $0x1538] sm:$0xff]
    %v797 = vld [vmem:[#allocation5 + $0x1540] sm:$0xff]
    %v798 = vld [vmem:[#allocation5 + $0x1548] sm:$0xff]
    %v799 = vld [vmem:[#allocation5 + $0x1550] sm:$0xff]
    %v800 = vld [vmem:[#allocation5 + $0x1558] sm:$0xff]
    %v801 = vld [vmem:[#allocation5 + $0x1560] sm:$0xff]
    %v802 = vld [vmem:[#allocation5 + $0x1568] sm:$0xff]
    %v803 = vld [vmem:[#allocation5 + $0x1570] sm:$0xff]
    %v804 = vld [vmem:[#allocation5 + $0x1578] sm:$0xff]
    %v805 = vld [vmem:[#allocation5 + $0x1580] sm:$0xff]
    %v806 = vld [vmem:[#allocation5 + $0x1588] sm:$0xff]
    %v807 = vld [vmem:[#allocation5 + $0x1590] sm:$0xff]
    %v808 = vld [vmem:[#allocation5 + $0x1598] sm:$0xff]
    %v809 = vld [vmem:[#allocation5 + $0x15a0] sm:$0xff]
    %v810 = vld [vmem:[#allocation5 + $0x15a8] sm:$0xff]
    %v811 = vld [vmem:[#allocation5 + $0x15b0] sm:$0xff]
    %v812 = vld [vmem:[#allocation5 + $0x15b8] sm:$0xff]
    %v813 = vld [vmem:[#allocation5 + $0x15c0] sm:$0xff]
    %v814 = vld [vmem:[#allocation5 + $0x15c8] sm:$0xff]
    %v815 = vld [vmem:[#allocation5 + $0x15d0] sm:$0xff]
    %v816 = vld [vmem:[#allocation5 + $0x15d8] sm:$0xff]
    %v817 = vld [vmem:[#allocation5 + $0x15e0] sm:$0xff]
    %v818 = vld [vmem:[#allocation5 + $0x15e8] sm:$0xff]
    %v819 = vld [vmem:[#allocation5 + $0x15f0] sm:$0xff]
    %v820 = vld [vmem:[#allocation5 + $0x15f8] sm:$0xff]
    %v821 = vld [vmem:[#allocation5 + $0x1600] sm:$0xff]
    %v822 = vld [vmem:[#allocation5 + $0x1608] sm:$0xff]
    %v823 = vld [vmem:[#allocation5 + $0x1610] sm:$0xff]
    %v824 = vld [vmem:[#allocation5 + $0x1618] sm:$0xff]
    %v825 = vld [vmem:[#allocation5 + $0x1620] sm:$0xff]
    %v826 = vld [vmem:[#allocation5 + $0x1628] sm:$0xff]
    %v827 = vld [vmem:[#allocation5 + $0x1630] sm:$0xff]
    %v828 = vld [vmem:[#allocation5 + $0x1638] sm:$0xff]
    %v829 = vld [vmem:[#allocation5 + $0x1640] sm:$0xff]
    %v830 = vld [vmem:[#allocation5 + $0x1648] sm:$0xff]
    %v831 = vld [vmem:[#allocation5 + $0x1650] sm:$0xff]
    %v832 = vld [vmem:[#allocation5 + $0x1658] sm:$0xff]
    %v833 = vld [vmem:[#allocation5 + $0x1660] sm:$0xff]
    %v834 = vld [vmem:[#allocation5 + $0x1668] sm:$0xff]
    %v835 = vld [vmem:[#allocation5 + $0x1670] sm:$0xff]
    %v836 = vld [vmem:[#allocation5 + $0x1678] sm:$0xff]
    %v837 = vld [vmem:[#allocation5 + $0x1680] sm:$0xff]
    %v838 = vld [vmem:[#allocation5 + $0x1688] sm:$0xff]
    %v839 = vld [vmem:[#allocation5 + $0x1690] sm:$0xff]
    %v840 = vld [vmem:[#allocation5 + $0x1698] sm:$0xff]
    %v841 = vld [vmem:[#allocation5 + $0x16a0] sm:$0xff]
    %v842 = vld [vmem:[#allocation5 + $0x16a8] sm:$0xff]
    %v843 = vld [vmem:[#allocation5 + $0x16b0] sm:$0xff]
    %v844 = vld [vmem:[#allocation5 + $0x16b8] sm:$0xff]
    %v845 = vld [vmem:[#allocation5 + $0x16c0] sm:$0xff]
    %v846 = vld [vmem:[#allocation5 + $0x16c8] sm:$0xff]
    %v847 = vld [vmem:[#allocation5 + $0x16d0] sm:$0xff]
    %v848 = vld [vmem:[#allocation5 + $0x16d8] sm:$0xff]
    %v849 = vld [vmem:[#allocation5 + $0x16e0] sm:$0xff]
    %v850 = vld [vmem:[#allocation5 + $0x16e8] sm:$0xff]
    %v851 = vld [vmem:[#allocation5 + $0x16f0] sm:$0xff]
    %v852 = vld [vmem:[#allocation5 + $0x16f8] sm:$0xff]
    %v853 = vld [vmem:[#allocation5 + $0x1700] sm:$0xff]
    %v854 = vld [vmem:[#allocation5 + $0x1708] sm:$0xff]
    %v855 = vld [vmem:[#allocation5 + $0x1710] sm:$0xff]
    %v856 = vld [vmem:[#allocation5 + $0x1718] sm:$0xff]
    %v857 = vld [vmem:[#allocation5 + $0x1720] sm:$0xff]
    %v858 = vld [vmem:[#allocation5 + $0x1728] sm:$0xff]
    %v859 = vld [vmem:[#allocation5 + $0x1730] sm:$0xff]
    %v860 = vld [vmem:[#allocation5 + $0x1738] sm:$0xff]
    %v861 = vld [vmem:[#allocation5 + $0x1740] sm:$0xff]
    %v862 = vld [vmem:[#allocation5 + $0x1748] sm:$0xff]
    %v863 = vld [vmem:[#allocation5 + $0x1750] sm:$0xff]
    %v864 = vld [vmem:[#allocation5 + $0x1758] sm:$0xff]
    %v865 = vld [vmem:[#allocation5 + $0x1760] sm:$0xff]
    %v866 = vld [vmem:[#allocation5 + $0x1768] sm:$0xff]
    %v867 = vld [vmem:[#allocation5 + $0x1770] sm:$0xff]
    %v868 = vld [vmem:[#allocation5 + $0x1778] sm:$0xff]
    %v869 = vld [vmem:[#allocation5 + $0x1780] sm:$0xff]
    %v870 = vld [vmem:[#allocation5 + $0x1788] sm:$0xff]
    %v871 = vld [vmem:[#allocation5 + $0x1790] sm:$0xff]
    %v872 = vld [vmem:[#allocation5 + $0x1798] sm:$0xff]
    %v873 = vld [vmem:[#allocation5 + $0x17a0] sm:$0xff]
    %v874 = vld [vmem:[#allocation5 + $0x17a8] sm:$0xff]
    %v875 = vld [vmem:[#allocation5 + $0x17b0] sm:$0xff]
    %v876 = vld [vmem:[#allocation5 + $0x17b8] sm:$0xff]
    %v877 = vld [vmem:[#allocation5 + $0x17c0] sm:$0xff]
    %v878 = vld [vmem:[#allocation5 + $0x17c8] sm:$0xff]
    %v879 = vld [vmem:[#allocation5 + $0x17d0] sm:$0xff]
    %v880 = vld [vmem:[#allocation5 + $0x17d8] sm:$0xff]
    %v881 = vld [vmem:[#allocation5 + $0x17e0] sm:$0xff]
    %v882 = vld [vmem:[#allocation5 + $0x17e8] sm:$0xff]
    %v883 = vld [vmem:[#allocation5 + $0x17f0] sm:$0xff]
    %v884 = vld [vmem:[#allocation5 + $0x17f8] sm:$0xff]
    %v885 = vld [vmem:[#allocation5 + $0x1800] sm:$0xff]
    %v886 = vld [vmem:[#allocation5 + $0x1808] sm:$0xff]
    %v887 = vld [vmem:[#allocation5 + $0x1810] sm:$0xff]
    %v888 = vld [vmem:[#allocation5 + $0x1818] sm:$0xff]
    %v889 = vld [vmem:[#allocation5 + $0x1820] sm:$0xff]
    %v890 = vld [vmem:[#allocation5 + $0x1828] sm:$0xff]
    %v891 = vld [vmem:[#allocation5 + $0x1830] sm:$0xff]
    %v892 = vld [vmem:[#allocation5 + $0x1838] sm:$0xff]
    %v893 = vld [vmem:[#allocation5 + $0x1840] sm:$0xff]
    %v894 = vld [vmem:[#allocation5 + $0x1848] sm:$0xff]
    %v895 = vld [vmem:[#allocation5 + $0x1850] sm:$0xff]
    %v896 = vld [vmem:[#allocation5 + $0x1858] sm:$0xff]
    %v897 = vld [vmem:[#allocation5 + $0x1860] sm:$0xff]
    %v898 = vld [vmem:[#allocation5 + $0x1868] sm:$0xff]
    %v899 = vld [vmem:[#allocation5 + $0x1870] sm:$0xff]
    %v900 = vld [vmem:[#allocation5 + $0x1878] sm:$0xff]
    %v901 = vld [vmem:[#allocation5 + $0x1880] sm:$0xff]
    %v902 = vld [vmem:[#allocation5 + $0x1888] sm:$0xff]
    %v903 = vld [vmem:[#allocation5 + $0x1890] sm:$0xff]
    %v904 = vld [vmem:[#allocation5 + $0x1898] sm:$0xff]
    %v905 = vld [vmem:[#allocation5 + $0x18a0] sm:$0xff]
    %v906 = vld [vmem:[#allocation5 + $0x18a8] sm:$0xff]
    %v907 = vld [vmem:[#allocation5 + $0x18b0] sm:$0xff]
    %v908 = vld [vmem:[#allocation5 + $0x18b8] sm:$0xff]
    %v909 = vld [vmem:[#allocation5 + $0x18c0] sm:$0xff]
    %v910 = vld [vmem:[#allocation5 + $0x18c8] sm:$0xff]
    %v911 = vld [vmem:[#allocation5 + $0x18d0] sm:$0xff]
    %v912 = vld [vmem:[#allocation5 + $0x18d8] sm:$0xff]
    %v913 = vld [vmem:[#allocation5 + $0x18e0] sm:$0xff]
    %v914 = vld [vmem:[#allocation5 + $0x18e8] sm:$0xff]
    %v915 = vld [vmem:[#allocation5 + $0x18f0] sm:$0xff]
    %v916 = vld [vmem:[#allocation5 + $0x18f8] sm:$0xff]
    %v917 = vld [vmem:[#allocation5 + $0x1900] sm:$0xff]
    %v918 = vld [vmem:[#allocation5 + $0x1908] sm:$0xff]
    %v919 = vld [vmem:[#allocation5 + $0x1910] sm:$0xff]
    %v920 = vld [vmem:[#allocation5 + $0x1918] sm:$0xff]
    %v921 = vld [vmem:[#allocation5 + $0x1920] sm:$0xff]
    %v922 = vld [vmem:[#allocation5 + $0x1928] sm:$0xff]
    %v923 = vld [vmem:[#allocation5 + $0x1930] sm:$0xff]
    %v924 = vld [vmem:[#allocation5 + $0x1938] sm:$0xff]
    %v925 = vld [vmem:[#allocation5 + $0x1940] sm:$0xff]
    %v926 = vld [vmem:[#allocation5 + $0x1948] sm:$0xff]
    %v927 = vld [vmem:[#allocation5 + $0x1950] sm:$0xff]
    %v928 = vld [vmem:[#allocation5 + $0x1958] sm:$0xff]
    %v929 = vld [vmem:[#allocation5 + $0x1960] sm:$0xff]
    %v930 = vld [vmem:[#allocation5 + $0x1968] sm:$0xff]
    %v931 = vld [vmem:[#allocation5 + $0x1970] sm:$0xff]
    %v932 = vld [vmem:[#allocation5 + $0x1978] sm:$0xff]
    %v933 = vld [vmem:[#allocation5 + $0x1980] sm:$0xff]
    %v934 = vld [vmem:[#allocation5 + $0x1988] sm:$0xff]
    %v935 = vld [vmem:[#allocation5 + $0x1990] sm:$0xff]
    %v936 = vld [vmem:[#allocation5 + $0x1998] sm:$0xff]
    %v937 = vld [vmem:[#allocation5 + $0x19a0] sm:$0xff]
    %v938 = vld [vmem:[#allocation5 + $0x19a8] sm:$0xff]
    %v939 = vld [vmem:[#allocation5 + $0x19b0] sm:$0xff]
    %v940 = vld [vmem:[#allocation5 + $0x19b8] sm:$0xff]
    %v941 = vld [vmem:[#allocation5 + $0x19c0] sm:$0xff]
    %v942 = vld [vmem:[#allocation5 + $0x19c8] sm:$0xff]
    %v943 = vld [vmem:[#allocation5 + $0x19d0] sm:$0xff]
    %v944 = vld [vmem:[#allocation5 + $0x19d8] sm:$0xff]
    %v945 = vld [vmem:[#allocation5 + $0x19e0] sm:$0xff]
    %v946 = vld [vmem:[#allocation5 + $0x19e8] sm:$0xff]
    %v947 = vld [vmem:[#allocation5 + $0x19f0] sm:$0xff]
    %v948 = vld [vmem:[#allocation5 + $0x19f8] sm:$0xff]
    %v949 = vld [vmem:[#allocation5 + $0x1a00] sm:$0xff]
    %v950 = vld [vmem:[#allocation5 + $0x1a08] sm:$0xff]
    %v951 = vld [vmem:[#allocation5 + $0x1a10] sm:$0xff]
    %v952 = vld [vmem:[#allocation5 + $0x1a18] sm:$0xff]
    %v953 = vld [vmem:[#allocation5 + $0x1a20] sm:$0xff]
    %v954 = vld [vmem:[#allocation5 + $0x1a28] sm:$0xff]
    %v955 = vld [vmem:[#allocation5 + $0x1a30] sm:$0xff]
    %v956 = vld [vmem:[#allocation5 + $0x1a38] sm:$0xff]
    %v957 = vld [vmem:[#allocation5 + $0x1a40] sm:$0xff]
    %v958 = vld [vmem:[#allocation5 + $0x1a48] sm:$0xff]
    %v959 = vld [vmem:[#allocation5 + $0x1a50] sm:$0xff]
    %v960 = vld [vmem:[#allocation5 + $0x1a58] sm:$0xff]
    %v961 = vld [vmem:[#allocation5 + $0x1a60] sm:$0xff]
    %v962 = vld [vmem:[#allocation5 + $0x1a68] sm:$0xff]
    %v963 = vld [vmem:[#allocation5 + $0x1a70] sm:$0xff]
    %v964 = vld [vmem:[#allocation5 + $0x1a78] sm:$0xff]
    %v965 = vld [vmem:[#allocation5 + $0x1a80] sm:$0xff]
    %v966 = vld [vmem:[#allocation5 + $0x1a88] sm:$0xff]
    %v967 = vld [vmem:[#allocation5 + $0x1a90] sm:$0xff]
    %v968 = vld [vmem:[#allocation5 + $0x1a98] sm:$0xff]
    %v969 = vld [vmem:[#allocation5 + $0x1aa0] sm:$0xff]
    %v970 = vld [vmem:[#allocation5 + $0x1aa8] sm:$0xff]
    %v971 = vld [vmem:[#allocation5 + $0x1ab0] sm:$0xff]
    %v972 = vld [vmem:[#allocation5 + $0x1ab8] sm:$0xff]
    %v973 = vld [vmem:[#allocation5 + $0x1ac0] sm:$0xff]
    %v974 = vld [vmem:[#allocation5 + $0x1ac8] sm:$0xff]
    %v975 = vld [vmem:[#allocation5 + $0x1ad0] sm:$0xff]
    %v976 = vld [vmem:[#allocation5 + $0x1ad8] sm:$0xff]
    %v977 = vld [vmem:[#allocation5 + $0x1ae0] sm:$0xff]
    %v978 = vld [vmem:[#allocation5 + $0x1ae8] sm:$0xff]
    %v979 = vld [vmem:[#allocation5 + $0x1af0] sm:$0xff]
    %v980 = vld [vmem:[#allocation5 + $0x1af8] sm:$0xff]
    %v981 = vld [vmem:[#allocation5 + $0x1b00] sm:$0xff]
    %v982 = vld [vmem:[#allocation5 + $0x1b08] sm:$0xff]
    %v983 = vld [vmem:[#allocation5 + $0x1b10] sm:$0xff]
    %v984 = vld [vmem:[#allocation5 + $0x1b18] sm:$0xff]
    %v985 = vld [vmem:[#allocation5 + $0x1b20] sm:$0xff]
    %v986 = vld [vmem:[#allocation5 + $0x1b28] sm:$0xff]
    %v987 = vld [vmem:[#allocation5 + $0x1b30] sm:$0xff]
    %v988 = vld [vmem:[#allocation5 + $0x1b38] sm:$0xff]
    %v989 = vld [vmem:[#allocation5 + $0x1b40] sm:$0xff]
    %v990 = vld [vmem:[#allocation5 + $0x1b48] sm:$0xff]
    %v991 = vld [vmem:[#allocation5 + $0x1b50] sm:$0xff]
    %v992 = vld [vmem:[#allocation5 + $0x1b58] sm:$0xff]
    %v993 = vld [vmem:[#allocation5 + $0x1b60] sm:$0xff]
    %v994 = vld [vmem:[#allocation5 + $0x1b68] sm:$0xff]
    %v995 = vld [vmem:[#allocation5 + $0x1b70] sm:$0xff]
    %v996 = vld [vmem:[#allocation5 + $0x1b78] sm:$0xff]
    %v997 = vld [vmem:[#allocation5 + $0x1b80] sm:$0xff]
    %v998 = vld [vmem:[#allocation5 + $0x1b88] sm:$0xff]
    %v999 = vld [vmem:[#allocation5 + $0x1b90] sm:$0xff]
    %v1000 = vld [vmem:[#allocation5 + $0x1b98] sm:$0xff]
    %v1001 = vld [vmem:[#allocation5 + $0x1ba0] sm:$0xff]
    %v1002 = vld [vmem:[#allocation5 + $0x1ba8] sm:$0xff]
    %v1003 = vld [vmem:[#allocation5 + $0x1bb0] sm:$0xff]
    %v1004 = vld [vmem:[#allocation5 + $0x1bb8] sm:$0xff]
    %v1005 = vld [vmem:[#allocation5 + $0x1bc0] sm:$0xff]
    %v1006 = vld [vmem:[#allocation5 + $0x1bc8] sm:$0xff]
    %v1007 = vld [vmem:[#allocation5 + $0x1bd0] sm:$0xff]
    %v1008 = vld [vmem:[#allocation5 + $0x1bd8] sm:$0xff]
    %v1009 = vld [vmem:[#allocation5 + $0x1be0] sm:$0xff]
    %v1010 = vld [vmem:[#allocation5 + $0x1be8] sm:$0xff]
    %v1011 = vld [vmem:[#allocation5 + $0x1bf0] sm:$0xff]
    %v1012 = vld [vmem:[#allocation5 + $0x1bf8] sm:$0xff]
    %v1013 = vld [vmem:[#allocation5 + $0x1c00] sm:$0xff]
    %v1014 = vld [vmem:[#allocation5 + $0x1c08] sm:$0xff]
    %v1015 = vld [vmem:[#allocation5 + $0x1c10] sm:$0xff]
    %v1016 = vld [vmem:[#allocation5 + $0x1c18] sm:$0xff]
    %v1017 = vld [vmem:[#allocation5 + $0x1c20] sm:$0xff]
    %v1018 = vld [vmem:[#allocation5 + $0x1c28] sm:$0xff]
    %v1019 = vld [vmem:[#allocation5 + $0x1c30] sm:$0xff]
    %v1020 = vld [vmem:[#allocation5 + $0x1c38] sm:$0xff]
    %v1021 = vld [vmem:[#allocation5 + $0x1c40] sm:$0xff]
    %v1022 = vld [vmem:[#allocation5 + $0x1c48] sm:$0xff]
    %v1023 = vld [vmem:[#allocation5 + $0x1c50] sm:$0xff]
    %v1024 = vld [vmem:[#allocation5 + $0x1c58] sm:$0xff]
    %v1025 = vld [vmem:[#allocation5 + $0x1c60] sm:$0xff]
    %v1026 = vld [vmem:[#allocation5 + $0x1c68] sm:$0xff]
    %v1027 = vld [vmem:[#allocation5 + $0x1c70] sm:$0xff]
    %v1028 = vld [vmem:[#allocation5 + $0x1c78] sm:$0xff]
    %v1029 = vld [vmem:[#allocation5 + $0x1c80] sm:$0xff]
    %v1030 = vld [vmem:[#allocation5 + $0x1c88] sm:$0xff]
    %v1031 = vld [vmem:[#allocation5 + $0x1c90] sm:$0xff]
    %v1032 = vld [vmem:[#allocation5 + $0x1c98] sm:$0xff]
    %v1033 = vld [vmem:[#allocation5 + $0x1ca0] sm:$0xff]
    %v1034 = vld [vmem:[#allocation5 + $0x1ca8] sm:$0xff]
    %v1035 = vld [vmem:[#allocation5 + $0x1cb0] sm:$0xff]
    %v1036 = vld [vmem:[#allocation5 + $0x1cb8] sm:$0xff]
    %v1037 = vld [vmem:[#allocation5 + $0x1cc0] sm:$0xff]
    %v1038 = vld [vmem:[#allocation5 + $0x1cc8] sm:$0xff]
    %v1039 = vld [vmem:[#allocation5 + $0x1cd0] sm:$0xff]
    %v1040 = vld [vmem:[#allocation5 + $0x1cd8] sm:$0xff]
    %v1041 = vld [vmem:[#allocation5 + $0x1ce0] sm:$0xff]
    %v1042 = vld [vmem:[#allocation5 + $0x1ce8] sm:$0xff]
    %v1043 = vld [vmem:[#allocation5 + $0x1cf0] sm:$0xff]
    %v1044 = vld [vmem:[#allocation5 + $0x1cf8] sm:$0xff]
    %v1045 = vld [vmem:[#allocation5 + $0x1d00] sm:$0xff]
    %v1046 = vld [vmem:[#allocation5 + $0x1d08] sm:$0xff]
    %v1047 = vld [vmem:[#allocation5 + $0x1d10] sm:$0xff]
    %v1048 = vld [vmem:[#allocation5 + $0x1d18] sm:$0xff]
    %v1049 = vld [vmem:[#allocation5 + $0x1d20] sm:$0xff]
    %v1050 = vld [vmem:[#allocation5 + $0x1d28] sm:$0xff]
    %v1051 = vld [vmem:[#allocation5 + $0x1d30] sm:$0xff]
    %v1052 = vld [vmem:[#allocation5 + $0x1d38] sm:$0xff]
    %v1053 = vld [vmem:[#allocation5 + $0x1d40] sm:$0xff]
    %v1054 = vld [vmem:[#allocation5 + $0x1d48] sm:$0xff]
    %v1055 = vld [vmem:[#allocation5 + $0x1d50] sm:$0xff]
    %v1056 = vld [vmem:[#allocation5 + $0x1d58] sm:$0xff]
    %v1057 = vld [vmem:[#allocation5 + $0x1d60] sm:$0xff]
    %v1058 = vld [vmem:[#allocation5 + $0x1d68] sm:$0xff]
    %v1059 = vld [vmem:[#allocation5 + $0x1d70] sm:$0xff]
    %v1060 = vld [vmem:[#allocation5 + $0x1d78] sm:$0xff]
    %v1061 = vld [vmem:[#allocation5 + $0x1d80] sm:$0xff]
    %v1062 = vld [vmem:[#allocation5 + $0x1d88] sm:$0xff]
    %v1063 = vld [vmem:[#allocation5 + $0x1d90] sm:$0xff]
    %v1064 = vld [vmem:[#allocation5 + $0x1d98] sm:$0xff]
    %v1065 = vld [vmem:[#allocation5 + $0x1da0] sm:$0xff]
    %v1066 = vld [vmem:[#allocation5 + $0x1da8] sm:$0xff]
    %v1067 = vld [vmem:[#allocation5 + $0x1db0] sm:$0xff]
    %v1068 = vld [vmem:[#allocation5 + $0x1db8] sm:$0xff]
    %v1069 = vld [vmem:[#allocation5 + $0x1dc0] sm:$0xff]
    %v1070 = vld [vmem:[#allocation5 + $0x1dc8] sm:$0xff]
    %v1071 = vld [vmem:[#allocation5 + $0x1dd0] sm:$0xff]
    %v1072 = vld [vmem:[#allocation5 + $0x1dd8] sm:$0xff]
    %v1073 = vld [vmem:[#allocation5 + $0x1de0] sm:$0xff]
    %v1074 = vld [vmem:[#allocation5 + $0x1de8] sm:$0xff]
    %v1075 = vld [vmem:[#allocation5 + $0x1df0] sm:$0xff]
    %v1076 = vld [vmem:[#allocation5 + $0x1df8] sm:$0xff]
    %v1077 = vld [vmem:[#allocation5 + $0x1e00] sm:$0xff]
    %v1078 = vld [vmem:[#allocation5 + $0x1e08] sm:$0xff]
    %v1079 = vld [vmem:[#allocation5 + $0x1e10] sm:$0xff]
    %v1080 = vld [vmem:[#allocation5 + $0x1e18] sm:$0xff]
    %v1081 = vld [vmem:[#allocation5 + $0x1e20] sm:$0xff]
    %v1082 = vld [vmem:[#allocation5 + $0x1e28] sm:$0xff]
    %v1083 = vld [vmem:[#allocation5 + $0x1e30] sm:$0xff]
    %v1084 = vld [vmem:[#allocation5 + $0x1e38] sm:$0xff]
    %v1085 = vld [vmem:[#allocation5 + $0x1e40] sm:$0xff]
    %v1086 = vld [vmem:[#allocation5 + $0x1e48] sm:$0xff]
    %v1087 = vld [vmem:[#allocation5 + $0x1e50] sm:$0xff]
    %v1088 = vld [vmem:[#allocation5 + $0x1e58] sm:$0xff]
    %v1089 = vld [vmem:[#allocation5 + $0x1e60] sm:$0xff]
    %v1090 = vld [vmem:[#allocation5 + $0x1e68] sm:$0xff]
    %v1091 = vld [vmem:[#allocation5 + $0x1e70] sm:$0xff]
    %v1092 = vld [vmem:[#allocation5 + $0x1e78] sm:$0xff]
    %v1093 = vld [vmem:[#allocation5 + $0x1e80] sm:$0xff]
    %v1094 = vld [vmem:[#allocation5 + $0x1e88] sm:$0xff]
    %v1095 = vld [vmem:[#allocation5 + $0x1e90] sm:$0xff]
    %v1096 = vld [vmem:[#allocation5 + $0x1e98] sm:$0xff]
    %v1097 = vld [vmem:[#allocation5 + $0x1ea0] sm:$0xff]
    %v1098 = vld [vmem:[#allocation5 + $0x1ea8] sm:$0xff]
    %v1099 = vld [vmem:[#allocation5 + $0x1eb0] sm:$0xff]
    %v1100 = vld [vmem:[#allocation5 + $0x1eb8] sm:$0xff]
    %v1101 = vld [vmem:[#allocation5 + $0x1ec0] sm:$0xff]
    %v1102 = vld [vmem:[#allocation5 + $0x1ec8] sm:$0xff]
    %v1103 = vld [vmem:[#allocation5 + $0x1ed0] sm:$0xff]
    %v1104 = vld [vmem:[#allocation5 + $0x1ed8] sm:$0xff]
    %v1105 = vld [vmem:[#allocation5 + $0x1ee0] sm:$0xff]
    %v1106 = vld [vmem:[#allocation5 + $0x1ee8] sm:$0xff]
    %v1107 = vld [vmem:[#allocation5 + $0x1ef0] sm:$0xff]
    %v1108 = vld [vmem:[#allocation5 + $0x1ef8] sm:$0xff]
    %v1109 = vld [vmem:[#allocation5 + $0x1f00] sm:$0xff]
    %v1110 = vld [vmem:[#allocation5 + $0x1f08] sm:$0xff]
    %v1111 = vld [vmem:[#allocation5 + $0x1f10] sm:$0xff]
    %v1112 = vld [vmem:[#allocation5 + $0x1f18] sm:$0xff]
    %v1113 = vld [vmem:[#allocation5 + $0x1f20] sm:$0xff]
    %v1114 = vld [vmem:[#allocation5 + $0x1f28] sm:$0xff]
    %v1115 = vld [vmem:[#allocation5 + $0x1f30] sm:$0xff]
    %v1116 = vld [vmem:[#allocation5 + $0x1f38] sm:$0xff]
    %v1117 = vld [vmem:[#allocation5 + $0x1f40] sm:$0xff]
    %v1118 = vld [vmem:[#allocation5 + $0x1f48] sm:$0xff]
    %v1119 = vld [vmem:[#allocation5 + $0x1f50] sm:$0xff]
    %v1120 = vld [vmem:[#allocation5 + $0x1f58] sm:$0xff]
    %v1121 = vld [vmem:[#allocation5 + $0x1f60] sm:$0xff]
    %v1122 = vld [vmem:[#allocation5 + $0x1f68] sm:$0xff]
    %v1123 = vld [vmem:[#allocation5 + $0x1f70] sm:$0xff]
    %v1124 = vld [vmem:[#allocation5 + $0x1f78] sm:$0xff]
    %v1125 = vld [vmem:[#allocation5 + $0x1f80] sm:$0xff]
    %v1126 = vld [vmem:[#allocation5 + $0x1f88] sm:$0xff]
    %v1127 = vld [vmem:[#allocation5 + $0x1f90] sm:$0xff]
    %v1128 = vld [vmem:[#allocation5 + $0x1f98] sm:$0xff]
    %v1129 = vld [vmem:[#allocation5 + $0x1fa0] sm:$0xff]
    %v1130 = vld [vmem:[#allocation5 + $0x1fa8] sm:$0xff]
    %v1131 = vld [vmem:[#allocation5 + $0x1fb0] sm:$0xff]
    %v1132 = vld [vmem:[#allocation5 + $0x1fb8] sm:$0xff]
    %v1133 = vld [vmem:[#allocation5 + $0x1fc0] sm:$0xff]
    %v1134 = vld [vmem:[#allocation5 + $0x1fc8] sm:$0xff]
    %v1135 = vld [vmem:[#allocation5 + $0x1fd0] sm:$0xff]
    %v1136 = vld [vmem:[#allocation5 + $0x1fd8] sm:$0xff]
    %v1137 = vld [vmem:[#allocation5 + $0x1fe0] sm:$0xff]
    %v1138 = vld [vmem:[#allocation5 + $0x1fe8] sm:$0xff]
    %v1139 = vld [vmem:[#allocation5 + $0x1ff0] sm:$0xff]
    %v1140 = vld [vmem:[#allocation5 + $0x1ff8] sm:$0xff]
    %v1141 = vld [vmem:[#allocation7] ss:$4 sm:$0xf]
    %v1143 = vlaneseq
    %v1144 = vshrl.u32 %v1143, 7
    %v1145 = vsub.s32 0, %v1144
    %v1146 = vrot.slane %v1141, %v1145
    %v1147 = vlaneseq
    %v1148 = vshrl.u32 %v1147, 7
    %v1149 = vsub.s32 1, %v1148
    %v1150 = vrot.slane %v1141, %v1149
    %v1151 = vlaneseq
    %v1152 = vshrl.u32 %v1151, 7
    %v1153 = vsub.s32 2, %v1152
    %v1154 = vrot.slane %v1141, %v1153
    %v1155 = vlaneseq
    %v1156 = vshrl.u32 %v1155, 7
    %v1157 = vsub.s32 3, %v1156
    %v1158 = vrot.slane %v1141, %v1157
    %1163 = vmatprep.subr.mxu0 %v118
    %1164 = vmatpush1.msra.mxu0 %v117
    %1165 = vmatprep.subr.mxu0 %v122
    %1166 = vmatpush1.msra.mxu0 %v121
    %1167 = vmatprep.subr.mxu0 %v126
    %1168 = vmatpush1.msra.mxu0 %v125
    %1169 = vmatprep.subr.mxu0 %v130
    %1170 = vmatpush1.msra.mxu0 %v129
    %1171 = vmatprep.subr.mxu0 %v134
    %1172 = vmatpush1.msra.mxu0 %v133
    %1173 = vmatprep.subr.mxu0 %v138
    %1174 = vmatpush1.msra.mxu0 %v137
    %1175 = vmatprep.subr.mxu0 %v142
    %1176 = vmatpush1.msra.mxu0 %v141
    %1177 = vmatprep.subr.mxu0 %v146
    %1178 = vmatpush1.msra.mxu0 %v145
    %1179 = vmatprep.subr.mxu0 %v150
    %1180 = vmatpush1.msra.mxu0 %v149
    %1181 = vmatprep.subr.mxu0 %v154
    %1182 = vmatpush1.msra.mxu0 %v153
    %1183 = vmatprep.subr.mxu0 %v158
    %1184 = vmatpush1.msra.mxu0 %v157
    %1185 = vmatprep.subr.mxu0 %v162
    %1186 = vmatpush1.msra.mxu0 %v161
    %1187 = vmatprep.subr.mxu0 %v166
    %1188 = vmatpush1.msra.mxu0 %v165
    %1189 = vmatprep.subr.mxu0 %v170
    %1190 = vmatpush1.msra.mxu0 %v169
    %1191 = vmatprep.subr.mxu0 %v174
    %1192 = vmatpush1.msra.mxu0 %v173
    %1193 = vmatprep.subr.mxu0 %v178
    %1194 = vmatpush1.msra.mxu0 %v177
    %1195 = vmatprep.subr.mxu0 %v182
    %1196 = vmatpush1.msra.mxu0 %v181
    %1197 = vmatprep.subr.mxu0 %v186
    %1198 = vmatpush1.msra.mxu0 %v185
    %1199 = vmatprep.subr.mxu0 %v190
    %1200 = vmatpush1.msra.mxu0 %v189
    %1201 = vmatprep.subr.mxu0 %v194
    %1202 = vmatpush1.msra.mxu0 %v193
    %1203 = vmatprep.subr.mxu0 %v198
    %1204 = vmatpush1.msra.mxu0 %v197
    %1205 = vmatprep.subr.mxu0 %v202
    %1206 = vmatpush1.msra.mxu0 %v201
    %1207 = vmatprep.subr.mxu0 %v206
    %1208 = vmatpush1.msra.mxu0 %v205
    %1209 = vmatprep.subr.mxu0 %v210
    %1210 = vmatpush1.msra.mxu0 %v209
    %1211 = vmatprep.subr.mxu0 %v214
    %1212 = vmatpush1.msra.mxu0 %v213
    %1213 = vmatprep.subr.mxu0 %v218
    %1214 = vmatpush1.msra.mxu0 %v217
    %1215 = vmatprep.subr.mxu0 %v222
    %1216 = vmatpush1.msra.mxu0 %v221
    %1217 = vmatprep.subr.mxu0 %v226
    %1218 = vmatpush1.msra.mxu0 %v225
    %1219 = vmatprep.subr.mxu0 %v230
    %1220 = vmatpush1.msra.mxu0 %v229
    %1221 = vmatprep.subr.mxu0 %v234
    %1222 = vmatpush1.msra.mxu0 %v233
    %1223 = vmatprep.subr.mxu0 %v238
    %1224 = vmatpush1.msra.mxu0 %v237
    %1225 = vmatprep.subr.mxu0 %v242
    %1226 = vmatpush1.msra.mxu0 %v241
    %1227 = vmatprep.mubr.f32.mxu0 %v86
    %1228 = vmatmul.mubr.f32.gmra.mrb[0].mxu0 %v85
    %v1229 = vpop.f32.mrb[0].mxu0
    %v1230 = vadd.f32 %v1146, %v1229
    %v1231 = vpop.f32.mrb[0].mxu0
    %v1232 = vadd.f32 %v1150, %v1231
    %1233 = vmatprep.mubr.f32.mxu0 %v102
    %1234 = vmatmul.mubr.f32.gmra.mrb[0].mxu0 %v101
    %v1235 = vpop.f32.mrb[0].mxu0
    %v1236 = vadd.f32 %v1146, %v1235
    %v1237 = vpop.f32.mrb[0].mxu0
    %v1238 = vadd.f32 %v1150, %v1237
    %1239 = vdwg.mxu0
    %1240 = vmatprep.subr.mxu0 %v246
    %1241 = vmatpush1.msra.mxu0 %v245
    %1242 = vmatprep.subr.mxu0 %v250
    %1243 = vmatpush1.msra.mxu0 %v249
    %1244 = vmatprep.subr.mxu0 %v254
    %1245 = vmatpush1.msra.mxu0 %v253
    %1246 = vmatprep.subr.mxu0 %v258
    %1247 = vmatpush1.msra.mxu0 %v257
    %1248 = vmatprep.subr.mxu0 %v262
    %1249 = vmatpush1.msra.mxu0 %v261
    %1250 = vmatprep.subr.mxu0 %v266
    %1251 = vmatpush1.msra.mxu0 %v265
    %1252 = vmatprep.subr.mxu0 %v270
    %1253 = vmatpush1.msra.mxu0 %v269
    %1254 = vmatprep.subr.mxu0 %v274
    %1255 = vmatpush1.msra.mxu0 %v273
    %1256 = vmatprep.subr.mxu0 %v278
    %1257 = vmatpush1.msra.mxu0 %v277
    %1258 = vmatprep.subr.mxu0 %v282
    %1259 = vmatpush1.msra.mxu0 %v281
    %1260 = vmatprep.subr.mxu0 %v286
    %1261 = vmatpush1.msra.mxu0 %v285
    %1262 = vmatprep.subr.mxu0 %v290
    %1263 = vmatpush1.msra.mxu0 %v289
    %1264 = vmatprep.subr.mxu0 %v294
    %1265 = vmatpush1.msra.mxu0 %v293
    %1266 = vmatprep.subr.mxu0 %v298
    %1267 = vmatpush1.msra.mxu0 %v297
    %1268 = vmatprep.subr.mxu0 %v302
    %1269 = vmatpush1.msra.mxu0 %v301
    %1270 = vmatprep.subr.mxu0 %v306
    %1271 = vmatpush1.msra.mxu0 %v305
    %1272 = vmatprep.subr.mxu0 %v310
    %1273 = vmatpush1.msra.mxu0 %v309
    %1274 = vmatprep.subr.mxu0 %v314
    %1275 = vmatpush1.msra.mxu0 %v313
    %1276 = vmatprep.subr.mxu0 %v318
    %1277 = vmatpush1.msra.mxu0 %v317
    %1278 = vmatprep.subr.mxu0 %v322
    %1279 = vmatpush1.msra.mxu0 %v321
    %1280 = vmatprep.subr.mxu0 %v326
    %1281 = vmatpush1.msra.mxu0 %v325
    %1282 = vmatprep.subr.mxu0 %v330
    %1283 = vmatpush1.msra.mxu0 %v329
    %1284 = vmatprep.subr.mxu0 %v334
    %1285 = vmatpush1.msra.mxu0 %v333
    %1286 = vmatprep.subr.mxu0 %v338
    %1287 = vmatpush1.msra.mxu0 %v337
    %1288 = vmatprep.subr.mxu0 %v342
    %1289 = vmatpush1.msra.mxu0 %v341
    %1290 = vmatprep.subr.mxu0 %v346
    %1291 = vmatpush1.msra.mxu0 %v345
    %1292 = vmatprep.subr.mxu0 %v350
    %1293 = vmatpush1.msra.mxu0 %v349
    %1294 = vmatprep.subr.mxu0 %v354
    %1295 = vmatpush1.msra.mxu0 %v353
    %1296 = vmatprep.subr.mxu0 %v358
    %1297 = vmatpush1.msra.mxu0 %v357
    %1298 = vmatprep.subr.mxu0 %v362
    %1299 = vmatpush1.msra.mxu0 %v361
    %1300 = vmatprep.subr.mxu0 %v366
    %1301 = vmatpush1.msra.mxu0 %v365
    %1302 = vmatprep.subr.mxu0 %v370
    %1303 = vmatpush1.msra.mxu0 %v369
    %1304 = vmatprep.mubr.f32.mxu0 %v88
    %1305 = vmatmul.mubr.f32.gmra.mrb[0].mxu0 %v87
    %v1306 = vpop.f32.mrb[0].mxu0
    %v1307 = vadd.f32 %v1230, %v1306
    %v1308 = vpop.f32.mrb[0].mxu0
    %v1309 = vadd.f32 %v1232, %v1308
    %1310 = vmatprep.mubr.f32.mxu0 %v104
    %1311 = vmatmul.mubr.f32.gmra.mrb[0].mxu0 %v103
    %v1312 = vpop.f32.mrb[0].mxu0
    %v1313 = vadd.f32 %v1236, %v1312
    %v1314 = vpop.f32.mrb[0].mxu0
    %v1315 = vadd.f32 %v1238, %v1314
    %1316 = vdwg.mxu0
    %1317 = vmatprep.subr.mxu0 %v374
    %1318 = vmatpush1.msra.mxu0 %v373
    %1319 = vmatprep.subr.mxu0 %v378
    %1320 = vmatpush1.msra.mxu0 %v377
    %1321 = vmatprep.subr.mxu0 %v382
    %1322 = vmatpush1.msra.mxu0 %v381
    %1323 = vmatprep.subr.mxu0 %v386
    %1324 = vmatpush1.msra.mxu0 %v385
    %1325 = vmatprep.subr.mxu0 %v390
    %1326 = vmatpush1.msra.mxu0 %v389
    %1327 = vmatprep.subr.mxu0 %v394
    %1328 = vmatpush1.msra.mxu0 %v393
    %1329 = vmatprep.subr.mxu0 %v398
    %1330 = vmatpush1.msra.mxu0 %v397
    %1331 = vmatprep.subr.mxu0 %v402
    %1332 = vmatpush1.msra.mxu0 %v401
    %1333 = vmatprep.subr.mxu0 %v406
    %1334 = vmatpush1.msra.mxu0 %v405
    %1335 = vmatprep.subr.mxu0 %v410
    %1336 = vmatpush1.msra.mxu0 %v409
    %1337 = vmatprep.subr.mxu0 %v414
    %1338 = vmatpush1.msra.mxu0 %v413
    %1339 = vmatprep.subr.mxu0 %v418
    %1340 = vmatpush1.msra.mxu0 %v417
    %1341 = vmatprep.subr.mxu0 %v422
    %1342 = vmatpush1.msra.mxu0 %v421
    %1343 = vmatprep.subr.mxu0 %v426
    %1344 = vmatpush1.msra.mxu0 %v425
    %1345 = vmatprep.subr.mxu0 %v430
    %1346 = vmatpush1.msra.mxu0 %v429
    %1347 = vmatprep.subr.mxu0 %v434
    %1348 = vmatpush1.msra.mxu0 %v433
    %1349 = vmatprep.subr.mxu0 %v438
    %1350 = vmatpush1.msra.mxu0 %v437
    %1351 = vmatprep.subr.mxu0 %v442
    %1352 = vmatpush1.msra.mxu0 %v441
    %1353 = vmatprep.subr.mxu0 %v446
    %1354 = vmatpush1.msra.mxu0 %v445
    %1355 = vmatprep.subr.mxu0 %v450
    %1356 = vmatpush1.msra.mxu0 %v449
    %1357 = vmatprep.subr.mxu0 %v454
    %1358 = vmatpush1.msra.mxu0 %v453
    %1359 = vmatprep.subr.mxu0 %v458
    %1360 = vmatpush1.msra.mxu0 %v457
    %1361 = vmatprep.subr.mxu0 %v462
    %1362 = vmatpush1.msra.mxu0 %v461
    %1363 = vmatprep.subr.mxu0 %v466
    %1364 = vmatpush1.msra.mxu0 %v465
    %1365 = vmatprep.subr.mxu0 %v470
    %1366 = vmatpush1.msra.mxu0 %v469
    %1367 = vmatprep.subr.mxu0 %v474
    %1368 = vmatpush1.msra.mxu0 %v473
    %1369 = vmatprep.subr.mxu0 %v478
    %1370 = vmatpush1.msra.mxu0 %v477
    %1371 = vmatprep.subr.mxu0 %v482
    %1372 = vmatpush1.msra.mxu0 %v481
    %1373 = vmatprep.subr.mxu0 %v486
    %1374 = vmatpush1.msra.mxu0 %v485
    %1375 = vmatprep.subr.mxu0 %v490
    %1376 = vmatpush1.msra.mxu0 %v489
    %1377 = vmatprep.subr.mxu0 %v494
    %1378 = vmatpush1.msra.mxu0 %v493
    %1379 = vmatprep.subr.mxu0 %v498
    %1380 = vmatpush1.msra.mxu0 %v497
    %1381 = vmatprep.mubr.f32.mxu0 %v90
    %1382 = vmatmul.mubr.f32.gmra.mrb[0].mxu0 %v89
    %v1383 = vpop.f32.mrb[0].mxu0
    %v1384 = vadd.f32 %v1307, %v1383
    %v1385 = vpop.f32.mrb[0].mxu0
    %v1386 = vadd.f32 %v1309, %v1385
    %1387 = vmatprep.mubr.f32.mxu0 %v106
    %1388 = vmatmul.mubr.f32.gmra.mrb[0].mxu0 %v105
    %v1389 = vpop.f32.mrb[0].mxu0
    %v1390 = vadd.f32 %v1313, %v1389
    %v1391 = vpop.f32.mrb[0].mxu0
    %v1392 = vadd.f32 %v1315, %v1391
    %1393 = vdwg.mxu0
    %1394 = vmatprep.subr.mxu0 %v502
    %1395 = vmatpush1.msra.mxu0 %v501
    %1396 = vmatprep.subr.mxu0 %v506
    %1397 = vmatpush1.msra.mxu0 %v505
    %1398 = vmatprep.subr.mxu0 %v510
    %1399 = vmatpush1.msra.mxu0 %v509
    %1400 = vmatprep.subr.mxu0 %v514
    %1401 = vmatpush1.msra.mxu0 %v513
    %1402 = vmatprep.subr.mxu0 %v518
    %1403 = vmatpush1.msra.mxu0 %v517
    %1404 = vmatprep.subr.mxu0 %v522
    %1405 = vmatpush1.msra.mxu0 %v521
    %1406 = vmatprep.subr.mxu0 %v526
    %1407 = vmatpush1.msra.mxu0 %v525
    %1408 = vmatprep.subr.mxu0 %v530
    %1409 = vmatpush1.msra.mxu0 %v529
    %1410 = vmatprep.subr.mxu0 %v534
    %1411 = vmatpush1.msra.mxu0 %v533
    %1412 = vmatprep.subr.mxu0 %v538
    %1413 = vmatpush1.msra.mxu0 %v537
    %1414 = vmatprep.subr.mxu0 %v542
    %1415 = vmatpush1.msra.mxu0 %v541
    %1416 = vmatprep.subr.mxu0 %v546
    %1417 = vmatpush1.msra.mxu0 %v545
    %1418 = vmatprep.subr.mxu0 %v550
    %1419 = vmatpush1.msra.mxu0 %v549
    %1420 = vmatprep.subr.mxu0 %v554
    %1421 = vmatpush1.msra.mxu0 %v553
    %1422 = vmatprep.subr.mxu0 %v558
    %1423 = vmatpush1.msra.mxu0 %v557
    %1424 = vmatprep.subr.mxu0 %v562
    %1425 = vmatpush1.msra.mxu0 %v561
    %1426 = vmatprep.subr.mxu0 %v566
    %1427 = vmatpush1.msra.mxu0 %v565
    %1428 = vmatprep.subr.mxu0 %v570
    %1429 = vmatpush1.msra.mxu0 %v569
    %1430 = vmatprep.subr.mxu0 %v574
    %1431 = vmatpush1.msra.mxu0 %v573
    %1432 = vmatprep.subr.mxu0 %v578
    %1433 = vmatpush1.msra.mxu0 %v577
    %1434 = vmatprep.subr.mxu0 %v582
    %1435 = vmatpush1.msra.mxu0 %v581
    %1436 = vmatprep.subr.mxu0 %v586
    %1437 = vmatpush1.msra.mxu0 %v585
    %1438 = vmatprep.subr.mxu0 %v590
    %1439 = vmatpush1.msra.mxu0 %v589
    %1440 = vmatprep.subr.mxu0 %v594
    %1441 = vmatpush1.msra.mxu0 %v593
    %1442 = vmatprep.subr.mxu0 %v598
    %1443 = vmatpush1.msra.mxu0 %v597
    %1444 = vmatprep.subr.mxu0 %v602
    %1445 = vmatpush1.msra.mxu0 %v601
    %1446 = vmatprep.subr.mxu0 %v606
    %1447 = vmatpush1.msra.mxu0 %v605
    %1448 = vmatprep.subr.mxu0 %v610
    %1449 = vmatpush1.msra.mxu0 %v609
    %1450 = vmatprep.subr.mxu0 %v614
    %1451 = vmatpush1.msra.mxu0 %v613
    %1452 = vmatprep.subr.mxu0 %v618
    %1453 = vmatpush1.msra.mxu0 %v617
    %1454 = vmatprep.subr.mxu0 %v622
    %1455 = vmatpush1.msra.mxu0 %v621
    %1456 = vmatprep.subr.mxu0 %v626
    %1457 = vmatpush1.msra.mxu0 %v625
    %1458 = vmatprep.mubr.f32.mxu0 %v92
    %1459 = vmatmul.mubr.f32.gmra.mrb[0].mxu0 %v91
    %v1460 = vpop.f32.mrb[0].mxu0
    %v1461 = vadd.f32 %v1384, %v1460
    %v1462 = vpop.f32.mrb[0].mxu0
    %v1463 = vadd.f32 %v1386, %v1462
    %1464 = vmatprep.mubr.f32.mxu0 %v108
    %1465 = vmatmul.mubr.f32.gmra.mrb[0].mxu0 %v107
    %v1466 = vpop.f32.mrb[0].mxu0
    %v1467 = vadd.f32 %v1390, %v1466
    %v1468 = vpop.f32.mrb[0].mxu0
    %v1469 = vadd.f32 %v1392, %v1468
    %1470 = vdwg.mxu0
    %1471 = vmatprep.subr.mxu0 %v630
    %1472 = vmatpush1.msra.mxu0 %v629
    %1473 = vmatprep.subr.mxu0 %v634
    %1474 = vmatpush1.msra.mxu0 %v633
    %1475 = vmatprep.subr.mxu0 %v638
    %1476 = vmatpush1.msra.mxu0 %v637
    %1477 = vmatprep.subr.mxu0 %v642
    %1478 = vmatpush1.msra.mxu0 %v641
    %1479 = vmatprep.subr.mxu0 %v646
    %1480 = vmatpush1.msra.mxu0 %v645
    %1481 = vmatprep.subr.mxu0 %v650
    %1482 = vmatpush1.msra.mxu0 %v649
    %1483 = vmatprep.subr.mxu0 %v654
    %1484 = vmatpush1.msra.mxu0 %v653
    %1485 = vmatprep.subr.mxu0 %v658
    %1486 = vmatpush1.msra.mxu0 %v657
    %1487 = vmatprep.subr.mxu0 %v662
    %1488 = vmatpush1.msra.mxu0 %v661
    %1489 = vmatprep.subr.mxu0 %v666
    %1490 = vmatpush1.msra.mxu0 %v665
    %1491 = vmatprep.subr.mxu0 %v670
    %1492 = vmatpush1.msra.mxu0 %v669
    %1493 = vmatprep.subr.mxu0 %v674
    %1494 = vmatpush1.msra.mxu0 %v673
    %1495 = vmatprep.subr.mxu0 %v678
    %1496 = vmatpush1.msra.mxu0 %v677
    %1497 = vmatprep.subr.mxu0 %v682
    %1498 = vmatpush1.msra.mxu0 %v681
    %1499 = vmatprep.subr.mxu0 %v686
    %1500 = vmatpush1.msra.mxu0 %v685
    %1501 = vmatprep.subr.mxu0 %v690
    %1502 = vmatpush1.msra.mxu0 %v689
    %1503 = vmatprep.subr.mxu0 %v694
    %1504 = vmatpush1.msra.mxu0 %v693
    %1505 = vmatprep.subr.mxu0 %v698
    %1506 = vmatpush1.msra.mxu0 %v697
    %1507 = vmatprep.subr.mxu0 %v702
    %1508 = vmatpush1.msra.mxu0 %v701
    %1509 = vmatprep.subr.mxu0 %v706
    %1510 = vmatpush1.msra.mxu0 %v705
    %1511 = vmatprep.subr.mxu0 %v710
    %1512 = vmatpush1.msra.mxu0 %v709
    %1513 = vmatprep.subr.mxu0 %v714
    %1514 = vmatpush1.msra.mxu0 %v713
    %1515 = vmatprep.subr.mxu0 %v718
    %1516 = vmatpush1.msra.mxu0 %v717
    %1517 = vmatprep.subr.mxu0 %v722
    %1518 = vmatpush1.msra.mxu0 %v721
    %1519 = vmatprep.subr.mxu0 %v726
    %1520 = vmatpush1.msra.mxu0 %v725
    %1521 = vmatprep.subr.mxu0 %v730
    %1522 = vmatpush1.msra.mxu0 %v729
    %1523 = vmatprep.subr.mxu0 %v734
    %1524 = vmatpush1.msra.mxu0 %v733
    %1525 = vmatprep.subr.mxu0 %v738
    %1526 = vmatpush1.msra.mxu0 %v737
    %1527 = vmatprep.subr.mxu0 %v742
    %1528 = vmatpush1.msra.mxu0 %v741
    %1529 = vmatprep.subr.mxu0 %v746
    %1530 = vmatpush1.msra.mxu0 %v745
    %1531 = vmatprep.subr.mxu0 %v750
    %1532 = vmatpush1.msra.mxu0 %v749
    %1533 = vmatprep.subr.mxu0 %v754
    %1534 = vmatpush1.msra.mxu0 %v753
    %1535 = vmatprep.mubr.f32.mxu0 %v94
    %1536 = vmatmul.mubr.f32.gmra.mrb[0].mxu0 %v93
    %v1537 = vpop.f32.mrb[0].mxu0
    %v1538 = vadd.f32 %v1461, %v1537
    %v1539 = vpop.f32.mrb[0].mxu0
    %v1540 = vadd.f32 %v1463, %v1539
    %1541 = vmatprep.mubr.f32.mxu0 %v110
    %1542 = vmatmul.mubr.f32.gmra.mrb[0].mxu0 %v109
    %v1543 = vpop.f32.mrb[0].mxu0
    %v1544 = vadd.f32 %v1467, %v1543
    %v1545 = vpop.f32.mrb[0].mxu0
    %v1546 = vadd.f32 %v1469, %v1545
    %1547 = vdwg.mxu0
    %1548 = vmatprep.subr.mxu0 %v758
    %1549 = vmatpush1.msra.mxu0 %v757
    %1550 = vmatprep.subr.mxu0 %v762
    %1551 = vmatpush1.msra.mxu0 %v761
    %1552 = vmatprep.subr.mxu0 %v766
    %1553 = vmatpush1.msra.mxu0 %v765
    %1554 = vmatprep.subr.mxu0 %v770
    %1555 = vmatpush1.msra.mxu0 %v769
    %1556 = vmatprep.subr.mxu0 %v774
    %1557 = vmatpush1.msra.mxu0 %v773
    %1558 = vmatprep.subr.mxu0 %v778
    %1559 = vmatpush1.msra.mxu0 %v777
    %1560 = vmatprep.subr.mxu0 %v782
    %1561 = vmatpush1.msra.mxu0 %v781
    %1562 = vmatprep.subr.mxu0 %v786
    %1563 = vmatpush1.msra.mxu0 %v785
    %1564 = vmatprep.subr.mxu0 %v790
    %1565 = vmatpush1.msra.mxu0 %v789
    %1566 = vmatprep.subr.mxu0 %v794
    %1567 = vmatpush1.msra.mxu0 %v793
    %1568 = vmatprep.subr.mxu0 %v798
    %1569 = vmatpush1.msra.mxu0 %v797
    %1570 = vmatprep.subr.mxu0 %v802
    %1571 = vmatpush1.msra.mxu0 %v801
    %1572 = vmatprep.subr.mxu0 %v806
    %1573 = vmatpush1.msra.mxu0 %v805
    %1574 = vmatprep.subr.mxu0 %v810
    %1575 = vmatpush1.msra.mxu0 %v809
    %1576 = vmatprep.subr.mxu0 %v814
    %1577 = vmatpush1.msra.mxu0 %v813
    %1578 = vmatprep.subr.mxu0 %v818
    %1579 = vmatpush1.msra.mxu0 %v817
    %1580 = vmatprep.subr.mxu0 %v822
    %1581 = vmatpush1.msra.mxu0 %v821
    %1582 = vmatprep.subr.mxu0 %v826
    %1583 = vmatpush1.msra.mxu0 %v825
    %1584 = vmatprep.subr.mxu0 %v830
    %1585 = vmatpush1.msra.mxu0 %v829
    %1586 = vmatprep.subr.mxu0 %v834
    %1587 = vmatpush1.msra.mxu0 %v833
    %1588 = vmatprep.subr.mxu0 %v838
    %1589 = vmatpush1.msra.mxu0 %v837
    %1590 = vmatprep.subr.mxu0 %v842
    %1591 = vmatpush1.msra.mxu0 %v841
    %1592 = vmatprep.subr.mxu0 %v846
    %1593 = vmatpush1.msra.mxu0 %v845
    %1594 = vmatprep.subr.mxu0 %v850
    %1595 = vmatpush1.msra.mxu0 %v849
    %1596 = vmatprep.subr.mxu0 %v854
    %1597 = vmatpush1.msra.mxu0 %v853
    %1598 = vmatprep.subr.mxu0 %v858
    %1599 = vmatpush1.msra.mxu0 %v857
    %1600 = vmatprep.subr.mxu0 %v862
    %1601 = vmatpush1.msra.mxu0 %v861
    %1602 = vmatprep.subr.mxu0 %v866
    %1603 = vmatpush1.msra.mxu0 %v865
    %1604 = vmatprep.subr.mxu0 %v870
    %1605 = vmatpush1.msra.mxu0 %v869
    %1606 = vmatprep.subr.mxu0 %v874
    %1607 = vmatpush1.msra.mxu0 %v873
    %1608 = vmatprep.subr.mxu0 %v878
    %1609 = vmatpush1.msra.mxu0 %v877
    %1610 = vmatprep.subr.mxu0 %v882
    %1611 = vmatpush1.msra.mxu0 %v881
    %1612 = vmatprep.mubr.f32.mxu0 %v96
    %1613 = vmatmul.mubr.f32.gmra.mrb[0].mxu0 %v95
    %v1614 = vpop.f32.mrb[0].mxu0
    %v1615 = vadd.f32 %v1538, %v1614
    %v1616 = vpop.f32.mrb[0].mxu0
    %v1617 = vadd.f32 %v1540, %v1616
    %1618 = vmatprep.mubr.f32.mxu0 %v112
    %1619 = vmatmul.mubr.f32.gmra.mrb[0].mxu0 %v111
    %v1620 = vpop.f32.mrb[0].mxu0
    %v1621 = vadd.f32 %v1544, %v1620
    %v1622 = vpop.f32.mrb[0].mxu0
    %v1623 = vadd.f32 %v1546, %v1622
    %1624 = vdwg.mxu0
    %1625 = vmatprep.subr.mxu0 %v886
    %1626 = vmatpush1.msra.mxu0 %v885
    %1627 = vmatprep.subr.mxu0 %v890
    %1628 = vmatpush1.msra.mxu0 %v889
    %1629 = vmatprep.subr.mxu0 %v894
    %1630 = vmatpush1.msra.mxu0 %v893
    %1631 = vmatprep.subr.mxu0 %v898
    %1632 = vmatpush1.msra.mxu0 %v897
    %1633 = vmatprep.subr.mxu0 %v902
    %1634 = vmatpush1.msra.mxu0 %v901
    %1635 = vmatprep.subr.mxu0 %v906
    %1636 = vmatpush1.msra.mxu0 %v905
    %1637 = vmatprep.subr.mxu0 %v910
    %1638 = vmatpush1.msra.mxu0 %v909
    %1639 = vmatprep.subr.mxu0 %v914
    %1640 = vmatpush1.msra.mxu0 %v913
    %1641 = vmatprep.subr.mxu0 %v918
    %1642 = vmatpush1.msra.mxu0 %v917
    %1643 = vmatprep.subr.mxu0 %v922
    %1644 = vmatpush1.msra.mxu0 %v921
    %1645 = vmatprep.subr.mxu0 %v926
    %1646 = vmatpush1.msra.mxu0 %v925
    %1647 = vmatprep.subr.mxu0 %v930
    %1648 = vmatpush1.msra.mxu0 %v929
    %1649 = vmatprep.subr.mxu0 %v934
    %1650 = vmatpush1.msra.mxu0 %v933
    %1651 = vmatprep.subr.mxu0 %v938
    %1652 = vmatpush1.msra.mxu0 %v937
    %1653 = vmatprep.subr.mxu0 %v942
    %1654 = vmatpush1.msra.mxu0 %v941
    %1655 = vmatprep.subr.mxu0 %v946
    %1656 = vmatpush1.msra.mxu0 %v945
    %1657 = vmatprep.subr.mxu0 %v950
    %1658 = vmatpush1.msra.mxu0 %v949
    %1659 = vmatprep.subr.mxu0 %v954
    %1660 = vmatpush1.msra.mxu0 %v953
    %1661 = vmatprep.subr.mxu0 %v958
    %1662 = vmatpush1.msra.mxu0 %v957
    %1663 = vmatprep.subr.mxu0 %v962
    %1664 = vmatpush1.msra.mxu0 %v961
    %1665 = vmatprep.subr.mxu0 %v966
    %1666 = vmatpush1.msra.mxu0 %v965
    %1667 = vmatprep.subr.mxu0 %v970
    %1668 = vmatpush1.msra.mxu0 %v969
    %1669 = vmatprep.subr.mxu0 %v974
    %1670 = vmatpush1.msra.mxu0 %v973
    %1671 = vmatprep.subr.mxu0 %v978
    %1672 = vmatpush1.msra.mxu0 %v977
    %1673 = vmatprep.subr.mxu0 %v982
    %1674 = vmatpush1.msra.mxu0 %v981
    %1675 = vmatprep.subr.mxu0 %v986
    %1676 = vmatpush1.msra.mxu0 %v985
    %1677 = vmatprep.subr.mxu0 %v990
    %1678 = vmatpush1.msra.mxu0 %v989
    %1679 = vmatprep.subr.mxu0 %v994
    %1680 = vmatpush1.msra.mxu0 %v993
    %1681 = vmatprep.subr.mxu0 %v998
    %1682 = vmatpush1.msra.mxu0 %v997
    %1683 = vmatprep.subr.mxu0 %v1002
    %1684 = vmatpush1.msra.mxu0 %v1001
    %1685 = vmatprep.subr.mxu0 %v1006
    %1686 = vmatpush1.msra.mxu0 %v1005
    %1687 = vmatprep.subr.mxu0 %v1010
    %1688 = vmatpush1.msra.mxu0 %v1009
    %1689 = vmatprep.mubr.f32.mxu0 %v98
    %1690 = vmatmul.mubr.f32.gmra.mrb[0].mxu0 %v97
    %v1691 = vpop.f32.mrb[0].mxu0
    %v1692 = vadd.f32 %v1615, %v1691
    %v1693 = vpop.f32.mrb[0].mxu0
    %v1694 = vadd.f32 %v1617, %v1693
    %1695 = vmatprep.mubr.f32.mxu0 %v114
    %1696 = vmatmul.mubr.f32.gmra.mrb[0].mxu0 %v113
    %v1697 = vpop.f32.mrb[0].mxu0
    %v1698 = vadd.f32 %v1621, %v1697
    %v1699 = vpop.f32.mrb[0].mxu0
    %v1700 = vadd.f32 %v1623, %v1699
    %1701 = vdwg.mxu0
    %1702 = vmatprep.subr.mxu0 %v1014
    %1703 = vmatpush1.msra.mxu0 %v1013
    %1704 = vmatprep.subr.mxu0 %v1018
    %1705 = vmatpush1.msra.mxu0 %v1017
    %1706 = vmatprep.subr.mxu0 %v1022
    %1707 = vmatpush1.msra.mxu0 %v1021
    %1708 = vmatprep.subr.mxu0 %v1026
    %1709 = vmatpush1.msra.mxu0 %v1025
    %1710 = vmatprep.subr.mxu0 %v1030
    %1711 = vmatpush1.msra.mxu0 %v1029
    %1712 = vmatprep.subr.mxu0 %v1034
    %1713 = vmatpush1.msra.mxu0 %v1033
    %1714 = vmatprep.subr.mxu0 %v1038
    %1715 = vmatpush1.msra.mxu0 %v1037
    %1716 = vmatprep.subr.mxu0 %v1042
    %1717 = vmatpush1.msra.mxu0 %v1041
    %1718 = vmatprep.subr.mxu0 %v1046
    %1719 = vmatpush1.msra.mxu0 %v1045
    %1720 = vmatprep.subr.mxu0 %v1050
    %1721 = vmatpush1.msra.mxu0 %v1049
    %1722 = vmatprep.subr.mxu0 %v1054
    %1723 = vmatpush1.msra.mxu0 %v1053
    %1724 = vmatprep.subr.mxu0 %v1058
    %1725 = vmatpush1.msra.mxu0 %v1057
    %1726 = vmatprep.subr.mxu0 %v1062
    %1727 = vmatpush1.msra.mxu0 %v1061
    %1728 = vmatprep.subr.mxu0 %v1066
    %1729 = vmatpush1.msra.mxu0 %v1065
    %1730 = vmatprep.subr.mxu0 %v1070
    %1731 = vmatpush1.msra.mxu0 %v1069
    %1732 = vmatprep.subr.mxu0 %v1074
    %1733 = vmatpush1.msra.mxu0 %v1073
    %1734 = vmatprep.subr.mxu0 %v1078
    %1735 = vmatpush1.msra.mxu0 %v1077
    %1736 = vmatprep.subr.mxu0 %v1082
    %1737 = vmatpush1.msra.mxu0 %v1081
    %1738 = vmatprep.subr.mxu0 %v1086
    %1739 = vmatpush1.msra.mxu0 %v1085
    %1740 = vmatprep.subr.mxu0 %v1090
    %1741 = vmatpush1.msra.mxu0 %v1089
    %1742 = vmatprep.subr.mxu0 %v1094
    %1743 = vmatpush1.msra.mxu0 %v1093
    %1744 = vmatprep.subr.mxu0 %v1098
    %1745 = vmatpush1.msra.mxu0 %v1097
    %1746 = vmatprep.subr.mxu0 %v1102
    %1747 = vmatpush1.msra.mxu0 %v1101
    %1748 = vmatprep.subr.mxu0 %v1106
    %1749 = vmatpush1.msra.mxu0 %v1105
    %1750 = vmatprep.subr.mxu0 %v1110
    %1751 = vmatpush1.msra.mxu0 %v1109
    %1752 = vmatprep.subr.mxu0 %v1114
    %1753 = vmatpush1.msra.mxu0 %v1113
    %1754 = vmatprep.subr.mxu0 %v1118
    %1755 = vmatpush1.msra.mxu0 %v1117
    %1756 = vmatprep.subr.mxu0 %v1122
    %1757 = vmatpush1.msra.mxu0 %v1121
    %1758 = vmatprep.subr.mxu0 %v1126
    %1759 = vmatpush1.msra.mxu0 %v1125
    %1760 = vmatprep.subr.mxu0 %v1130
    %1761 = vmatpush1.msra.mxu0 %v1129
    %1762 = vmatprep.subr.mxu0 %v1134
    %1763 = vmatpush1.msra.mxu0 %v1133
    %1764 = vmatprep.subr.mxu0 %v1138
    %1765 = vmatpush1.msra.mxu0 %v1137
    %1766 = vmatprep.mubr.f32.mxu0 %v100
    %1767 = vmatmul.mubr.f32.gmra.mrb[0].mxu0 %v99
    %v1768 = vpop.f32.mrb[0].mxu0
    %v1769 = vadd.f32 %v1692, %v1768
    %v1770 = vpop.f32.mrb[0].mxu0
    %v1771 = vadd.f32 %v1694, %v1770
    %1772 = vmatprep.mubr.f32.mxu0 %v116
    %1773 = vmatmul.mubr.f32.gmra.mrb[0].mxu0 %v115
    %v1774 = vpop.f32.mrb[0].mxu0
    %v1775 = vadd.f32 %v1698, %v1774
    %v1776 = vpop.f32.mrb[0].mxu0
    %v1777 = vadd.f32 %v1700, %v1776
    %1778 = vdwg.mxu0
    %1779 = vmatprep.subr.mxu0 %v120
    %1780 = vmatpush1.msra.mxu0 %v119
    %1781 = vmatprep.subr.mxu0 %v124
    %1782 = vmatpush1.msra.mxu0 %v123
    %1783 = vmatprep.subr.mxu0 %v128
    %1784 = vmatpush1.msra.mxu0 %v127
    %1785 = vmatprep.subr.mxu0 %v132
    %1786 = vmatpush1.msra.mxu0 %v131
    %1787 = vmatprep.subr.mxu0 %v136
    %1788 = vmatpush1.msra.mxu0 %v135
    %1789 = vmatprep.subr.mxu0 %v140
    %1790 = vmatpush1.msra.mxu0 %v139
    %1791 = vmatprep.subr.mxu0 %v144
    %1792 = vmatpush1.msra.mxu0 %v143
    %1793 = vmatprep.subr.mxu0 %v148
    %1794 = vmatpush1.msra.mxu0 %v147
    %1795 = vmatprep.subr.mxu0 %v152
    %1796 = vmatpush1.msra.mxu0 %v151
    %1797 = vmatprep.subr.mxu0 %v156
    %1798 = vmatpush1.msra.mxu0 %v155
    %1799 = vmatprep.subr.mxu0 %v160
    %1800 = vmatpush1.msra.mxu0 %v159
    %1801 = vmatprep.subr.mxu0 %v164
    %1802 = vmatpush1.msra.mxu0 %v163
    %1803 = vmatprep.subr.mxu0 %v168
    %1804 = vmatpush1.msra.mxu0 %v167
    %1805 = vmatprep.subr.mxu0 %v172
    %1806 = vmatpush1.msra.mxu0 %v171
    %1807 = vmatprep.subr.mxu0 %v176
    %1808 = vmatpush1.msra.mxu0 %v175
    %1809 = vmatprep.subr.mxu0 %v180
    %1810 = vmatpush1.msra.mxu0 %v179
    %1811 = vmatprep.subr.mxu0 %v184
    %1812 = vmatpush1.msra.mxu0 %v183
    %1813 = vmatprep.subr.mxu0 %v188
    %1814 = vmatpush1.msra.mxu0 %v187
    %1815 = vmatprep.subr.mxu0 %v192
    %1816 = vmatpush1.msra.mxu0 %v191
    %1817 = vmatprep.subr.mxu0 %v196
    %1818 = vmatpush1.msra.mxu0 %v195
    %1819 = vmatprep.subr.mxu0 %v200
    %1820 = vmatpush1.msra.mxu0 %v199
    %1821 = vmatprep.subr.mxu0 %v204
    %1822 = vmatpush1.msra.mxu0 %v203
    %1823 = vmatprep.subr.mxu0 %v208
    %1824 = vmatpush1.msra.mxu0 %v207
    %1825 = vmatprep.subr.mxu0 %v212
    %1826 = vmatpush1.msra.mxu0 %v211
    %1827 = vmatprep.subr.mxu0 %v216
    %1828 = vmatpush1.msra.mxu0 %v215
    %1829 = vmatprep.subr.mxu0 %v220
    %1830 = vmatpush1.msra.mxu0 %v219
    %1831 = vmatprep.subr.mxu0 %v224
    %1832 = vmatpush1.msra.mxu0 %v223
    %1833 = vmatprep.subr.mxu0 %v228
    %1834 = vmatpush1.msra.mxu0 %v227
    %1835 = vmatprep.subr.mxu0 %v232
    %1836 = vmatpush1.msra.mxu0 %v231
    %1837 = vmatprep.subr.mxu0 %v236
    %1838 = vmatpush1.msra.mxu0 %v235
    %1839 = vmatprep.subr.mxu0 %v240
    %1840 = vmatpush1.msra.mxu0 %v239
    %1841 = vmatprep.subr.mxu0 %v244
    %1842 = vmatpush1.msra.mxu0 %v243
    %1843 = vmatprep.mubr.f32.mxu0 %v86
    %1844 = vmatmul.mubr.f32.gmra.mrb[0].mxu0 %v85
    %v1845 = vpop.f32.mrb[0].mxu0
    %v1846 = vadd.f32 %v1154, %v1845
    %v1847 = vpop.f32.mrb[0].mxu0
    %v1848 = vadd.f32 %v1158, %v1847
    %1849 = vmatprep.mubr.f32.mxu0 %v102
    %1850 = vmatmul.mubr.f32.gmra.mrb[0].mxu0 %v101
    %v1851 = vpop.f32.mrb[0].mxu0
    %v1852 = vadd.f32 %v1154, %v1851
    %v1853 = vpop.f32.mrb[0].mxu0
    %v1854 = vadd.f32 %v1158, %v1853
    %1855 = vdwg.mxu0
    %1856 = vmatprep.subr.mxu0 %v248
    %1857 = vmatpush1.msra.mxu0 %v247
    %1858 = vmatprep.subr.mxu0 %v252
    %1859 = vmatpush1.msra.mxu0 %v251
    %1860 = vmatprep.subr.mxu0 %v256
    %1861 = vmatpush1.msra.mxu0 %v255
    %1862 = vmatprep.subr.mxu0 %v260
    %1863 = vmatpush1.msra.mxu0 %v259
    %1864 = vmatprep.subr.mxu0 %v264
    %1865 = vmatpush1.msra.mxu0 %v263
    %1866 = vmatprep.subr.mxu0 %v268
    %1867 = vmatpush1.msra.mxu0 %v267
    %1868 = vmatprep.subr.mxu0 %v272
    %1869 = vmatpush1.msra.mxu0 %v271
    %1870 = vmatprep.subr.mxu0 %v276
    %1871 = vmatpush1.msra.mxu0 %v275
    %1872 = vmatprep.subr.mxu0 %v280
    %1873 = vmatpush1.msra.mxu0 %v279
    %1874 = vmatprep.subr.mxu0 %v284
    %1875 = vmatpush1.msra.mxu0 %v283
    %1876 = vmatprep.subr.mxu0 %v288
    %1877 = vmatpush1.msra.mxu0 %v287
    %1878 = vmatprep.subr.mxu0 %v292
    %1879 = vmatpush1.msra.mxu0 %v291
    %1880 = vmatprep.subr.mxu0 %v296
    %1881 = vmatpush1.msra.mxu0 %v295
    %1882 = vmatprep.subr.mxu0 %v300
    %1883 = vmatpush1.msra.mxu0 %v299
    %1884 = vmatprep.subr.mxu0 %v304
    %1885 = vmatpush1.msra.mxu0 %v303
    %1886 = vmatprep.subr.mxu0 %v308
    %1887 = vmatpush1.msra.mxu0 %v307
    %1888 = vmatprep.subr.mxu0 %v312
    %1889 = vmatpush1.msra.mxu0 %v311
    %1890 = vmatprep.subr.mxu0 %v316
    %1891 = vmatpush1.msra.mxu0 %v315
    %1892 = vmatprep.subr.mxu0 %v320
    %1893 = vmatpush1.msra.mxu0 %v319
    %1894 = vmatprep.subr.mxu0 %v324
    %1895 = vmatpush1.msra.mxu0 %v323
    %1896 = vmatprep.subr.mxu0 %v328
    %1897 = vmatpush1.msra.mxu0 %v327
    %1898 = vmatprep.subr.mxu0 %v332
    %1899 = vmatpush1.msra.mxu0 %v331
    %1900 = vmatprep.subr.mxu0 %v336
    %1901 = vmatpush1.msra.mxu0 %v335
    %1902 = vmatprep.subr.mxu0 %v340
    %1903 = vmatpush1.msra.mxu0 %v339
    %1904 = vmatprep.subr.mxu0 %v344
    %1905 = vmatpush1.msra.mxu0 %v343
    %1906 = vmatprep.subr.mxu0 %v348
    %1907 = vmatpush1.msra.mxu0 %v347
    %1908 = vmatprep.subr.mxu0 %v352
    %1909 = vmatpush1.msra.mxu0 %v351
    %1910 = vmatprep.subr.mxu0 %v356
    %1911 = vmatpush1.msra.mxu0 %v355
    %1912 = vmatprep.subr.mxu0 %v360
    %1913 = vmatpush1.msra.mxu0 %v359
    %1914 = vmatprep.subr.mxu0 %v364
    %1915 = vmatpush1.msra.mxu0 %v363
    %1916 = vmatprep.subr.mxu0 %v368
    %1917 = vmatpush1.msra.mxu0 %v367
    %1918 = vmatprep.subr.mxu0 %v372
    %1919 = vmatpush1.msra.mxu0 %v371
    %1920 = vmatprep.mubr.f32.mxu0 %v88
    %1921 = vmatmul.mubr.f32.gmra.mrb[0].mxu0 %v87
    %v1922 = vpop.f32.mrb[0].mxu0
    %v1923 = vadd.f32 %v1846, %v1922
    %v1924 = vpop.f32.mrb[0].mxu0
    %v1925 = vadd.f32 %v1848, %v1924
    %1926 = vmatprep.mubr.f32.mxu0 %v104
    %1927 = vmatmul.mubr.f32.gmra.mrb[0].mxu0 %v103
    %v1928 = vpop.f32.mrb[0].mxu0
    %v1929 = vadd.f32 %v1852, %v1928
    %v1930 = vpop.f32.mrb[0].mxu0
    %v1931 = vadd.f32 %v1854, %v1930
    %1932 = vdwg.mxu0
    %1933 = vmatprep.subr.mxu0 %v376
    %1934 = vmatpush1.msra.mxu0 %v375
    %1935 = vmatprep.subr.mxu0 %v380
    %1936 = vmatpush1.msra.mxu0 %v379
    %1937 = vmatprep.subr.mxu0 %v384
    %1938 = vmatpush1.msra.mxu0 %v383
    %1939 = vmatprep.subr.mxu0 %v388
    %1940 = vmatpush1.msra.mxu0 %v387
    %1941 = vmatprep.subr.mxu0 %v392
    %1942 = vmatpush1.msra.mxu0 %v391
    %1943 = vmatprep.subr.mxu0 %v396
    %1944 = vmatpush1.msra.mxu0 %v395
    %1945 = vmatprep.subr.mxu0 %v400
    %1946 = vmatpush1.msra.mxu0 %v399
    %1947 = vmatprep.subr.mxu0 %v404
    %1948 = vmatpush1.msra.mxu0 %v403
    %1949 = vmatprep.subr.mxu0 %v408
    %1950 = vmatpush1.msra.mxu0 %v407
    %1951 = vmatprep.subr.mxu0 %v412
    %1952 = vmatpush1.msra.mxu0 %v411
    %1953 = vmatprep.subr.mxu0 %v416
    %1954 = vmatpush1.msra.mxu0 %v415
    %1955 = vmatprep.subr.mxu0 %v420
    %1956 = vmatpush1.msra.mxu0 %v419
    %1957 = vmatprep.subr.mxu0 %v424
    %1958 = vmatpush1.msra.mxu0 %v423
    %1959 = vmatprep.subr.mxu0 %v428
    %1960 = vmatpush1.msra.mxu0 %v427
    %1961 = vmatprep.subr.mxu0 %v432
    %1962 = vmatpush1.msra.mxu0 %v431
    %1963 = vmatprep.subr.mxu0 %v436
    %1964 = vmatpush1.msra.mxu0 %v435
    %1965 = vmatprep.subr.mxu0 %v440
    %1966 = vmatpush1.msra.mxu0 %v439
    %1967 = vmatprep.subr.mxu0 %v444
    %1968 = vmatpush1.msra.mxu0 %v443
    %1969 = vmatprep.subr.mxu0 %v448
    %1970 = vmatpush1.msra.mxu0 %v447
    %1971 = vmatprep.subr.mxu0 %v452
    %1972 = vmatpush1.msra.mxu0 %v451
    %1973 = vmatprep.subr.mxu0 %v456
    %1974 = vmatpush1.msra.mxu0 %v455
    %1975 = vmatprep.subr.mxu0 %v460
    %1976 = vmatpush1.msra.mxu0 %v459
    %1977 = vmatprep.subr.mxu0 %v464
    %1978 = vmatpush1.msra.mxu0 %v463
    %1979 = vmatprep.subr.mxu0 %v468
    %1980 = vmatpush1.msra.mxu0 %v467
    %1981 = vmatprep.subr.mxu0 %v472
    %1982 = vmatpush1.msra.mxu0 %v471
    %1983 = vmatprep.subr.mxu0 %v476
    %1984 = vmatpush1.msra.mxu0 %v475
    %1985 = vmatprep.subr.mxu0 %v480
    %1986 = vmatpush1.msra.mxu0 %v479
    %1987 = vmatprep.subr.mxu0 %v484
    %1988 = vmatpush1.msra.mxu0 %v483
    %1989 = vmatprep.subr.mxu0 %v488
    %1990 = vmatpush1.msra.mxu0 %v487
    %1991 = vmatprep.subr.mxu0 %v492
    %1992 = vmatpush1.msra.mxu0 %v491
    %1993 = vmatprep.subr.mxu0 %v496
    %1994 = vmatpush1.msra.mxu0 %v495
    %1995 = vmatprep.subr.mxu0 %v500
    %1996 = vmatpush1.msra.mxu0 %v499
    %1997 = vmatprep.mubr.f32.mxu0 %v90
    %1998 = vmatmul.mubr.f32.gmra.mrb[0].mxu0 %v89
    %v1999 = vpop.f32.mrb[0].mxu0
    %v2000 = vadd.f32 %v1923, %v1999
    %v2001 = vpop.f32.mrb[0].mxu0
    %v2002 = vadd.f32 %v1925, %v2001
    %2003 = vmatprep.mubr.f32.mxu0 %v106
    %2004 = vmatmul.mubr.f32.gmra.mrb[0].mxu0 %v105
    %v2005 = vpop.f32.mrb[0].mxu0
    %v2006 = vadd.f32 %v1929, %v2005
    %v2007 = vpop.f32.mrb[0].mxu0
    %v2008 = vadd.f32 %v1931, %v2007
    %2009 = vdwg.mxu0
    %2010 = vmatprep.subr.mxu0 %v504
    %2011 = vmatpush1.msra.mxu0 %v503
    %2012 = vmatprep.subr.mxu0 %v508
    %2013 = vmatpush1.msra.mxu0 %v507
    %2014 = vmatprep.subr.mxu0 %v512
    %2015 = vmatpush1.msra.mxu0 %v511
    %2016 = vmatprep.subr.mxu0 %v516
    %2017 = vmatpush1.msra.mxu0 %v515
    %2018 = vmatprep.subr.mxu0 %v520
    %2019 = vmatpush1.msra.mxu0 %v519
    %2020 = vmatprep.subr.mxu0 %v524
    %2021 = vmatpush1.msra.mxu0 %v523
    %2022 = vmatprep.subr.mxu0 %v528
    %2023 = vmatpush1.msra.mxu0 %v527
    %2024 = vmatprep.subr.mxu0 %v532
    %2025 = vmatpush1.msra.mxu0 %v531
    %2026 = vmatprep.subr.mxu0 %v536
    %2027 = vmatpush1.msra.mxu0 %v535
    %2028 = vmatprep.subr.mxu0 %v540
    %2029 = vmatpush1.msra.mxu0 %v539
    %2030 = vmatprep.subr.mxu0 %v544
    %2031 = vmatpush1.msra.mxu0 %v543
    %2032 = vmatprep.subr.mxu0 %v548
    %2033 = vmatpush1.msra.mxu0 %v547
    %2034 = vmatprep.subr.mxu0 %v552
    %2035 = vmatpush1.msra.mxu0 %v551
    %2036 = vmatprep.subr.mxu0 %v556
    %2037 = vmatpush1.msra.mxu0 %v555
    %2038 = vmatprep.subr.mxu0 %v560
    %2039 = vmatpush1.msra.mxu0 %v559
    %2040 = vmatprep.subr.mxu0 %v564
    %2041 = vmatpush1.msra.mxu0 %v563
    %2042 = vmatprep.subr.mxu0 %v568
    %2043 = vmatpush1.msra.mxu0 %v567
    %2044 = vmatprep.subr.mxu0 %v572
    %2045 = vmatpush1.msra.mxu0 %v571
    %2046 = vmatprep.subr.mxu0 %v576
    %2047 = vmatpush1.msra.mxu0 %v575
    %2048 = vmatprep.subr.mxu0 %v580
    %2049 = vmatpush1.msra.mxu0 %v579
    %2050 = vmatprep.subr.mxu0 %v584
    %2051 = vmatpush1.msra.mxu0 %v583
    %2052 = vmatprep.subr.mxu0 %v588
    %2053 = vmatpush1.msra.mxu0 %v587
    %2054 = vmatprep.subr.mxu0 %v592
    %2055 = vmatpush1.msra.mxu0 %v591
    %2056 = vmatprep.subr.mxu0 %v596
    %2057 = vmatpush1.msra.mxu0 %v595
    %2058 = vmatprep.subr.mxu0 %v600
    %2059 = vmatpush1.msra.mxu0 %v599
    %2060 = vmatprep.subr.mxu0 %v604
    %2061 = vmatpush1.msra.mxu0 %v603
    %2062 = vmatprep.subr.mxu0 %v608
    %2063 = vmatpush1.msra.mxu0 %v607
    %2064 = vmatprep.subr.mxu0 %v612
    %2065 = vmatpush1.msra.mxu0 %v611
    %2066 = vmatprep.subr.mxu0 %v616
    %2067 = vmatpush1.msra.mxu0 %v615
    %2068 = vmatprep.subr.mxu0 %v620
    %2069 = vmatpush1.msra.mxu0 %v619
    %2070 = vmatprep.subr.mxu0 %v624
    %2071 = vmatpush1.msra.mxu0 %v623
    %2072 = vmatprep.subr.mxu0 %v628
    %2073 = vmatpush1.msra.mxu0 %v627
    %2074 = vmatprep.mubr.f32.mxu0 %v92
    %2075 = vmatmul.mubr.f32.gmra.mrb[0].mxu0 %v91
    %v2076 = vpop.f32.mrb[0].mxu0
    %v2077 = vadd.f32 %v2000, %v2076
    %v2078 = vpop.f32.mrb[0].mxu0
    %v2079 = vadd.f32 %v2002, %v2078
    %2080 = vmatprep.mubr.f32.mxu0 %v108
    %2081 = vmatmul.mubr.f32.gmra.mrb[0].mxu0 %v107
    %v2082 = vpop.f32.mrb[0].mxu0
    %v2083 = vadd.f32 %v2006, %v2082
    %v2084 = vpop.f32.mrb[0].mxu0
    %v2085 = vadd.f32 %v2008, %v2084
    %2086 = vdwg.mxu0
    %2087 = vmatprep.subr.mxu0 %v632
    %2088 = vmatpush1.msra.mxu0 %v631
    %2089 = vmatprep.subr.mxu0 %v636
    %2090 = vmatpush1.msra.mxu0 %v635
    %2091 = vmatprep.subr.mxu0 %v640
    %2092 = vmatpush1.msra.mxu0 %v639
    %2093 = vmatprep.subr.mxu0 %v644
    %2094 = vmatpush1.msra.mxu0 %v643
    %2095 = vmatprep.subr.mxu0 %v648
    %2096 = vmatpush1.msra.mxu0 %v647
    %2097 = vmatprep.subr.mxu0 %v652
    %2098 = vmatpush1.msra.mxu0 %v651
    %2099 = vmatprep.subr.mxu0 %v656
    %2100 = vmatpush1.msra.mxu0 %v655
    %2101 = vmatprep.subr.mxu0 %v660
    %2102 = vmatpush1.msra.mxu0 %v659
    %2103 = vmatprep.subr.mxu0 %v664
    %2104 = vmatpush1.msra.mxu0 %v663
    %2105 = vmatprep.subr.mxu0 %v668
    %2106 = vmatpush1.msra.mxu0 %v667
    %2107 = vmatprep.subr.mxu0 %v672
    %2108 = vmatpush1.msra.mxu0 %v671
    %2109 = vmatprep.subr.mxu0 %v676
    %2110 = vmatpush1.msra.mxu0 %v675
    %2111 = vmatprep.subr.mxu0 %v680
    %2112 = vmatpush1.msra.mxu0 %v679
    %2113 = vmatprep.subr.mxu0 %v684
    %2114 = vmatpush1.msra.mxu0 %v683
    %2115 = vmatprep.subr.mxu0 %v688
    %2116 = vmatpush1.msra.mxu0 %v687
    %2117 = vmatprep.subr.mxu0 %v692
    %2118 = vmatpush1.msra.mxu0 %v691
    %2119 = vmatprep.subr.mxu0 %v696
    %2120 = vmatpush1.msra.mxu0 %v695
    %2121 = vmatprep.subr.mxu0 %v700
    %2122 = vmatpush1.msra.mxu0 %v699
    %2123 = vmatprep.subr.mxu0 %v704
    %2124 = vmatpush1.msra.mxu0 %v703
    %2125 = vmatprep.subr.mxu0 %v708
    %2126 = vmatpush1.msra.mxu0 %v707
    %2127 = vmatprep.subr.mxu0 %v712
    %2128 = vmatpush1.msra.mxu0 %v711
    %2129 = vmatprep.subr.mxu0 %v716
    %2130 = vmatpush1.msra.mxu0 %v715
    %2131 = vmatprep.subr.mxu0 %v720
    %2132 = vmatpush1.msra.mxu0 %v719
    %2133 = vmatprep.subr.mxu0 %v724
    %2134 = vmatpush1.msra.mxu0 %v723
    %2135 = vmatprep.subr.mxu0 %v728
    %2136 = vmatpush1.msra.mxu0 %v727
    %2137 = vmatprep.subr.mxu0 %v732
    %2138 = vmatpush1.msra.mxu0 %v731
    %2139 = vmatprep.subr.mxu0 %v736
    %2140 = vmatpush1.msra.mxu0 %v735
    %2141 = vmatprep.subr.mxu0 %v740
    %2142 = vmatpush1.msra.mxu0 %v739
    %2143 = vmatprep.subr.mxu0 %v744
    %2144 = vmatpush1.msra.mxu0 %v743
    %2145 = vmatprep.subr.mxu0 %v748
    %2146 = vmatpush1.msra.mxu0 %v747
    %2147 = vmatprep.subr.mxu0 %v752
    %2148 = vmatpush1.msra.mxu0 %v751
    %2149 = vmatprep.subr.mxu0 %v756
    %2150 = vmatpush1.msra.mxu0 %v755
    %2151 = vmatprep.mubr.f32.mxu0 %v94
    %2152 = vmatmul.mubr.f32.gmra.mrb[0].mxu0 %v93
    %v2153 = vpop.f32.mrb[0].mxu0
    %v2154 = vadd.f32 %v2077, %v2153
    %v2155 = vpop.f32.mrb[0].mxu0
    %v2156 = vadd.f32 %v2079, %v2155
    %2157 = vmatprep.mubr.f32.mxu0 %v110
    %2158 = vmatmul.mubr.f32.gmra.mrb[0].mxu0 %v109
    %v2159 = vpop.f32.mrb[0].mxu0
    %v2160 = vadd.f32 %v2083, %v2159
    %v2161 = vpop.f32.mrb[0].mxu0
    %v2162 = vadd.f32 %v2085, %v2161
    %2163 = vdwg.mxu0
    %2164 = vmatprep.subr.mxu0 %v760
    %2165 = vmatpush1.msra.mxu0 %v759
    %2166 = vmatprep.subr.mxu0 %v764
    %2167 = vmatpush1.msra.mxu0 %v763
    %2168 = vmatprep.subr.mxu0 %v768
    %2169 = vmatpush1.msra.mxu0 %v767
    %2170 = vmatprep.subr.mxu0 %v772
    %2171 = vmatpush1.msra.mxu0 %v771
    %2172 = vmatprep.subr.mxu0 %v776
    %2173 = vmatpush1.msra.mxu0 %v775
    %2174 = vmatprep.subr.mxu0 %v780
    %2175 = vmatpush1.msra.mxu0 %v779
    %2176 = vmatprep.subr.mxu0 %v784
    %2177 = vmatpush1.msra.mxu0 %v783
    %2178 = vmatprep.subr.mxu0 %v788
    %2179 = vmatpush1.msra.mxu0 %v787
    %2180 = vmatprep.subr.mxu0 %v792
    %2181 = vmatpush1.msra.mxu0 %v791
    %2182 = vmatprep.subr.mxu0 %v796
    %2183 = vmatpush1.msra.mxu0 %v795
    %2184 = vmatprep.subr.mxu0 %v800
    %2185 = vmatpush1.msra.mxu0 %v799
    %2186 = vmatprep.subr.mxu0 %v804
    %2187 = vmatpush1.msra.mxu0 %v803
    %2188 = vmatprep.subr.mxu0 %v808
    %2189 = vmatpush1.msra.mxu0 %v807
    %2190 = vmatprep.subr.mxu0 %v812
    %2191 = vmatpush1.msra.mxu0 %v811
    %2192 = vmatprep.subr.mxu0 %v816
    %2193 = vmatpush1.msra.mxu0 %v815
    %2194 = vmatprep.subr.mxu0 %v820
    %2195 = vmatpush1.msra.mxu0 %v819
    %2196 = vmatprep.subr.mxu0 %v824
    %2197 = vmatpush1.msra.mxu0 %v823
    %2198 = vmatprep.subr.mxu0 %v828
    %2199 = vmatpush1.msra.mxu0 %v827
    %2200 = vmatprep.subr.mxu0 %v832
    %2201 = vmatpush1.msra.mxu0 %v831
    %2202 = vmatprep.subr.mxu0 %v836
    %2203 = vmatpush1.msra.mxu0 %v835
    %2204 = vmatprep.subr.mxu0 %v840
    %2205 = vmatpush1.msra.mxu0 %v839
    %2206 = vmatprep.subr.mxu0 %v844
    %2207 = vmatpush1.msra.mxu0 %v843
    %2208 = vmatprep.subr.mxu0 %v848
    %2209 = vmatpush1.msra.mxu0 %v847
    %2210 = vmatprep.subr.mxu0 %v852
    %2211 = vmatpush1.msra.mxu0 %v851
    %2212 = vmatprep.subr.mxu0 %v856
    %2213 = vmatpush1.msra.mxu0 %v855
    %2214 = vmatprep.subr.mxu0 %v860
    %2215 = vmatpush1.msra.mxu0 %v859
    %2216 = vmatprep.subr.mxu0 %v864
    %2217 = vmatpush1.msra.mxu0 %v863
    %2218 = vmatprep.subr.mxu0 %v868
    %2219 = vmatpush1.msra.mxu0 %v867
    %2220 = vmatprep.subr.mxu0 %v872
    %2221 = vmatpush1.msra.mxu0 %v871
    %2222 = vmatprep.subr.mxu0 %v876
    %2223 = vmatpush1.msra.mxu0 %v875
    %2224 = vmatprep.subr.mxu0 %v880
    %2225 = vmatpush1.msra.mxu0 %v879
    %2226 = vmatprep.subr.mxu0 %v884
    %2227 = vmatpush1.msra.mxu0 %v883
    %2228 = vmatprep.mubr.f32.mxu0 %v96
    %2229 = vmatmul.mubr.f32.gmra.mrb[0].mxu0 %v95
    %v2230 = vpop.f32.mrb[0].mxu0
    %v2231 = vadd.f32 %v2154, %v2230
    %v2232 = vpop.f32.mrb[0].mxu0
    %v2233 = vadd.f32 %v2156, %v2232
    %2234 = vmatprep.mubr.f32.mxu0 %v112
    %2235 = vmatmul.mubr.f32.gmra.mrb[0].mxu0 %v111
    %v2236 = vpop.f32.mrb[0].mxu0
    %v2237 = vadd.f32 %v2160, %v2236
    %v2238 = vpop.f32.mrb[0].mxu0
    %v2239 = vadd.f32 %v2162, %v2238
    %2240 = vdwg.mxu0
    %2241 = vmatprep.subr.mxu0 %v888
    %2242 = vmatpush1.msra.mxu0 %v887
    %2243 = vmatprep.subr.mxu0 %v892
    %2244 = vmatpush1.msra.mxu0 %v891
    %2245 = vmatprep.subr.mxu0 %v896
    %2246 = vmatpush1.msra.mxu0 %v895
    %2247 = vmatprep.subr.mxu0 %v900
    %2248 = vmatpush1.msra.mxu0 %v899
    %2249 = vmatprep.subr.mxu0 %v904
    %2250 = vmatpush1.msra.mxu0 %v903
    %2251 = vmatprep.subr.mxu0 %v908
    %2252 = vmatpush1.msra.mxu0 %v907
    %2253 = vmatprep.subr.mxu0 %v912
    %2254 = vmatpush1.msra.mxu0 %v911
    %2255 = vmatprep.subr.mxu0 %v916
    %2256 = vmatpush1.msra.mxu0 %v915
    %2257 = vmatprep.subr.mxu0 %v920
    %2258 = vmatpush1.msra.mxu0 %v919
    %2259 = vmatprep.subr.mxu0 %v924
    %2260 = vmatpush1.msra.mxu0 %v923
    %2261 = vmatprep.subr.mxu0 %v928
    %2262 = vmatpush1.msra.mxu0 %v927
    %2263 = vmatprep.subr.mxu0 %v932
    %2264 = vmatpush1.msra.mxu0 %v931
    %2265 = vmatprep.subr.mxu0 %v936
    %2266 = vmatpush1.msra.mxu0 %v935
    %2267 = vmatprep.subr.mxu0 %v940
    %2268 = vmatpush1.msra.mxu0 %v939
    %2269 = vmatprep.subr.mxu0 %v944
    %2270 = vmatpush1.msra.mxu0 %v943
    %2271 = vmatprep.subr.mxu0 %v948
    %2272 = vmatpush1.msra.mxu0 %v947
    %2273 = vmatprep.subr.mxu0 %v952
    %2274 = vmatpush1.msra.mxu0 %v951
    %2275 = vmatprep.subr.mxu0 %v956
    %2276 = vmatpush1.msra.mxu0 %v955
    %2277 = vmatprep.subr.mxu0 %v960
    %2278 = vmatpush1.msra.mxu0 %v959
    %2279 = vmatprep.subr.mxu0 %v964
    %2280 = vmatpush1.msra.mxu0 %v963
    %2281 = vmatprep.subr.mxu0 %v968
    %2282 = vmatpush1.msra.mxu0 %v967
    %2283 = vmatprep.subr.mxu0 %v972
    %2284 = vmatpush1.msra.mxu0 %v971
    %2285 = vmatprep.subr.mxu0 %v976
    %2286 = vmatpush1.msra.mxu0 %v975
    %2287 = vmatprep.subr.mxu0 %v980
    %2288 = vmatpush1.msra.mxu0 %v979
    %2289 = vmatprep.subr.mxu0 %v984
    %2290 = vmatpush1.msra.mxu0 %v983
    %2291 = vmatprep.subr.mxu0 %v988
    %2292 = vmatpush1.msra.mxu0 %v987
    %2293 = vmatprep.subr.mxu0 %v992
    %2294 = vmatpush1.msra.mxu0 %v991
    %2295 = vmatprep.subr.mxu0 %v996
    %2296 = vmatpush1.msra.mxu0 %v995
    %2297 = vmatprep.subr.mxu0 %v1000
    %2298 = vmatpush1.msra.mxu0 %v999
    %2299 = vmatprep.subr.mxu0 %v1004
    %2300 = vmatpush1.msra.mxu0 %v1003
    %2301 = vmatprep.subr.mxu0 %v1008
    %2302 = vmatpush1.msra.mxu0 %v1007
    %2303 = vmatprep.subr.mxu0 %v1012
    %2304 = vmatpush1.msra.mxu0 %v1011
    %2305 = vmatprep.mubr.f32.mxu0 %v98
    %2306 = vmatmul.mubr.f32.gmra.mrb[0].mxu0 %v97
    %v2307 = vpop.f32.mrb[0].mxu0
    %v2308 = vadd.f32 %v2231, %v2307
    %v2309 = vpop.f32.mrb[0].mxu0
    %v2310 = vadd.f32 %v2233, %v2309
    %2311 = vmatprep.mubr.f32.mxu0 %v114
    %2312 = vmatmul.mubr.f32.gmra.mrb[0].mxu0 %v113
    %v2313 = vpop.f32.mrb[0].mxu0
    %v2314 = vadd.f32 %v2237, %v2313
    %v2315 = vpop.f32.mrb[0].mxu0
    %v2316 = vadd.f32 %v2239, %v2315
    %2317 = vdwg.mxu0
    %2318 = vmatprep.subr.mxu0 %v1016
    %2319 = vmatpush1.msra.mxu0 %v1015
    %2320 = vmatprep.subr.mxu0 %v1020
    %2321 = vmatpush1.msra.mxu0 %v1019
    %2322 = vmatprep.subr.mxu0 %v1024
    %2323 = vmatpush1.msra.mxu0 %v1023
    %2324 = vmatprep.subr.mxu0 %v1028
    %2325 = vmatpush1.msra.mxu0 %v1027
    %2326 = vmatprep.subr.mxu0 %v1032
    %2327 = vmatpush1.msra.mxu0 %v1031
    %2328 = vmatprep.subr.mxu0 %v1036
    %2329 = vmatpush1.msra.mxu0 %v1035
    %2330 = vmatprep.subr.mxu0 %v1040
    %2331 = vmatpush1.msra.mxu0 %v1039
    %2332 = vmatprep.subr.mxu0 %v1044
    %2333 = vmatpush1.msra.mxu0 %v1043
    %2334 = vmatprep.subr.mxu0 %v1048
    %2335 = vmatpush1.msra.mxu0 %v1047
    %2336 = vmatprep.subr.mxu0 %v1052
    %2337 = vmatpush1.msra.mxu0 %v1051
    %2338 = vmatprep.subr.mxu0 %v1056
    %2339 = vmatpush1.msra.mxu0 %v1055
    %2340 = vmatprep.subr.mxu0 %v1060
    %2341 = vmatpush1.msra.mxu0 %v1059
    %2342 = vmatprep.subr.mxu0 %v1064
    %2343 = vmatpush1.msra.mxu0 %v1063
    %2344 = vmatprep.subr.mxu0 %v1068
    %2345 = vmatpush1.msra.mxu0 %v1067
    %2346 = vmatprep.subr.mxu0 %v1072
    %2347 = vmatpush1.msra.mxu0 %v1071
    %2348 = vmatprep.subr.mxu0 %v1076
    %2349 = vmatpush1.msra.mxu0 %v1075
    %2350 = vmatprep.subr.mxu0 %v1080
    %2351 = vmatpush1.msra.mxu0 %v1079
    %2352 = vmatprep.subr.mxu0 %v1084
    %2353 = vmatpush1.msra.mxu0 %v1083
    %2354 = vmatprep.subr.mxu0 %v1088
    %2355 = vmatpush1.msra.mxu0 %v1087
    %2356 = vmatprep.subr.mxu0 %v1092
    %2357 = vmatpush1.msra.mxu0 %v1091
    %2358 = vmatprep.subr.mxu0 %v1096
    %2359 = vmatpush1.msra.mxu0 %v1095
    %2360 = vmatprep.subr.mxu0 %v1100
    %2361 = vmatpush1.msra.mxu0 %v1099
    %2362 = vmatprep.subr.mxu0 %v1104
    %2363 = vmatpush1.msra.mxu0 %v1103
    %2364 = vmatprep.subr.mxu0 %v1108
    %2365 = vmatpush1.msra.mxu0 %v1107
    %2366 = vmatprep.subr.mxu0 %v1112
    %2367 = vmatpush1.msra.mxu0 %v1111
    %2368 = vmatprep.subr.mxu0 %v1116
    %2369 = vmatpush1.msra.mxu0 %v1115
    %2370 = vmatprep.subr.mxu0 %v1120
    %2371 = vmatpush1.msra.mxu0 %v1119
    %2372 = vmatprep.subr.mxu0 %v1124
    %2373 = vmatpush1.msra.mxu0 %v1123
    %2374 = vmatprep.subr.mxu0 %v1128
    %2375 = vmatpush1.msra.mxu0 %v1127
    %2376 = vmatprep.subr.mxu0 %v1132
    %2377 = vmatpush1.msra.mxu0 %v1131
    %2378 = vmatprep.subr.mxu0 %v1136
    %2379 = vmatpush1.msra.mxu0 %v1135
    %2380 = vmatprep.subr.mxu0 %v1140
    %2381 = vmatpush1.msra.mxu0 %v1139
    %2382 = vmatprep.mubr.f32.mxu0 %v100
    %2383 = vmatmul.mubr.f32.gmra.mrb[0].mxu0 %v99
    %v2384 = vpop.f32.mrb[0].mxu0
    %v2385 = vadd.f32 %v2308, %v2384
    %v2386 = vpop.f32.mrb[0].mxu0
    %v2387 = vadd.f32 %v2310, %v2386
    %2388 = vmatprep.mubr.f32.mxu0 %v116
    %2389 = vmatmul.mubr.f32.gmra.mrb[0].mxu0 %v115
    %v2390 = vpop.f32.mrb[0].mxu0
    %v2391 = vadd.f32 %v2314, %v2390
    %v2392 = vpop.f32.mrb[0].mxu0
    %v2393 = vadd.f32 %v2316, %v2392
    %2394 = vdwg.mxu0
    %v2395 = vmul.f32 %v1769, 0.5
    %v2396 = vmul.f32 %v1771, 0.5
    %v2397 = vmul.f32 %v2385, 0.5
    %v2398 = vmul.f32 %v2387, 0.5
    %v2399 = vmul.f32 %v1775, 0.5
    %v2400 = vmul.f32 %v1777, 0.5
    %v2401 = vmul.f32 %v2391, 0.5
    %v2402 = vmul.f32 %v2393, 0.5
    %v2403 = vmul.f32 %v1769, 0.70710677
    %v2404 = vmul.f32 %v1771, 0.70710677
    %v2405 = vmul.f32 %v2385, 0.70710677
    %v2406 = vmul.f32 %v2387, 0.70710677
    %v2407 = vmul.f32 %v1775, 0.70710677
    %v2408 = vmul.f32 %v1777, 0.70710677
    %v2409 = vmul.f32 %v2391, 0.70710677
    %v2410 = vmul.f32 %v2393, 0.70710677
    %v2411 = verf.f32.pop %v2403
    %v2412 = verf.f32.pop %v2404
    %v2413 = verf.f32.pop %v2405
    %v2414 = verf.f32.pop %v2406
    %v2415 = verf.f32.pop %v2407
    %v2416 = verf.f32.pop %v2408
    %v2417 = verf.f32.pop %v2409
    %v2418 = verf.f32.pop %v2410
    %v2419 = vadd.f32 %v2411, 1.0
    %v2420 = vadd.f32 %v2412, 1.0
    %v2421 = vadd.f32 %v2413, 1.0
    %v2422 = vadd.f32 %v2414, 1.0
    %v2423 = vadd.f32 %v2415, 1.0
    %v2424 = vadd.f32 %v2416, 1.0
    %v2425 = vadd.f32 %v2417, 1.0
    %v2426 = vadd.f32 %v2418, 1.0
    %v2427 = vmul.f32 %v2395, %v2419
    %v2428 = vmul.f32 %v2396, %v2420
    %v2429 = vmul.f32 %v2397, %v2421
    %v2430 = vmul.f32 %v2398, %v2422
    %v2431 = vmul.f32 %v2399, %v2423
    %v2432 = vmul.f32 %v2400, %v2424
    %v2433 = vmul.f32 %v2401, %v2425
    %v2434 = vmul.f32 %v2402, %v2426
    %v2435 = vadd.f32 %v2427, %v2428
    %v2436 = vadd.f32 %v2435, %v2429
    %v2437 = vadd.f32 %v2436, %v2430
    %2438 = vadd.xlane.f32.xlu0 %v2437
    %v2439 = vpop.xlane.xlu0 %2438
    %v2440 = vadd.f32 %v2431, %v2432
    %v2441 = vadd.f32 %v2440, %v2433
    %v2442 = vadd.f32 %v2441, %v2434
    %2443 = vadd.xlane.f32.xlu0 %v2442
    %v2444 = vpop.xlane.xlu0 %2443
    %v2445 = vrcp.pop 512.0
    %v2446 = vmul.f32 %v2439, %v2445
    %v2447 = vmul.f32 %v2444, %v2445
    %v2448 = vsub.f32 %v2427, %v2446
    %v2449 = vsub.f32 %v2428, %v2446
    %v2450 = vsub.f32 %v2429, %v2446
    %v2451 = vsub.f32 %v2430, %v2446
    %v2452 = vsub.f32 %v2431, %v2447
    %v2453 = vsub.f32 %v2432, %v2447
    %v2454 = vsub.f32 %v2433, %v2447
    %v2455 = vsub.f32 %v2434, %v2447
    %v2456 = vmul.f32 %v2448, %v2448
    %v2457 = vmul.f32 %v2449, %v2449
    %v2458 = vmul.f32 %v2450, %v2450
    %v2459 = vmul.f32 %v2451, %v2451
    %v2460 = vmul.f32 %v2452, %v2452
    %v2461 = vmul.f32 %v2453, %v2453
    %v2462 = vmul.f32 %v2454, %v2454
    %v2463 = vmul.f32 %v2455, %v2455
    %v2464 = vadd.f32 %v2456, %v2457
    %v2465 = vadd.f32 %v2464, %v2458
    %v2466 = vadd.f32 %v2465, %v2459
    %2467 = vadd.xlane.f32.xlu0 %v2466
    %v2468 = vpop.xlane.xlu0 %2467
    %v2469 = vadd.f32 %v2460, %v2461
    %v2470 = vadd.f32 %v2469, %v2462
    %v2471 = vadd.f32 %v2470, %v2463
    %2472 = vadd.xlane.f32.xlu0 %v2471
    %v2473 = vpop.xlane.xlu0 %2472
    %v2474 = vmul.f32 %v2468, %v2445
    %v2475 = vmul.f32 %v2473, %v2445
    %v2476 = vadd.f32 %v2474, 1e-05
    %v2477 = vadd.f32 %v2475, 1e-05
    %v2478 = vrsqrt.pop %v2476
    %v2479 = vrsqrt.pop %v2477
    %v2480 = vmul.f32 %v2448, %v2478
    %v2481 = vmul.f32 %v2449, %v2478
    %v2482 = vmul.f32 %v2450, %v2478
    %v2483 = vmul.f32 %v2451, %v2478
    %v2484 = vmul.f32 %v2452, %v2479
    %v2485 = vmul.f32 %v2453, %v2479
    %v2486 = vmul.f32 %v2454, %v2479
    %v2487 = vmul.f32 %v2455, %v2479
    %s2488 = scalar_lea.vmem [#allocation7], 1
    %v2489 = vld [vmem:[%s2488] ss:$4 sm:$0xf]
    %v2491 = vlaneseq
    %v2492 = vshrl.u32 %v2491, 7
    %v2493 = vsub.s32 0, %v2492
    %v2494 = vrot.slane %v2489, %v2493
    %v2495 = vlaneseq
    %v2496 = vshrl.u32 %v2495, 7
    %v2497 = vsub.s32 1, %v2496
    %v2498 = vrot.slane %v2489, %v2497
    %v2499 = vlaneseq
    %v2500 = vshrl.u32 %v2499, 7
    %v2501 = vsub.s32 2, %v2500
    %v2502 = vrot.slane %v2489, %v2501
    %v2503 = vlaneseq
    %v2504 = vshrl.u32 %v2503, 7
    %v2505 = vsub.s32 3, %v2504
    %v2506 = vrot.slane %v2489, %v2505
    %v2511 = vmul.f32 %v2480, %v2494
    %v2512 = vmul.f32 %v2481, %v2498
    %v2513 = vmul.f32 %v2482, %v2502
    %v2514 = vmul.f32 %v2483, %v2506
    %v2515 = vmul.f32 %v2484, %v2494
    %v2516 = vmul.f32 %v2485, %v2498
    %v2517 = vmul.f32 %v2486, %v2502
    %v2518 = vmul.f32 %v2487, %v2506
    %s2519 = scalar_lea.vmem [#allocation7], 2
    %v2520 = vld [vmem:[%s2519] ss:$4 sm:$0xf]
    %v2522 = vlaneseq
    %v2523 = vshrl.u32 %v2522, 7
    %v2524 = vsub.s32 0, %v2523
    %v2525 = vrot.slane %v2520, %v2524
    %v2526 = vlaneseq
    %v2527 = vshrl.u32 %v2526, 7
    %v2528 = vsub.s32 1, %v2527
    %v2529 = vrot.slane %v2520, %v2528
    %v2530 = vlaneseq
    %v2531 = vshrl.u32 %v2530, 7
    %v2532 = vsub.s32 2, %v2531
    %v2533 = vrot.slane %v2520, %v2532
    %v2534 = vlaneseq
    %v2535 = vshrl.u32 %v2534, 7
    %v2536 = vsub.s32 3, %v2535
    %v2537 = vrot.slane %v2520, %v2536
    %v2542 = vadd.f32 %v2511, %v2525
    %v2543 = vadd.f32 %v2512, %v2529
    %v2544 = vadd.f32 %v2513, %v2533
    %v2545 = vadd.f32 %v2514, %v2537
    %v2546 = vadd.f32 %v2515, %v2525
    %v2547 = vadd.f32 %v2516, %v2529
    %v2548 = vadd.f32 %v2517, %v2533
    %v2549 = vadd.f32 %v2518, %v2537
    %v2550 = vld [vmem:[#allocation8] sm:$0xff]
    %v2551 = vld [vmem:[#allocation8 + $0x8] sm:$0xff]
    %v2552 = vld [vmem:[#allocation8 + $0x10] sm:$0xff]
    %v2553 = vld [vmem:[#allocation8 + $0x18] sm:$0xff]
    %v2554 = vld [vmem:[#allocation8 + $0x20] sm:$0xff]
    %v2555 = vld [vmem:[#allocation8 + $0x28] sm:$0xff]
    %v2556 = vld [vmem:[#allocation8 + $0x30] sm:$0xff]
    %v2557 = vld [vmem:[#allocation8 + $0x38] sm:$0xff]
    %v2558 = vld [vmem:[#allocation8 + $0x40] sm:$0xff]
    %v2559 = vld [vmem:[#allocation8 + $0x48] sm:$0xff]
    %v2560 = vld [vmem:[#allocation8 + $0x50] sm:$0xff]
    %v2561 = vld [vmem:[#allocation8 + $0x58] sm:$0xff]
    %v2562 = vld [vmem:[#allocation8 + $0x60] sm:$0xff]
    %v2563 = vld [vmem:[#allocation8 + $0x68] sm:$0xff]
    %v2564 = vld [vmem:[#allocation8 + $0x70] sm:$0xff]
    %v2565 = vld [vmem:[#allocation8 + $0x78] sm:$0xff]
    %v2566 = vld [vmem:[#allocation8 + $0x80] sm:$0xff]
    %v2567 = vld [vmem:[#allocation8 + $0x88] sm:$0xff]
    %v2568 = vld [vmem:[#allocation8 + $0x90] sm:$0xff]
    %v2569 = vld [vmem:[#allocation8 + $0x98] sm:$0xff]
    %v2570 = vld [vmem:[#allocation8 + $0xa0] sm:$0xff]
    %v2571 = vld [vmem:[#allocation8 + $0xa8] sm:$0xff]
    %v2572 = vld [vmem:[#allocation8 + $0xb0] sm:$0xff]
    %v2573 = vld [vmem:[#allocation8 + $0xb8] sm:$0xff]
    %v2574 = vld [vmem:[#allocation8 + $0xc0] sm:$0xff]
    %v2575 = vld [vmem:[#allocation8 + $0xc8] sm:$0xff]
    %v2576 = vld [vmem:[#allocation8 + $0xd0] sm:$0xff]
    %v2577 = vld [vmem:[#allocation8 + $0xd8] sm:$0xff]
    %v2578 = vld [vmem:[#allocation8 + $0xe0] sm:$0xff]
    %v2579 = vld [vmem:[#allocation8 + $0xe8] sm:$0xff]
    %v2580 = vld [vmem:[#allocation8 + $0xf0] sm:$0xff]
    %v2581 = vld [vmem:[#allocation8 + $0xf8] sm:$0xff]
    %v2582 = vld [vmem:[#allocation8 + $0x100] sm:$0xff]
    %v2583 = vld [vmem:[#allocation8 + $0x108] sm:$0xff]
    %v2584 = vld [vmem:[#allocation8 + $0x110] sm:$0xff]
    %v2585 = vld [vmem:[#allocation8 + $0x118] sm:$0xff]
    %v2586 = vld [vmem:[#allocation8 + $0x120] sm:$0xff]
    %v2587 = vld [vmem:[#allocation8 + $0x128] sm:$0xff]
    %v2588 = vld [vmem:[#allocation8 + $0x130] sm:$0xff]
    %v2589 = vld [vmem:[#allocation8 + $0x138] sm:$0xff]
    %v2590 = vld [vmem:[#allocation8 + $0x140] sm:$0xff]
    %v2591 = vld [vmem:[#allocation8 + $0x148] sm:$0xff]
    %v2592 = vld [vmem:[#allocation8 + $0x150] sm:$0xff]
    %v2593 = vld [vmem:[#allocation8 + $0x158] sm:$0xff]
    %v2594 = vld [vmem:[#allocation8 + $0x160] sm:$0xff]
    %v2595 = vld [vmem:[#allocation8 + $0x168] sm:$0xff]
    %v2596 = vld [vmem:[#allocation8 + $0x170] sm:$0xff]
    %v2597 = vld [vmem:[#allocation8 + $0x178] sm:$0xff]
    %v2598 = vld [vmem:[#allocation8 + $0x180] sm:$0xff]
    %v2599 = vld [vmem:[#allocation8 + $0x188] sm:$0xff]
    %v2600 = vld [vmem:[#allocation8 + $0x190] sm:$0xff]
    %v2601 = vld [vmem:[#allocation8 + $0x198] sm:$0xff]
    %v2602 = vld [vmem:[#allocation8 + $0x1a0] sm:$0xff]
    %v2603 = vld [vmem:[#allocation8 + $0x1a8] sm:$0xff]
    %v2604 = vld [vmem:[#allocation8 + $0x1b0] sm:$0xff]
    %v2605 = vld [vmem:[#allocation8 + $0x1b8] sm:$0xff]
    %v2606 = vld [vmem:[#allocation8 + $0x1c0] sm:$0xff]
    %v2607 = vld [vmem:[#allocation8 + $0x1c8] sm:$0xff]
    %v2608 = vld [vmem:[#allocation8 + $0x1d0] sm:$0xff]
    %v2609 = vld [vmem:[#allocation8 + $0x1d8] sm:$0xff]
    %v2610 = vld [vmem:[#allocation8 + $0x1e0] sm:$0xff]
    %v2611 = vld [vmem:[#allocation8 + $0x1e8] sm:$0xff]
    %v2612 = vld [vmem:[#allocation8 + $0x1f0] sm:$0xff]
    %v2613 = vld [vmem:[#allocation8 + $0x1f8] sm:$0xff]
    %v2614 = vld [vmem:[#allocation8 + $0x200] sm:$0xff]
    %v2615 = vld [vmem:[#allocation8 + $0x208] sm:$0xff]
    %v2616 = vld [vmem:[#allocation8 + $0x210] sm:$0xff]
    %v2617 = vld [vmem:[#allocation8 + $0x218] sm:$0xff]
    %v2618 = vld [vmem:[#allocation8 + $0x220] sm:$0xff]
    %v2619 = vld [vmem:[#allocation8 + $0x228] sm:$0xff]
    %v2620 = vld [vmem:[#allocation8 + $0x230] sm:$0xff]
    %v2621 = vld [vmem:[#allocation8 + $0x238] sm:$0xff]
    %v2622 = vld [vmem:[#allocation8 + $0x240] sm:$0xff]
    %v2623 = vld [vmem:[#allocation8 + $0x248] sm:$0xff]
    %v2624 = vld [vmem:[#allocation8 + $0x250] sm:$0xff]
    %v2625 = vld [vmem:[#allocation8 + $0x258] sm:$0xff]
    %v2626 = vld [vmem:[#allocation8 + $0x260] sm:$0xff]
    %v2627 = vld [vmem:[#allocation8 + $0x268] sm:$0xff]
    %v2628 = vld [vmem:[#allocation8 + $0x270] sm:$0xff]
    %v2629 = vld [vmem:[#allocation8 + $0x278] sm:$0xff]
    %v2630 = vld [vmem:[#allocation8 + $0x280] sm:$0xff]
    %v2631 = vld [vmem:[#allocation8 + $0x288] sm:$0xff]
    %v2632 = vld [vmem:[#allocation8 + $0x290] sm:$0xff]
    %v2633 = vld [vmem:[#allocation8 + $0x298] sm:$0xff]
    %v2634 = vld [vmem:[#allocation8 + $0x2a0] sm:$0xff]
    %v2635 = vld [vmem:[#allocation8 + $0x2a8] sm:$0xff]
    %v2636 = vld [vmem:[#allocation8 + $0x2b0] sm:$0xff]
    %v2637 = vld [vmem:[#allocation8 + $0x2b8] sm:$0xff]
    %v2638 = vld [vmem:[#allocation8 + $0x2c0] sm:$0xff]
    %v2639 = vld [vmem:[#allocation8 + $0x2c8] sm:$0xff]
    %v2640 = vld [vmem:[#allocation8 + $0x2d0] sm:$0xff]
    %v2641 = vld [vmem:[#allocation8 + $0x2d8] sm:$0xff]
    %v2642 = vld [vmem:[#allocation8 + $0x2e0] sm:$0xff]
    %v2643 = vld [vmem:[#allocation8 + $0x2e8] sm:$0xff]
    %v2644 = vld [vmem:[#allocation8 + $0x2f0] sm:$0xff]
    %v2645 = vld [vmem:[#allocation8 + $0x2f8] sm:$0xff]
    %v2646 = vld [vmem:[#allocation8 + $0x300] sm:$0xff]
    %v2647 = vld [vmem:[#allocation8 + $0x308] sm:$0xff]
    %v2648 = vld [vmem:[#allocation8 + $0x310] sm:$0xff]
    %v2649 = vld [vmem:[#allocation8 + $0x318] sm:$0xff]
    %v2650 = vld [vmem:[#allocation8 + $0x320] sm:$0xff]
    %v2651 = vld [vmem:[#allocation8 + $0x328] sm:$0xff]
    %v2652 = vld [vmem:[#allocation8 + $0x330] sm:$0xff]
    %v2653 = vld [vmem:[#allocation8 + $0x338] sm:$0xff]
    %v2654 = vld [vmem:[#allocation8 + $0x340] sm:$0xff]
    %v2655 = vld [vmem:[#allocation8 + $0x348] sm:$0xff]
    %v2656 = vld [vmem:[#allocation8 + $0x350] sm:$0xff]
    %v2657 = vld [vmem:[#allocation8 + $0x358] sm:$0xff]
    %v2658 = vld [vmem:[#allocation8 + $0x360] sm:$0xff]
    %v2659 = vld [vmem:[#allocation8 + $0x368] sm:$0xff]
    %v2660 = vld [vmem:[#allocation8 + $0x370] sm:$0xff]
    %v2661 = vld [vmem:[#allocation8 + $0x378] sm:$0xff]
    %v2662 = vld [vmem:[#allocation8 + $0x380] sm:$0xff]
    %v2663 = vld [vmem:[#allocation8 + $0x388] sm:$0xff]
    %v2664 = vld [vmem:[#allocation8 + $0x390] sm:$0xff]
    %v2665 = vld [vmem:[#allocation8 + $0x398] sm:$0xff]
    %v2666 = vld [vmem:[#allocation8 + $0x3a0] sm:$0xff]
    %v2667 = vld [vmem:[#allocation8 + $0x3a8] sm:$0xff]
    %v2668 = vld [vmem:[#allocation8 + $0x3b0] sm:$0xff]
    %v2669 = vld [vmem:[#allocation8 + $0x3b8] sm:$0xff]
    %v2670 = vld [vmem:[#allocation8 + $0x3c0] sm:$0xff]
    %v2671 = vld [vmem:[#allocation8 + $0x3c8] sm:$0xff]
    %v2672 = vld [vmem:[#allocation8 + $0x3d0] sm:$0xff]
    %v2673 = vld [vmem:[#allocation8 + $0x3d8] sm:$0xff]
    %v2674 = vld [vmem:[#allocation8 + $0x3e0] sm:$0xff]
    %v2675 = vld [vmem:[#allocation8 + $0x3e8] sm:$0xff]
    %v2676 = vld [vmem:[#allocation8 + $0x3f0] sm:$0xff]
    %v2677 = vld [vmem:[#allocation8 + $0x3f8] sm:$0xff]
    %v2678 = vld [vmem:[#allocation8 + $0x400] sm:$0xff]
    %v2679 = vld [vmem:[#allocation8 + $0x408] sm:$0xff]
    %v2680 = vld [vmem:[#allocation8 + $0x410] sm:$0xff]
    %v2681 = vld [vmem:[#allocation8 + $0x418] sm:$0xff]
    %v2682 = vld [vmem:[#allocation8 + $0x420] sm:$0xff]
    %v2683 = vld [vmem:[#allocation8 + $0x428] sm:$0xff]
    %v2684 = vld [vmem:[#allocation8 + $0x430] sm:$0xff]
    %v2685 = vld [vmem:[#allocation8 + $0x438] sm:$0xff]
    %v2686 = vld [vmem:[#allocation8 + $0x440] sm:$0xff]
    %v2687 = vld [vmem:[#allocation8 + $0x448] sm:$0xff]
    %v2688 = vld [vmem:[#allocation8 + $0x450] sm:$0xff]
    %v2689 = vld [vmem:[#allocation8 + $0x458] sm:$0xff]
    %v2690 = vld [vmem:[#allocation8 + $0x460] sm:$0xff]
    %v2691 = vld [vmem:[#allocation8 + $0x468] sm:$0xff]
    %v2692 = vld [vmem:[#allocation8 + $0x470] sm:$0xff]
    %v2693 = vld [vmem:[#allocation8 + $0x478] sm:$0xff]
    %v2694 = vld [vmem:[#allocation8 + $0x480] sm:$0xff]
    %v2695 = vld [vmem:[#allocation8 + $0x488] sm:$0xff]
    %v2696 = vld [vmem:[#allocation8 + $0x490] sm:$0xff]
    %v2697 = vld [vmem:[#allocation8 + $0x498] sm:$0xff]
    %v2698 = vld [vmem:[#allocation8 + $0x4a0] sm:$0xff]
    %v2699 = vld [vmem:[#allocation8 + $0x4a8] sm:$0xff]
    %v2700 = vld [vmem:[#allocation8 + $0x4b0] sm:$0xff]
    %v2701 = vld [vmem:[#allocation8 + $0x4b8] sm:$0xff]
    %v2702 = vld [vmem:[#allocation8 + $0x4c0] sm:$0xff]
    %v2703 = vld [vmem:[#allocation8 + $0x4c8] sm:$0xff]
    %v2704 = vld [vmem:[#allocation8 + $0x4d0] sm:$0xff]
    %v2705 = vld [vmem:[#allocation8 + $0x4d8] sm:$0xff]
    %v2706 = vld [vmem:[#allocation8 + $0x4e0] sm:$0xff]
    %v2707 = vld [vmem:[#allocation8 + $0x4e8] sm:$0xff]
    %v2708 = vld [vmem:[#allocation8 + $0x4f0] sm:$0xff]
    %v2709 = vld [vmem:[#allocation8 + $0x4f8] sm:$0xff]
    %v2710 = vld [vmem:[#allocation8 + $0x500] sm:$0xff]
    %v2711 = vld [vmem:[#allocation8 + $0x508] sm:$0xff]
    %v2712 = vld [vmem:[#allocation8 + $0x510] sm:$0xff]
    %v2713 = vld [vmem:[#allocation8 + $0x518] sm:$0xff]
    %v2714 = vld [vmem:[#allocation8 + $0x520] sm:$0xff]
    %v2715 = vld [vmem:[#allocation8 + $0x528] sm:$0xff]
    %v2716 = vld [vmem:[#allocation8 + $0x530] sm:$0xff]
    %v2717 = vld [vmem:[#allocation8 + $0x538] sm:$0xff]
    %v2718 = vld [vmem:[#allocation8 + $0x540] sm:$0xff]
    %v2719 = vld [vmem:[#allocation8 + $0x548] sm:$0xff]
    %v2720 = vld [vmem:[#allocation8 + $0x550] sm:$0xff]
    %v2721 = vld [vmem:[#allocation8 + $0x558] sm:$0xff]
    %v2722 = vld [vmem:[#allocation8 + $0x560] sm:$0xff]
    %v2723 = vld [vmem:[#allocation8 + $0x568] sm:$0xff]
    %v2724 = vld [vmem:[#allocation8 + $0x570] sm:$0xff]
    %v2725 = vld [vmem:[#allocation8 + $0x578] sm:$0xff]
    %v2726 = vld [vmem:[#allocation8 + $0x580] sm:$0xff]
    %v2727 = vld [vmem:[#allocation8 + $0x588] sm:$0xff]
    %v2728 = vld [vmem:[#allocation8 + $0x590] sm:$0xff]
    %v2729 = vld [vmem:[#allocation8 + $0x598] sm:$0xff]
    %v2730 = vld [vmem:[#allocation8 + $0x5a0] sm:$0xff]
    %v2731 = vld [vmem:[#allocation8 + $0x5a8] sm:$0xff]
    %v2732 = vld [vmem:[#allocation8 + $0x5b0] sm:$0xff]
    %v2733 = vld [vmem:[#allocation8 + $0x5b8] sm:$0xff]
    %v2734 = vld [vmem:[#allocation8 + $0x5c0] sm:$0xff]
    %v2735 = vld [vmem:[#allocation8 + $0x5c8] sm:$0xff]
    %v2736 = vld [vmem:[#allocation8 + $0x5d0] sm:$0xff]
    %v2737 = vld [vmem:[#allocation8 + $0x5d8] sm:$0xff]
    %v2738 = vld [vmem:[#allocation8 + $0x5e0] sm:$0xff]
    %v2739 = vld [vmem:[#allocation8 + $0x5e8] sm:$0xff]
    %v2740 = vld [vmem:[#allocation8 + $0x5f0] sm:$0xff]
    %v2741 = vld [vmem:[#allocation8 + $0x5f8] sm:$0xff]
    %v2742 = vld [vmem:[#allocation8 + $0x600] sm:$0xff]
    %v2743 = vld [vmem:[#allocation8 + $0x608] sm:$0xff]
    %v2744 = vld [vmem:[#allocation8 + $0x610] sm:$0xff]
    %v2745 = vld [vmem:[#allocation8 + $0x618] sm:$0xff]
    %v2746 = vld [vmem:[#allocation8 + $0x620] sm:$0xff]
    %v2747 = vld [vmem:[#allocation8 + $0x628] sm:$0xff]
    %v2748 = vld [vmem:[#allocation8 + $0x630] sm:$0xff]
    %v2749 = vld [vmem:[#allocation8 + $0x638] sm:$0xff]
    %v2750 = vld [vmem:[#allocation8 + $0x640] sm:$0xff]
    %v2751 = vld [vmem:[#allocation8 + $0x648] sm:$0xff]
    %v2752 = vld [vmem:[#allocation8 + $0x650] sm:$0xff]
    %v2753 = vld [vmem:[#allocation8 + $0x658] sm:$0xff]
    %v2754 = vld [vmem:[#allocation8 + $0x660] sm:$0xff]
    %v2755 = vld [vmem:[#allocation8 + $0x668] sm:$0xff]
    %v2756 = vld [vmem:[#allocation8 + $0x670] sm:$0xff]
    %v2757 = vld [vmem:[#allocation8 + $0x678] sm:$0xff]
    %v2758 = vld [vmem:[#allocation8 + $0x680] sm:$0xff]
    %v2759 = vld [vmem:[#allocation8 + $0x688] sm:$0xff]
    %v2760 = vld [vmem:[#allocation8 + $0x690] sm:$0xff]
    %v2761 = vld [vmem:[#allocation8 + $0x698] sm:$0xff]
    %v2762 = vld [vmem:[#allocation8 + $0x6a0] sm:$0xff]
    %v2763 = vld [vmem:[#allocation8 + $0x6a8] sm:$0xff]
    %v2764 = vld [vmem:[#allocation8 + $0x6b0] sm:$0xff]
    %v2765 = vld [vmem:[#allocation8 + $0x6b8] sm:$0xff]
    %v2766 = vld [vmem:[#allocation8 + $0x6c0] sm:$0xff]
    %v2767 = vld [vmem:[#allocation8 + $0x6c8] sm:$0xff]
    %v2768 = vld [vmem:[#allocation8 + $0x6d0] sm:$0xff]
    %v2769 = vld [vmem:[#allocation8 + $0x6d8] sm:$0xff]
    %v2770 = vld [vmem:[#allocation8 + $0x6e0] sm:$0xff]
    %v2771 = vld [vmem:[#allocation8 + $0x6e8] sm:$0xff]
    %v2772 = vld [vmem:[#allocation8 + $0x6f0] sm:$0xff]
    %v2773 = vld [vmem:[#allocation8 + $0x6f8] sm:$0xff]
    %v2774 = vld [vmem:[#allocation8 + $0x700] sm:$0xff]
    %v2775 = vld [vmem:[#allocation8 + $0x708] sm:$0xff]
    %v2776 = vld [vmem:[#allocation8 + $0x710] sm:$0xff]
    %v2777 = vld [vmem:[#allocation8 + $0x718] sm:$0xff]
    %v2778 = vld [vmem:[#allocation8 + $0x720] sm:$0xff]
    %v2779 = vld [vmem:[#allocation8 + $0x728] sm:$0xff]
    %v2780 = vld [vmem:[#allocation8 + $0x730] sm:$0xff]
    %v2781 = vld [vmem:[#allocation8 + $0x738] sm:$0xff]
    %v2782 = vld [vmem:[#allocation8 + $0x740] sm:$0xff]
    %v2783 = vld [vmem:[#allocation8 + $0x748] sm:$0xff]
    %v2784 = vld [vmem:[#allocation8 + $0x750] sm:$0xff]
    %v2785 = vld [vmem:[#allocation8 + $0x758] sm:$0xff]
    %v2786 = vld [vmem:[#allocation8 + $0x760] sm:$0xff]
    %v2787 = vld [vmem:[#allocation8 + $0x768] sm:$0xff]
    %v2788 = vld [vmem:[#allocation8 + $0x770] sm:$0xff]
    %v2789 = vld [vmem:[#allocation8 + $0x778] sm:$0xff]
    %v2790 = vld [vmem:[#allocation8 + $0x780] sm:$0xff]
    %v2791 = vld [vmem:[#allocation8 + $0x788] sm:$0xff]
    %v2792 = vld [vmem:[#allocation8 + $0x790] sm:$0xff]
    %v2793 = vld [vmem:[#allocation8 + $0x798] sm:$0xff]
    %v2794 = vld [vmem:[#allocation8 + $0x7a0] sm:$0xff]
    %v2795 = vld [vmem:[#allocation8 + $0x7a8] sm:$0xff]
    %v2796 = vld [vmem:[#allocation8 + $0x7b0] sm:$0xff]
    %v2797 = vld [vmem:[#allocation8 + $0x7b8] sm:$0xff]
    %v2798 = vld [vmem:[#allocation8 + $0x7c0] sm:$0xff]
    %v2799 = vld [vmem:[#allocation8 + $0x7c8] sm:$0xff]
    %v2800 = vld [vmem:[#allocation8 + $0x7d0] sm:$0xff]
    %v2801 = vld [vmem:[#allocation8 + $0x7d8] sm:$0xff]
    %v2802 = vld [vmem:[#allocation8 + $0x7e0] sm:$0xff]
    %v2803 = vld [vmem:[#allocation8 + $0x7e8] sm:$0xff]
    %v2804 = vld [vmem:[#allocation8 + $0x7f0] sm:$0xff]
    %v2805 = vld [vmem:[#allocation8 + $0x7f8] sm:$0xff]
    %v2806 = vld [vmem:[#allocation8 + $0x800] sm:$0xff]
    %v2807 = vld [vmem:[#allocation8 + $0x808] sm:$0xff]
    %v2808 = vld [vmem:[#allocation8 + $0x810] sm:$0xff]
    %v2809 = vld [vmem:[#allocation8 + $0x818] sm:$0xff]
    %v2810 = vld [vmem:[#allocation8 + $0x820] sm:$0xff]
    %v2811 = vld [vmem:[#allocation8 + $0x828] sm:$0xff]
    %v2812 = vld [vmem:[#allocation8 + $0x830] sm:$0xff]
    %v2813 = vld [vmem:[#allocation8 + $0x838] sm:$0xff]
    %v2814 = vld [vmem:[#allocation8 + $0x840] sm:$0xff]
    %v2815 = vld [vmem:[#allocation8 + $0x848] sm:$0xff]
    %v2816 = vld [vmem:[#allocation8 + $0x850] sm:$0xff]
    %v2817 = vld [vmem:[#allocation8 + $0x858] sm:$0xff]
    %v2818 = vld [vmem:[#allocation8 + $0x860] sm:$0xff]
    %v2819 = vld [vmem:[#allocation8 + $0x868] sm:$0xff]
    %v2820 = vld [vmem:[#allocation8 + $0x870] sm:$0xff]
    %v2821 = vld [vmem:[#allocation8 + $0x878] sm:$0xff]
    %v2822 = vld [vmem:[#allocation8 + $0x880] sm:$0xff]
    %v2823 = vld [vmem:[#allocation8 + $0x888] sm:$0xff]
    %v2824 = vld [vmem:[#allocation8 + $0x890] sm:$0xff]
    %v2825 = vld [vmem:[#allocation8 + $0x898] sm:$0xff]
    %v2826 = vld [vmem:[#allocation8 + $0x8a0] sm:$0xff]
    %v2827 = vld [vmem:[#allocation8 + $0x8a8] sm:$0xff]
    %v2828 = vld [vmem:[#allocation8 + $0x8b0] sm:$0xff]
    %v2829 = vld [vmem:[#allocation8 + $0x8b8] sm:$0xff]
    %v2830 = vld [vmem:[#allocation8 + $0x8c0] sm:$0xff]
    %v2831 = vld [vmem:[#allocation8 + $0x8c8] sm:$0xff]
    %v2832 = vld [vmem:[#allocation8 + $0x8d0] sm:$0xff]
    %v2833 = vld [vmem:[#allocation8 + $0x8d8] sm:$0xff]
    %v2834 = vld [vmem:[#allocation8 + $0x8e0] sm:$0xff]
    %v2835 = vld [vmem:[#allocation8 + $0x8e8] sm:$0xff]
    %v2836 = vld [vmem:[#allocation8 + $0x8f0] sm:$0xff]
    %v2837 = vld [vmem:[#allocation8 + $0x8f8] sm:$0xff]
    %v2838 = vld [vmem:[#allocation8 + $0x900] sm:$0xff]
    %v2839 = vld [vmem:[#allocation8 + $0x908] sm:$0xff]
    %v2840 = vld [vmem:[#allocation8 + $0x910] sm:$0xff]
    %v2841 = vld [vmem:[#allocation8 + $0x918] sm:$0xff]
    %v2842 = vld [vmem:[#allocation8 + $0x920] sm:$0xff]
    %v2843 = vld [vmem:[#allocation8 + $0x928] sm:$0xff]
    %v2844 = vld [vmem:[#allocation8 + $0x930] sm:$0xff]
    %v2845 = vld [vmem:[#allocation8 + $0x938] sm:$0xff]
    %v2846 = vld [vmem:[#allocation8 + $0x940] sm:$0xff]
    %v2847 = vld [vmem:[#allocation8 + $0x948] sm:$0xff]
    %v2848 = vld [vmem:[#allocation8 + $0x950] sm:$0xff]
    %v2849 = vld [vmem:[#allocation8 + $0x958] sm:$0xff]
    %v2850 = vld [vmem:[#allocation8 + $0x960] sm:$0xff]
    %v2851 = vld [vmem:[#allocation8 + $0x968] sm:$0xff]
    %v2852 = vld [vmem:[#allocation8 + $0x970] sm:$0xff]
    %v2853 = vld [vmem:[#allocation8 + $0x978] sm:$0xff]
    %v2854 = vld [vmem:[#allocation8 + $0x980] sm:$0xff]
    %v2855 = vld [vmem:[#allocation8 + $0x988] sm:$0xff]
    %v2856 = vld [vmem:[#allocation8 + $0x990] sm:$0xff]
    %v2857 = vld [vmem:[#allocation8 + $0x998] sm:$0xff]
    %v2858 = vld [vmem:[#allocation8 + $0x9a0] sm:$0xff]
    %v2859 = vld [vmem:[#allocation8 + $0x9a8] sm:$0xff]
    %v2860 = vld [vmem:[#allocation8 + $0x9b0] sm:$0xff]
    %v2861 = vld [vmem:[#allocation8 + $0x9b8] sm:$0xff]
    %v2862 = vld [vmem:[#allocation8 + $0x9c0] sm:$0xff]
    %v2863 = vld [vmem:[#allocation8 + $0x9c8] sm:$0xff]
    %v2864 = vld [vmem:[#allocation8 + $0x9d0] sm:$0xff]
    %v2865 = vld [vmem:[#allocation8 + $0x9d8] sm:$0xff]
    %v2866 = vld [vmem:[#allocation8 + $0x9e0] sm:$0xff]
    %v2867 = vld [vmem:[#allocation8 + $0x9e8] sm:$0xff]
    %v2868 = vld [vmem:[#allocation8 + $0x9f0] sm:$0xff]
    %v2869 = vld [vmem:[#allocation8 + $0x9f8] sm:$0xff]
    %v2870 = vld [vmem:[#allocation8 + $0xa00] sm:$0xff]
    %v2871 = vld [vmem:[#allocation8 + $0xa08] sm:$0xff]
    %v2872 = vld [vmem:[#allocation8 + $0xa10] sm:$0xff]
    %v2873 = vld [vmem:[#allocation8 + $0xa18] sm:$0xff]
    %v2874 = vld [vmem:[#allocation8 + $0xa20] sm:$0xff]
    %v2875 = vld [vmem:[#allocation8 + $0xa28] sm:$0xff]
    %v2876 = vld [vmem:[#allocation8 + $0xa30] sm:$0xff]
    %v2877 = vld [vmem:[#allocation8 + $0xa38] sm:$0xff]
    %v2878 = vld [vmem:[#allocation8 + $0xa40] sm:$0xff]
    %v2879 = vld [vmem:[#allocation8 + $0xa48] sm:$0xff]
    %v2880 = vld [vmem:[#allocation8 + $0xa50] sm:$0xff]
    %v2881 = vld [vmem:[#allocation8 + $0xa58] sm:$0xff]
    %v2882 = vld [vmem:[#allocation8 + $0xa60] sm:$0xff]
    %v2883 = vld [vmem:[#allocation8 + $0xa68] sm:$0xff]
    %v2884 = vld [vmem:[#allocation8 + $0xa70] sm:$0xff]
    %v2885 = vld [vmem:[#allocation8 + $0xa78] sm:$0xff]
    %v2886 = vld [vmem:[#allocation8 + $0xa80] sm:$0xff]
    %v2887 = vld [vmem:[#allocation8 + $0xa88] sm:$0xff]
    %v2888 = vld [vmem:[#allocation8 + $0xa90] sm:$0xff]
    %v2889 = vld [vmem:[#allocation8 + $0xa98] sm:$0xff]
    %v2890 = vld [vmem:[#allocation8 + $0xaa0] sm:$0xff]
    %v2891 = vld [vmem:[#allocation8 + $0xaa8] sm:$0xff]
    %v2892 = vld [vmem:[#allocation8 + $0xab0] sm:$0xff]
    %v2893 = vld [vmem:[#allocation8 + $0xab8] sm:$0xff]
    %v2894 = vld [vmem:[#allocation8 + $0xac0] sm:$0xff]
    %v2895 = vld [vmem:[#allocation8 + $0xac8] sm:$0xff]
    %v2896 = vld [vmem:[#allocation8 + $0xad0] sm:$0xff]
    %v2897 = vld [vmem:[#allocation8 + $0xad8] sm:$0xff]
    %v2898 = vld [vmem:[#allocation8 + $0xae0] sm:$0xff]
    %v2899 = vld [vmem:[#allocation8 + $0xae8] sm:$0xff]
    %v2900 = vld [vmem:[#allocation8 + $0xaf0] sm:$0xff]
    %v2901 = vld [vmem:[#allocation8 + $0xaf8] sm:$0xff]
    %v2902 = vld [vmem:[#allocation8 + $0xb00] sm:$0xff]
    %v2903 = vld [vmem:[#allocation8 + $0xb08] sm:$0xff]
    %v2904 = vld [vmem:[#allocation8 + $0xb10] sm:$0xff]
    %v2905 = vld [vmem:[#allocation8 + $0xb18] sm:$0xff]
    %v2906 = vld [vmem:[#allocation8 + $0xb20] sm:$0xff]
    %v2907 = vld [vmem:[#allocation8 + $0xb28] sm:$0xff]
    %v2908 = vld [vmem:[#allocation8 + $0xb30] sm:$0xff]
    %v2909 = vld [vmem:[#allocation8 + $0xb38] sm:$0xff]
    %v2910 = vld [vmem:[#allocation8 + $0xb40] sm:$0xff]
    %v2911 = vld [vmem:[#allocation8 + $0xb48] sm:$0xff]
    %v2912 = vld [vmem:[#allocation8 + $0xb50] sm:$0xff]
    %v2913 = vld [vmem:[#allocation8 + $0xb58] sm:$0xff]
    %v2914 = vld [vmem:[#allocation8 + $0xb60] sm:$0xff]
    %v2915 = vld [vmem:[#allocation8 + $0xb68] sm:$0xff]
    %v2916 = vld [vmem:[#allocation8 + $0xb70] sm:$0xff]
    %v2917 = vld [vmem:[#allocation8 + $0xb78] sm:$0xff]
    %v2918 = vld [vmem:[#allocation8 + $0xb80] sm:$0xff]
    %v2919 = vld [vmem:[#allocation8 + $0xb88] sm:$0xff]
    %v2920 = vld [vmem:[#allocation8 + $0xb90] sm:$0xff]
    %v2921 = vld [vmem:[#allocation8 + $0xb98] sm:$0xff]
    %v2922 = vld [vmem:[#allocation8 + $0xba0] sm:$0xff]
    %v2923 = vld [vmem:[#allocation8 + $0xba8] sm:$0xff]
    %v2924 = vld [vmem:[#allocation8 + $0xbb0] sm:$0xff]
    %v2925 = vld [vmem:[#allocation8 + $0xbb8] sm:$0xff]
    %v2926 = vld [vmem:[#allocation8 + $0xbc0] sm:$0xff]
    %v2927 = vld [vmem:[#allocation8 + $0xbc8] sm:$0xff]
    %v2928 = vld [vmem:[#allocation8 + $0xbd0] sm:$0xff]
    %v2929 = vld [vmem:[#allocation8 + $0xbd8] sm:$0xff]
    %v2930 = vld [vmem:[#allocation8 + $0xbe0] sm:$0xff]
    %v2931 = vld [vmem:[#allocation8 + $0xbe8] sm:$0xff]
    %v2932 = vld [vmem:[#allocation8 + $0xbf0] sm:$0xff]
    %v2933 = vld [vmem:[#allocation8 + $0xbf8] sm:$0xff]
    %v2934 = vld [vmem:[#allocation8 + $0xc00] sm:$0xff]
    %v2935 = vld [vmem:[#allocation8 + $0xc08] sm:$0xff]
    %v2936 = vld [vmem:[#allocation8 + $0xc10] sm:$0xff]
    %v2937 = vld [vmem:[#allocation8 + $0xc18] sm:$0xff]
    %v2938 = vld [vmem:[#allocation8 + $0xc20] sm:$0xff]
    %v2939 = vld [vmem:[#allocation8 + $0xc28] sm:$0xff]
    %v2940 = vld [vmem:[#allocation8 + $0xc30] sm:$0xff]
    %v2941 = vld [vmem:[#allocation8 + $0xc38] sm:$0xff]
    %v2942 = vld [vmem:[#allocation8 + $0xc40] sm:$0xff]
    %v2943 = vld [vmem:[#allocation8 + $0xc48] sm:$0xff]
    %v2944 = vld [vmem:[#allocation8 + $0xc50] sm:$0xff]
    %v2945 = vld [vmem:[#allocation8 + $0xc58] sm:$0xff]
    %v2946 = vld [vmem:[#allocation8 + $0xc60] sm:$0xff]
    %v2947 = vld [vmem:[#allocation8 + $0xc68] sm:$0xff]
    %v2948 = vld [vmem:[#allocation8 + $0xc70] sm:$0xff]
    %v2949 = vld [vmem:[#allocation8 + $0xc78] sm:$0xff]
    %v2950 = vld [vmem:[#allocation8 + $0xc80] sm:$0xff]
    %v2951 = vld [vmem:[#allocation8 + $0xc88] sm:$0xff]
    %v2952 = vld [vmem:[#allocation8 + $0xc90] sm:$0xff]
    %v2953 = vld [vmem:[#allocation8 + $0xc98] sm:$0xff]
    %v2954 = vld [vmem:[#allocation8 + $0xca0] sm:$0xff]
    %v2955 = vld [vmem:[#allocation8 + $0xca8] sm:$0xff]
    %v2956 = vld [vmem:[#allocation8 + $0xcb0] sm:$0xff]
    %v2957 = vld [vmem:[#allocation8 + $0xcb8] sm:$0xff]
    %v2958 = vld [vmem:[#allocation8 + $0xcc0] sm:$0xff]
    %v2959 = vld [vmem:[#allocation8 + $0xcc8] sm:$0xff]
    %v2960 = vld [vmem:[#allocation8 + $0xcd0] sm:$0xff]
    %v2961 = vld [vmem:[#allocation8 + $0xcd8] sm:$0xff]
    %v2962 = vld [vmem:[#allocation8 + $0xce0] sm:$0xff]
    %v2963 = vld [vmem:[#allocation8 + $0xce8] sm:$0xff]
    %v2964 = vld [vmem:[#allocation8 + $0xcf0] sm:$0xff]
    %v2965 = vld [vmem:[#allocation8 + $0xcf8] sm:$0xff]
    %v2966 = vld [vmem:[#allocation8 + $0xd00] sm:$0xff]
    %v2967 = vld [vmem:[#allocation8 + $0xd08] sm:$0xff]
    %v2968 = vld [vmem:[#allocation8 + $0xd10] sm:$0xff]
    %v2969 = vld [vmem:[#allocation8 + $0xd18] sm:$0xff]
    %v2970 = vld [vmem:[#allocation8 + $0xd20] sm:$0xff]
    %v2971 = vld [vmem:[#allocation8 + $0xd28] sm:$0xff]
    %v2972 = vld [vmem:[#allocation8 + $0xd30] sm:$0xff]
    %v2973 = vld [vmem:[#allocation8 + $0xd38] sm:$0xff]
    %v2974 = vld [vmem:[#allocation8 + $0xd40] sm:$0xff]
    %v2975 = vld [vmem:[#allocation8 + $0xd48] sm:$0xff]
    %v2976 = vld [vmem:[#allocation8 + $0xd50] sm:$0xff]
    %v2977 = vld [vmem:[#allocation8 + $0xd58] sm:$0xff]
    %v2978 = vld [vmem:[#allocation8 + $0xd60] sm:$0xff]
    %v2979 = vld [vmem:[#allocation8 + $0xd68] sm:$0xff]
    %v2980 = vld [vmem:[#allocation8 + $0xd70] sm:$0xff]
    %v2981 = vld [vmem:[#allocation8 + $0xd78] sm:$0xff]
    %v2982 = vld [vmem:[#allocation8 + $0xd80] sm:$0xff]
    %v2983 = vld [vmem:[#allocation8 + $0xd88] sm:$0xff]
    %v2984 = vld [vmem:[#allocation8 + $0xd90] sm:$0xff]
    %v2985 = vld [vmem:[#allocation8 + $0xd98] sm:$0xff]
    %v2986 = vld [vmem:[#allocation8 + $0xda0] sm:$0xff]
    %v2987 = vld [vmem:[#allocation8 + $0xda8] sm:$0xff]
    %v2988 = vld [vmem:[#allocation8 + $0xdb0] sm:$0xff]
    %v2989 = vld [vmem:[#allocation8 + $0xdb8] sm:$0xff]
    %v2990 = vld [vmem:[#allocation8 + $0xdc0] sm:$0xff]
    %v2991 = vld [vmem:[#allocation8 + $0xdc8] sm:$0xff]
    %v2992 = vld [vmem:[#allocation8 + $0xdd0] sm:$0xff]
    %v2993 = vld [vmem:[#allocation8 + $0xdd8] sm:$0xff]
    %v2994 = vld [vmem:[#allocation8 + $0xde0] sm:$0xff]
    %v2995 = vld [vmem:[#allocation8 + $0xde8] sm:$0xff]
    %v2996 = vld [vmem:[#allocation8 + $0xdf0] sm:$0xff]
    %v2997 = vld [vmem:[#allocation8 + $0xdf8] sm:$0xff]
    %v2998 = vld [vmem:[#allocation10] sm:$0xff]
    %v3000 = vlaneseq
    %v3001 = vshrl.u32 %v3000, 7
    %v3002 = vsub.s32 0, %v3001
    %v3003 = vrot.slane %v2998, %v3002
    %v3004 = vlaneseq
    %v3005 = vshrl.u32 %v3004, 7
    %v3006 = vsub.s32 1, %v3005
    %v3007 = vrot.slane %v2998, %v3006
    %v3008 = vlaneseq
    %v3009 = vshrl.u32 %v3008, 7
    %v3010 = vsub.s32 2, %v3009
    %v3011 = vrot.slane %v2998, %v3010
    %v3012 = vlaneseq
    %v3013 = vshrl.u32 %v3012, 7
    %v3014 = vsub.s32 3, %v3013
    %v3015 = vrot.slane %v2998, %v3014
    %v3016 = vlaneseq
    %v3017 = vshrl.u32 %v3016, 7
    %v3018 = vsub.s32 4, %v3017
    %v3019 = vrot.slane %v2998, %v3018
    %v3020 = vlaneseq
    %v3021 = vshrl.u32 %v3020, 7
    %v3022 = vsub.s32 5, %v3021
    %v3023 = vrot.slane %v2998, %v3022
    %v3024 = vlaneseq
    %v3025 = vshrl.u32 %v3024, 7
    %v3026 = vsub.s32 6, %v3025
    %v3027 = vrot.slane %v2998, %v3026
    %3035 = vmatprep.subr.mxu0 %v2551
    %3036 = vmatpush1.msra.mxu0 %v2550
    %3037 = vmatprep.subr.mxu0 %v2558
    %3038 = vmatpush1.msra.mxu0 %v2557
    %3039 = vmatprep.subr.mxu0 %v2565
    %3040 = vmatpush1.msra.mxu0 %v2564
    %3041 = vmatprep.subr.mxu0 %v2572
    %3042 = vmatpush1.msra.mxu0 %v2571
    %3043 = vmatprep.subr.mxu0 %v2579
    %3044 = vmatpush1.msra.mxu0 %v2578
    %3045 = vmatprep.subr.mxu0 %v2586
    %3046 = vmatpush1.msra.mxu0 %v2585
    %3047 = vmatprep.subr.mxu0 %v2593
    %3048 = vmatpush1.msra.mxu0 %v2592
    %3049 = vmatprep.subr.mxu0 %v2600
    %3050 = vmatpush1.msra.mxu0 %v2599
    %3051 = vmatprep.subr.mxu0 %v2607
    %3052 = vmatpush1.msra.mxu0 %v2606
    %3053 = vmatprep.subr.mxu0 %v2614
    %3054 = vmatpush1.msra.mxu0 %v2613
    %3055 = vmatprep.subr.mxu0 %v2621
    %3056 = vmatpush1.msra.mxu0 %v2620
    %3057 = vmatprep.subr.mxu0 %v2628
    %3058 = vmatpush1.msra.mxu0 %v2627
    %3059 = vmatprep.subr.mxu0 %v2635
    %3060 = vmatpush1.msra.mxu0 %v2634
    %3061 = vmatprep.subr.mxu0 %v2642
    %3062 = vmatpush1.msra.mxu0 %v2641
    %3063 = vmatprep.subr.mxu0 %v2649
    %3064 = vmatpush1.msra.mxu0 %v2648
    %3065 = vmatprep.subr.mxu0 %v2656
    %3066 = vmatpush1.msra.mxu0 %v2655
    %3067 = vmatprep.subr.mxu0 %v2663
    %3068 = vmatpush1.msra.mxu0 %v2662
    %3069 = vmatprep.subr.mxu0 %v2670
    %3070 = vmatpush1.msra.mxu0 %v2669
    %3071 = vmatprep.subr.mxu0 %v2677
    %3072 = vmatpush1.msra.mxu0 %v2676
    %3073 = vmatprep.subr.mxu0 %v2684
    %3074 = vmatpush1.msra.mxu0 %v2683
    %3075 = vmatprep.subr.mxu0 %v2691
    %3076 = vmatpush1.msra.mxu0 %v2690
    %3077 = vmatprep.subr.mxu0 %v2698
    %3078 = vmatpush1.msra.mxu0 %v2697
    %3079 = vmatprep.subr.mxu0 %v2705
    %3080 = vmatpush1.msra.mxu0 %v2704
    %3081 = vmatprep.subr.mxu0 %v2712
    %3082 = vmatpush1.msra.mxu0 %v2711
    %3083 = vmatprep.subr.mxu0 %v2719
    %3084 = vmatpush1.msra.mxu0 %v2718
    %3085 = vmatprep.subr.mxu0 %v2726
    %3086 = vmatpush1.msra.mxu0 %v2725
    %3087 = vmatprep.subr.mxu0 %v2733
    %3088 = vmatpush1.msra.mxu0 %v2732
    %3089 = vmatprep.subr.mxu0 %v2740
    %3090 = vmatpush1.msra.mxu0 %v2739
    %3091 = vmatprep.subr.mxu0 %v2747
    %3092 = vmatpush1.msra.mxu0 %v2746
    %3093 = vmatprep.subr.mxu0 %v2754
    %3094 = vmatpush1.msra.mxu0 %v2753
    %3095 = vmatprep.subr.mxu0 %v2761
    %3096 = vmatpush1.msra.mxu0 %v2760
    %3097 = vmatprep.subr.mxu0 %v2768
    %3098 = vmatpush1.msra.mxu0 %v2767
    %3099 = vmatprep.mubr.f32.mxu0 %v2543
    %3100 = vmatmul.mubr.f32.gmra.mrb[0].mxu0 %v2542
    %v3101 = vpop.f32.mrb[0].mxu0
    %v3102 = vadd.f32 %v3003, %v3101
    %v3103 = vpop.f32.mrb[0].mxu0
    %v3104 = vadd.f32 %v3007, %v3103
    %3105 = vmatprep.mubr.f32.mxu0 %v2547
    %3106 = vmatmul.mubr.f32.gmra.mrb[0].mxu0 %v2546
    %v3107 = vpop.f32.mrb[0].mxu0
    %v3108 = vadd.f32 %v3003, %v3107
    %v3109 = vpop.f32.mrb[0].mxu0
    %v3110 = vadd.f32 %v3007, %v3109
    %3111 = vdwg.mxu0
    %3112 = vmatprep.subr.mxu0 %v2775
    %3113 = vmatpush1.msra.mxu0 %v2774
    %3114 = vmatprep.subr.mxu0 %v2782
    %3115 = vmatpush1.msra.mxu0 %v2781
    %3116 = vmatprep.subr.mxu0 %v2789
    %3117 = vmatpush1.msra.mxu0 %v2788
    %3118 = vmatprep.subr.mxu0 %v2796
    %3119 = vmatpush1.msra.mxu0 %v2795
    %3120 = vmatprep.subr.mxu0 %v2803
    %3121 = vmatpush1.msra.mxu0 %v2802
    %3122 = vmatprep.subr.mxu0 %v2810
    %3123 = vmatpush1.msra.mxu0 %v2809
    %3124 = vmatprep.subr.mxu0 %v2817
    %3125 = vmatpush1.msra.mxu0 %v2816
    %3126 = vmatprep.subr.mxu0 %v2824
    %3127 = vmatpush1.msra.mxu0 %v2823
    %3128 = vmatprep.subr.mxu0 %v2831
    %3129 = vmatpush1.msra.mxu0 %v2830
    %3130 = vmatprep.subr.mxu0 %v2838
    %3131 = vmatpush1.msra.mxu0 %v2837
    %3132 = vmatprep.subr.mxu0 %v2845
    %3133 = vmatpush1.msra.mxu0 %v2844
    %3134 = vmatprep.subr.mxu0 %v2852
    %3135 = vmatpush1.msra.mxu0 %v2851
    %3136 = vmatprep.subr.mxu0 %v2859
    %3137 = vmatpush1.msra.mxu0 %v2858
    %3138 = vmatprep.subr.mxu0 %v2866
    %3139 = vmatpush1.msra.mxu0 %v2865
    %3140 = vmatprep.subr.mxu0 %v2873
    %3141 = vmatpush1.msra.mxu0 %v2872
    %3142 = vmatprep.subr.mxu0 %v2880
    %3143 = vmatpush1.msra.mxu0 %v2879
    %3144 = vmatprep.subr.mxu0 %v2887
    %3145 = vmatpush1.msra.mxu0 %v2886
    %3146 = vmatprep.subr.mxu0 %v2894
    %3147 = vmatpush1.msra.mxu0 %v2893
    %3148 = vmatprep.subr.mxu0 %v2901
    %3149 = vmatpush1.msra.mxu0 %v2900
    %3150 = vmatprep.subr.mxu0 %v2908
    %3151 = vmatpush1.msra.mxu0 %v2907
    %3152 = vmatprep.subr.mxu0 %v2915
    %3153 = vmatpush1.msra.mxu0 %v2914
    %3154 = vmatprep.subr.mxu0 %v2922
    %3155 = vmatpush1.msra.mxu0 %v2921
    %3156 = vmatprep.subr.mxu0 %v2929
    %3157 = vmatpush1.msra.mxu0 %v2928
    %3158 = vmatprep.subr.mxu0 %v2936
    %3159 = vmatpush1.msra.mxu0 %v2935
    %3160 = vmatprep.subr.mxu0 %v2943
    %3161 = vmatpush1.msra.mxu0 %v2942
    %3162 = vmatprep.subr.mxu0 %v2950
    %3163 = vmatpush1.msra.mxu0 %v2949
    %3164 = vmatprep.subr.mxu0 %v2957
    %3165 = vmatpush1.msra.mxu0 %v2956
    %3166 = vmatprep.subr.mxu0 %v2964
    %3167 = vmatpush1.msra.mxu0 %v2963
    %3168 = vmatprep.subr.mxu0 %v2971
    %3169 = vmatpush1.msra.mxu0 %v2970
    %3170 = vmatprep.subr.mxu0 %v2978
    %3171 = vmatpush1.msra.mxu0 %v2977
    %3172 = vmatprep.subr.mxu0 %v2985
    %3173 = vmatpush1.msra.mxu0 %v2984
    %3174 = vmatprep.subr.mxu0 %v2992
    %3175 = vmatpush1.msra.mxu0 %v2991
    %3176 = vmatprep.mubr.f32.mxu0 %v2545
    %3177 = vmatmul.mubr.f32.gmra.mrb[0].mxu0 %v2544
    %v3178 = vpop.f32.mrb[0].mxu0
    %v3179 = vadd.f32 %v3102, %v3178
    %v3180 = vpop.f32.mrb[0].mxu0
    %v3181 = vadd.f32 %v3104, %v3180
    %3182 = vmatprep.mubr.f32.mxu0 %v2549
    %3183 = vmatmul.mubr.f32.gmra.mrb[0].mxu0 %v2548
    %v3184 = vpop.f32.mrb[0].mxu0
    %v3185 = vadd.f32 %v3108, %v3184
    %v3186 = vpop.f32.mrb[0].mxu0
    %v3187 = vadd.f32 %v3110, %v3186
    %3188 = vdwg.mxu0
    %3189 = vmatprep.subr.mxu0 %v2553
    %3190 = vmatpush1.msra.mxu0 %v2552
    %3191 = vmatprep.subr.mxu0 %v2560
    %3192 = vmatpush1.msra.mxu0 %v2559
    %3193 = vmatprep.subr.mxu0 %v2567
    %3194 = vmatpush1.msra.mxu0 %v2566
    %3195 = vmatprep.subr.mxu0 %v2574
    %3196 = vmatpush1.msra.mxu0 %v2573
    %3197 = vmatprep.subr.mxu0 %v2581
    %3198 = vmatpush1.msra.mxu0 %v2580
    %3199 = vmatprep.subr.mxu0 %v2588
    %3200 = vmatpush1.msra.mxu0 %v2587
    %3201 = vmatprep.subr.mxu0 %v2595
    %3202 = vmatpush1.msra.mxu0 %v2594
    %3203 = vmatprep.subr.mxu0 %v2602
    %3204 = vmatpush1.msra.mxu0 %v2601
    %3205 = vmatprep.subr.mxu0 %v2609
    %3206 = vmatpush1.msra.mxu0 %v2608
    %3207 = vmatprep.subr.mxu0 %v2616
    %3208 = vmatpush1.msra.mxu0 %v2615
    %3209 = vmatprep.subr.mxu0 %v2623
    %3210 = vmatpush1.msra.mxu0 %v2622
    %3211 = vmatprep.subr.mxu0 %v2630
    %3212 = vmatpush1.msra.mxu0 %v2629
    %3213 = vmatprep.subr.mxu0 %v2637
    %3214 = vmatpush1.msra.mxu0 %v2636
    %3215 = vmatprep.subr.mxu0 %v2644
    %3216 = vmatpush1.msra.mxu0 %v2643
    %3217 = vmatprep.subr.mxu0 %v2651
    %3218 = vmatpush1.msra.mxu0 %v2650
    %3219 = vmatprep.subr.mxu0 %v2658
    %3220 = vmatpush1.msra.mxu0 %v2657
    %3221 = vmatprep.subr.mxu0 %v2665
    %3222 = vmatpush1.msra.mxu0 %v2664
    %3223 = vmatprep.subr.mxu0 %v2672
    %3224 = vmatpush1.msra.mxu0 %v2671
    %3225 = vmatprep.subr.mxu0 %v2679
    %3226 = vmatpush1.msra.mxu0 %v2678
    %3227 = vmatprep.subr.mxu0 %v2686
    %3228 = vmatpush1.msra.mxu0 %v2685
    %3229 = vmatprep.subr.mxu0 %v2693
    %3230 = vmatpush1.msra.mxu0 %v2692
    %3231 = vmatprep.subr.mxu0 %v2700
    %3232 = vmatpush1.msra.mxu0 %v2699
    %3233 = vmatprep.subr.mxu0 %v2707
    %3234 = vmatpush1.msra.mxu0 %v2706
    %3235 = vmatprep.subr.mxu0 %v2714
    %3236 = vmatpush1.msra.mxu0 %v2713
    %3237 = vmatprep.subr.mxu0 %v2721
    %3238 = vmatpush1.msra.mxu0 %v2720
    %3239 = vmatprep.subr.mxu0 %v2728
    %3240 = vmatpush1.msra.mxu0 %v2727
    %3241 = vmatprep.subr.mxu0 %v2735
    %3242 = vmatpush1.msra.mxu0 %v2734
    %3243 = vmatprep.subr.mxu0 %v2742
    %3244 = vmatpush1.msra.mxu0 %v2741
    %3245 = vmatprep.subr.mxu0 %v2749
    %3246 = vmatpush1.msra.mxu0 %v2748
    %3247 = vmatprep.subr.mxu0 %v2756
    %3248 = vmatpush1.msra.mxu0 %v2755
    %3249 = vmatprep.subr.mxu0 %v2763
    %3250 = vmatpush1.msra.mxu0 %v2762
    %3251 = vmatprep.subr.mxu0 %v2770
    %3252 = vmatpush1.msra.mxu0 %v2769
    %3253 = vmatprep.mubr.f32.mxu0 %v2543
    %3254 = vmatmul.mubr.f32.gmra.mrb[0].mxu0 %v2542
    %v3255 = vpop.f32.mrb[0].mxu0
    %v3256 = vadd.f32 %v3011, %v3255
    %v3257 = vpop.f32.mrb[0].mxu0
    %v3258 = vadd.f32 %v3015, %v3257
    %3259 = vmatprep.mubr.f32.mxu0 %v2547
    %3260 = vmatmul.mubr.f32.gmra.mrb[0].mxu0 %v2546
    %v3261 = vpop.f32.mrb[0].mxu0
    %v3262 = vadd.f32 %v3011, %v3261
    %v3263 = vpop.f32.mrb[0].mxu0
    %v3264 = vadd.f32 %v3015, %v3263
    %3265 = vdwg.mxu0
    %3266 = vmatprep.subr.mxu0 %v2777
    %3267 = vmatpush1.msra.mxu0 %v2776
    %3268 = vmatprep.subr.mxu0 %v2784
    %3269 = vmatpush1.msra.mxu0 %v2783
    %3270 = vmatprep.subr.mxu0 %v2791
    %3271 = vmatpush1.msra.mxu0 %v2790
    %3272 = vmatprep.subr.mxu0 %v2798
    %3273 = vmatpush1.msra.mxu0 %v2797
    %3274 = vmatprep.subr.mxu0 %v2805
    %3275 = vmatpush1.msra.mxu0 %v2804
    %3276 = vmatprep.subr.mxu0 %v2812
    %3277 = vmatpush1.msra.mxu0 %v2811
    %3278 = vmatprep.subr.mxu0 %v2819
    %3279 = vmatpush1.msra.mxu0 %v2818
    %3280 = vmatprep.subr.mxu0 %v2826
    %3281 = vmatpush1.msra.mxu0 %v2825
    %3282 = vmatprep.subr.mxu0 %v2833
    %3283 = vmatpush1.msra.mxu0 %v2832
    %3284 = vmatprep.subr.mxu0 %v2840
    %3285 = vmatpush1.msra.mxu0 %v2839
    %3286 = vmatprep.subr.mxu0 %v2847
    %3287 = vmatpush1.msra.mxu0 %v2846
    %3288 = vmatprep.subr.mxu0 %v2854
    %3289 = vmatpush1.msra.mxu0 %v2853
    %3290 = vmatprep.subr.mxu0 %v2861
    %3291 = vmatpush1.msra.mxu0 %v2860
    %3292 = vmatprep.subr.mxu0 %v2868
    %3293 = vmatpush1.msra.mxu0 %v2867
    %3294 = vmatprep.subr.mxu0 %v2875
    %3295 = vmatpush1.msra.mxu0 %v2874
    %3296 = vmatprep.subr.mxu0 %v2882
    %3297 = vmatpush1.msra.mxu0 %v2881
    %3298 = vmatprep.subr.mxu0 %v2889
    %3299 = vmatpush1.msra.mxu0 %v2888
    %3300 = vmatprep.subr.mxu0 %v2896
    %3301 = vmatpush1.msra.mxu0 %v2895
    %3302 = vmatprep.subr.mxu0 %v2903
    %3303 = vmatpush1.msra.mxu0 %v2902
    %3304 = vmatprep.subr.mxu0 %v2910
    %3305 = vmatpush1.msra.mxu0 %v2909
    %3306 = vmatprep.subr.mxu0 %v2917
    %3307 = vmatpush1.msra.mxu0 %v2916
    %3308 = vmatprep.subr.mxu0 %v2924
    %3309 = vmatpush1.msra.mxu0 %v2923
    %3310 = vmatprep.subr.mxu0 %v2931
    %3311 = vmatpush1.msra.mxu0 %v2930
    %3312 = vmatprep.subr.mxu0 %v2938
    %3313 = vmatpush1.msra.mxu0 %v2937
    %3314 = vmatprep.subr.mxu0 %v2945
    %3315 = vmatpush1.msra.mxu0 %v2944
    %3316 = vmatprep.subr.mxu0 %v2952
    %3317 = vmatpush1.msra.mxu0 %v2951
    %3318 = vmatprep.subr.mxu0 %v2959
    %3319 = vmatpush1.msra.mxu0 %v2958
    %3320 = vmatprep.subr.mxu0 %v2966
    %3321 = vmatpush1.msra.mxu0 %v2965
    %3322 = vmatprep.subr.mxu0 %v2973
    %3323 = vmatpush1.msra.mxu0 %v2972
    %3324 = vmatprep.subr.mxu0 %v2980
    %3325 = vmatpush1.msra.mxu0 %v2979
    %3326 = vmatprep.subr.mxu0 %v2987
    %3327 = vmatpush1.msra.mxu0 %v2986
    %3328 = vmatprep.subr.mxu0 %v2994
    %3329 = vmatpush1.msra.mxu0 %v2993
    %3330 = vmatprep.mubr.f32.mxu0 %v2545
    %3331 = vmatmul.mubr.f32.gmra.mrb[0].mxu0 %v2544
    %v3332 = vpop.f32.mrb[0].mxu0
    %v3333 = vadd.f32 %v3256, %v3332
    %v3334 = vpop.f32.mrb[0].mxu0
    %v3335 = vadd.f32 %v3258, %v3334
    %3336 = vmatprep.mubr.f32.mxu0 %v2549
    %3337 = vmatmul.mubr.f32.gmra.mrb[0].mxu0 %v2548
    %v3338 = vpop.f32.mrb[0].mxu0
    %v3339 = vadd.f32 %v3262, %v3338
    %v3340 = vpop.f32.mrb[0].mxu0
    %v3341 = vadd.f32 %v3264, %v3340
    %3342 = vdwg.mxu0
    %3343 = vmatprep.subr.mxu0 %v2555
    %3344 = vmatpush1.msra.mxu0 %v2554
    %3345 = vmatprep.subr.mxu0 %v2562
    %3346 = vmatpush1.msra.mxu0 %v2561
    %3347 = vmatprep.subr.mxu0 %v2569
    %3348 = vmatpush1.msra.mxu0 %v2568
    %3349 = vmatprep.subr.mxu0 %v2576
    %3350 = vmatpush1.msra.mxu0 %v2575
    %3351 = vmatprep.subr.mxu0 %v2583
    %3352 = vmatpush1.msra.mxu0 %v2582
    %3353 = vmatprep.subr.mxu0 %v2590
    %3354 = vmatpush1.msra.mxu0 %v2589
    %3355 = vmatprep.subr.mxu0 %v2597
    %3356 = vmatpush1.msra.mxu0 %v2596
    %3357 = vmatprep.subr.mxu0 %v2604
    %3358 = vmatpush1.msra.mxu0 %v2603
    %3359 = vmatprep.subr.mxu0 %v2611
    %3360 = vmatpush1.msra.mxu0 %v2610
    %3361 = vmatprep.subr.mxu0 %v2618
    %3362 = vmatpush1.msra.mxu0 %v2617
    %3363 = vmatprep.subr.mxu0 %v2625
    %3364 = vmatpush1.msra.mxu0 %v2624
    %3365 = vmatprep.subr.mxu0 %v2632
    %3366 = vmatpush1.msra.mxu0 %v2631
    %3367 = vmatprep.subr.mxu0 %v2639
    %3368 = vmatpush1.msra.mxu0 %v2638
    %3369 = vmatprep.subr.mxu0 %v2646
    %3370 = vmatpush1.msra.mxu0 %v2645
    %3371 = vmatprep.subr.mxu0 %v2653
    %3372 = vmatpush1.msra.mxu0 %v2652
    %3373 = vmatprep.subr.mxu0 %v2660
    %3374 = vmatpush1.msra.mxu0 %v2659
    %3375 = vmatprep.subr.mxu0 %v2667
    %3376 = vmatpush1.msra.mxu0 %v2666
    %3377 = vmatprep.subr.mxu0 %v2674
    %3378 = vmatpush1.msra.mxu0 %v2673
    %3379 = vmatprep.subr.mxu0 %v2681
    %3380 = vmatpush1.msra.mxu0 %v2680
    %3381 = vmatprep.subr.mxu0 %v2688
    %3382 = vmatpush1.msra.mxu0 %v2687
    %3383 = vmatprep.subr.mxu0 %v2695
    %3384 = vmatpush1.msra.mxu0 %v2694
    %3385 = vmatprep.subr.mxu0 %v2702
    %3386 = vmatpush1.msra.mxu0 %v2701
    %3387 = vmatprep.subr.mxu0 %v2709
    %3388 = vmatpush1.msra.mxu0 %v2708
    %3389 = vmatprep.subr.mxu0 %v2716
    %3390 = vmatpush1.msra.mxu0 %v2715
    %3391 = vmatprep.subr.mxu0 %v2723
    %3392 = vmatpush1.msra.mxu0 %v2722
    %3393 = vmatprep.subr.mxu0 %v2730
    %3394 = vmatpush1.msra.mxu0 %v2729
    %3395 = vmatprep.subr.mxu0 %v2737
    %3396 = vmatpush1.msra.mxu0 %v2736
    %3397 = vmatprep.subr.mxu0 %v2744
    %3398 = vmatpush1.msra.mxu0 %v2743
    %3399 = vmatprep.subr.mxu0 %v2751
    %3400 = vmatpush1.msra.mxu0 %v2750
    %3401 = vmatprep.subr.mxu0 %v2758
    %3402 = vmatpush1.msra.mxu0 %v2757
    %3403 = vmatprep.subr.mxu0 %v2765
    %3404 = vmatpush1.msra.mxu0 %v2764
    %3405 = vmatprep.subr.mxu0 %v2772
    %3406 = vmatpush1.msra.mxu0 %v2771
    %3407 = vmatprep.mubr.f32.mxu0 %v2543
    %3408 = vmatmul.mubr.f32.gmra.mrb[0].mxu0 %v2542
    %v3409 = vpop.f32.mrb[0].mxu0
    %v3410 = vadd.f32 %v3019, %v3409
    %v3411 = vpop.f32.mrb[0].mxu0
    %v3412 = vadd.f32 %v3023, %v3411
    %3413 = vmatprep.mubr.f32.mxu0 %v2547
    %3414 = vmatmul.mubr.f32.gmra.mrb[0].mxu0 %v2546
    %v3415 = vpop.f32.mrb[0].mxu0
    %v3416 = vadd.f32 %v3019, %v3415
    %v3417 = vpop.f32.mrb[0].mxu0
    %v3418 = vadd.f32 %v3023, %v3417
    %3419 = vdwg.mxu0
    %3420 = vmatprep.subr.mxu0 %v2779
    %3421 = vmatpush1.msra.mxu0 %v2778
    %3422 = vmatprep.subr.mxu0 %v2786
    %3423 = vmatpush1.msra.mxu0 %v2785
    %3424 = vmatprep.subr.mxu0 %v2793
    %3425 = vmatpush1.msra.mxu0 %v2792
    %3426 = vmatprep.subr.mxu0 %v2800
    %3427 = vmatpush1.msra.mxu0 %v2799
    %3428 = vmatprep.subr.mxu0 %v2807
    %3429 = vmatpush1.msra.mxu0 %v2806
    %3430 = vmatprep.subr.mxu0 %v2814
    %3431 = vmatpush1.msra.mxu0 %v2813
    %3432 = vmatprep.subr.mxu0 %v2821
    %3433 = vmatpush1.msra.mxu0 %v2820
    %3434 = vmatprep.subr.mxu0 %v2828
    %3435 = vmatpush1.msra.mxu0 %v2827
    %3436 = vmatprep.subr.mxu0 %v2835
    %3437 = vmatpush1.msra.mxu0 %v2834
    %3438 = vmatprep.subr.mxu0 %v2842
    %3439 = vmatpush1.msra.mxu0 %v2841
    %3440 = vmatprep.subr.mxu0 %v2849
    %3441 = vmatpush1.msra.mxu0 %v2848
    %3442 = vmatprep.subr.mxu0 %v2856
    %3443 = vmatpush1.msra.mxu0 %v2855
    %3444 = vmatprep.subr.mxu0 %v2863
    %3445 = vmatpush1.msra.mxu0 %v2862
    %3446 = vmatprep.subr.mxu0 %v2870
    %3447 = vmatpush1.msra.mxu0 %v2869
    %3448 = vmatprep.subr.mxu0 %v2877
    %3449 = vmatpush1.msra.mxu0 %v2876
    %3450 = vmatprep.subr.mxu0 %v2884
    %3451 = vmatpush1.msra.mxu0 %v2883
    %3452 = vmatprep.subr.mxu0 %v2891
    %3453 = vmatpush1.msra.mxu0 %v2890
    %3454 = vmatprep.subr.mxu0 %v2898
    %3455 = vmatpush1.msra.mxu0 %v2897
    %3456 = vmatprep.subr.mxu0 %v2905
    %3457 = vmatpush1.msra.mxu0 %v2904
    %3458 = vmatprep.subr.mxu0 %v2912
    %3459 = vmatpush1.msra.mxu0 %v2911
    %3460 = vmatprep.subr.mxu0 %v2919
    %3461 = vmatpush1.msra.mxu0 %v2918
    %3462 = vmatprep.subr.mxu0 %v2926
    %3463 = vmatpush1.msra.mxu0 %v2925
    %3464 = vmatprep.subr.mxu0 %v2933
    %3465 = vmatpush1.msra.mxu0 %v2932
    %3466 = vmatprep.subr.mxu0 %v2940
    %3467 = vmatpush1.msra.mxu0 %v2939
    %3468 = vmatprep.subr.mxu0 %v2947
    %3469 = vmatpush1.msra.mxu0 %v2946
    %3470 = vmatprep.subr.mxu0 %v2954
    %3471 = vmatpush1.msra.mxu0 %v2953
    %3472 = vmatprep.subr.mxu0 %v2961
    %3473 = vmatpush1.msra.mxu0 %v2960
    %3474 = vmatprep.subr.mxu0 %v2968
    %3475 = vmatpush1.msra.mxu0 %v2967
    %3476 = vmatprep.subr.mxu0 %v2975
    %3477 = vmatpush1.msra.mxu0 %v2974
    %3478 = vmatprep.subr.mxu0 %v2982
    %3479 = vmatpush1.msra.mxu0 %v2981
    %3480 = vmatprep.subr.mxu0 %v2989
    %3481 = vmatpush1.msra.mxu0 %v2988
    %3482 = vmatprep.subr.mxu0 %v2996
    %3483 = vmatpush1.msra.mxu0 %v2995
    %3484 = vmatprep.mubr.f32.mxu0 %v2545
    %3485 = vmatmul.mubr.f32.gmra.mrb[0].mxu0 %v2544
    %v3486 = vpop.f32.mrb[0].mxu0
    %v3487 = vadd.f32 %v3410, %v3486
    %v3488 = vpop.f32.mrb[0].mxu0
    %v3489 = vadd.f32 %v3412, %v3488
    %3490 = vmatprep.mubr.f32.mxu0 %v2549
    %3491 = vmatmul.mubr.f32.gmra.mrb[0].mxu0 %v2548
    %v3492 = vpop.f32.mrb[0].mxu0
    %v3493 = vadd.f32 %v3416, %v3492
    %v3494 = vpop.f32.mrb[0].mxu0
    %v3495 = vadd.f32 %v3418, %v3494
    %3496 = vdwg.mxu0
    %3497 = vmatprep.subr.mxu0 0.0
    %3498 = vmatpush1.msra.mxu0 %v2556
    %3499 = vmatprep.subr.mxu0 0.0
    %3500 = vmatpush1.msra.mxu0 %v2563
    %3501 = vmatprep.subr.mxu0 0.0
    %3502 = vmatpush1.msra.mxu0 %v2570
    %3503 = vmatprep.subr.mxu0 0.0
    %3504 = vmatpush1.msra.mxu0 %v2577
    %3505 = vmatprep.subr.mxu0 0.0
    %3506 = vmatpush1.msra.mxu0 %v2584
    %3507 = vmatprep.subr.mxu0 0.0
    %3508 = vmatpush1.msra.mxu0 %v2591
    %3509 = vmatprep.subr.mxu0 0.0
    %3510 = vmatpush1.msra.mxu0 %v2598
    %3511 = vmatprep.subr.mxu0 0.0
    %3512 = vmatpush1.msra.mxu0 %v2605
    %3513 = vmatprep.subr.mxu0 0.0
    %3514 = vmatpush1.msra.mxu0 %v2612
    %3515 = vmatprep.subr.mxu0 0.0
    %3516 = vmatpush1.msra.mxu0 %v2619
    %3517 = vmatprep.subr.mxu0 0.0
    %3518 = vmatpush1.msra.mxu0 %v2626
    %3519 = vmatprep.subr.mxu0 0.0
    %3520 = vmatpush1.msra.mxu0 %v2633
    %3521 = vmatprep.subr.mxu0 0.0
    %3522 = vmatpush1.msra.mxu0 %v2640
    %3523 = vmatprep.subr.mxu0 0.0
    %3524 = vmatpush1.msra.mxu0 %v2647
    %3525 = vmatprep.subr.mxu0 0.0
    %3526 = vmatpush1.msra.mxu0 %v2654
    %3527 = vmatprep.subr.mxu0 0.0
    %3528 = vmatpush1.msra.mxu0 %v2661
    %3529 = vmatprep.subr.mxu0 0.0
    %3530 = vmatpush1.msra.mxu0 %v2668
    %3531 = vmatprep.subr.mxu0 0.0
    %3532 = vmatpush1.msra.mxu0 %v2675
    %3533 = vmatprep.subr.mxu0 0.0
    %3534 = vmatpush1.msra.mxu0 %v2682
    %3535 = vmatprep.subr.mxu0 0.0
    %3536 = vmatpush1.msra.mxu0 %v2689
    %3537 = vmatprep.subr.mxu0 0.0
    %3538 = vmatpush1.msra.mxu0 %v2696
    %3539 = vmatprep.subr.mxu0 0.0
    %3540 = vmatpush1.msra.mxu0 %v2703
    %3541 = vmatprep.subr.mxu0 0.0
    %3542 = vmatpush1.msra.mxu0 %v2710
    %3543 = vmatprep.subr.mxu0 0.0
    %3544 = vmatpush1.msra.mxu0 %v2717
    %3545 = vmatprep.subr.mxu0 0.0
    %3546 = vmatpush1.msra.mxu0 %v2724
    %3547 = vmatprep.subr.mxu0 0.0
    %3548 = vmatpush1.msra.mxu0 %v2731
    %3549 = vmatprep.subr.mxu0 0.0
    %3550 = vmatpush1.msra.mxu0 %v2738
    %3551 = vmatprep.subr.mxu0 0.0
    %3552 = vmatpush1.msra.mxu0 %v2745
    %3553 = vmatprep.subr.mxu0 0.0
    %3554 = vmatpush1.msra.mxu0 %v2752
    %3555 = vmatprep.subr.mxu0 0.0
    %3556 = vmatpush1.msra.mxu0 %v2759
    %3557 = vmatprep.subr.mxu0 0.0
    %3558 = vmatpush1.msra.mxu0 %v2766
    %3559 = vmatprep.subr.mxu0 0.0
    %3560 = vmatpush1.msra.mxu0 %v2773
    %3561 = vmatprep.mubr.f32.mxu0 %v2543
    %3562 = vmatmul.mubr.f32.gmra.mrb[0].mxu0 %v2542
    %v3563 = vpop.f32.mrb[0].mxu0
    %v3564 = vadd.f32 %v3027, %v3563
    %v3565 = vpop.f32.mrb[0].mxu0
    %3566 = vmatprep.mubr.f32.mxu0 %v2547
    %3567 = vmatmul.mubr.f32.gmra.mrb[0].mxu0 %v2546
    %v3568 = vpop.f32.mrb[0].mxu0
    %v3569 = vadd.f32 %v3027, %v3568
    %v3570 = vpop.f32.mrb[0].mxu0
    %3571 = vdwg.mxu0
    %3572 = vmatprep.subr.mxu0 0.0
    %3573 = vmatpush1.msra.mxu0 %v2780
    %3574 = vmatprep.subr.mxu0 0.0
    %3575 = vmatpush1.msra.mxu0 %v2787
    %3576 = vmatprep.subr.mxu0 0.0
    %3577 = vmatpush1.msra.mxu0 %v2794
    %3578 = vmatprep.subr.mxu0 0.0
    %3579 = vmatpush1.msra.mxu0 %v2801
    %3580 = vmatprep.subr.mxu0 0.0
    %3581 = vmatpush1.msra.mxu0 %v2808
    %3582 = vmatprep.subr.mxu0 0.0
    %3583 = vmatpush1.msra.mxu0 %v2815
    %3584 = vmatprep.subr.mxu0 0.0
    %3585 = vmatpush1.msra.mxu0 %v2822
    %3586 = vmatprep.subr.mxu0 0.0
    %3587 = vmatpush1.msra.mxu0 %v2829
    %3588 = vmatprep.subr.mxu0 0.0
    %3589 = vmatpush1.msra.mxu0 %v2836
    %3590 = vmatprep.subr.mxu0 0.0
    %3591 = vmatpush1.msra.mxu0 %v2843
    %3592 = vmatprep.subr.mxu0 0.0
    %3593 = vmatpush1.msra.mxu0 %v2850
    %3594 = vmatprep.subr.mxu0 0.0
    %3595 = vmatpush1.msra.mxu0 %v2857
    %3596 = vmatprep.subr.mxu0 0.0
    %3597 = vmatpush1.msra.mxu0 %v2864
    %3598 = vmatprep.subr.mxu0 0.0
    %3599 = vmatpush1.msra.mxu0 %v2871
    %3600 = vmatprep.subr.mxu0 0.0
    %3601 = vmatpush1.msra.mxu0 %v2878
    %3602 = vmatprep.subr.mxu0 0.0
    %3603 = vmatpush1.msra.mxu0 %v2885
    %3604 = vmatprep.subr.mxu0 0.0
    %3605 = vmatpush1.msra.mxu0 %v2892
    %3606 = vmatprep.subr.mxu0 0.0
    %3607 = vmatpush1.msra.mxu0 %v2899
    %3608 = vmatprep.subr.mxu0 0.0
    %3609 = vmatpush1.msra.mxu0 %v2906
    %3610 = vmatprep.subr.mxu0 0.0
    %3611 = vmatpush1.msra.mxu0 %v2913
    %3612 = vmatprep.subr.mxu0 0.0
    %3613 = vmatpush1.msra.mxu0 %v2920
    %3614 = vmatprep.subr.mxu0 0.0
    %3615 = vmatpush1.msra.mxu0 %v2927
    %3616 = vmatprep.subr.mxu0 0.0
    %3617 = vmatpush1.msra.mxu0 %v2934
    %3618 = vmatprep.subr.mxu0 0.0
    %3619 = vmatpush1.msra.mxu0 %v2941
    %3620 = vmatprep.subr.mxu0 0.0
    %3621 = vmatpush1.msra.mxu0 %v2948
    %3622 = vmatprep.subr.mxu0 0.0
    %3623 = vmatpush1.msra.mxu0 %v2955
    %3624 = vmatprep.subr.mxu0 0.0
    %3625 = vmatpush1.msra.mxu0 %v2962
    %3626 = vmatprep.subr.mxu0 0.0
    %3627 = vmatpush1.msra.mxu0 %v2969
    %3628 = vmatprep.subr.mxu0 0.0
    %3629 = vmatpush1.msra.mxu0 %v2976
    %3630 = vmatprep.subr.mxu0 0.0
    %3631 = vmatpush1.msra.mxu0 %v2983
    %3632 = vmatprep.subr.mxu0 0.0
    %3633 = vmatpush1.msra.mxu0 %v2990
    %3634 = vmatprep.subr.mxu0 0.0
    %3635 = vmatpush1.msra.mxu0 %v2997
    %3636 = vmatprep.mubr.f32.mxu0 %v2545
    %3637 = vmatmul.mubr.f32.gmra.mrb[0].mxu0 %v2544
    %v3638 = vpop.f32.mrb[0].mxu0
    %v3639 = vadd.f32 %v3564, %v3638
    %v3640 = vpop.f32.mrb[0].mxu0
    %3641 = vmatprep.mubr.f32.mxu0 %v2549
    %3642 = vmatmul.mubr.f32.gmra.mrb[0].mxu0 %v2548
    %v3643 = vpop.f32.mrb[0].mxu0
    %v3644 = vadd.f32 %v3569, %v3643
    %v3645 = vpop.f32.mrb[0].mxu0
    %3646 = vdwg.mxu0
    %3647 = vst [vmem:[#allocation11] sm:$0xff] %v3179
    %3648 = vst [vmem:[#allocation11 + $0x8] sm:$0xff] %v3181
    %3649 = vst [vmem:[#allocation11 + $0x10] sm:$0xff] %v3333
    %3650 = vst [vmem:[#allocation11 + $0x18] sm:$0xff] %v3335
    %3651 = vst [vmem:[#allocation11 + $0x20] sm:$0xff] %v3487
    %3652 = vst [vmem:[#allocation11 + $0x28] sm:$0xff] %v3489
    %3653 = vst [vmem:[#allocation11 + $0x30] sm:$0xff] %v3639
    %3654 = vst [vmem:[#allocation11 + $0x38] sm:$0xff] %v3185
    %3655 = vst [vmem:[#allocation11 + $0x40] sm:$0xff] %v3187
    %3656 = vst [vmem:[#allocation11 + $0x48] sm:$0xff] %v3339
    %3657 = vst [vmem:[#allocation11 + $0x50] sm:$0xff] %v3341
    %3658 = vst [vmem:[#allocation11 + $0x58] sm:$0xff] %v3493
    %3659 = vst [vmem:[#allocation11 + $0x60] sm:$0xff] %v3495
    %3660 = vst [vmem:[#allocation11 + $0x68] sm:$0xff] %v3644
    // Predicated region
    $region42: #{tpu_custom_call.1} parent=1 // pred_check
      _
    $region43: #{tpu_custom_call.1} parent=1 // pred_check_branch
      %3662 = sbr.rel (0) target = $region45
    $region44: #{tpu_custom_call.1} parent=1 // pred_region
      %s3664 = ssub.s32 1792, 1792
      %3665 = vsyncadd [#allocation4], %s3664
      %s3666 = sshll.u32 [#allocation11], 4
      %s3667 = int_to_ptr.vmem [resolvable:$true] %s3666
      %3672 = dma.vmem_to_hbm [thread:$0]  %s3667, 1792, %s5, [#allocation4], 896, 896, 56
    $region45: #{tpu_custom_call.1} parent=1 // pred_fallthru
      _
    // Predicated region
    $region46: #{tpu_custom_call.1} parent=1 // pred_check
      _
    $region47: #{tpu_custom_call.1} parent=1 // pred_check_branch
      %3674 = sbr.rel (0) target = $region49
    $region48: #{tpu_custom_call.1} parent=1 // pred_region
      %3675 = dma.done [#allocation4], 1792
    $region49: #{tpu_custom_call.1} parent=1 // pred_fallthru
      _
    %3676 = vsyncpa [#allocation3], 1
    %3677 = vsyncpa [#allocation6], 1
    %3678 = vsyncpa [#allocation9], 1
    %3679 = vsyncpa [#allocation4], 1

</llo_original>
